<compile_context>
chip_gen: v6e
topology: v6e:2x2x1
jax: 0.10.0
libtpu: 0.0.40
codegen_flags: <defaults>
</compile_context>

<pallas_src>
import functools
import numpy as np
import jax
import jax.numpy as jnp
from jax.experimental import pallas as pl
from jax.experimental.pallas import tpu as pltpu


# ----------------------------------------------------------------------------
# Pallas kernel: one grid step == one group of BW windows.
# ----------------------------------------------------------------------------
def _wmsa_kernel(x_ref, wqkv_ref, bqkv_ref, wproj_ref, bproj_ref, bm_ref,
                 o_ref, heads_ref, *, num_heads):
    BW, N, C = x_ref.shape
    d = C // num_heads

    # QKV projection on the flattened window-group slab: (BW*N, C) @ (C, 3C).
    x2d = x_ref[...].reshape(BW * N, C)
    qkv = jnp.dot(x2d, wqkv_ref[...], preferred_element_type=jnp.float32)
    qkv = qkv + bqkv_ref[...]                 # scale already folded into the Q columns
    qkv3 = qkv.reshape(BW, N, 3 * C)

    # Static unroll over heads (H is small); each head is batched over BW windows.
    for h in range(num_heads):
        q = qkv3[:, :, h * d:(h + 1) * d]                       # (BW, N, d)
        k = qkv3[:, :, C + h * d:C + (h + 1) * d]               # (BW, N, d)
        v = qkv3[:, :, 2 * C + h * d:2 * C + (h + 1) * d]       # (BW, N, d)

        # q @ k^T without an explicit transpose (contract last dims of both).
        scores = jnp.einsum("wqd,wkd->wqk", q, k,
                            preferred_element_type=jnp.float32)  # (BW, N, N)
        scores = scores + bm_ref[h]          # fused rel-pos bias + shift mask, one add

        # Numerically-stable softmax; divide via EUP reciprocal.
        m = jnp.max(scores, axis=-1, keepdims=True)
        p = jnp.exp(scores - m)
        denom = jnp.sum(p, axis=-1, keepdims=True)
        p = p * pl.reciprocal(denom, approx=True)
        # TODO(synk): attn_drop / proj_drop are identity (p=0.0, eval mode) and skipped.

        # Static-offset store into VMEM scratch (replaces jnp.concatenate of heads).
        heads_ref[:, :, h * d:(h + 1) * d] = jnp.einsum(
            "wqk,wkd->wqd", p, v, preferred_element_type=jnp.float32)

    # Output projection on the flattened slab: (BW*N, C) @ (C, C).
    heads2d = heads_ref[...].reshape(BW * N, C)
    y = jnp.dot(heads2d, wproj_ref[...], preferred_element_type=jnp.float32)
    y = y + bproj_ref[...]
    o_ref[...] = y.reshape(BW, N, C).astype(o_ref.dtype)


def window_attention(x, wqkv, bqkv, wproj, bproj, rel_bias, mask, *,
                     num_heads, scale, windows_per_step=None):
    B, N, C = x.shape
    nW = mask.shape[0]
    H = num_heads

    # Pick the window-group size: a multiple of nW (so the per-block window->mask
    # pattern is fixed), dividing B, targeting >=128 matmul rows per grid step.
    if windows_per_step is None:
        windows_per_step = nW
        while (windows_per_step * 2 <= B
               and B % (windows_per_step * 2) == 0
               and windows_per_step * N < 128):
            windows_per_step *= 2
    BW = windows_per_step
    assert B % BW == 0 and BW % nW == 0, (B, BW, nW)

    # Fold the attention scale into the Q columns of the QKV weight/bias.
    col_scale = jnp.concatenate(
        [jnp.full((C,), scale, dtype=wqkv.dtype),
         jnp.ones((2 * C,), dtype=wqkv.dtype)])
    wqkv_s = wqkv * col_scale[None, :]
    bqkv_s = bqkv * col_scale[None, :]

    # Pre-fuse relative-position bias and shift mask into one (H, BW, N, N)
    # operand.  Because BW % nW == 0, the window->mask pattern inside a block is
    # identical for every grid step, so this operand is grid-invariant.
    bias_mask = rel_bias[None, :, :, :] + mask[:, None, :, :]    # (nW, H, N, N)
    bias_mask = jnp.tile(bias_mask, (BW // nW, 1, 1, 1))         # (BW, H, N, N)
    bias_mask = bias_mask.transpose(1, 0, 2, 3)                  # (H, BW, N, N)

    kernel = functools.partial(_wmsa_kernel, num_heads=num_heads)
    return pl.pallas_call(
        kernel,
        out_shape=jax.ShapeDtypeStruct((B, N, C), x.dtype),
        grid=(B // BW,),
        in_specs=[
            pl.BlockSpec((BW, N, C), lambda b: (b, 0, 0)),        # x window group b
            pl.BlockSpec((C, 3 * C), lambda b: (0, 0)),           # qkv weight (scale folded)
            pl.BlockSpec((1, 3 * C), lambda b: (0, 0)),           # qkv bias (scale folded)
            pl.BlockSpec((C, C), lambda b: (0, 0)),               # proj weight
            pl.BlockSpec((1, C), lambda b: (0, 0)),               # proj bias
            pl.BlockSpec((H, BW, N, N), lambda b: (0, 0, 0, 0)),  # fused bias + mask
        ],
        out_specs=pl.BlockSpec((BW, N, C), lambda b: (b, 0, 0)),
        scratch_shapes=[pltpu.VMEM((BW, N, C), jnp.float32)],     # per-head writeback
        compiler_params=pltpu.CompilerParams(dimension_semantics=("parallel",)),
    )(x, wqkv_s, bqkv_s, wproj, bproj, bias_mask)


# ----------------------------------------------------------------------------
# Glue: relative position index (same arithmetic as the torch buffer).
# ----------------------------------------------------------------------------
def relative_position_index(window_size):
    coords_h = np.arange(window_size)
    coords_w = np.arange(window_size)
    coords = np.stack(np.meshgrid(coords_h, coords_w, indexing="ij"))
    coords_flatten = coords.reshape(2, -1)
    rel = coords_flatten[:, :, None] - coords_flatten[:, None, :]
    rel = rel.transpose(1, 2, 0).copy()
    rel[:, :, 0] += window_size - 1
    rel[:, :, 1] += window_size - 1
    rel[:, :, 0] *= 2 * window_size - 1
    return rel.sum(-1)                                            # (N, N)


# ----------------------------------------------------------------------------
# Pure-JAX reference (mirrors the torch forward), used for a correctness check.
# ----------------------------------------------------------------------------
def reference(x, wqkv, bqkv, wproj, bproj, rel_bias, mask, num_heads, scale):
    B, N, C = x.shape
    H = num_heads
    d = C // H
    qkv = x @ wqkv + bqkv                                         # (B, N, 3C)
    qkv = qkv.reshape(B, N, 3, H, d).transpose(2, 0, 3, 1, 4)
    q, k, v = qkv[0] * scale, qkv[1], qkv[2]
    attn = jnp.einsum("bhnd,bhmd->bhnm", q, k)
    attn = attn + rel_bias[None]
    nW = mask.shape[0]
    attn = attn.reshape(B // nW, nW, H, N, N) + mask[None, :, None]
    attn = attn.reshape(B, H, N, N)
    attn = jax.nn.softmax(attn, axis=-1)
    out = jnp.einsum("bhnm,bhmd->bhnd", attn, v).transpose(0, 2, 1, 3).reshape(B, N, C)
    return out @ wproj + bproj


if __name__ == "__main__":
    embed_dim = 32
    window_size = 4
    num_heads = 4
    N = window_size * window_size        # 16 tokens per window
    nW = 4                               # windows per image (for the shift mask)
    B = 16                               # total windows (B // nW = 4 images)
    scale = embed_dim ** (-0.5)          # module default: embed_dim**-0.5 (qk_scale=None)

    key = jax.random.PRNGKey(0)
    k_x, k_wq, k_bq, k_wp, k_bp, k_tab, k_m = jax.random.split(key, 7)

    x = jax.random.normal(k_x, (B, N, embed_dim), dtype=jnp.float32)

    # Synthetic parameters (shapes from __init__; weights stored as (in, out)).
    wqkv = jax.random.normal(k_wq, (embed_dim, 3 * embed_dim), dtype=jnp.float32) * 0.05
    bqkv = jax.random.normal(k_bq, (1, 3 * embed_dim), dtype=jnp.float32) * 0.05
    wproj = jax.random.normal(k_wp, (embed_dim, embed_dim), dtype=jnp.float32) * 0.05
    bproj = jax.random.normal(k_bp, (1, embed_dim), dtype=jnp.float32) * 0.05
    bias_table = jax.random.normal(
        k_tab, ((2 * window_size - 1) * (2 * window_size - 1), num_heads),
        dtype=jnp.float32) * 0.02

    # Gather relative position bias: table[index] -> (N, N, H) -> (H, N, N).
    rel_idx = jnp.asarray(relative_position_index(window_size))
    rel_bias = bias_table[rel_idx.reshape(-1)].reshape(N, N, num_heads).transpose(2, 0, 1)

    # Swin-style shift mask: 0 where allowed, -100 where masked.
    mask = jnp.where(jax.random.uniform(k_m, (nW, N, N)) > 0.3, 0.0, -100.0).astype(jnp.float32)

    out = window_attention(x, wqkv, bqkv, wproj, bproj, rel_bias, mask,
                           num_heads=num_heads, scale=scale)
    out = jax.block_until_ready(out)

    ref = reference(x, wqkv, bqkv, wproj, bproj, rel_bias, mask, num_heads, scale)
    # Tolerance accommodates the approximate EUP reciprocal in the softmax divide.
    np.testing.assert_allclose(np.asarray(out), np.asarray(ref), atol=5e-3, rtol=5e-3)

    print("KERNEL_OK")
</pallas_src>

<mosaic_0001>
module attributes {stable_mosaic.version = 11 : i64} {
  func.func @_wmsa_kernel(%arg0: i32, %arg1: memref<8x16x32xf32, #tpu.memory_space<vmem>>, %arg2: memref<32x96xf32, #tpu.memory_space<vmem>>, %arg3: memref<1x96xf32, #tpu.memory_space<vmem>>, %arg4: memref<32x32xf32, #tpu.memory_space<vmem>>, %arg5: memref<1x32xf32, #tpu.memory_space<vmem>>, %arg6: memref<4x8x16x16xf32, #tpu.memory_space<vmem>>, %arg7: memref<8x16x32xf32, #tpu.memory_space<vmem>>, %arg8: memref<8x16x32xf32, #tpu.memory_space<vmem>>) attributes {dimension_semantics = [#tpu.dimension_semantics<parallel>], iteration_bounds = array<i64: 2>, scalar_prefetch = 0 : i64, scratch_operands = 1 : i64, tpu.core_type = #tpu.core_type<tc>, window_params = [{transform_indices = @transform_0, window_bounds = array<i64: 8, 16, 32>}, {pipeline_mode = #tpu.pipeline_mode<synchronous>, transform_indices = @transform_1, window_bounds = array<i64: 32, 96>}, {pipeline_mode = #tpu.pipeline_mode<synchronous>, transform_indices = @transform_2, window_bounds = array<i64: 1, 96>}, {pipeline_mode = #tpu.pipeline_mode<synchronous>, transform_indices = @transform_3, window_bounds = array<i64: 32, 32>}, {pipeline_mode = #tpu.pipeline_mode<synchronous>, transform_indices = @transform_4, window_bounds = array<i64: 1, 32>}, {pipeline_mode = #tpu.pipeline_mode<synchronous>, transform_indices = @transform_5, window_bounds = array<i64: 4, 8, 16, 16>}, {transform_indices = @transform_6, window_bounds = array<i64: 8, 16, 32>}]} {
    %c0 = arith.constant 0 : index
    %c0_0 = arith.constant 0 : index
    %c0_1 = arith.constant 0 : index
    %0 = vector.load %arg1[%c0, %c0_0, %c0_1] : memref<8x16x32xf32, #tpu.memory_space<vmem>>, vector<8x16x32xf32>
    %1 = vector.shape_cast %0 : vector<8x16x32xf32> to vector<128x32xf32>
    %c0_2 = arith.constant 0 : index
    %c0_3 = arith.constant 0 : index
    %2 = vector.load %arg2[%c0_2, %c0_3] : memref<32x96xf32, #tpu.memory_space<vmem>>, vector<32x96xf32>
    %cst = arith.constant dense<0.000000e+00> : vector<128x96xf32>
    %3 = tpu.matmul %1, %2, %cst {dimension_numbers = #tpu.dot_dimension_numbers<[1], [0], [0], [1], [0, 0, 1, 1], [], []>} : vector<128x32xf32>, vector<32x96xf32>, vector<128x96xf32> -> vector<128x96xf32>
    %c0_4 = arith.constant 0 : index
    %c0_5 = arith.constant 0 : index
    %4 = vector.load %arg3[%c0_4, %c0_5] : memref<1x96xf32, #tpu.memory_space<vmem>>, vector<1x96xf32>
    %5 = vector.broadcast %4 : vector<1x96xf32> to vector<128x96xf32>
    %6 = arith.addf %3, %5 : vector<128x96xf32>
    %7 = vector.shape_cast %6 : vector<128x96xf32> to vector<8x16x96xf32>
    %8 = vector.extract_strided_slice %7 {offsets = [0, 0, 0], sizes = [8, 16, 8], strides = [1, 1, 1]} : vector<8x16x96xf32> to vector<8x16x8xf32>
    %9 = vector.extract_strided_slice %7 {offsets = [0, 0, 32], sizes = [8, 16, 8], strides = [1, 1, 1]} : vector<8x16x96xf32> to vector<8x16x8xf32>
    %10 = vector.extract_strided_slice %7 {offsets = [0, 0, 64], sizes = [8, 16, 8], strides = [1, 1, 1]} : vector<8x16x96xf32> to vector<8x16x8xf32>
    "tpu.trace_start"() <{level = 10 : i32, message = "wqd,wkd->wqk"}> : () -> ()
    %cst_6 = arith.constant dense<0.000000e+00> : vector<8x16x16xf32>
    %11 = tpu.matmul %8, %9, %cst_6 {dimension_numbers = #tpu.dot_dimension_numbers<[2], [2], [1], [1], [0, 0, 0, 1, 1, 1], [0], [0]>} : vector<8x16x8xf32>, vector<8x16x8xf32>, vector<8x16x16xf32> -> vector<8x16x16xf32>
    "tpu.trace_stop"() : () -> ()
    %c0_7 = arith.constant 0 : index
    %c0_8 = arith.constant 0 : index
    %c0_9 = arith.constant 0 : index
    %c0_10 = arith.constant 0 : index
    %12 = vector.load %arg6[%c0_7, %c0_8, %c0_9, %c0_10] : memref<4x8x16x16xf32, #tpu.memory_space<vmem>>, vector<1x8x16x16xf32>
    %13 = vector.shape_cast %12 : vector<1x8x16x16xf32> to vector<8x16x16xf32>
    %14 = arith.addf %11, %13 : vector<8x16x16xf32>
    %cst_11 = arith.constant dense<0xFF800000> : vector<8x16xf32>
    %15 = vector.multi_reduction <maximumf>, %14, %cst_11 [2] : vector<8x16x16xf32> to vector<8x16xf32>
    %16 = vector.shape_cast %15 : vector<8x16xf32> to vector<8x16x1xf32>
    %17 = vector.broadcast %16 : vector<8x16x1xf32> to vector<8x16x16xf32>
    %18 = arith.subf %14, %17 : vector<8x16x16xf32>
    %19 = math.exp %18 : vector<8x16x16xf32>
    %cst_12 = arith.constant dense<0.000000e+00> : vector<8x16xf32>
    %20 = vector.multi_reduction <add>, %19, %cst_12 [2] : vector<8x16x16xf32> to vector<8x16xf32>
    %21 = vector.shape_cast %20 : vector<8x16xf32> to vector<8x16x1xf32>
    %22 = tpu.reciprocal %21 {approx = true} : vector<8x16x1xf32> -> vector<8x16x1xf32>
    %23 = vector.broadcast %22 : vector<8x16x1xf32> to vector<8x16x16xf32>
    %24 = arith.mulf %19, %23 : vector<8x16x16xf32>
    "tpu.trace_start"() <{level = 10 : i32, message = "wqk,wkd->wqd"}> : () -> ()
    %cst_13 = arith.constant dense<0.000000e+00> : vector<8x16x8xf32>
    %25 = tpu.matmul %24, %10, %cst_13 {dimension_numbers = #tpu.dot_dimension_numbers<[2], [1], [1], [2], [0, 0, 0, 1, 1, 2], [0], [0]>} : vector<8x16x16xf32>, vector<8x16x8xf32>, vector<8x16x8xf32> -> vector<8x16x8xf32>
    "tpu.trace_stop"() : () -> ()
    %c0_14 = arith.constant 0 : index
    %c0_15 = arith.constant 0 : index
    %c0_16 = arith.constant 0 : index
    %26 = vector.load %arg8[%c0_14, %c0_15, %c0_16] : memref<8x16x32xf32, #tpu.memory_space<vmem>>, vector<8x16x8xf32>
    tpu.vector_store %arg8[%c0_14, %c0_15, %c0_16], %25 {strides = array<i32>} : memref<8x16x32xf32, #tpu.memory_space<vmem>>, vector<8x16x8xf32>,
    %27 = vector.extract_strided_slice %7 {offsets = [0, 0, 8], sizes = [8, 16, 8], strides = [1, 1, 1]} : vector<8x16x96xf32> to vector<8x16x8xf32>
    %28 = vector.extract_strided_slice %7 {offsets = [0, 0, 40], sizes = [8, 16, 8], strides = [1, 1, 1]} : vector<8x16x96xf32> to vector<8x16x8xf32>
    %29 = vector.extract_strided_slice %7 {offsets = [0, 0, 72], sizes = [8, 16, 8], strides = [1, 1, 1]} : vector<8x16x96xf32> to vector<8x16x8xf32>
    "tpu.trace_start"() <{level = 10 : i32, message = "wqd,wkd->wqk"}> : () -> ()
    %cst_17 = arith.constant dense<0.000000e+00> : vector<8x16x16xf32>
    %30 = tpu.matmul %27, %28, %cst_17 {dimension_numbers = #tpu.dot_dimension_numbers<[2], [2], [1], [1], [0, 0, 0, 1, 1, 1], [0], [0]>} : vector<8x16x8xf32>, vector<8x16x8xf32>, vector<8x16x16xf32> -> vector<8x16x16xf32>
    "tpu.trace_stop"() : () -> ()
    %c1 = arith.constant 1 : index
    %c0_18 = arith.constant 0 : index
    %c0_19 = arith.constant 0 : index
    %c0_20 = arith.constant 0 : index
    %31 = vector.load %arg6[%c1, %c0_18, %c0_19, %c0_20] : memref<4x8x16x16xf32, #tpu.memory_space<vmem>>, vector<1x8x16x16xf32>
    %32 = vector.shape_cast %31 : vector<1x8x16x16xf32> to vector<8x16x16xf32>
    %33 = arith.addf %30, %32 : vector<8x16x16xf32>
    %cst_21 = arith.constant dense<0xFF800000> : vector<8x16xf32>
    %34 = vector.multi_reduction <maximumf>, %33, %cst_21 [2] : vector<8x16x16xf32> to vector<8x16xf32>
    %35 = vector.shape_cast %34 : vector<8x16xf32> to vector<8x16x1xf32>
    %36 = vector.broadcast %35 : vector<8x16x1xf32> to vector<8x16x16xf32>
    %37 = arith.subf %33, %36 : vector<8x16x16xf32>
    %38 = math.exp %37 : vector<8x16x16xf32>
    %cst_22 = arith.constant dense<0.000000e+00> : vector<8x16xf32>
    %39 = vector.multi_reduction <add>, %38, %cst_22 [2] : vector<8x16x16xf32> to vector<8x16xf32>
    %40 = vector.shape_cast %39 : vector<8x16xf32> to vector<8x16x1xf32>
    %41 = tpu.reciprocal %40 {approx = true} : vector<8x16x1xf32> -> vector<8x16x1xf32>
    %42 = vector.broadcast %41 : vector<8x16x1xf32> to vector<8x16x16xf32>
    %43 = arith.mulf %38, %42 : vector<8x16x16xf32>
    "tpu.trace_start"() <{level = 10 : i32, message = "wqk,wkd->wqd"}> : () -> ()
    %cst_23 = arith.constant dense<0.000000e+00> : vector<8x16x8xf32>
    %44 = tpu.matmul %43, %29, %cst_23 {dimension_numbers = #tpu.dot_dimension_numbers<[2], [1], [1], [2], [0, 0, 0, 1, 1, 2], [0], [0]>} : vector<8x16x16xf32>, vector<8x16x8xf32>, vector<8x16x8xf32> -> vector<8x16x8xf32>
    "tpu.trace_stop"() : () -> ()
    %c0_24 = arith.constant 0 : index
    %c0_25 = arith.constant 0 : index
    %c8 = arith.constant 8 : index
    %45 = vector.load %arg8[%c0_24, %c0_25, %c8] : memref<8x16x32xf32, #tpu.memory_space<vmem>>, vector<8x16x8xf32>
    tpu.vector_store %arg8[%c0_24, %c0_25, %c8], %44 {strides = array<i32>} : memref<8x16x32xf32, #tpu.memory_space<vmem>>, vector<8x16x8xf32>,
    %46 = vector.extract_strided_slice %7 {offsets = [0, 0, 16], sizes = [8, 16, 8], strides = [1, 1, 1]} : vector<8x16x96xf32> to vector<8x16x8xf32>
    %47 = vector.extract_strided_slice %7 {offsets = [0, 0, 48], sizes = [8, 16, 8], strides = [1, 1, 1]} : vector<8x16x96xf32> to vector<8x16x8xf32>
    %48 = vector.extract_strided_slice %7 {offsets = [0, 0, 80], sizes = [8, 16, 8], strides = [1, 1, 1]} : vector<8x16x96xf32> to vector<8x16x8xf32>
    "tpu.trace_start"() <{level = 10 : i32, message = "wqd,wkd->wqk"}> : () -> ()
    %cst_26 = arith.constant dense<0.000000e+00> : vector<8x16x16xf32>
    %49 = tpu.matmul %46, %47, %cst_26 {dimension_numbers = #tpu.dot_dimension_numbers<[2], [2], [1], [1], [0, 0, 0, 1, 1, 1], [0], [0]>} : vector<8x16x8xf32>, vector<8x16x8xf32>, vector<8x16x16xf32> -> vector<8x16x16xf32>
    "tpu.trace_stop"() : () -> ()
    %c2 = arith.constant 2 : index
    %c0_27 = arith.constant 0 : index
    %c0_28 = arith.constant 0 : index
    %c0_29 = arith.constant 0 : index
    %50 = vector.load %arg6[%c2, %c0_27, %c0_28, %c0_29] : memref<4x8x16x16xf32, #tpu.memory_space<vmem>>, vector<1x8x16x16xf32>
    %51 = vector.shape_cast %50 : vector<1x8x16x16xf32> to vector<8x16x16xf32>
    %52 = arith.addf %49, %51 : vector<8x16x16xf32>
    %cst_30 = arith.constant dense<0xFF800000> : vector<8x16xf32>
    %53 = vector.multi_reduction <maximumf>, %52, %cst_30 [2] : vector<8x16x16xf32> to vector<8x16xf32>
    %54 = vector.shape_cast %53 : vector<8x16xf32> to vector<8x16x1xf32>
    %55 = vector.broadcast %54 : vector<8x16x1xf32> to vector<8x16x16xf32>
    %56 = arith.subf %52, %55 : vector<8x16x16xf32>
    %57 = math.exp %56 : vector<8x16x16xf32>
    %cst_31 = arith.constant dense<0.000000e+00> : vector<8x16xf32>
    %58 = vector.multi_reduction <add>, %57, %cst_31 [2] : vector<8x16x16xf32> to vector<8x16xf32>
    %59 = vector.shape_cast %58 : vector<8x16xf32> to vector<8x16x1xf32>
    %60 = tpu.reciprocal %59 {approx = true} : vector<8x16x1xf32> -> vector<8x16x1xf32>
    %61 = vector.broadcast %60 : vector<8x16x1xf32> to vector<8x16x16xf32>
    %62 = arith.mulf %57, %61 : vector<8x16x16xf32>
    "tpu.trace_start"() <{level = 10 : i32, message = "wqk,wkd->wqd"}> : () -> ()
    %cst_32 = arith.constant dense<0.000000e+00> : vector<8x16x8xf32>
    %63 = tpu.matmul %62, %48, %cst_32 {dimension_numbers = #tpu.dot_dimension_numbers<[2], [1], [1], [2], [0, 0, 0, 1, 1, 2], [0], [0]>} : vector<8x16x16xf32>, vector<8x16x8xf32>, vector<8x16x8xf32> -> vector<8x16x8xf32>
    "tpu.trace_stop"() : () -> ()
    %c0_33 = arith.constant 0 : index
    %c0_34 = arith.constant 0 : index
    %c16 = arith.constant 16 : index
    %64 = vector.load %arg8[%c0_33, %c0_34, %c16] : memref<8x16x32xf32, #tpu.memory_space<vmem>>, vector<8x16x8xf32>
    tpu.vector_store %arg8[%c0_33, %c0_34, %c16], %63 {strides = array<i32>} : memref<8x16x32xf32, #tpu.memory_space<vmem>>, vector<8x16x8xf32>,
    %65 = vector.extract_strided_slice %7 {offsets = [0, 0, 24], sizes = [8, 16, 8], strides = [1, 1, 1]} : vector<8x16x96xf32> to vector<8x16x8xf32>
    %66 = vector.extract_strided_slice %7 {offsets = [0, 0, 56], sizes = [8, 16, 8], strides = [1, 1, 1]} : vector<8x16x96xf32> to vector<8x16x8xf32>
    %67 = vector.extract_strided_slice %7 {offsets = [0, 0, 88], sizes = [8, 16, 8], strides = [1, 1, 1]} : vector<8x16x96xf32> to vector<8x16x8xf32>
    "tpu.trace_start"() <{level = 10 : i32, message = "wqd,wkd->wqk"}> : () -> ()
    %cst_35 = arith.constant dense<0.000000e+00> : vector<8x16x16xf32>
    %68 = tpu.matmul %65, %66, %cst_35 {dimension_numbers = #tpu.dot_dimension_numbers<[2], [2], [1], [1], [0, 0, 0, 1, 1, 1], [0], [0]>} : vector<8x16x8xf32>, vector<8x16x8xf32>, vector<8x16x16xf32> -> vector<8x16x16xf32>
    "tpu.trace_stop"() : () -> ()
    %c3 = arith.constant 3 : index
    %c0_36 = arith.constant 0 : index
    %c0_37 = arith.constant 0 : index
    %c0_38 = arith.constant 0 : index
    %69 = vector.load %arg6[%c3, %c0_36, %c0_37, %c0_38] : memref<4x8x16x16xf32, #tpu.memory_space<vmem>>, vector<1x8x16x16xf32>
    %70 = vector.shape_cast %69 : vector<1x8x16x16xf32> to vector<8x16x16xf32>
    %71 = arith.addf %68, %70 : vector<8x16x16xf32>
    %cst_39 = arith.constant dense<0xFF800000> : vector<8x16xf32>
    %72 = vector.multi_reduction <maximumf>, %71, %cst_39 [2] : vector<8x16x16xf32> to vector<8x16xf32>
    %73 = vector.shape_cast %72 : vector<8x16xf32> to vector<8x16x1xf32>
    %74 = vector.broadcast %73 : vector<8x16x1xf32> to vector<8x16x16xf32>
    %75 = arith.subf %71, %74 : vector<8x16x16xf32>
    %76 = math.exp %75 : vector<8x16x16xf32>
    %cst_40 = arith.constant dense<0.000000e+00> : vector<8x16xf32>
    %77 = vector.multi_reduction <add>, %76, %cst_40 [2] : vector<8x16x16xf32> to vector<8x16xf32>
    %78 = vector.shape_cast %77 : vector<8x16xf32> to vector<8x16x1xf32>
    %79 = tpu.reciprocal %78 {approx = true} : vector<8x16x1xf32> -> vector<8x16x1xf32>
    %80 = vector.broadcast %79 : vector<8x16x1xf32> to vector<8x16x16xf32>
    %81 = arith.mulf %76, %80 : vector<8x16x16xf32>
    "tpu.trace_start"() <{level = 10 : i32, message = "wqk,wkd->wqd"}> : () -> ()
    %cst_41 = arith.constant dense<0.000000e+00> : vector<8x16x8xf32>
    %82 = tpu.matmul %81, %67, %cst_41 {dimension_numbers = #tpu.dot_dimension_numbers<[2], [1], [1], [2], [0, 0, 0, 1, 1, 2], [0], [0]>} : vector<8x16x16xf32>, vector<8x16x8xf32>, vector<8x16x8xf32> -> vector<8x16x8xf32>
    "tpu.trace_stop"() : () -> ()
    %c0_42 = arith.constant 0 : index
    %c0_43 = arith.constant 0 : index
    %c24 = arith.constant 24 : index
    %83 = vector.load %arg8[%c0_42, %c0_43, %c24] : memref<8x16x32xf32, #tpu.memory_space<vmem>>, vector<8x16x8xf32>
    tpu.vector_store %arg8[%c0_42, %c0_43, %c24], %82 {strides = array<i32>} : memref<8x16x32xf32, #tpu.memory_space<vmem>>, vector<8x16x8xf32>,
    %c0_44 = arith.constant 0 : index
    %c0_45 = arith.constant 0 : index
    %c0_46 = arith.constant 0 : index
    %84 = vector.load %arg8[%c0_44, %c0_45, %c0_46] : memref<8x16x32xf32, #tpu.memory_space<vmem>>, vector<8x16x32xf32>
    %85 = vector.shape_cast %84 : vector<8x16x32xf32> to vector<128x32xf32>
    %c0_47 = arith.constant 0 : index
    %c0_48 = arith.constant 0 : index
    %86 = vector.load %arg4[%c0_47, %c0_48] : memref<32x32xf32, #tpu.memory_space<vmem>>, vector<32x32xf32>
    %cst_49 = arith.constant dense<0.000000e+00> : vector<128x32xf32>
    %87 = tpu.matmul %85, %86, %cst_49 {dimension_numbers = #tpu.dot_dimension_numbers<[1], [0], [0], [1], [0, 0, 1, 1], [], []>} : vector<128x32xf32>, vector<32x32xf32>, vector<128x32xf32> -> vector<128x32xf32>
    %c0_50 = arith.constant 0 : index
    %c0_51 = arith.constant 0 : index
    %88 = vector.load %arg5[%c0_50, %c0_51] : memref<1x32xf32, #tpu.memory_space<vmem>>, vector<1x32xf32>
    %89 = vector.broadcast %88 : vector<1x32xf32> to vector<128x32xf32>
    %90 = arith.addf %87, %89 : vector<128x32xf32>
    %91 = vector.shape_cast %90 : vector<128x32xf32> to vector<8x16x32xf32>
    %c0_52 = arith.constant 0 : index
    %c0_53 = arith.constant 0 : index
    %c0_54 = arith.constant 0 : index
    %92 = vector.load %arg7[%c0_52, %c0_53, %c0_54] : memref<8x16x32xf32, #tpu.memory_space<vmem>>, vector<8x16x32xf32>
    tpu.vector_store %arg7[%c0_52, %c0_53, %c0_54], %91 {strides = array<i32>} : memref<8x16x32xf32, #tpu.memory_space<vmem>>, vector<8x16x32xf32>,
    return
  }
  func.func @transform_0(%arg0: i32) -> (i32, i32, i32) {
    %c0_i32 = arith.constant 0 : i32
    %c0_i32_0 = arith.constant 0 : i32
    %c0_i32_1 = arith.constant 0 : i32
    return %arg0, %c0_i32, %c0_i32_0 : i32, i32, i32
  }
  func.func @transform_1(%arg0: i32) -> (i32, i32) {
    %c0_i32 = arith.constant 0 : i32
    %c0_i32_0 = arith.constant 0 : i32
    %c0_i32_1 = arith.constant 0 : i32
    return %c0_i32, %c0_i32_0 : i32, i32
  }
  func.func @transform_2(%arg0: i32) -> (i32, i32) {
    %c0_i32 = arith.constant 0 : i32
    %c0_i32_0 = arith.constant 0 : i32
    %c0_i32_1 = arith.constant 0 : i32
    return %c0_i32, %c0_i32_0 : i32, i32
  }
  func.func @transform_3(%arg0: i32) -> (i32, i32) {
    %c0_i32 = arith.constant 0 : i32
    %c0_i32_0 = arith.constant 0 : i32
    %c0_i32_1 = arith.constant 0 : i32
    return %c0_i32, %c0_i32_0 : i32, i32
  }
  func.func @transform_4(%arg0: i32) -> (i32, i32) {
    %c0_i32 = arith.constant 0 : i32
    %c0_i32_0 = arith.constant 0 : i32
    %c0_i32_1 = arith.constant 0 : i32
    return %c0_i32, %c0_i32_0 : i32, i32
  }
  func.func @transform_5(%arg0: i32) -> (i32, i32, i32, i32) {
    %c0_i32 = arith.constant 0 : i32
    %c0_i32_0 = arith.constant 0 : i32
    %c0_i32_1 = arith.constant 0 : i32
    %c0_i32_2 = arith.constant 0 : i32
    %c0_i32_3 = arith.constant 0 : i32
    return %c0_i32, %c0_i32_0, %c0_i32_1, %c0_i32_2 : i32, i32, i32, i32
  }
  func.func @transform_6(%arg0: i32) -> (i32, i32, i32) {
    %c0_i32 = arith.constant 0 : i32
    %c0_i32_0 = arith.constant 0 : i32
    %c0_i32_1 = arith.constant 0 : i32
    return %arg0, %c0_i32, %c0_i32_0 : i32, i32, i32
  }
}

</mosaic_0001>

<llo_original>
// kernel: tpu_custom_call.1
$region0: #{tpu_custom_call.1}
  #allocation0 [shape = 'u32[]', space=smem, size = 0x4, offset = 0x4, fixed_abs, tag = 'smem constant byte address 0x4 - core index']
  #allocation1 [shape = 'u32[144,128]{1,0:T(1,128)}', space=vmem, size = 0x12000, scoped, tag = 'internal scratch']
  #allocation2 [shape = 'f32[8,16,32]{2,1,0:T(8,128)}', space=vmem, size = 0x10000, scoped, tag = 'scratch operand']
  %s0 = inlined_call_operand.hbm [shape: f32[16,16,32], index: 0, kind: input, shape index: {}]
  %s1 = inlined_call_operand.hbm [shape: f32[32,96], index: 1, kind: input, shape index: {}]
  %s2 = inlined_call_operand.vmem [shape: f32[1,96], index: 2, kind: input, shape index: {}]
  %s3 = inlined_call_operand.hbm [shape: f32[32,32], index: 3, kind: input, shape index: {}]
  %s4 = inlined_call_operand.vmem [shape: f32[1,32], index: 4, kind: input, shape index: {}]
  %s5 = inlined_call_operand.hbm [shape: f32[4,8,16,16], index: 5, kind: input, shape index: {}]
  %s6 = inlined_call_operand.hbm [shape: f32[16,16,32], index: 6, kind: output, shape index: {}]
  %s7 = sld [smem:[#allocation0]]
  $region73: #{tpu_custom_call.1} parent=0
    _
  %s9 = ssub.s32 1, %s7
  %s10 = scalar_select 0, %s9, %s7
  $region1: #{tpu_custom_call.1} parent=0
    #allocation3 [shape = 'u8[131072]{0}', space=vmem, size = 0x20000, scoped, tag = 'input window, operand 0']
    #allocation4 [shape = 's32[2]{0}', space=sflag, size = 0x8, scoped, tag = 'scoped memory for tpu_custom_call.1']
    #allocation5 [shape = 's32[2]{0}', space=sflag, size = 0x8, scoped, tag = 'scoped memory for tpu_custom_call.1']
    #allocation6 [shape = 'u8[16384]{0}', space=vmem, size = 0x4000, scoped, tag = 'input window, operand 1, single buffered']
    #allocation7 [shape = 's32[1]{0}', space=sflag, size = 0x4, scoped, tag = 'scoped memory for tpu_custom_call.1']
    #allocation8 [shape = 'u8[16384]{0}', space=vmem, size = 0x4000, scoped, tag = 'input window, operand 3, single buffered']
    #allocation9 [shape = 'u8[262144]{0}', space=vmem, size = 0x40000, scoped, tag = 'input window, operand 5, single buffered']
    #allocation10 [shape = 's32[1]{0}', space=sflag, size = 0x4, scoped, tag = 'scoped memory for tpu_custom_call.1']
    #allocation11 [shape = 'u8[131072]{0}', space=vmem, size = 0x20000, scoped, tag = 'output window, operand 0']
    %11 = vsyncpa [#allocation4], 0
    %s12 = scalar_lea.sflag [#allocation4], 1
    %13 = vsyncpa %s12, 0
    %14 = vsyncpa [#allocation7], 0
    %15 = vsyncpa [#allocation10], 0
    %16 = vsyncpa [#allocation5], 0
    %s17 = scalar_lea.sflag [#allocation5], 1
    %18 = vsyncpa %s17, 0
    loop: start=0, step=1, limit=4
    $region2: #{tpu_custom_call.1} parent=1 // loop_pre_header
      _
    $region3: #{tpu_custom_call.1} parent=1 // loop_header
      %s20 = sphi 0, %s24
      %p21 = scmp.ge.s32.totalorder %s20, 4
      %s30 = sphi 0, %s32
      %s33 = sphi 0, %s30
      %s34 = sphi 0, %s33
      %s50 = sphi 0, %s34
      %s54 = sphi 0, %s54
      %s56 = sphi 0, %s54
      %s57 = sphi 0, %s56
      %s71 = sphi 0, %s57
      %s75 = sphi 0, %s75
      %s77 = sphi 0, %s75
      %s78 = sphi 0, %s77
      %s92 = sphi 0, %s78
      %s96 = sphi 0, %s96
      %s98 = sphi 0, %s96
      %s99 = sphi 0, %s98
      %s113 = sphi 0, %s99
      %s117 = sphi 0, %s117
      %s119 = sphi 0, %s117
      %s120 = sphi 0, %s119
      %s134 = sphi 0, %s120
      %s138 = sphi 0, %s138
      %s140 = sphi 0, %s138
      %s141 = sphi 0, %s140
      %s155 = sphi 0, %s141
      %s161 = sphi 0, %s163
      %s164 = sphi 0, %s161
      %s165 = sphi 0, %s164
      %s181 = sphi 0, %s165
    $region4: #{tpu_custom_call.1} parent=1 // loop_header_branch
      %23 = sbr.rel (%p21) target = $region8
    $region5: #{tpu_custom_call.1} parent=1 // loop_body
      %s25 = ssub.s32 %s20, 1
      %s26 = ssub.s32 %s20, 2
      %s27 = sadd.s32 %s20, 1
      %s28 = ssub.s32 %s20, %s27
      %p29 = scmp.eq.s32.totalorder %s28, 0
      %s31 = sadd.s32 %s30, 1
      %s32 = scalar_select %p29, %s30, %s31
      %p35 = pneg %p29
      %p36 = scmp.eq.s32.totalorder %s20, 1
      %p37 = por %p35, %p36
      %p38 = scmp.ne.s32.totalorder %s30, %s33
      %p39 = scmp.eq.s32.totalorder %s20, 0
      %p40 = por %p38, %p39
      %p41 = scmp.ne.s32.totalorder %s30, %s33
      %p42 = scmp.eq.s32.totalorder %s25, 1
      %p43 = por %p41, %p42
      %p44 = scmp.ne.s32.totalorder %s33, %s34
      %p45 = scmp.eq.s32.totalorder %s25, 0
      %p46 = por %p44, %p45
      %p47 = scmp.ne.s32.totalorder %s33, %s34
      %p48 = scmp.eq.s32.totalorder %s26, 1
      %p49 = por %p47, %p48
      %p51 = scmp.ne.s32.totalorder %s34, %s50
      %p52 = scmp.eq.s32.totalorder %s26, 0
      %p53 = por %p51, %p52
      %s55 = sadd.s32 %s54, 1
      %p58 = scmp.eq.s32.totalorder %s20, 1
      %p59 = scmp.ne.s32.totalorder %s54, %s56
      %p60 = scmp.eq.s32.totalorder %s20, 0
      %p61 = por %p59, %p60
      %p62 = scmp.ne.s32.totalorder %s54, %s56
      %p63 = scmp.eq.s32.totalorder %s25, 1
      %p64 = por %p62, %p63
      %p65 = scmp.ne.s32.totalorder %s56, %s57
      %p66 = scmp.eq.s32.totalorder %s25, 0
      %p67 = por %p65, %p66
      %p68 = scmp.ne.s32.totalorder %s56, %s57
      %p69 = scmp.eq.s32.totalorder %s26, 1
      %p70 = por %p68, %p69
      %p72 = scmp.ne.s32.totalorder %s57, %s71
      %p73 = scmp.eq.s32.totalorder %s26, 0
      %p74 = por %p72, %p73
      %s76 = sadd.s32 %s75, 1
      %p79 = scmp.eq.s32.totalorder %s20, 1
      %p80 = scmp.ne.s32.totalorder %s75, %s77
      %p81 = scmp.eq.s32.totalorder %s20, 0
      %p82 = por %p80, %p81
      %p83 = scmp.ne.s32.totalorder %s75, %s77
      %p84 = scmp.eq.s32.totalorder %s25, 1
      %p85 = por %p83, %p84
      %p86 = scmp.ne.s32.totalorder %s77, %s78
      %p87 = scmp.eq.s32.totalorder %s25, 0
      %p88 = por %p86, %p87
      %p89 = scmp.ne.s32.totalorder %s77, %s78
      %p90 = scmp.eq.s32.totalorder %s26, 1
      %p91 = por %p89, %p90
      %p93 = scmp.ne.s32.totalorder %s78, %s92
      %p94 = scmp.eq.s32.totalorder %s26, 0
      %p95 = por %p93, %p94
      %s97 = sadd.s32 %s96, 1
      %p100 = scmp.eq.s32.totalorder %s20, 1
      %p101 = scmp.ne.s32.totalorder %s96, %s98
      %p102 = scmp.eq.s32.totalorder %s20, 0
      %p103 = por %p101, %p102
      %p104 = scmp.ne.s32.totalorder %s96, %s98
      %p105 = scmp.eq.s32.totalorder %s25, 1
      %p106 = por %p104, %p105
      %p107 = scmp.ne.s32.totalorder %s98, %s99
      %p108 = scmp.eq.s32.totalorder %s25, 0
      %p109 = por %p107, %p108
      %p110 = scmp.ne.s32.totalorder %s98, %s99
      %p111 = scmp.eq.s32.totalorder %s26, 1
      %p112 = por %p110, %p111
      %p114 = scmp.ne.s32.totalorder %s99, %s113
      %p115 = scmp.eq.s32.totalorder %s26, 0
      %p116 = por %p114, %p115
      %s118 = sadd.s32 %s117, 1
      %p121 = scmp.eq.s32.totalorder %s20, 1
      %p122 = scmp.ne.s32.totalorder %s117, %s119
      %p123 = scmp.eq.s32.totalorder %s20, 0
      %p124 = por %p122, %p123
      %p125 = scmp.ne.s32.totalorder %s117, %s119
      %p126 = scmp.eq.s32.totalorder %s25, 1
      %p127 = por %p125, %p126
      %p128 = scmp.ne.s32.totalorder %s119, %s120
      %p129 = scmp.eq.s32.totalorder %s25, 0
      %p130 = por %p128, %p129
      %p131 = scmp.ne.s32.totalorder %s119, %s120
      %p132 = scmp.eq.s32.totalorder %s26, 1
      %p133 = por %p131, %p132
      %p135 = scmp.ne.s32.totalorder %s120, %s134
      %p136 = scmp.eq.s32.totalorder %s26, 0
      %p137 = por %p135, %p136
      %s139 = sadd.s32 %s138, 1
      %p142 = scmp.eq.s32.totalorder %s20, 1
      %p143 = scmp.ne.s32.totalorder %s138, %s140
      %p144 = scmp.eq.s32.totalorder %s20, 0
      %p145 = por %p143, %p144
      %p146 = scmp.ne.s32.totalorder %s138, %s140
      %p147 = scmp.eq.s32.totalorder %s25, 1
      %p148 = por %p146, %p147
      %p149 = scmp.ne.s32.totalorder %s140, %s141
      %p150 = scmp.eq.s32.totalorder %s25, 0
      %p151 = por %p149, %p150
      %p152 = scmp.ne.s32.totalorder %s140, %s141
      %p153 = scmp.eq.s32.totalorder %s26, 1
      %p154 = por %p152, %p153
      %p156 = scmp.ne.s32.totalorder %s141, %s155
      %p157 = scmp.eq.s32.totalorder %s26, 0
      %p158 = por %p156, %p157
      %s159 = ssub.s32 %s20, %s27
      %p160 = scmp.eq.s32.totalorder %s159, 0
      %s162 = sadd.s32 %s161, 1
      %s163 = scalar_select %p160, %s161, %s162
      %p166 = pneg %p160
      %p167 = scmp.eq.s32.totalorder %s20, 1
      %p168 = por %p166, %p167
      %p169 = scmp.ne.s32.totalorder %s161, %s164
      %p170 = scmp.eq.s32.totalorder %s20, 0
      %p171 = por %p169, %p170
      %p172 = scmp.ne.s32.totalorder %s161, %s164
      %p173 = scmp.eq.s32.totalorder %s25, 1
      %p174 = por %p172, %p173
      %p175 = scmp.ne.s32.totalorder %s164, %s165
      %p176 = scmp.eq.s32.totalorder %s25, 0
      %p177 = por %p175, %p176
      %p178 = scmp.ne.s32.totalorder %s164, %s165
      %p179 = scmp.eq.s32.totalorder %s26, 1
      %p180 = por %p178, %p179
      %p182 = scmp.ne.s32.totalorder %s165, %s181
      %p183 = scmp.eq.s32.totalorder %s26, 0
      %p184 = por %p182, %p183
      %p185 = scmp.le.s32.totalorder 1, %s20
      %p186 = scmp.lt.s32.totalorder %s20, 3
      %p187 = pnand %p185, %p186
      %p188 = pneg %p187
      // Predicated region
      $region9: #{tpu_custom_call.1} parent=5 // pred_check
        _
      $region10: #{tpu_custom_call.1} parent=5 // pred_check_branch
        %190 = sbr.rel (%p187) target = $region12
      $region11: #{tpu_custom_call.1} parent=5 // pred_region
        %s191 = ssub.s32 %s20, 1
        // Predicated region
        $region13: #{tpu_custom_call.1} parent=11 // pred_check
          %p192 = pneg %p67
        $region14: #{tpu_custom_call.1} parent=11 // pred_check_branch
          %194 = sbr.rel (%p192) target = $region16
        $region15: #{tpu_custom_call.1} parent=11 // pred_region
          %s196 = ssub.s32 512, 512
          %197 = vsyncadd [#allocation7], %s196
          %s198 = sshll.u32 [#allocation6], 4
          %s199 = int_to_ptr.vmem [resolvable:$true] %s198
          %204 = dma.hbm_to_vmem [thread:$0]  %s1, 512, %s199, [#allocation7], 128, 128, 8
        $region16: #{tpu_custom_call.1} parent=11 // pred_fallthru
          _
        // Predicated region
        $region17: #{tpu_custom_call.1} parent=11 // pred_check
          %p205 = pneg %p88
        $region18: #{tpu_custom_call.1} parent=11 // pred_check_branch
          %207 = sbr.rel (%p205) target = $region20
        $region19: #{tpu_custom_call.1} parent=11 // pred_region
          _
        $region20: #{tpu_custom_call.1} parent=11 // pred_fallthru
          _
        // Predicated region
        $region21: #{tpu_custom_call.1} parent=11 // pred_check
          %p208 = pneg %p109
        $region22: #{tpu_custom_call.1} parent=11 // pred_check_branch
          %210 = sbr.rel (%p208) target = $region24
        $region23: #{tpu_custom_call.1} parent=11 // pred_region
          %s212 = ssub.s32 512, 512
          %213 = vsyncadd [#allocation7], %s212
          %s214 = sshll.u32 [#allocation8], 4
          %s215 = int_to_ptr.vmem [resolvable:$true] %s214
          %220 = dma.hbm_to_vmem [thread:$0]  %s3, 512, %s215, [#allocation7], 128, 128, 8
        $region24: #{tpu_custom_call.1} parent=11 // pred_fallthru
          _
        // Predicated region
        $region25: #{tpu_custom_call.1} parent=11 // pred_check
          %p221 = pneg %p130
        $region26: #{tpu_custom_call.1} parent=11 // pred_check_branch
          %223 = sbr.rel (%p221) target = $region28
        $region27: #{tpu_custom_call.1} parent=11 // pred_region
          _
        $region28: #{tpu_custom_call.1} parent=11 // pred_fallthru
          _
        // Predicated region
        $region29: #{tpu_custom_call.1} parent=11 // pred_check
          %p224 = pneg %p151
        $region30: #{tpu_custom_call.1} parent=11 // pred_check_branch
          %226 = sbr.rel (%p224) target = $region32
        $region31: #{tpu_custom_call.1} parent=11 // pred_region
          %s228 = ssub.s32 8192, 8192
          %229 = vsyncadd [#allocation10], %s228
          %s230 = sshll.u32 [#allocation9], 4
          %s231 = int_to_ptr.vmem [resolvable:$true] %s230
          %236 = dma.hbm_to_vmem [thread:$0]  %s5, 8192, %s231, [#allocation10], 128, 128, 8
        $region32: #{tpu_custom_call.1} parent=11 // pred_fallthru
          _
      $region12: #{tpu_custom_call.1} parent=5 // pred_fallthru
        _
      %p237 = scmp.lt.s32.totalorder %s20, 2
      // Predicated region
      $region33: #{tpu_custom_call.1} parent=5 // pred_check
        %p238 = pneg %p237
      $region34: #{tpu_custom_call.1} parent=5 // pred_check_branch
        %240 = sbr.rel (%p238) target = $region36
      $region35: #{tpu_custom_call.1} parent=5 // pred_region
        // Predicated region
        $region37: #{tpu_custom_call.1} parent=35 // pred_check
          %p241 = pneg %p40
        $region38: #{tpu_custom_call.1} parent=35 // pred_check_branch
          %243 = sbr.rel (%p241) target = $region40
        $region39: #{tpu_custom_call.1} parent=35 // pred_region
          %s244 = sand.u32 %s30, 1
          %s245 = scalar_lea.sflag [#allocation4], %s244
          %s246 = sand.u32 %s30, 1
          %s247 = smul.addr %s246, 128
          %s248 = scalar_lea.vmem [#allocation3], %s247
          %s249 = smul.u32 8, %s20
          %s251 = ssub.s32 2048, 2048
          %252 = vsyncadd %s245, %s251
          %s253 = smul.addr %s249, 2
          %s254 = smul.addr %s253, 128
          %s255 = scalar_lea.hbm %s0, %s254
          %s256 = sshll.u32 %s248, 4
          %s257 = int_to_ptr.vmem [resolvable:$true] %s256
          %262 = dma.hbm_to_vmem [thread:$0]  %s255, 2048, %s257, %s245, 128, 128, 8
        $region40: #{tpu_custom_call.1} parent=35 // pred_fallthru
          _
      $region36: #{tpu_custom_call.1} parent=5 // pred_fallthru
        _
      %p263 = scmp.le.s32.totalorder 1, %s20
      %p264 = scmp.lt.s32.totalorder %s20, 3
      %p265 = pnand %p263, %p264
      %p266 = pneg %p265
      // Predicated region
      $region41: #{tpu_custom_call.1} parent=5 // pred_check
        _
      $region42: #{tpu_custom_call.1} parent=5 // pred_check_branch
        %268 = sbr.rel (%p265) target = $region44
      $region43: #{tpu_custom_call.1} parent=5 // pred_region
        %s269 = ssub.s32 %s20, 1
        %s270 = sand.u32 %s33, 1
        %s271 = scalar_lea.sflag [#allocation4], %s270
        %s272 = sand.u32 %s33, 1
        %s273 = smul.addr %s272, 128
        %s274 = scalar_lea.vmem [#allocation3], %s273
        // Predicated region
        $region45: #{tpu_custom_call.1} parent=43 // pred_check
          %p275 = pneg %p46
        $region46: #{tpu_custom_call.1} parent=43 // pred_check_branch
          %277 = sbr.rel (%p275) target = $region48
        $region47: #{tpu_custom_call.1} parent=43 // pred_region
          %278 = dma.done %s271, 2048
        $region48: #{tpu_custom_call.1} parent=43 // pred_fallthru
          _
        // Predicated region
        $region49: #{tpu_custom_call.1} parent=43 // pred_check
          %p279 = pneg %p67
        $region50: #{tpu_custom_call.1} parent=43 // pred_check_branch
          %281 = sbr.rel (%p279) target = $region52
        $region51: #{tpu_custom_call.1} parent=43 // pred_region
          %282 = dma.done [#allocation7], 512
        $region52: #{tpu_custom_call.1} parent=43 // pred_fallthru
          _
        // Predicated region
        $region53: #{tpu_custom_call.1} parent=43 // pred_check
          %p283 = pneg %p109
        $region54: #{tpu_custom_call.1} parent=43 // pred_check_branch
          %285 = sbr.rel (%p283) target = $region56
        $region55: #{tpu_custom_call.1} parent=43 // pred_region
          %286 = dma.done [#allocation7], 512
        $region56: #{tpu_custom_call.1} parent=43 // pred_fallthru
          _
        // Predicated region
        $region57: #{tpu_custom_call.1} parent=43 // pred_check
          %p287 = pneg %p151
        $region58: #{tpu_custom_call.1} parent=43 // pred_check_branch
          %289 = sbr.rel (%p287) target = $region60
        $region59: #{tpu_custom_call.1} parent=43 // pred_region
          %290 = dma.done [#allocation10], 8192
        $region60: #{tpu_custom_call.1} parent=43 // pred_fallthru
          _
        %s291 = sand.u32 %s33, 1
        %s292 = scalar_lea.sflag [#allocation4], %s291
        %s293 = sand.u32 %s33, 1
        %s294 = smul.addr %s293, 128
        %s295 = scalar_lea.vmem [#allocation3], %s294
        %p296 = pneg %p46
        %p297 = pneg %p43
        %p298 = pneg %p67
        %p299 = pneg %p64
        %p300 = pneg %p88
        %p301 = pneg %p85
        %p302 = pneg %p109
        %p303 = pneg %p106
        %p304 = pneg %p130
        %p305 = pneg %p127
        %p306 = pneg %p151
        %p307 = pneg %p148
        %p308 = pneg %p177
        %p309 = pneg %p174
        %s310 = sand.u32 %s164, 1
        %s311 = scalar_lea.sflag [#allocation5], %s310
        %s312 = sand.u32 %s164, 1
        %s313 = smul.addr %s312, 128
        %s314 = scalar_lea.vmem [#allocation11], %s313
        %s315 = smul.u32 8, %s25
        %s316 = smul.u32 8, %s25
        %v317 = vld [vmem:[%s274] sm:$0xff]
        %v318 = vld [vmem:[%s274 + $0x8] sm:$0xff]
        %v319 = vld [vmem:[%s274 + $0x10] sm:$0xff]
        %v320 = vld [vmem:[%s274 + $0x18] sm:$0xff]
        %v321 = vld [vmem:[%s274 + $0x20] sm:$0xff]
        %v322 = vld [vmem:[%s274 + $0x28] sm:$0xff]
        %v323 = vld [vmem:[%s274 + $0x30] sm:$0xff]
        %v324 = vld [vmem:[%s274 + $0x38] sm:$0xff]
        %v325 = vld [vmem:[%s274 + $0x40] sm:$0xff]
        %v326 = vld [vmem:[%s274 + $0x48] sm:$0xff]
        %v327 = vld [vmem:[%s274 + $0x50] sm:$0xff]
        %v328 = vld [vmem:[%s274 + $0x58] sm:$0xff]
        %v329 = vld [vmem:[%s274 + $0x60] sm:$0xff]
        %v330 = vld [vmem:[%s274 + $0x68] sm:$0xff]
        %v331 = vld [vmem:[%s274 + $0x70] sm:$0xff]
        %v332 = vld [vmem:[%s274 + $0x78] sm:$0xff]
        %v333 = vld [vmem:[#allocation6] sm:$0xff]
        %v334 = vld [vmem:[#allocation6 + $0x8] sm:$0xff]
        %v335 = vld [vmem:[#allocation6 + $0x10] sm:$0xff]
        %v336 = vld [vmem:[#allocation6 + $0x18] sm:$0xff]
        %v337 = vld [vmem:[%s2] sm:$0x1]
        %v339 = vlaneseq
        %v340 = vshrl.u32 %v339, 7
        %v341 = vsub.s32 0, %v340
        %v342 = vrot.slane %v337, %v341
        %vm344 = vcmask 261120
        %v346 = vsel %vm344, %v317, 0
        %v349 = vsel %vm344, %v318, 0
        %v352 = vsel %vm344, %v319, 0
        %v355 = vsel %vm344, %v320, 0
        %v358 = vsel %vm344, %v321, 0
        %v361 = vsel %vm344, %v322, 0
        %v364 = vsel %vm344, %v323, 0
        %v367 = vsel %vm344, %v324, 0
        %v370 = vsel %vm344, %v325, 0
        %v373 = vsel %vm344, %v326, 0
        %v376 = vsel %vm344, %v327, 0
        %v379 = vsel %vm344, %v328, 0
        %v382 = vsel %vm344, %v329, 0
        %v385 = vsel %vm344, %v330, 0
        %v388 = vsel %vm344, %v331, 0
        %v391 = vsel %vm344, %v332, 0
        %393 = vmatprep.subr.mxu0 0.0
        %394 = vmatpush1.msra.mxu0 0.0
        %395 = vmatprep.subr.mxu0 0.0
        %396 = vmatpush1.msra.mxu0 0.0
        %397 = vmatprep.subr.mxu0 0.0
        %398 = vmatpush1.msra.mxu0 0.0
        %399 = vmatprep.subr.mxu0 0.0
        %400 = vmatpush1.msra.mxu0 0.0
        %401 = vmatprep.subr.mxu0 0.0
        %402 = vmatpush1.msra.mxu0 0.0
        %403 = vmatprep.subr.mxu0 0.0
        %404 = vmatpush1.msra.mxu0 0.0
        %405 = vmatprep.subr.mxu0 0.0
        %406 = vmatpush1.msra.mxu0 0.0
        %407 = vmatprep.subr.mxu0 0.0
        %408 = vmatpush1.msra.mxu0 0.0
        %409 = vmatprep.subr.mxu0 0.0
        %410 = vmatpush1.msra.mxu0 0.0
        %411 = vmatprep.subr.mxu0 0.0
        %412 = vmatpush1.msra.mxu0 0.0
        %413 = vmatprep.subr.mxu0 0.0
        %414 = vmatpush1.msra.mxu0 0.0
        %415 = vmatprep.subr.mxu0 0.0
        %416 = vmatpush1.msra.mxu0 0.0
        %417 = vmatprep.subr.mxu0 0.0
        %418 = vmatpush1.msra.mxu0 %v336
        %419 = vmatprep.subr.mxu0 0.0
        %420 = vmatpush1.msra.mxu0 %v335
        %421 = vmatprep.subr.mxu0 0.0
        %422 = vmatpush1.msra.mxu0 %v334
        %423 = vmatprep.subr.mxu0 0.0
        %424 = vmatpush1.msra.mxu0 %v333
        %425 = vmatprep.subr.mxu0 0.0
        %426 = vmatpush2.msra.mxu0 0.0
        %427 = vmatprep.subr.mxu0 0.0
        %428 = vmatpush2.msra.mxu0 0.0
        %429 = vmatprep.subr.mxu0 0.0
        %430 = vmatpush2.msra.mxu0 0.0
        %431 = vmatprep.subr.mxu0 0.0
        %432 = vmatpush2.msra.mxu0 0.0
        %433 = vmatprep.subr.mxu0 0.0
        %434 = vmatpush2.msra.mxu0 0.0
        %435 = vmatprep.subr.mxu0 0.0
        %436 = vmatpush2.msra.mxu0 0.0
        %437 = vmatprep.subr.mxu0 0.0
        %438 = vmatpush2.msra.mxu0 0.0
        %439 = vmatprep.subr.mxu0 0.0
        %440 = vmatpush2.msra.mxu0 0.0
        %441 = vmatprep.subr.mxu0 0.0
        %442 = vmatpush2.msra.mxu0 0.0
        %443 = vmatprep.subr.mxu0 0.0
        %444 = vmatpush2.msra.mxu0 0.0
        %445 = vmatprep.subr.mxu0 0.0
        %446 = vmatpush2.msra.mxu0 0.0
        %447 = vmatprep.subr.mxu0 0.0
        %448 = vmatpush2.msra.mxu0 0.0
        %449 = vmatprep.subr.mxu0 0.0
        %450 = vmatpush2.msra.mxu0 0.0
        %451 = vmatprep.subr.mxu0 0.0
        %452 = vmatpush2.msra.mxu0 0.0
        %453 = vmatprep.subr.mxu0 0.0
        %454 = vmatpush2.msra.mxu0 0.0
        %455 = vmatprep.subr.mxu0 0.0
        %456 = vmatpush2.msra.mxu0 0.0
        %457 = vmatprep.mubr.f32.mxu0 0.0
        %458 = vmatmul.mubr.f32.gmra.mxu0 %v346
        %v459 = vpop.f32.mrf.mxu0
        %v460 = vadd.f32 %v342, %v459
        %v461 = vpop.f32.mrf.mxu0
        %462 = vmatprep.mubr.f32.mxu0 0.0
        %463 = vmatmul.mubr.f32.gmra.mxu0 %v349
        %v464 = vpop.f32.mrf.mxu0
        %v465 = vadd.f32 %v342, %v464
        %v466 = vpop.f32.mrf.mxu0
        %467 = vmatprep.mubr.f32.mxu0 0.0
        %468 = vmatmul.mubr.f32.gmra.mxu0 %v352
        %v469 = vpop.f32.mrf.mxu0
        %v470 = vadd.f32 %v342, %v469
        %v471 = vpop.f32.mrf.mxu0
        %472 = vmatprep.mubr.f32.mxu0 0.0
        %473 = vmatmul.mubr.f32.gmra.mxu0 %v355
        %v474 = vpop.f32.mrf.mxu0
        %v475 = vadd.f32 %v342, %v474
        %v476 = vpop.f32.mrf.mxu0
        %477 = vmatprep.mubr.f32.mxu0 0.0
        %478 = vmatmul.mubr.f32.gmra.mxu0 %v358
        %v479 = vpop.f32.mrf.mxu0
        %v480 = vadd.f32 %v342, %v479
        %v481 = vpop.f32.mrf.mxu0
        %482 = vmatprep.mubr.f32.mxu0 0.0
        %483 = vmatmul.mubr.f32.gmra.mxu0 %v361
        %v484 = vpop.f32.mrf.mxu0
        %v485 = vadd.f32 %v342, %v484
        %v486 = vpop.f32.mrf.mxu0
        %487 = vmatprep.mubr.f32.mxu0 0.0
        %488 = vmatmul.mubr.f32.gmra.mxu0 %v364
        %v489 = vpop.f32.mrf.mxu0
        %v490 = vadd.f32 %v342, %v489
        %v491 = vpop.f32.mrf.mxu0
        %492 = vmatprep.mubr.f32.mxu0 0.0
        %493 = vmatmul.mubr.f32.gmra.mxu0 %v367
        %v494 = vpop.f32.mrf.mxu0
        %v495 = vadd.f32 %v342, %v494
        %v496 = vpop.f32.mrf.mxu0
        %497 = vmatprep.mubr.f32.mxu0 0.0
        %498 = vmatmul.mubr.f32.gmra.mxu0 %v370
        %v499 = vpop.f32.mrf.mxu0
        %v500 = vadd.f32 %v342, %v499
        %v501 = vpop.f32.mrf.mxu0
        %502 = vmatprep.mubr.f32.mxu0 0.0
        %503 = vmatmul.mubr.f32.gmra.mxu0 %v373
        %v504 = vpop.f32.mrf.mxu0
        %v505 = vadd.f32 %v342, %v504
        %v506 = vpop.f32.mrf.mxu0
        %507 = vmatprep.mubr.f32.mxu0 0.0
        %508 = vmatmul.mubr.f32.gmra.mxu0 %v376
        %v509 = vpop.f32.mrf.mxu0
        %v510 = vadd.f32 %v342, %v509
        %v511 = vpop.f32.mrf.mxu0
        %512 = vmatprep.mubr.f32.mxu0 0.0
        %513 = vmatmul.mubr.f32.gmra.mxu0 %v379
        %v514 = vpop.f32.mrf.mxu0
        %v515 = vadd.f32 %v342, %v514
        %v516 = vpop.f32.mrf.mxu0
        %517 = vmatprep.mubr.f32.mxu0 0.0
        %518 = vmatmul.mubr.f32.gmra.mxu0 %v382
        %v519 = vpop.f32.mrf.mxu0
        %v520 = vadd.f32 %v342, %v519
        %v521 = vpop.f32.mrf.mxu0
        %522 = vmatprep.mubr.f32.mxu0 0.0
        %523 = vmatmul.mubr.f32.gmra.mxu0 %v385
        %v524 = vpop.f32.mrf.mxu0
        %v525 = vadd.f32 %v342, %v524
        %v526 = vpop.f32.mrf.mxu0
        %527 = vmatprep.mubr.f32.mxu0 0.0
        %528 = vmatmul.mubr.f32.gmra.mxu0 %v388
        %v529 = vpop.f32.mrf.mxu0
        %v530 = vadd.f32 %v342, %v529
        %v531 = vpop.f32.mrf.mxu0
        %532 = vmatprep.mubr.f32.mxu0 0.0
        %533 = vmatmul.mubr.f32.gmra.mxu0 %v391
        %v534 = vpop.f32.mrf.mxu0
        %v535 = vadd.f32 %v342, %v534
        %v536 = vpop.f32.mrf.mxu0
        %537 = vdwg.mxu0
        %v538 = vld [vmem:[#allocation9] sm:$0xff]
        %v539 = vld [vmem:[#allocation9 + $0x8] sm:$0xff]
        %v540 = vld [vmem:[#allocation9 + $0x10] sm:$0xff]
        %v541 = vld [vmem:[#allocation9 + $0x18] sm:$0xff]
        %v542 = vld [vmem:[#allocation9 + $0x20] sm:$0xff]
        %v543 = vld [vmem:[#allocation9 + $0x28] sm:$0xff]
        %v544 = vld [vmem:[#allocation9 + $0x30] sm:$0xff]
        %v545 = vld [vmem:[#allocation9 + $0x38] sm:$0xff]
        %v546 = vld [vmem:[#allocation9 + $0x40] sm:$0xff]
        %v547 = vld [vmem:[#allocation9 + $0x48] sm:$0xff]
        %v548 = vld [vmem:[#allocation9 + $0x50] sm:$0xff]
        %v549 = vld [vmem:[#allocation9 + $0x58] sm:$0xff]
        %v550 = vld [vmem:[#allocation9 + $0x60] sm:$0xff]
        %v551 = vld [vmem:[#allocation9 + $0x68] sm:$0xff]
        %v552 = vld [vmem:[#allocation9 + $0x70] sm:$0xff]
        %v553 = vld [vmem:[#allocation9 + $0x78] sm:$0xff]
        %556 = vrot.lane.b32.xlu0 %v460, 96
        %v557 = vpop.permute.xlu0 %556
        %558 = vrot.lane.b32.xlu0 %v465, 96
        %v559 = vpop.permute.xlu0 %558
        %vm560 = vcmask 64512
        %v561 = vsel %vm560, %v460, 0
        %v563 = vsel %vm560, %v465, 0
        %v565 = vsel %vm560, %v557, 0
        %v567 = vsel %vm560, %v559, 0
        %569 = vmatprep.subr.mxu0 0.0
        %570 = vmatpush1.xpose.msra.mxu0 0.0
        %571 = vmatprep.subr.mxu0 0.0
        %572 = vmatpush1.xpose.msra.mxu0 0.0
        %573 = vmatprep.subr.mxu0 0.0
        %574 = vmatpush1.xpose.msra.mxu0 0.0
        %575 = vmatprep.subr.mxu0 0.0
        %576 = vmatpush1.xpose.msra.mxu0 0.0
        %577 = vmatprep.subr.mxu0 0.0
        %578 = vmatpush1.xpose.msra.mxu0 0.0
        %579 = vmatprep.subr.mxu0 0.0
        %580 = vmatpush1.xpose.msra.mxu0 0.0
        %581 = vmatprep.subr.mxu0 0.0
        %582 = vmatpush1.xpose.msra.mxu0 0.0
        %583 = vmatprep.subr.mxu0 0.0
        %584 = vmatpush1.xpose.msra.mxu0 0.0
        %585 = vmatprep.subr.mxu0 0.0
        %586 = vmatpush1.xpose.msra.mxu0 0.0
        %587 = vmatprep.subr.mxu0 0.0
        %588 = vmatpush1.xpose.msra.mxu0 0.0
        %589 = vmatprep.subr.mxu0 0.0
        %590 = vmatpush1.xpose.msra.mxu0 0.0
        %591 = vmatprep.subr.mxu0 0.0
        %592 = vmatpush1.xpose.msra.mxu0 0.0
        %593 = vmatprep.subr.mxu0 0.0
        %594 = vmatpush1.xpose.msra.mxu0 0.0
        %595 = vmatprep.subr.mxu0 0.0
        %596 = vmatpush1.xpose.msra.mxu0 0.0
        %597 = vmatprep.subr.mxu0 0.0
        %598 = vmatpush1.xpose.msra.mxu0 %v567
        %599 = vmatprep.subr.mxu0 0.0
        %600 = vmatpush1.xpose.msra.mxu0 %v565
        %601 = vmatprep.subr.mxu0 0.0
        %602 = vmatpush2.xpose.msra.mxu0 0.0
        %603 = vmatprep.subr.mxu0 0.0
        %604 = vmatpush2.xpose.msra.mxu0 0.0
        %605 = vmatprep.subr.mxu0 0.0
        %606 = vmatpush2.xpose.msra.mxu0 0.0
        %607 = vmatprep.subr.mxu0 0.0
        %608 = vmatpush2.xpose.msra.mxu0 0.0
        %609 = vmatprep.subr.mxu0 0.0
        %610 = vmatpush2.xpose.msra.mxu0 0.0
        %611 = vmatprep.subr.mxu0 0.0
        %612 = vmatpush2.xpose.msra.mxu0 0.0
        %613 = vmatprep.subr.mxu0 0.0
        %614 = vmatpush2.xpose.msra.mxu0 0.0
        %615 = vmatprep.subr.mxu0 0.0
        %616 = vmatpush2.xpose.msra.mxu0 0.0
        %617 = vmatprep.subr.mxu0 0.0
        %618 = vmatpush2.xpose.msra.mxu0 0.0
        %619 = vmatprep.subr.mxu0 0.0
        %620 = vmatpush2.xpose.msra.mxu0 0.0
        %621 = vmatprep.subr.mxu0 0.0
        %622 = vmatpush2.xpose.msra.mxu0 0.0
        %623 = vmatprep.subr.mxu0 0.0
        %624 = vmatpush2.xpose.msra.mxu0 0.0
        %625 = vmatprep.subr.mxu0 0.0
        %626 = vmatpush2.xpose.msra.mxu0 0.0
        %627 = vmatprep.subr.mxu0 0.0
        %628 = vmatpush2.xpose.msra.mxu0 0.0
        %629 = vmatprep.subr.mxu0 0.0
        %630 = vmatpush2.xpose.msra.mxu0 0.0
        %631 = vmatprep.subr.mxu0 0.0
        %632 = vmatpush2.xpose.msra.mxu0 0.0
        %633 = vmatprep.mubr.f32.mxu0 0.0
        %634 = vmatmul.mubr.f32.gmra.mxu0 %v561
        %v635 = vpop.f32.mrf.mxu0
        %v636 = vadd.f32 %v538, %v635
        %v637 = vpop.f32.mrf.mxu0
        %638 = vmatprep.mubr.f32.mxu0 0.0
        %639 = vmatmul.mubr.f32.gmra.mxu0 %v563
        %v640 = vpop.f32.mrf.mxu0
        %v641 = vadd.f32 %v539, %v640
        %v642 = vpop.f32.mrf.mxu0
        %643 = vdwg.mxu0
        %646 = vrot.lane.b32.xlu0 %v470, 96
        %v647 = vpop.permute.xlu0 %646
        %648 = vrot.lane.b32.xlu0 %v475, 96
        %v649 = vpop.permute.xlu0 %648
        %v650 = vsel %vm560, %v470, 0
        %v652 = vsel %vm560, %v475, 0
        %v654 = vsel %vm560, %v647, 0
        %v656 = vsel %vm560, %v649, 0
        %658 = vmatprep.subr.mxu0 0.0
        %659 = vmatpush1.xpose.msra.mxu0 0.0
        %660 = vmatprep.subr.mxu0 0.0
        %661 = vmatpush1.xpose.msra.mxu0 0.0
        %662 = vmatprep.subr.mxu0 0.0
        %663 = vmatpush1.xpose.msra.mxu0 0.0
        %664 = vmatprep.subr.mxu0 0.0
        %665 = vmatpush1.xpose.msra.mxu0 0.0
        %666 = vmatprep.subr.mxu0 0.0
        %667 = vmatpush1.xpose.msra.mxu0 0.0
        %668 = vmatprep.subr.mxu0 0.0
        %669 = vmatpush1.xpose.msra.mxu0 0.0
        %670 = vmatprep.subr.mxu0 0.0
        %671 = vmatpush1.xpose.msra.mxu0 0.0
        %672 = vmatprep.subr.mxu0 0.0
        %673 = vmatpush1.xpose.msra.mxu0 0.0
        %674 = vmatprep.subr.mxu0 0.0
        %675 = vmatpush1.xpose.msra.mxu0 0.0
        %676 = vmatprep.subr.mxu0 0.0
        %677 = vmatpush1.xpose.msra.mxu0 0.0
        %678 = vmatprep.subr.mxu0 0.0
        %679 = vmatpush1.xpose.msra.mxu0 0.0
        %680 = vmatprep.subr.mxu0 0.0
        %681 = vmatpush1.xpose.msra.mxu0 0.0
        %682 = vmatprep.subr.mxu0 0.0
        %683 = vmatpush1.xpose.msra.mxu0 0.0
        %684 = vmatprep.subr.mxu0 0.0
        %685 = vmatpush1.xpose.msra.mxu0 0.0
        %686 = vmatprep.subr.mxu0 0.0
        %687 = vmatpush1.xpose.msra.mxu0 %v656
        %688 = vmatprep.subr.mxu0 0.0
        %689 = vmatpush1.xpose.msra.mxu0 %v654
        %690 = vmatprep.subr.mxu0 0.0
        %691 = vmatpush2.xpose.msra.mxu0 0.0
        %692 = vmatprep.subr.mxu0 0.0
        %693 = vmatpush2.xpose.msra.mxu0 0.0
        %694 = vmatprep.subr.mxu0 0.0
        %695 = vmatpush2.xpose.msra.mxu0 0.0
        %696 = vmatprep.subr.mxu0 0.0
        %697 = vmatpush2.xpose.msra.mxu0 0.0
        %698 = vmatprep.subr.mxu0 0.0
        %699 = vmatpush2.xpose.msra.mxu0 0.0
        %700 = vmatprep.subr.mxu0 0.0
        %701 = vmatpush2.xpose.msra.mxu0 0.0
        %702 = vmatprep.subr.mxu0 0.0
        %703 = vmatpush2.xpose.msra.mxu0 0.0
        %704 = vmatprep.subr.mxu0 0.0
        %705 = vmatpush2.xpose.msra.mxu0 0.0
        %706 = vmatprep.subr.mxu0 0.0
        %707 = vmatpush2.xpose.msra.mxu0 0.0
        %708 = vmatprep.subr.mxu0 0.0
        %709 = vmatpush2.xpose.msra.mxu0 0.0
        %710 = vmatprep.subr.mxu0 0.0
        %711 = vmatpush2.xpose.msra.mxu0 0.0
        %712 = vmatprep.subr.mxu0 0.0
        %713 = vmatpush2.xpose.msra.mxu0 0.0
        %714 = vmatprep.subr.mxu0 0.0
        %715 = vmatpush2.xpose.msra.mxu0 0.0
        %716 = vmatprep.subr.mxu0 0.0
        %717 = vmatpush2.xpose.msra.mxu0 0.0
        %718 = vmatprep.subr.mxu0 0.0
        %719 = vmatpush2.xpose.msra.mxu0 0.0
        %720 = vmatprep.subr.mxu0 0.0
        %721 = vmatpush2.xpose.msra.mxu0 0.0
        %722 = vmatprep.mubr.f32.mxu0 0.0
        %723 = vmatmul.mubr.f32.gmra.mxu0 %v650
        %v724 = vpop.f32.mrf.mxu0
        %v725 = vadd.f32 %v540, %v724
        %v726 = vpop.f32.mrf.mxu0
        %727 = vmatprep.mubr.f32.mxu0 0.0
        %728 = vmatmul.mubr.f32.gmra.mxu0 %v652
        %v729 = vpop.f32.mrf.mxu0
        %v730 = vadd.f32 %v541, %v729
        %v731 = vpop.f32.mrf.mxu0
        %732 = vdwg.mxu0
        %735 = vrot.lane.b32.xlu0 %v480, 96
        %v736 = vpop.permute.xlu0 %735
        %737 = vrot.lane.b32.xlu0 %v485, 96
        %v738 = vpop.permute.xlu0 %737
        %v739 = vsel %vm560, %v480, 0
        %v741 = vsel %vm560, %v485, 0
        %v743 = vsel %vm560, %v736, 0
        %v745 = vsel %vm560, %v738, 0
        %747 = vmatprep.subr.mxu0 0.0
        %748 = vmatpush1.xpose.msra.mxu0 0.0
        %749 = vmatprep.subr.mxu0 0.0
        %750 = vmatpush1.xpose.msra.mxu0 0.0
        %751 = vmatprep.subr.mxu0 0.0
        %752 = vmatpush1.xpose.msra.mxu0 0.0
        %753 = vmatprep.subr.mxu0 0.0
        %754 = vmatpush1.xpose.msra.mxu0 0.0
        %755 = vmatprep.subr.mxu0 0.0
        %756 = vmatpush1.xpose.msra.mxu0 0.0
        %757 = vmatprep.subr.mxu0 0.0
        %758 = vmatpush1.xpose.msra.mxu0 0.0
        %759 = vmatprep.subr.mxu0 0.0
        %760 = vmatpush1.xpose.msra.mxu0 0.0
        %761 = vmatprep.subr.mxu0 0.0
        %762 = vmatpush1.xpose.msra.mxu0 0.0
        %763 = vmatprep.subr.mxu0 0.0
        %764 = vmatpush1.xpose.msra.mxu0 0.0
        %765 = vmatprep.subr.mxu0 0.0
        %766 = vmatpush1.xpose.msra.mxu0 0.0
        %767 = vmatprep.subr.mxu0 0.0
        %768 = vmatpush1.xpose.msra.mxu0 0.0
        %769 = vmatprep.subr.mxu0 0.0
        %770 = vmatpush1.xpose.msra.mxu0 0.0
        %771 = vmatprep.subr.mxu0 0.0
        %772 = vmatpush1.xpose.msra.mxu0 0.0
        %773 = vmatprep.subr.mxu0 0.0
        %774 = vmatpush1.xpose.msra.mxu0 0.0
        %775 = vmatprep.subr.mxu0 0.0
        %776 = vmatpush1.xpose.msra.mxu0 %v745
        %777 = vmatprep.subr.mxu0 0.0
        %778 = vmatpush1.xpose.msra.mxu0 %v743
        %779 = vmatprep.subr.mxu0 0.0
        %780 = vmatpush2.xpose.msra.mxu0 0.0
        %781 = vmatprep.subr.mxu0 0.0
        %782 = vmatpush2.xpose.msra.mxu0 0.0
        %783 = vmatprep.subr.mxu0 0.0
        %784 = vmatpush2.xpose.msra.mxu0 0.0
        %785 = vmatprep.subr.mxu0 0.0
        %786 = vmatpush2.xpose.msra.mxu0 0.0
        %787 = vmatprep.subr.mxu0 0.0
        %788 = vmatpush2.xpose.msra.mxu0 0.0
        %789 = vmatprep.subr.mxu0 0.0
        %790 = vmatpush2.xpose.msra.mxu0 0.0
        %791 = vmatprep.subr.mxu0 0.0
        %792 = vmatpush2.xpose.msra.mxu0 0.0
        %793 = vmatprep.subr.mxu0 0.0
        %794 = vmatpush2.xpose.msra.mxu0 0.0
        %795 = vmatprep.subr.mxu0 0.0
        %796 = vmatpush2.xpose.msra.mxu0 0.0
        %797 = vmatprep.subr.mxu0 0.0
        %798 = vmatpush2.xpose.msra.mxu0 0.0
        %799 = vmatprep.subr.mxu0 0.0
        %800 = vmatpush2.xpose.msra.mxu0 0.0
        %801 = vmatprep.subr.mxu0 0.0
        %802 = vmatpush2.xpose.msra.mxu0 0.0
        %803 = vmatprep.subr.mxu0 0.0
        %804 = vmatpush2.xpose.msra.mxu0 0.0
        %805 = vmatprep.subr.mxu0 0.0
        %806 = vmatpush2.xpose.msra.mxu0 0.0
        %807 = vmatprep.subr.mxu0 0.0
        %808 = vmatpush2.xpose.msra.mxu0 0.0
        %809 = vmatprep.subr.mxu0 0.0
        %810 = vmatpush2.xpose.msra.mxu0 0.0
        %811 = vmatprep.mubr.f32.mxu0 0.0
        %812 = vmatmul.mubr.f32.gmra.mxu0 %v739
        %v813 = vpop.f32.mrf.mxu0
        %v814 = vadd.f32 %v542, %v813
        %v815 = vpop.f32.mrf.mxu0
        %816 = vmatprep.mubr.f32.mxu0 0.0
        %817 = vmatmul.mubr.f32.gmra.mxu0 %v741
        %v818 = vpop.f32.mrf.mxu0
        %v819 = vadd.f32 %v543, %v818
        %v820 = vpop.f32.mrf.mxu0
        %821 = vdwg.mxu0
        %824 = vrot.lane.b32.xlu0 %v490, 96
        %v825 = vpop.permute.xlu0 %824
        %826 = vrot.lane.b32.xlu0 %v495, 96
        %v827 = vpop.permute.xlu0 %826
        %v828 = vsel %vm560, %v490, 0
        %v830 = vsel %vm560, %v495, 0
        %v832 = vsel %vm560, %v825, 0
        %v834 = vsel %vm560, %v827, 0
        %836 = vmatprep.subr.mxu0 0.0
        %837 = vmatpush1.xpose.msra.mxu0 0.0
        %838 = vmatprep.subr.mxu0 0.0
        %839 = vmatpush1.xpose.msra.mxu0 0.0
        %840 = vmatprep.subr.mxu0 0.0
        %841 = vmatpush1.xpose.msra.mxu0 0.0
        %842 = vmatprep.subr.mxu0 0.0
        %843 = vmatpush1.xpose.msra.mxu0 0.0
        %844 = vmatprep.subr.mxu0 0.0
        %845 = vmatpush1.xpose.msra.mxu0 0.0
        %846 = vmatprep.subr.mxu0 0.0
        %847 = vmatpush1.xpose.msra.mxu0 0.0
        %848 = vmatprep.subr.mxu0 0.0
        %849 = vmatpush1.xpose.msra.mxu0 0.0
        %850 = vmatprep.subr.mxu0 0.0
        %851 = vmatpush1.xpose.msra.mxu0 0.0
        %852 = vmatprep.subr.mxu0 0.0
        %853 = vmatpush1.xpose.msra.mxu0 0.0
        %854 = vmatprep.subr.mxu0 0.0
        %855 = vmatpush1.xpose.msra.mxu0 0.0
        %856 = vmatprep.subr.mxu0 0.0
        %857 = vmatpush1.xpose.msra.mxu0 0.0
        %858 = vmatprep.subr.mxu0 0.0
        %859 = vmatpush1.xpose.msra.mxu0 0.0
        %860 = vmatprep.subr.mxu0 0.0
        %861 = vmatpush1.xpose.msra.mxu0 0.0
        %862 = vmatprep.subr.mxu0 0.0
        %863 = vmatpush1.xpose.msra.mxu0 0.0
        %864 = vmatprep.subr.mxu0 0.0
        %865 = vmatpush1.xpose.msra.mxu0 %v834
        %866 = vmatprep.subr.mxu0 0.0
        %867 = vmatpush1.xpose.msra.mxu0 %v832
        %868 = vmatprep.subr.mxu0 0.0
        %869 = vmatpush2.xpose.msra.mxu0 0.0
        %870 = vmatprep.subr.mxu0 0.0
        %871 = vmatpush2.xpose.msra.mxu0 0.0
        %872 = vmatprep.subr.mxu0 0.0
        %873 = vmatpush2.xpose.msra.mxu0 0.0
        %874 = vmatprep.subr.mxu0 0.0
        %875 = vmatpush2.xpose.msra.mxu0 0.0
        %876 = vmatprep.subr.mxu0 0.0
        %877 = vmatpush2.xpose.msra.mxu0 0.0
        %878 = vmatprep.subr.mxu0 0.0
        %879 = vmatpush2.xpose.msra.mxu0 0.0
        %880 = vmatprep.subr.mxu0 0.0
        %881 = vmatpush2.xpose.msra.mxu0 0.0
        %882 = vmatprep.subr.mxu0 0.0
        %883 = vmatpush2.xpose.msra.mxu0 0.0
        %884 = vmatprep.subr.mxu0 0.0
        %885 = vmatpush2.xpose.msra.mxu0 0.0
        %886 = vmatprep.subr.mxu0 0.0
        %887 = vmatpush2.xpose.msra.mxu0 0.0
        %888 = vmatprep.subr.mxu0 0.0
        %889 = vmatpush2.xpose.msra.mxu0 0.0
        %890 = vmatprep.subr.mxu0 0.0
        %891 = vmatpush2.xpose.msra.mxu0 0.0
        %892 = vmatprep.subr.mxu0 0.0
        %893 = vmatpush2.xpose.msra.mxu0 0.0
        %894 = vmatprep.subr.mxu0 0.0
        %895 = vmatpush2.xpose.msra.mxu0 0.0
        %896 = vmatprep.subr.mxu0 0.0
        %897 = vmatpush2.xpose.msra.mxu0 0.0
        %898 = vmatprep.subr.mxu0 0.0
        %899 = vmatpush2.xpose.msra.mxu0 0.0
        %900 = vmatprep.mubr.f32.mxu0 0.0
        %901 = vmatmul.mubr.f32.gmra.mxu0 %v828
        %v902 = vpop.f32.mrf.mxu0
        %v903 = vadd.f32 %v544, %v902
        %v904 = vpop.f32.mrf.mxu0
        %905 = vmatprep.mubr.f32.mxu0 0.0
        %906 = vmatmul.mubr.f32.gmra.mxu0 %v830
        %v907 = vpop.f32.mrf.mxu0
        %v908 = vadd.f32 %v545, %v907
        %v909 = vpop.f32.mrf.mxu0
        %910 = vdwg.mxu0
        %913 = vrot.lane.b32.xlu0 %v500, 96
        %v914 = vpop.permute.xlu0 %913
        %915 = vrot.lane.b32.xlu0 %v505, 96
        %v916 = vpop.permute.xlu0 %915
        %v917 = vsel %vm560, %v500, 0
        %v919 = vsel %vm560, %v505, 0
        %v921 = vsel %vm560, %v914, 0
        %v923 = vsel %vm560, %v916, 0
        %925 = vmatprep.subr.mxu0 0.0
        %926 = vmatpush1.xpose.msra.mxu0 0.0
        %927 = vmatprep.subr.mxu0 0.0
        %928 = vmatpush1.xpose.msra.mxu0 0.0
        %929 = vmatprep.subr.mxu0 0.0
        %930 = vmatpush1.xpose.msra.mxu0 0.0
        %931 = vmatprep.subr.mxu0 0.0
        %932 = vmatpush1.xpose.msra.mxu0 0.0
        %933 = vmatprep.subr.mxu0 0.0
        %934 = vmatpush1.xpose.msra.mxu0 0.0
        %935 = vmatprep.subr.mxu0 0.0
        %936 = vmatpush1.xpose.msra.mxu0 0.0
        %937 = vmatprep.subr.mxu0 0.0
        %938 = vmatpush1.xpose.msra.mxu0 0.0
        %939 = vmatprep.subr.mxu0 0.0
        %940 = vmatpush1.xpose.msra.mxu0 0.0
        %941 = vmatprep.subr.mxu0 0.0
        %942 = vmatpush1.xpose.msra.mxu0 0.0
        %943 = vmatprep.subr.mxu0 0.0
        %944 = vmatpush1.xpose.msra.mxu0 0.0
        %945 = vmatprep.subr.mxu0 0.0
        %946 = vmatpush1.xpose.msra.mxu0 0.0
        %947 = vmatprep.subr.mxu0 0.0
        %948 = vmatpush1.xpose.msra.mxu0 0.0
        %949 = vmatprep.subr.mxu0 0.0
        %950 = vmatpush1.xpose.msra.mxu0 0.0
        %951 = vmatprep.subr.mxu0 0.0
        %952 = vmatpush1.xpose.msra.mxu0 0.0
        %953 = vmatprep.subr.mxu0 0.0
        %954 = vmatpush1.xpose.msra.mxu0 %v923
        %955 = vmatprep.subr.mxu0 0.0
        %956 = vmatpush1.xpose.msra.mxu0 %v921
        %957 = vmatprep.subr.mxu0 0.0
        %958 = vmatpush2.xpose.msra.mxu0 0.0
        %959 = vmatprep.subr.mxu0 0.0
        %960 = vmatpush2.xpose.msra.mxu0 0.0
        %961 = vmatprep.subr.mxu0 0.0
        %962 = vmatpush2.xpose.msra.mxu0 0.0
        %963 = vmatprep.subr.mxu0 0.0
        %964 = vmatpush2.xpose.msra.mxu0 0.0
        %965 = vmatprep.subr.mxu0 0.0
        %966 = vmatpush2.xpose.msra.mxu0 0.0
        %967 = vmatprep.subr.mxu0 0.0
        %968 = vmatpush2.xpose.msra.mxu0 0.0
        %969 = vmatprep.subr.mxu0 0.0
        %970 = vmatpush2.xpose.msra.mxu0 0.0
        %971 = vmatprep.subr.mxu0 0.0
        %972 = vmatpush2.xpose.msra.mxu0 0.0
        %973 = vmatprep.subr.mxu0 0.0
        %974 = vmatpush2.xpose.msra.mxu0 0.0
        %975 = vmatprep.subr.mxu0 0.0
        %976 = vmatpush2.xpose.msra.mxu0 0.0
        %977 = vmatprep.subr.mxu0 0.0
        %978 = vmatpush2.xpose.msra.mxu0 0.0
        %979 = vmatprep.subr.mxu0 0.0
        %980 = vmatpush2.xpose.msra.mxu0 0.0
        %981 = vmatprep.subr.mxu0 0.0
        %982 = vmatpush2.xpose.msra.mxu0 0.0
        %983 = vmatprep.subr.mxu0 0.0
        %984 = vmatpush2.xpose.msra.mxu0 0.0
        %985 = vmatprep.subr.mxu0 0.0
        %986 = vmatpush2.xpose.msra.mxu0 0.0
        %987 = vmatprep.subr.mxu0 0.0
        %988 = vmatpush2.xpose.msra.mxu0 0.0
        %989 = vmatprep.mubr.f32.mxu0 0.0
        %990 = vmatmul.mubr.f32.gmra.mxu0 %v917
        %v991 = vpop.f32.mrf.mxu0
        %v992 = vadd.f32 %v546, %v991
        %v993 = vpop.f32.mrf.mxu0
        %994 = vmatprep.mubr.f32.mxu0 0.0
        %995 = vmatmul.mubr.f32.gmra.mxu0 %v919
        %v996 = vpop.f32.mrf.mxu0
        %v997 = vadd.f32 %v547, %v996
        %v998 = vpop.f32.mrf.mxu0
        %999 = vdwg.mxu0
        %1002 = vrot.lane.b32.xlu0 %v510, 96
        %v1003 = vpop.permute.xlu0 %1002
        %1004 = vrot.lane.b32.xlu0 %v515, 96
        %v1005 = vpop.permute.xlu0 %1004
        %v1006 = vsel %vm560, %v510, 0
        %v1008 = vsel %vm560, %v515, 0
        %v1010 = vsel %vm560, %v1003, 0
        %v1012 = vsel %vm560, %v1005, 0
        %1014 = vmatprep.subr.mxu0 0.0
        %1015 = vmatpush1.xpose.msra.mxu0 0.0
        %1016 = vmatprep.subr.mxu0 0.0
        %1017 = vmatpush1.xpose.msra.mxu0 0.0
        %1018 = vmatprep.subr.mxu0 0.0
        %1019 = vmatpush1.xpose.msra.mxu0 0.0
        %1020 = vmatprep.subr.mxu0 0.0
        %1021 = vmatpush1.xpose.msra.mxu0 0.0
        %1022 = vmatprep.subr.mxu0 0.0
        %1023 = vmatpush1.xpose.msra.mxu0 0.0
        %1024 = vmatprep.subr.mxu0 0.0
        %1025 = vmatpush1.xpose.msra.mxu0 0.0
        %1026 = vmatprep.subr.mxu0 0.0
        %1027 = vmatpush1.xpose.msra.mxu0 0.0
        %1028 = vmatprep.subr.mxu0 0.0
        %1029 = vmatpush1.xpose.msra.mxu0 0.0
        %1030 = vmatprep.subr.mxu0 0.0
        %1031 = vmatpush1.xpose.msra.mxu0 0.0
        %1032 = vmatprep.subr.mxu0 0.0
        %1033 = vmatpush1.xpose.msra.mxu0 0.0
        %1034 = vmatprep.subr.mxu0 0.0
        %1035 = vmatpush1.xpose.msra.mxu0 0.0
        %1036 = vmatprep.subr.mxu0 0.0
        %1037 = vmatpush1.xpose.msra.mxu0 0.0
        %1038 = vmatprep.subr.mxu0 0.0
        %1039 = vmatpush1.xpose.msra.mxu0 0.0
        %1040 = vmatprep.subr.mxu0 0.0
        %1041 = vmatpush1.xpose.msra.mxu0 0.0
        %1042 = vmatprep.subr.mxu0 0.0
        %1043 = vmatpush1.xpose.msra.mxu0 %v1012
        %1044 = vmatprep.subr.mxu0 0.0
        %1045 = vmatpush1.xpose.msra.mxu0 %v1010
        %1046 = vmatprep.subr.mxu0 0.0
        %1047 = vmatpush2.xpose.msra.mxu0 0.0
        %1048 = vmatprep.subr.mxu0 0.0
        %1049 = vmatpush2.xpose.msra.mxu0 0.0
        %1050 = vmatprep.subr.mxu0 0.0
        %1051 = vmatpush2.xpose.msra.mxu0 0.0
        %1052 = vmatprep.subr.mxu0 0.0
        %1053 = vmatpush2.xpose.msra.mxu0 0.0
        %1054 = vmatprep.subr.mxu0 0.0
        %1055 = vmatpush2.xpose.msra.mxu0 0.0
        %1056 = vmatprep.subr.mxu0 0.0
        %1057 = vmatpush2.xpose.msra.mxu0 0.0
        %1058 = vmatprep.subr.mxu0 0.0
        %1059 = vmatpush2.xpose.msra.mxu0 0.0
        %1060 = vmatprep.subr.mxu0 0.0
        %1061 = vmatpush2.xpose.msra.mxu0 0.0
        %1062 = vmatprep.subr.mxu0 0.0
        %1063 = vmatpush2.xpose.msra.mxu0 0.0
        %1064 = vmatprep.subr.mxu0 0.0
        %1065 = vmatpush2.xpose.msra.mxu0 0.0
        %1066 = vmatprep.subr.mxu0 0.0
        %1067 = vmatpush2.xpose.msra.mxu0 0.0
        %1068 = vmatprep.subr.mxu0 0.0
        %1069 = vmatpush2.xpose.msra.mxu0 0.0
        %1070 = vmatprep.subr.mxu0 0.0
        %1071 = vmatpush2.xpose.msra.mxu0 0.0
        %1072 = vmatprep.subr.mxu0 0.0
        %1073 = vmatpush2.xpose.msra.mxu0 0.0
        %1074 = vmatprep.subr.mxu0 0.0
        %1075 = vmatpush2.xpose.msra.mxu0 0.0
        %1076 = vmatprep.subr.mxu0 0.0
        %1077 = vmatpush2.xpose.msra.mxu0 0.0
        %1078 = vmatprep.mubr.f32.mxu0 0.0
        %1079 = vmatmul.mubr.f32.gmra.mxu0 %v1006
        %v1080 = vpop.f32.mrf.mxu0
        %v1081 = vadd.f32 %v548, %v1080
        %v1082 = vpop.f32.mrf.mxu0
        %1083 = vmatprep.mubr.f32.mxu0 0.0
        %1084 = vmatmul.mubr.f32.gmra.mxu0 %v1008
        %v1085 = vpop.f32.mrf.mxu0
        %v1086 = vadd.f32 %v549, %v1085
        %v1087 = vpop.f32.mrf.mxu0
        %1088 = vdwg.mxu0
        %1091 = vrot.lane.b32.xlu0 %v520, 96
        %v1092 = vpop.permute.xlu0 %1091
        %1093 = vrot.lane.b32.xlu0 %v525, 96
        %v1094 = vpop.permute.xlu0 %1093
        %v1095 = vsel %vm560, %v520, 0
        %v1097 = vsel %vm560, %v525, 0
        %v1099 = vsel %vm560, %v1092, 0
        %v1101 = vsel %vm560, %v1094, 0
        %1103 = vmatprep.subr.mxu0 0.0
        %1104 = vmatpush1.xpose.msra.mxu0 0.0
        %1105 = vmatprep.subr.mxu0 0.0
        %1106 = vmatpush1.xpose.msra.mxu0 0.0
        %1107 = vmatprep.subr.mxu0 0.0
        %1108 = vmatpush1.xpose.msra.mxu0 0.0
        %1109 = vmatprep.subr.mxu0 0.0
        %1110 = vmatpush1.xpose.msra.mxu0 0.0
        %1111 = vmatprep.subr.mxu0 0.0
        %1112 = vmatpush1.xpose.msra.mxu0 0.0
        %1113 = vmatprep.subr.mxu0 0.0
        %1114 = vmatpush1.xpose.msra.mxu0 0.0
        %1115 = vmatprep.subr.mxu0 0.0
        %1116 = vmatpush1.xpose.msra.mxu0 0.0
        %1117 = vmatprep.subr.mxu0 0.0
        %1118 = vmatpush1.xpose.msra.mxu0 0.0
        %1119 = vmatprep.subr.mxu0 0.0
        %1120 = vmatpush1.xpose.msra.mxu0 0.0
        %1121 = vmatprep.subr.mxu0 0.0
        %1122 = vmatpush1.xpose.msra.mxu0 0.0
        %1123 = vmatprep.subr.mxu0 0.0
        %1124 = vmatpush1.xpose.msra.mxu0 0.0
        %1125 = vmatprep.subr.mxu0 0.0
        %1126 = vmatpush1.xpose.msra.mxu0 0.0
        %1127 = vmatprep.subr.mxu0 0.0
        %1128 = vmatpush1.xpose.msra.mxu0 0.0
        %1129 = vmatprep.subr.mxu0 0.0
        %1130 = vmatpush1.xpose.msra.mxu0 0.0
        %1131 = vmatprep.subr.mxu0 0.0
        %1132 = vmatpush1.xpose.msra.mxu0 %v1101
        %1133 = vmatprep.subr.mxu0 0.0
        %1134 = vmatpush1.xpose.msra.mxu0 %v1099
        %1135 = vmatprep.subr.mxu0 0.0
        %1136 = vmatpush2.xpose.msra.mxu0 0.0
        %1137 = vmatprep.subr.mxu0 0.0
        %1138 = vmatpush2.xpose.msra.mxu0 0.0
        %1139 = vmatprep.subr.mxu0 0.0
        %1140 = vmatpush2.xpose.msra.mxu0 0.0
        %1141 = vmatprep.subr.mxu0 0.0
        %1142 = vmatpush2.xpose.msra.mxu0 0.0
        %1143 = vmatprep.subr.mxu0 0.0
        %1144 = vmatpush2.xpose.msra.mxu0 0.0
        %1145 = vmatprep.subr.mxu0 0.0
        %1146 = vmatpush2.xpose.msra.mxu0 0.0
        %1147 = vmatprep.subr.mxu0 0.0
        %1148 = vmatpush2.xpose.msra.mxu0 0.0
        %1149 = vmatprep.subr.mxu0 0.0
        %1150 = vmatpush2.xpose.msra.mxu0 0.0
        %1151 = vmatprep.subr.mxu0 0.0
        %1152 = vmatpush2.xpose.msra.mxu0 0.0
        %1153 = vmatprep.subr.mxu0 0.0
        %1154 = vmatpush2.xpose.msra.mxu0 0.0
        %1155 = vmatprep.subr.mxu0 0.0
        %1156 = vmatpush2.xpose.msra.mxu0 0.0
        %1157 = vmatprep.subr.mxu0 0.0
        %1158 = vmatpush2.xpose.msra.mxu0 0.0
        %1159 = vmatprep.subr.mxu0 0.0
        %1160 = vmatpush2.xpose.msra.mxu0 0.0
        %1161 = vmatprep.subr.mxu0 0.0
        %1162 = vmatpush2.xpose.msra.mxu0 0.0
        %1163 = vmatprep.subr.mxu0 0.0
        %1164 = vmatpush2.xpose.msra.mxu0 0.0
        %1165 = vmatprep.subr.mxu0 0.0
        %1166 = vmatpush2.xpose.msra.mxu0 0.0
        %1167 = vmatprep.mubr.f32.mxu0 0.0
        %1168 = vmatmul.mubr.f32.gmra.mxu0 %v1095
        %v1169 = vpop.f32.mrf.mxu0
        %v1170 = vadd.f32 %v550, %v1169
        %v1171 = vpop.f32.mrf.mxu0
        %1172 = vmatprep.mubr.f32.mxu0 0.0
        %1173 = vmatmul.mubr.f32.gmra.mxu0 %v1097
        %v1174 = vpop.f32.mrf.mxu0
        %v1175 = vadd.f32 %v551, %v1174
        %v1176 = vpop.f32.mrf.mxu0
        %1177 = vdwg.mxu0
        %1180 = vrot.lane.b32.xlu0 %v530, 96
        %v1181 = vpop.permute.xlu0 %1180
        %1182 = vrot.lane.b32.xlu0 %v535, 96
        %v1183 = vpop.permute.xlu0 %1182
        %v1184 = vsel %vm560, %v530, 0
        %v1186 = vsel %vm560, %v535, 0
        %v1188 = vsel %vm560, %v1181, 0
        %v1190 = vsel %vm560, %v1183, 0
        %1192 = vmatprep.subr.mxu0 0.0
        %1193 = vmatpush1.xpose.msra.mxu0 0.0
        %1194 = vmatprep.subr.mxu0 0.0
        %1195 = vmatpush1.xpose.msra.mxu0 0.0
        %1196 = vmatprep.subr.mxu0 0.0
        %1197 = vmatpush1.xpose.msra.mxu0 0.0
        %1198 = vmatprep.subr.mxu0 0.0
        %1199 = vmatpush1.xpose.msra.mxu0 0.0
        %1200 = vmatprep.subr.mxu0 0.0
        %1201 = vmatpush1.xpose.msra.mxu0 0.0
        %1202 = vmatprep.subr.mxu0 0.0
        %1203 = vmatpush1.xpose.msra.mxu0 0.0
        %1204 = vmatprep.subr.mxu0 0.0
        %1205 = vmatpush1.xpose.msra.mxu0 0.0
        %1206 = vmatprep.subr.mxu0 0.0
        %1207 = vmatpush1.xpose.msra.mxu0 0.0
        %1208 = vmatprep.subr.mxu0 0.0
        %1209 = vmatpush1.xpose.msra.mxu0 0.0
        %1210 = vmatprep.subr.mxu0 0.0
        %1211 = vmatpush1.xpose.msra.mxu0 0.0
        %1212 = vmatprep.subr.mxu0 0.0
        %1213 = vmatpush1.xpose.msra.mxu0 0.0
        %1214 = vmatprep.subr.mxu0 0.0
        %1215 = vmatpush1.xpose.msra.mxu0 0.0
        %1216 = vmatprep.subr.mxu0 0.0
        %1217 = vmatpush1.xpose.msra.mxu0 0.0
        %1218 = vmatprep.subr.mxu0 0.0
        %1219 = vmatpush1.xpose.msra.mxu0 0.0
        %1220 = vmatprep.subr.mxu0 0.0
        %1221 = vmatpush1.xpose.msra.mxu0 %v1190
        %1222 = vmatprep.subr.mxu0 0.0
        %1223 = vmatpush1.xpose.msra.mxu0 %v1188
        %1224 = vmatprep.subr.mxu0 0.0
        %1225 = vmatpush2.xpose.msra.mxu0 0.0
        %1226 = vmatprep.subr.mxu0 0.0
        %1227 = vmatpush2.xpose.msra.mxu0 0.0
        %1228 = vmatprep.subr.mxu0 0.0
        %1229 = vmatpush2.xpose.msra.mxu0 0.0
        %1230 = vmatprep.subr.mxu0 0.0
        %1231 = vmatpush2.xpose.msra.mxu0 0.0
        %1232 = vmatprep.subr.mxu0 0.0
        %1233 = vmatpush2.xpose.msra.mxu0 0.0
        %1234 = vmatprep.subr.mxu0 0.0
        %1235 = vmatpush2.xpose.msra.mxu0 0.0
        %1236 = vmatprep.subr.mxu0 0.0
        %1237 = vmatpush2.xpose.msra.mxu0 0.0
        %1238 = vmatprep.subr.mxu0 0.0
        %1239 = vmatpush2.xpose.msra.mxu0 0.0
        %1240 = vmatprep.subr.mxu0 0.0
        %1241 = vmatpush2.xpose.msra.mxu0 0.0
        %1242 = vmatprep.subr.mxu0 0.0
        %1243 = vmatpush2.xpose.msra.mxu0 0.0
        %1244 = vmatprep.subr.mxu0 0.0
        %1245 = vmatpush2.xpose.msra.mxu0 0.0
        %1246 = vmatprep.subr.mxu0 0.0
        %1247 = vmatpush2.xpose.msra.mxu0 0.0
        %1248 = vmatprep.subr.mxu0 0.0
        %1249 = vmatpush2.xpose.msra.mxu0 0.0
        %1250 = vmatprep.subr.mxu0 0.0
        %1251 = vmatpush2.xpose.msra.mxu0 0.0
        %1252 = vmatprep.subr.mxu0 0.0
        %1253 = vmatpush2.xpose.msra.mxu0 0.0
        %1254 = vmatprep.subr.mxu0 0.0
        %1255 = vmatpush2.xpose.msra.mxu0 0.0
        %1256 = vmatprep.mubr.f32.mxu0 0.0
        %1257 = vmatmul.mubr.f32.gmra.mxu0 %v1184
        %v1258 = vpop.f32.mrf.mxu0
        %v1259 = vadd.f32 %v552, %v1258
        %v1260 = vpop.f32.mrf.mxu0
        %1261 = vmatprep.mubr.f32.mxu0 0.0
        %1262 = vmatmul.mubr.f32.gmra.mxu0 %v1186
        %v1263 = vpop.f32.mrf.mxu0
        %v1264 = vadd.f32 %v553, %v1263
        %v1265 = vpop.f32.mrf.mxu0
        %1266 = vdwg.mxu0
        %vm1267 = vcmask 130048
        %v1268 = vsel %vm1267, %v636, -inf
        %1269 = vmax.xlane.f32.xlu0 %v1268
        %v1270 = vpop.xlane.xlu0 %1269
        %v1271 = vsel %vm1267, %v641, -inf
        %1272 = vmax.xlane.f32.xlu0 %v1271
        %v1273 = vpop.xlane.xlu0 %1272
        %v1274 = vsel %vm1267, %v725, -inf
        %1275 = vmax.xlane.f32.xlu0 %v1274
        %v1276 = vpop.xlane.xlu0 %1275
        %v1277 = vsel %vm1267, %v730, -inf
        %1278 = vmax.xlane.f32.xlu0 %v1277
        %v1279 = vpop.xlane.xlu0 %1278
        %v1280 = vsel %vm1267, %v814, -inf
        %1281 = vmax.xlane.f32.xlu0 %v1280
        %v1282 = vpop.xlane.xlu0 %1281
        %v1283 = vsel %vm1267, %v819, -inf
        %1284 = vmax.xlane.f32.xlu0 %v1283
        %v1285 = vpop.xlane.xlu0 %1284
        %v1286 = vsel %vm1267, %v903, -inf
        %1287 = vmax.xlane.f32.xlu0 %v1286
        %v1288 = vpop.xlane.xlu0 %1287
        %v1289 = vsel %vm1267, %v908, -inf
        %1290 = vmax.xlane.f32.xlu0 %v1289
        %v1291 = vpop.xlane.xlu0 %1290
        %v1292 = vsel %vm1267, %v992, -inf
        %1293 = vmax.xlane.f32.xlu0 %v1292
        %v1294 = vpop.xlane.xlu0 %1293
        %v1295 = vsel %vm1267, %v997, -inf
        %1296 = vmax.xlane.f32.xlu0 %v1295
        %v1297 = vpop.xlane.xlu0 %1296
        %v1298 = vsel %vm1267, %v1081, -inf
        %1299 = vmax.xlane.f32.xlu0 %v1298
        %v1300 = vpop.xlane.xlu0 %1299
        %v1301 = vsel %vm1267, %v1086, -inf
        %1302 = vmax.xlane.f32.xlu0 %v1301
        %v1303 = vpop.xlane.xlu0 %1302
        %v1304 = vsel %vm1267, %v1170, -inf
        %1305 = vmax.xlane.f32.xlu0 %v1304
        %v1306 = vpop.xlane.xlu0 %1305
        %v1307 = vsel %vm1267, %v1175, -inf
        %1308 = vmax.xlane.f32.xlu0 %v1307
        %v1309 = vpop.xlane.xlu0 %1308
        %v1310 = vsel %vm1267, %v1259, -inf
        %1311 = vmax.xlane.f32.xlu0 %v1310
        %v1312 = vpop.xlane.xlu0 %1311
        %v1313 = vsel %vm1267, %v1264, -inf
        %1314 = vmax.xlane.f32.xlu0 %v1313
        %v1315 = vpop.xlane.xlu0 %1314
        %v1316 = vsub.f32 %v636, %v1270
        %v1317 = vsub.f32 %v641, %v1273
        %v1318 = vsub.f32 %v725, %v1276
        %v1319 = vsub.f32 %v730, %v1279
        %v1320 = vsub.f32 %v814, %v1282
        %v1321 = vsub.f32 %v819, %v1285
        %v1322 = vsub.f32 %v903, %v1288
        %v1323 = vsub.f32 %v908, %v1291
        %v1324 = vsub.f32 %v992, %v1294
        %v1325 = vsub.f32 %v997, %v1297
        %v1326 = vsub.f32 %v1081, %v1300
        %v1327 = vsub.f32 %v1086, %v1303
        %v1328 = vsub.f32 %v1170, %v1306
        %v1329 = vsub.f32 %v1175, %v1309
        %v1330 = vsub.f32 %v1259, %v1312
        %v1331 = vsub.f32 %v1264, %v1315
        %v1332 = vmul.f32 %v1316, 1.442695
        %v1333 = vpow.pop %v1332
        %v1334 = vmul.f32 %v1317, 1.442695
        %v1335 = vpow.pop %v1334
        %v1336 = vmul.f32 %v1318, 1.442695
        %v1337 = vpow.pop %v1336
        %v1338 = vmul.f32 %v1319, 1.442695
        %v1339 = vpow.pop %v1338
        %v1340 = vmul.f32 %v1320, 1.442695
        %v1341 = vpow.pop %v1340
        %v1342 = vmul.f32 %v1321, 1.442695
        %v1343 = vpow.pop %v1342
        %v1344 = vmul.f32 %v1322, 1.442695
        %v1345 = vpow.pop %v1344
        %v1346 = vmul.f32 %v1323, 1.442695
        %v1347 = vpow.pop %v1346
        %v1348 = vmul.f32 %v1324, 1.442695
        %v1349 = vpow.pop %v1348
        %v1350 = vmul.f32 %v1325, 1.442695
        %v1351 = vpow.pop %v1350
        %v1352 = vmul.f32 %v1326, 1.442695
        %v1353 = vpow.pop %v1352
        %v1354 = vmul.f32 %v1327, 1.442695
        %v1355 = vpow.pop %v1354
        %v1356 = vmul.f32 %v1328, 1.442695
        %v1357 = vpow.pop %v1356
        %v1358 = vmul.f32 %v1329, 1.442695
        %v1359 = vpow.pop %v1358
        %v1360 = vmul.f32 %v1330, 1.442695
        %v1361 = vpow.pop %v1360
        %v1362 = vmul.f32 %v1331, 1.442695
        %v1363 = vpow.pop %v1362
        %v1364 = vsel %vm1267, %v1333, 0.0
        %1365 = vadd.xlane.f32.xlu0 %v1364
        %v1366 = vpop.xlane.xlu0 %1365
        %v1367 = vsel %vm1267, %v1335, 0.0
        %1368 = vadd.xlane.f32.xlu0 %v1367
        %v1369 = vpop.xlane.xlu0 %1368
        %v1370 = vsel %vm1267, %v1337, 0.0
        %1371 = vadd.xlane.f32.xlu0 %v1370
        %v1372 = vpop.xlane.xlu0 %1371
        %v1373 = vsel %vm1267, %v1339, 0.0
        %1374 = vadd.xlane.f32.xlu0 %v1373
        %v1375 = vpop.xlane.xlu0 %1374
        %v1376 = vsel %vm1267, %v1341, 0.0
        %1377 = vadd.xlane.f32.xlu0 %v1376
        %v1378 = vpop.xlane.xlu0 %1377
        %v1379 = vsel %vm1267, %v1343, 0.0
        %1380 = vadd.xlane.f32.xlu0 %v1379
        %v1381 = vpop.xlane.xlu0 %1380
        %v1382 = vsel %vm1267, %v1345, 0.0
        %1383 = vadd.xlane.f32.xlu0 %v1382
        %v1384 = vpop.xlane.xlu0 %1383
        %v1385 = vsel %vm1267, %v1347, 0.0
        %1386 = vadd.xlane.f32.xlu0 %v1385
        %v1387 = vpop.xlane.xlu0 %1386
        %v1388 = vsel %vm1267, %v1349, 0.0
        %1389 = vadd.xlane.f32.xlu0 %v1388
        %v1390 = vpop.xlane.xlu0 %1389
        %v1391 = vsel %vm1267, %v1351, 0.0
        %1392 = vadd.xlane.f32.xlu0 %v1391
        %v1393 = vpop.xlane.xlu0 %1392
        %v1394 = vsel %vm1267, %v1353, 0.0
        %1395 = vadd.xlane.f32.xlu0 %v1394
        %v1396 = vpop.xlane.xlu0 %1395
        %v1397 = vsel %vm1267, %v1355, 0.0
        %1398 = vadd.xlane.f32.xlu0 %v1397
        %v1399 = vpop.xlane.xlu0 %1398
        %v1400 = vsel %vm1267, %v1357, 0.0
        %1401 = vadd.xlane.f32.xlu0 %v1400
        %v1402 = vpop.xlane.xlu0 %1401
        %v1403 = vsel %vm1267, %v1359, 0.0
        %1404 = vadd.xlane.f32.xlu0 %v1403
        %v1405 = vpop.xlane.xlu0 %1404
        %v1406 = vsel %vm1267, %v1361, 0.0
        %1407 = vadd.xlane.f32.xlu0 %v1406
        %v1408 = vpop.xlane.xlu0 %1407
        %v1409 = vsel %vm1267, %v1363, 0.0
        %1410 = vadd.xlane.f32.xlu0 %v1409
        %v1411 = vpop.xlane.xlu0 %1410
        %v1412 = vrcp.pop %v1366
        %v1413 = vrcp.pop %v1369
        %v1414 = vrcp.pop %v1372
        %v1415 = vrcp.pop %v1375
        %v1416 = vrcp.pop %v1378
        %v1417 = vrcp.pop %v1381
        %v1418 = vrcp.pop %v1384
        %v1419 = vrcp.pop %v1387
        %v1420 = vrcp.pop %v1390
        %v1421 = vrcp.pop %v1393
        %v1422 = vrcp.pop %v1396
        %v1423 = vrcp.pop %v1399
        %v1424 = vrcp.pop %v1402
        %v1425 = vrcp.pop %v1405
        %v1426 = vrcp.pop %v1408
        %v1427 = vrcp.pop %v1411
        %v1428 = vmul.f32 %v1333, %v1412
        %v1429 = vmul.f32 %v1335, %v1413
        %v1430 = vmul.f32 %v1337, %v1414
        %v1431 = vmul.f32 %v1339, %v1415
        %v1432 = vmul.f32 %v1341, %v1416
        %v1433 = vmul.f32 %v1343, %v1417
        %v1434 = vmul.f32 %v1345, %v1418
        %v1435 = vmul.f32 %v1347, %v1419
        %v1436 = vmul.f32 %v1349, %v1420
        %v1437 = vmul.f32 %v1351, %v1421
        %v1438 = vmul.f32 %v1353, %v1422
        %v1439 = vmul.f32 %v1355, %v1423
        %v1440 = vmul.f32 %v1357, %v1424
        %v1441 = vmul.f32 %v1359, %v1425
        %v1442 = vmul.f32 %v1361, %v1426
        %v1443 = vmul.f32 %v1363, %v1427
        %1444 = vrot.lane.b32.xlu0 %v460, 64
        %v1445 = vpop.permute.xlu0 %1444
        %1446 = vrot.lane.b32.xlu0 %v465, 64
        %v1447 = vpop.permute.xlu0 %1446
        %v1451 = vsel %vm1267, %v1428, 0
        %v1454 = vsel %vm1267, %v1429, 0
        %1456 = vmatprep.subr.mxu0 0.0
        %1457 = vmatpush1.msra.mxu0 0.0
        %1458 = vmatprep.subr.mxu0 0.0
        %1459 = vmatpush1.msra.mxu0 0.0
        %1460 = vmatprep.subr.mxu0 0.0
        %1461 = vmatpush1.msra.mxu0 0.0
        %1462 = vmatprep.subr.mxu0 0.0
        %1463 = vmatpush1.msra.mxu0 0.0
        %1464 = vmatprep.subr.mxu0 0.0
        %1465 = vmatpush1.msra.mxu0 0.0
        %1466 = vmatprep.subr.mxu0 0.0
        %1467 = vmatpush1.msra.mxu0 0.0
        %1468 = vmatprep.subr.mxu0 0.0
        %1469 = vmatpush1.msra.mxu0 0.0
        %1470 = vmatprep.subr.mxu0 0.0
        %1471 = vmatpush1.msra.mxu0 0.0
        %1472 = vmatprep.subr.mxu0 0.0
        %1473 = vmatpush1.msra.mxu0 0.0
        %1474 = vmatprep.subr.mxu0 0.0
        %1475 = vmatpush1.msra.mxu0 0.0
        %1476 = vmatprep.subr.mxu0 0.0
        %1477 = vmatpush1.msra.mxu0 0.0
        %1478 = vmatprep.subr.mxu0 0.0
        %1479 = vmatpush1.msra.mxu0 0.0
        %1480 = vmatprep.subr.mxu0 0.0
        %1481 = vmatpush1.msra.mxu0 0.0
        %1482 = vmatprep.subr.mxu0 0.0
        %1483 = vmatpush1.msra.mxu0 0.0
        %1484 = vmatprep.subr.mxu0 0.0
        %1485 = vmatpush1.msra.mxu0 %v1447
        %1486 = vmatprep.subr.mxu0 0.0
        %1487 = vmatpush1.msra.mxu0 %v1445
        %1488 = vmatprep.subr.mxu0 0.0
        %1489 = vmatpush2.msra.mxu0 0.0
        %1490 = vmatprep.subr.mxu0 0.0
        %1491 = vmatpush2.msra.mxu0 0.0
        %1492 = vmatprep.subr.mxu0 0.0
        %1493 = vmatpush2.msra.mxu0 0.0
        %1494 = vmatprep.subr.mxu0 0.0
        %1495 = vmatpush2.msra.mxu0 0.0
        %1496 = vmatprep.subr.mxu0 0.0
        %1497 = vmatpush2.msra.mxu0 0.0
        %1498 = vmatprep.subr.mxu0 0.0
        %1499 = vmatpush2.msra.mxu0 0.0
        %1500 = vmatprep.subr.mxu0 0.0
        %1501 = vmatpush2.msra.mxu0 0.0
        %1502 = vmatprep.subr.mxu0 0.0
        %1503 = vmatpush2.msra.mxu0 0.0
        %1504 = vmatprep.subr.mxu0 0.0
        %1505 = vmatpush2.msra.mxu0 0.0
        %1506 = vmatprep.subr.mxu0 0.0
        %1507 = vmatpush2.msra.mxu0 0.0
        %1508 = vmatprep.subr.mxu0 0.0
        %1509 = vmatpush2.msra.mxu0 0.0
        %1510 = vmatprep.subr.mxu0 0.0
        %1511 = vmatpush2.msra.mxu0 0.0
        %1512 = vmatprep.subr.mxu0 0.0
        %1513 = vmatpush2.msra.mxu0 0.0
        %1514 = vmatprep.subr.mxu0 0.0
        %1515 = vmatpush2.msra.mxu0 0.0
        %1516 = vmatprep.subr.mxu0 0.0
        %1517 = vmatpush2.msra.mxu0 0.0
        %1518 = vmatprep.subr.mxu0 0.0
        %1519 = vmatpush2.msra.mxu0 0.0
        %1520 = vmatprep.mubr.f32.mxu0 0.0
        %1521 = vmatmul.mubr.f32.gmra.mxu0 %v1451
        %v1522 = vpop.f32.mrf.mxu0
        %v1523 = vadd.f32 0.0, %v1522
        %v1524 = vpop.f32.mrf.mxu0
        %1525 = vmatprep.mubr.f32.mxu0 0.0
        %1526 = vmatmul.mubr.f32.gmra.mxu0 %v1454
        %v1527 = vpop.f32.mrf.mxu0
        %v1528 = vadd.f32 0.0, %v1527
        %v1529 = vpop.f32.mrf.mxu0
        %1530 = vdwg.mxu0
        %1531 = vrot.lane.b32.xlu0 %v470, 64
        %v1532 = vpop.permute.xlu0 %1531
        %1533 = vrot.lane.b32.xlu0 %v475, 64
        %v1534 = vpop.permute.xlu0 %1533
        %v1538 = vsel %vm1267, %v1430, 0
        %v1541 = vsel %vm1267, %v1431, 0
        %1543 = vmatprep.subr.mxu0 0.0
        %1544 = vmatpush1.msra.mxu0 0.0
        %1545 = vmatprep.subr.mxu0 0.0
        %1546 = vmatpush1.msra.mxu0 0.0
        %1547 = vmatprep.subr.mxu0 0.0
        %1548 = vmatpush1.msra.mxu0 0.0
        %1549 = vmatprep.subr.mxu0 0.0
        %1550 = vmatpush1.msra.mxu0 0.0
        %1551 = vmatprep.subr.mxu0 0.0
        %1552 = vmatpush1.msra.mxu0 0.0
        %1553 = vmatprep.subr.mxu0 0.0
        %1554 = vmatpush1.msra.mxu0 0.0
        %1555 = vmatprep.subr.mxu0 0.0
        %1556 = vmatpush1.msra.mxu0 0.0
        %1557 = vmatprep.subr.mxu0 0.0
        %1558 = vmatpush1.msra.mxu0 0.0
        %1559 = vmatprep.subr.mxu0 0.0
        %1560 = vmatpush1.msra.mxu0 0.0
        %1561 = vmatprep.subr.mxu0 0.0
        %1562 = vmatpush1.msra.mxu0 0.0
        %1563 = vmatprep.subr.mxu0 0.0
        %1564 = vmatpush1.msra.mxu0 0.0
        %1565 = vmatprep.subr.mxu0 0.0
        %1566 = vmatpush1.msra.mxu0 0.0
        %1567 = vmatprep.subr.mxu0 0.0
        %1568 = vmatpush1.msra.mxu0 0.0
        %1569 = vmatprep.subr.mxu0 0.0
        %1570 = vmatpush1.msra.mxu0 0.0
        %1571 = vmatprep.subr.mxu0 0.0
        %1572 = vmatpush1.msra.mxu0 %v1534
        %1573 = vmatprep.subr.mxu0 0.0
        %1574 = vmatpush1.msra.mxu0 %v1532
        %1575 = vmatprep.subr.mxu0 0.0
        %1576 = vmatpush2.msra.mxu0 0.0
        %1577 = vmatprep.subr.mxu0 0.0
        %1578 = vmatpush2.msra.mxu0 0.0
        %1579 = vmatprep.subr.mxu0 0.0
        %1580 = vmatpush2.msra.mxu0 0.0
        %1581 = vmatprep.subr.mxu0 0.0
        %1582 = vmatpush2.msra.mxu0 0.0
        %1583 = vmatprep.subr.mxu0 0.0
        %1584 = vmatpush2.msra.mxu0 0.0
        %1585 = vmatprep.subr.mxu0 0.0
        %1586 = vmatpush2.msra.mxu0 0.0
        %1587 = vmatprep.subr.mxu0 0.0
        %1588 = vmatpush2.msra.mxu0 0.0
        %1589 = vmatprep.subr.mxu0 0.0
        %1590 = vmatpush2.msra.mxu0 0.0
        %1591 = vmatprep.subr.mxu0 0.0
        %1592 = vmatpush2.msra.mxu0 0.0
        %1593 = vmatprep.subr.mxu0 0.0
        %1594 = vmatpush2.msra.mxu0 0.0
        %1595 = vmatprep.subr.mxu0 0.0
        %1596 = vmatpush2.msra.mxu0 0.0
        %1597 = vmatprep.subr.mxu0 0.0
        %1598 = vmatpush2.msra.mxu0 0.0
        %1599 = vmatprep.subr.mxu0 0.0
        %1600 = vmatpush2.msra.mxu0 0.0
        %1601 = vmatprep.subr.mxu0 0.0
        %1602 = vmatpush2.msra.mxu0 0.0
        %1603 = vmatprep.subr.mxu0 0.0
        %1604 = vmatpush2.msra.mxu0 0.0
        %1605 = vmatprep.subr.mxu0 0.0
        %1606 = vmatpush2.msra.mxu0 0.0
        %1607 = vmatprep.mubr.f32.mxu0 0.0
        %1608 = vmatmul.mubr.f32.gmra.mxu0 %v1538
        %v1609 = vpop.f32.mrf.mxu0
        %v1610 = vadd.f32 0.0, %v1609
        %v1611 = vpop.f32.mrf.mxu0
        %1612 = vmatprep.mubr.f32.mxu0 0.0
        %1613 = vmatmul.mubr.f32.gmra.mxu0 %v1541
        %v1614 = vpop.f32.mrf.mxu0
        %v1615 = vadd.f32 0.0, %v1614
        %v1616 = vpop.f32.mrf.mxu0
        %1617 = vdwg.mxu0
        %1618 = vrot.lane.b32.xlu0 %v480, 64
        %v1619 = vpop.permute.xlu0 %1618
        %1620 = vrot.lane.b32.xlu0 %v485, 64
        %v1621 = vpop.permute.xlu0 %1620
        %v1625 = vsel %vm1267, %v1432, 0
        %v1628 = vsel %vm1267, %v1433, 0
        %1630 = vmatprep.subr.mxu0 0.0
        %1631 = vmatpush1.msra.mxu0 0.0
        %1632 = vmatprep.subr.mxu0 0.0
        %1633 = vmatpush1.msra.mxu0 0.0
        %1634 = vmatprep.subr.mxu0 0.0
        %1635 = vmatpush1.msra.mxu0 0.0
        %1636 = vmatprep.subr.mxu0 0.0
        %1637 = vmatpush1.msra.mxu0 0.0
        %1638 = vmatprep.subr.mxu0 0.0
        %1639 = vmatpush1.msra.mxu0 0.0
        %1640 = vmatprep.subr.mxu0 0.0
        %1641 = vmatpush1.msra.mxu0 0.0
        %1642 = vmatprep.subr.mxu0 0.0
        %1643 = vmatpush1.msra.mxu0 0.0
        %1644 = vmatprep.subr.mxu0 0.0
        %1645 = vmatpush1.msra.mxu0 0.0
        %1646 = vmatprep.subr.mxu0 0.0
        %1647 = vmatpush1.msra.mxu0 0.0
        %1648 = vmatprep.subr.mxu0 0.0
        %1649 = vmatpush1.msra.mxu0 0.0
        %1650 = vmatprep.subr.mxu0 0.0
        %1651 = vmatpush1.msra.mxu0 0.0
        %1652 = vmatprep.subr.mxu0 0.0
        %1653 = vmatpush1.msra.mxu0 0.0
        %1654 = vmatprep.subr.mxu0 0.0
        %1655 = vmatpush1.msra.mxu0 0.0
        %1656 = vmatprep.subr.mxu0 0.0
        %1657 = vmatpush1.msra.mxu0 0.0
        %1658 = vmatprep.subr.mxu0 0.0
        %1659 = vmatpush1.msra.mxu0 %v1621
        %1660 = vmatprep.subr.mxu0 0.0
        %1661 = vmatpush1.msra.mxu0 %v1619
        %1662 = vmatprep.subr.mxu0 0.0
        %1663 = vmatpush2.msra.mxu0 0.0
        %1664 = vmatprep.subr.mxu0 0.0
        %1665 = vmatpush2.msra.mxu0 0.0
        %1666 = vmatprep.subr.mxu0 0.0
        %1667 = vmatpush2.msra.mxu0 0.0
        %1668 = vmatprep.subr.mxu0 0.0
        %1669 = vmatpush2.msra.mxu0 0.0
        %1670 = vmatprep.subr.mxu0 0.0
        %1671 = vmatpush2.msra.mxu0 0.0
        %1672 = vmatprep.subr.mxu0 0.0
        %1673 = vmatpush2.msra.mxu0 0.0
        %1674 = vmatprep.subr.mxu0 0.0
        %1675 = vmatpush2.msra.mxu0 0.0
        %1676 = vmatprep.subr.mxu0 0.0
        %1677 = vmatpush2.msra.mxu0 0.0
        %1678 = vmatprep.subr.mxu0 0.0
        %1679 = vmatpush2.msra.mxu0 0.0
        %1680 = vmatprep.subr.mxu0 0.0
        %1681 = vmatpush2.msra.mxu0 0.0
        %1682 = vmatprep.subr.mxu0 0.0
        %1683 = vmatpush2.msra.mxu0 0.0
        %1684 = vmatprep.subr.mxu0 0.0
        %1685 = vmatpush2.msra.mxu0 0.0
        %1686 = vmatprep.subr.mxu0 0.0
        %1687 = vmatpush2.msra.mxu0 0.0
        %1688 = vmatprep.subr.mxu0 0.0
        %1689 = vmatpush2.msra.mxu0 0.0
        %1690 = vmatprep.subr.mxu0 0.0
        %1691 = vmatpush2.msra.mxu0 0.0
        %1692 = vmatprep.subr.mxu0 0.0
        %1693 = vmatpush2.msra.mxu0 0.0
        %1694 = vmatprep.mubr.f32.mxu0 0.0
        %1695 = vmatmul.mubr.f32.gmra.mxu0 %v1625
        %v1696 = vpop.f32.mrf.mxu0
        %v1697 = vadd.f32 0.0, %v1696
        %v1698 = vpop.f32.mrf.mxu0
        %1699 = vmatprep.mubr.f32.mxu0 0.0
        %1700 = vmatmul.mubr.f32.gmra.mxu0 %v1628
        %v1701 = vpop.f32.mrf.mxu0
        %v1702 = vadd.f32 0.0, %v1701
        %v1703 = vpop.f32.mrf.mxu0
        %1704 = vdwg.mxu0
        %1705 = vrot.lane.b32.xlu0 %v490, 64
        %v1706 = vpop.permute.xlu0 %1705
        %1707 = vrot.lane.b32.xlu0 %v495, 64
        %v1708 = vpop.permute.xlu0 %1707
        %v1712 = vsel %vm1267, %v1434, 0
        %v1715 = vsel %vm1267, %v1435, 0
        %1717 = vmatprep.subr.mxu0 0.0
        %1718 = vmatpush1.msra.mxu0 0.0
        %1719 = vmatprep.subr.mxu0 0.0
        %1720 = vmatpush1.msra.mxu0 0.0
        %1721 = vmatprep.subr.mxu0 0.0
        %1722 = vmatpush1.msra.mxu0 0.0
        %1723 = vmatprep.subr.mxu0 0.0
        %1724 = vmatpush1.msra.mxu0 0.0
        %1725 = vmatprep.subr.mxu0 0.0
        %1726 = vmatpush1.msra.mxu0 0.0
        %1727 = vmatprep.subr.mxu0 0.0
        %1728 = vmatpush1.msra.mxu0 0.0
        %1729 = vmatprep.subr.mxu0 0.0
        %1730 = vmatpush1.msra.mxu0 0.0
        %1731 = vmatprep.subr.mxu0 0.0
        %1732 = vmatpush1.msra.mxu0 0.0
        %1733 = vmatprep.subr.mxu0 0.0
        %1734 = vmatpush1.msra.mxu0 0.0
        %1735 = vmatprep.subr.mxu0 0.0
        %1736 = vmatpush1.msra.mxu0 0.0
        %1737 = vmatprep.subr.mxu0 0.0
        %1738 = vmatpush1.msra.mxu0 0.0
        %1739 = vmatprep.subr.mxu0 0.0
        %1740 = vmatpush1.msra.mxu0 0.0
        %1741 = vmatprep.subr.mxu0 0.0
        %1742 = vmatpush1.msra.mxu0 0.0
        %1743 = vmatprep.subr.mxu0 0.0
        %1744 = vmatpush1.msra.mxu0 0.0
        %1745 = vmatprep.subr.mxu0 0.0
        %1746 = vmatpush1.msra.mxu0 %v1708
        %1747 = vmatprep.subr.mxu0 0.0
        %1748 = vmatpush1.msra.mxu0 %v1706
        %1749 = vmatprep.subr.mxu0 0.0
        %1750 = vmatpush2.msra.mxu0 0.0
        %1751 = vmatprep.subr.mxu0 0.0
        %1752 = vmatpush2.msra.mxu0 0.0
        %1753 = vmatprep.subr.mxu0 0.0
        %1754 = vmatpush2.msra.mxu0 0.0
        %1755 = vmatprep.subr.mxu0 0.0
        %1756 = vmatpush2.msra.mxu0 0.0
        %1757 = vmatprep.subr.mxu0 0.0
        %1758 = vmatpush2.msra.mxu0 0.0
        %1759 = vmatprep.subr.mxu0 0.0
        %1760 = vmatpush2.msra.mxu0 0.0
        %1761 = vmatprep.subr.mxu0 0.0
        %1762 = vmatpush2.msra.mxu0 0.0
        %1763 = vmatprep.subr.mxu0 0.0
        %1764 = vmatpush2.msra.mxu0 0.0
        %1765 = vmatprep.subr.mxu0 0.0
        %1766 = vmatpush2.msra.mxu0 0.0
        %1767 = vmatprep.subr.mxu0 0.0
        %1768 = vmatpush2.msra.mxu0 0.0
        %1769 = vmatprep.subr.mxu0 0.0
        %1770 = vmatpush2.msra.mxu0 0.0
        %1771 = vmatprep.subr.mxu0 0.0
        %1772 = vmatpush2.msra.mxu0 0.0
        %1773 = vmatprep.subr.mxu0 0.0
        %1774 = vmatpush2.msra.mxu0 0.0
        %1775 = vmatprep.subr.mxu0 0.0
        %1776 = vmatpush2.msra.mxu0 0.0
        %1777 = vmatprep.subr.mxu0 0.0
        %1778 = vmatpush2.msra.mxu0 0.0
        %1779 = vmatprep.subr.mxu0 0.0
        %1780 = vmatpush2.msra.mxu0 0.0
        %1781 = vmatprep.mubr.f32.mxu0 0.0
        %1782 = vmatmul.mubr.f32.gmra.mxu0 %v1712
        %v1783 = vpop.f32.mrf.mxu0
        %v1784 = vadd.f32 0.0, %v1783
        %v1785 = vpop.f32.mrf.mxu0
        %1786 = vmatprep.mubr.f32.mxu0 0.0
        %1787 = vmatmul.mubr.f32.gmra.mxu0 %v1715
        %v1788 = vpop.f32.mrf.mxu0
        %v1789 = vadd.f32 0.0, %v1788
        %v1790 = vpop.f32.mrf.mxu0
        %1791 = vdwg.mxu0
        %1792 = vrot.lane.b32.xlu0 %v500, 64
        %v1793 = vpop.permute.xlu0 %1792
        %1794 = vrot.lane.b32.xlu0 %v505, 64
        %v1795 = vpop.permute.xlu0 %1794
        %v1799 = vsel %vm1267, %v1436, 0
        %v1802 = vsel %vm1267, %v1437, 0
        %1804 = vmatprep.subr.mxu0 0.0
        %1805 = vmatpush1.msra.mxu0 0.0
        %1806 = vmatprep.subr.mxu0 0.0
        %1807 = vmatpush1.msra.mxu0 0.0
        %1808 = vmatprep.subr.mxu0 0.0
        %1809 = vmatpush1.msra.mxu0 0.0
        %1810 = vmatprep.subr.mxu0 0.0
        %1811 = vmatpush1.msra.mxu0 0.0
        %1812 = vmatprep.subr.mxu0 0.0
        %1813 = vmatpush1.msra.mxu0 0.0
        %1814 = vmatprep.subr.mxu0 0.0
        %1815 = vmatpush1.msra.mxu0 0.0
        %1816 = vmatprep.subr.mxu0 0.0
        %1817 = vmatpush1.msra.mxu0 0.0
        %1818 = vmatprep.subr.mxu0 0.0
        %1819 = vmatpush1.msra.mxu0 0.0
        %1820 = vmatprep.subr.mxu0 0.0
        %1821 = vmatpush1.msra.mxu0 0.0
        %1822 = vmatprep.subr.mxu0 0.0
        %1823 = vmatpush1.msra.mxu0 0.0
        %1824 = vmatprep.subr.mxu0 0.0
        %1825 = vmatpush1.msra.mxu0 0.0
        %1826 = vmatprep.subr.mxu0 0.0
        %1827 = vmatpush1.msra.mxu0 0.0
        %1828 = vmatprep.subr.mxu0 0.0
        %1829 = vmatpush1.msra.mxu0 0.0
        %1830 = vmatprep.subr.mxu0 0.0
        %1831 = vmatpush1.msra.mxu0 0.0
        %1832 = vmatprep.subr.mxu0 0.0
        %1833 = vmatpush1.msra.mxu0 %v1795
        %1834 = vmatprep.subr.mxu0 0.0
        %1835 = vmatpush1.msra.mxu0 %v1793
        %1836 = vmatprep.subr.mxu0 0.0
        %1837 = vmatpush2.msra.mxu0 0.0
        %1838 = vmatprep.subr.mxu0 0.0
        %1839 = vmatpush2.msra.mxu0 0.0
        %1840 = vmatprep.subr.mxu0 0.0
        %1841 = vmatpush2.msra.mxu0 0.0
        %1842 = vmatprep.subr.mxu0 0.0
        %1843 = vmatpush2.msra.mxu0 0.0
        %1844 = vmatprep.subr.mxu0 0.0
        %1845 = vmatpush2.msra.mxu0 0.0
        %1846 = vmatprep.subr.mxu0 0.0
        %1847 = vmatpush2.msra.mxu0 0.0
        %1848 = vmatprep.subr.mxu0 0.0
        %1849 = vmatpush2.msra.mxu0 0.0
        %1850 = vmatprep.subr.mxu0 0.0
        %1851 = vmatpush2.msra.mxu0 0.0
        %1852 = vmatprep.subr.mxu0 0.0
        %1853 = vmatpush2.msra.mxu0 0.0
        %1854 = vmatprep.subr.mxu0 0.0
        %1855 = vmatpush2.msra.mxu0 0.0
        %1856 = vmatprep.subr.mxu0 0.0
        %1857 = vmatpush2.msra.mxu0 0.0
        %1858 = vmatprep.subr.mxu0 0.0
        %1859 = vmatpush2.msra.mxu0 0.0
        %1860 = vmatprep.subr.mxu0 0.0
        %1861 = vmatpush2.msra.mxu0 0.0
        %1862 = vmatprep.subr.mxu0 0.0
        %1863 = vmatpush2.msra.mxu0 0.0
        %1864 = vmatprep.subr.mxu0 0.0
        %1865 = vmatpush2.msra.mxu0 0.0
        %1866 = vmatprep.subr.mxu0 0.0
        %1867 = vmatpush2.msra.mxu0 0.0
        %1868 = vmatprep.mubr.f32.mxu0 0.0
        %1869 = vmatmul.mubr.f32.gmra.mxu0 %v1799
        %v1870 = vpop.f32.mrf.mxu0
        %v1871 = vadd.f32 0.0, %v1870
        %v1872 = vpop.f32.mrf.mxu0
        %1873 = vmatprep.mubr.f32.mxu0 0.0
        %1874 = vmatmul.mubr.f32.gmra.mxu0 %v1802
        %v1875 = vpop.f32.mrf.mxu0
        %v1876 = vadd.f32 0.0, %v1875
        %v1877 = vpop.f32.mrf.mxu0
        %1878 = vdwg.mxu0
        %1879 = vrot.lane.b32.xlu0 %v510, 64
        %v1880 = vpop.permute.xlu0 %1879
        %1881 = vrot.lane.b32.xlu0 %v515, 64
        %v1882 = vpop.permute.xlu0 %1881
        %v1886 = vsel %vm1267, %v1438, 0
        %v1889 = vsel %vm1267, %v1439, 0
        %1891 = vmatprep.subr.mxu0 0.0
        %1892 = vmatpush1.msra.mxu0 0.0
        %1893 = vmatprep.subr.mxu0 0.0
        %1894 = vmatpush1.msra.mxu0 0.0
        %1895 = vmatprep.subr.mxu0 0.0
        %1896 = vmatpush1.msra.mxu0 0.0
        %1897 = vmatprep.subr.mxu0 0.0
        %1898 = vmatpush1.msra.mxu0 0.0
        %1899 = vmatprep.subr.mxu0 0.0
        %1900 = vmatpush1.msra.mxu0 0.0
        %1901 = vmatprep.subr.mxu0 0.0
        %1902 = vmatpush1.msra.mxu0 0.0
        %1903 = vmatprep.subr.mxu0 0.0
        %1904 = vmatpush1.msra.mxu0 0.0
        %1905 = vmatprep.subr.mxu0 0.0
        %1906 = vmatpush1.msra.mxu0 0.0
        %1907 = vmatprep.subr.mxu0 0.0
        %1908 = vmatpush1.msra.mxu0 0.0
        %1909 = vmatprep.subr.mxu0 0.0
        %1910 = vmatpush1.msra.mxu0 0.0
        %1911 = vmatprep.subr.mxu0 0.0
        %1912 = vmatpush1.msra.mxu0 0.0
        %1913 = vmatprep.subr.mxu0 0.0
        %1914 = vmatpush1.msra.mxu0 0.0
        %1915 = vmatprep.subr.mxu0 0.0
        %1916 = vmatpush1.msra.mxu0 0.0
        %1917 = vmatprep.subr.mxu0 0.0
        %1918 = vmatpush1.msra.mxu0 0.0
        %1919 = vmatprep.subr.mxu0 0.0
        %1920 = vmatpush1.msra.mxu0 %v1882
        %1921 = vmatprep.subr.mxu0 0.0
        %1922 = vmatpush1.msra.mxu0 %v1880
        %1923 = vmatprep.subr.mxu0 0.0
        %1924 = vmatpush2.msra.mxu0 0.0
        %1925 = vmatprep.subr.mxu0 0.0
        %1926 = vmatpush2.msra.mxu0 0.0
        %1927 = vmatprep.subr.mxu0 0.0
        %1928 = vmatpush2.msra.mxu0 0.0
        %1929 = vmatprep.subr.mxu0 0.0
        %1930 = vmatpush2.msra.mxu0 0.0
        %1931 = vmatprep.subr.mxu0 0.0
        %1932 = vmatpush2.msra.mxu0 0.0
        %1933 = vmatprep.subr.mxu0 0.0
        %1934 = vmatpush2.msra.mxu0 0.0
        %1935 = vmatprep.subr.mxu0 0.0
        %1936 = vmatpush2.msra.mxu0 0.0
        %1937 = vmatprep.subr.mxu0 0.0
        %1938 = vmatpush2.msra.mxu0 0.0
        %1939 = vmatprep.subr.mxu0 0.0
        %1940 = vmatpush2.msra.mxu0 0.0
        %1941 = vmatprep.subr.mxu0 0.0
        %1942 = vmatpush2.msra.mxu0 0.0
        %1943 = vmatprep.subr.mxu0 0.0
        %1944 = vmatpush2.msra.mxu0 0.0
        %1945 = vmatprep.subr.mxu0 0.0
        %1946 = vmatpush2.msra.mxu0 0.0
        %1947 = vmatprep.subr.mxu0 0.0
        %1948 = vmatpush2.msra.mxu0 0.0
        %1949 = vmatprep.subr.mxu0 0.0
        %1950 = vmatpush2.msra.mxu0 0.0
        %1951 = vmatprep.subr.mxu0 0.0
        %1952 = vmatpush2.msra.mxu0 0.0
        %1953 = vmatprep.subr.mxu0 0.0
        %1954 = vmatpush2.msra.mxu0 0.0
        %1955 = vmatprep.mubr.f32.mxu0 0.0
        %1956 = vmatmul.mubr.f32.gmra.mxu0 %v1886
        %v1957 = vpop.f32.mrf.mxu0
        %v1958 = vadd.f32 0.0, %v1957
        %v1959 = vpop.f32.mrf.mxu0
        %1960 = vmatprep.mubr.f32.mxu0 0.0
        %1961 = vmatmul.mubr.f32.gmra.mxu0 %v1889
        %v1962 = vpop.f32.mrf.mxu0
        %v1963 = vadd.f32 0.0, %v1962
        %v1964 = vpop.f32.mrf.mxu0
        %1965 = vdwg.mxu0
        %1966 = vrot.lane.b32.xlu0 %v520, 64
        %v1967 = vpop.permute.xlu0 %1966
        %1968 = vrot.lane.b32.xlu0 %v525, 64
        %v1969 = vpop.permute.xlu0 %1968
        %v1973 = vsel %vm1267, %v1440, 0
        %v1976 = vsel %vm1267, %v1441, 0
        %1978 = vmatprep.subr.mxu0 0.0
        %1979 = vmatpush1.msra.mxu0 0.0
        %1980 = vmatprep.subr.mxu0 0.0
        %1981 = vmatpush1.msra.mxu0 0.0
        %1982 = vmatprep.subr.mxu0 0.0
        %1983 = vmatpush1.msra.mxu0 0.0
        %1984 = vmatprep.subr.mxu0 0.0
        %1985 = vmatpush1.msra.mxu0 0.0
        %1986 = vmatprep.subr.mxu0 0.0
        %1987 = vmatpush1.msra.mxu0 0.0
        %1988 = vmatprep.subr.mxu0 0.0
        %1989 = vmatpush1.msra.mxu0 0.0
        %1990 = vmatprep.subr.mxu0 0.0
        %1991 = vmatpush1.msra.mxu0 0.0
        %1992 = vmatprep.subr.mxu0 0.0
        %1993 = vmatpush1.msra.mxu0 0.0
        %1994 = vmatprep.subr.mxu0 0.0
        %1995 = vmatpush1.msra.mxu0 0.0
        %1996 = vmatprep.subr.mxu0 0.0
        %1997 = vmatpush1.msra.mxu0 0.0
        %1998 = vmatprep.subr.mxu0 0.0
        %1999 = vmatpush1.msra.mxu0 0.0
        %2000 = vmatprep.subr.mxu0 0.0
        %2001 = vmatpush1.msra.mxu0 0.0
        %2002 = vmatprep.subr.mxu0 0.0
        %2003 = vmatpush1.msra.mxu0 0.0
        %2004 = vmatprep.subr.mxu0 0.0
        %2005 = vmatpush1.msra.mxu0 0.0
        %2006 = vmatprep.subr.mxu0 0.0
        %2007 = vmatpush1.msra.mxu0 %v1969
        %2008 = vmatprep.subr.mxu0 0.0
        %2009 = vmatpush1.msra.mxu0 %v1967
        %2010 = vmatprep.subr.mxu0 0.0
        %2011 = vmatpush2.msra.mxu0 0.0
        %2012 = vmatprep.subr.mxu0 0.0
        %2013 = vmatpush2.msra.mxu0 0.0
        %2014 = vmatprep.subr.mxu0 0.0
        %2015 = vmatpush2.msra.mxu0 0.0
        %2016 = vmatprep.subr.mxu0 0.0
        %2017 = vmatpush2.msra.mxu0 0.0
        %2018 = vmatprep.subr.mxu0 0.0
        %2019 = vmatpush2.msra.mxu0 0.0
        %2020 = vmatprep.subr.mxu0 0.0
        %2021 = vmatpush2.msra.mxu0 0.0
        %2022 = vmatprep.subr.mxu0 0.0
        %2023 = vmatpush2.msra.mxu0 0.0
        %2024 = vmatprep.subr.mxu0 0.0
        %2025 = vmatpush2.msra.mxu0 0.0
        %2026 = vmatprep.subr.mxu0 0.0
        %2027 = vmatpush2.msra.mxu0 0.0
        %2028 = vmatprep.subr.mxu0 0.0
        %2029 = vmatpush2.msra.mxu0 0.0
        %2030 = vmatprep.subr.mxu0 0.0
        %2031 = vmatpush2.msra.mxu0 0.0
        %2032 = vmatprep.subr.mxu0 0.0
        %2033 = vmatpush2.msra.mxu0 0.0
        %2034 = vmatprep.subr.mxu0 0.0
        %2035 = vmatpush2.msra.mxu0 0.0
        %2036 = vmatprep.subr.mxu0 0.0
        %2037 = vmatpush2.msra.mxu0 0.0
        %2038 = vmatprep.subr.mxu0 0.0
        %2039 = vmatpush2.msra.mxu0 0.0
        %2040 = vmatprep.subr.mxu0 0.0
        %2041 = vmatpush2.msra.mxu0 0.0
        %2042 = vmatprep.mubr.f32.mxu0 0.0
        %2043 = vmatmul.mubr.f32.gmra.mxu0 %v1973
        %v2044 = vpop.f32.mrf.mxu0
        %v2045 = vadd.f32 0.0, %v2044
        %v2046 = vpop.f32.mrf.mxu0
        %2047 = vmatprep.mubr.f32.mxu0 0.0
        %2048 = vmatmul.mubr.f32.gmra.mxu0 %v1976
        %v2049 = vpop.f32.mrf.mxu0
        %v2050 = vadd.f32 0.0, %v2049
        %v2051 = vpop.f32.mrf.mxu0
        %2052 = vdwg.mxu0
        %2053 = vrot.lane.b32.xlu0 %v530, 64
        %v2054 = vpop.permute.xlu0 %2053
        %2055 = vrot.lane.b32.xlu0 %v535, 64
        %v2056 = vpop.permute.xlu0 %2055
        %v2060 = vsel %vm1267, %v1442, 0
        %v2063 = vsel %vm1267, %v1443, 0
        %2065 = vmatprep.subr.mxu0 0.0
        %2066 = vmatpush1.msra.mxu0 0.0
        %2067 = vmatprep.subr.mxu0 0.0
        %2068 = vmatpush1.msra.mxu0 0.0
        %2069 = vmatprep.subr.mxu0 0.0
        %2070 = vmatpush1.msra.mxu0 0.0
        %2071 = vmatprep.subr.mxu0 0.0
        %2072 = vmatpush1.msra.mxu0 0.0
        %2073 = vmatprep.subr.mxu0 0.0
        %2074 = vmatpush1.msra.mxu0 0.0
        %2075 = vmatprep.subr.mxu0 0.0
        %2076 = vmatpush1.msra.mxu0 0.0
        %2077 = vmatprep.subr.mxu0 0.0
        %2078 = vmatpush1.msra.mxu0 0.0
        %2079 = vmatprep.subr.mxu0 0.0
        %2080 = vmatpush1.msra.mxu0 0.0
        %2081 = vmatprep.subr.mxu0 0.0
        %2082 = vmatpush1.msra.mxu0 0.0
        %2083 = vmatprep.subr.mxu0 0.0
        %2084 = vmatpush1.msra.mxu0 0.0
        %2085 = vmatprep.subr.mxu0 0.0
        %2086 = vmatpush1.msra.mxu0 0.0
        %2087 = vmatprep.subr.mxu0 0.0
        %2088 = vmatpush1.msra.mxu0 0.0
        %2089 = vmatprep.subr.mxu0 0.0
        %2090 = vmatpush1.msra.mxu0 0.0
        %2091 = vmatprep.subr.mxu0 0.0
        %2092 = vmatpush1.msra.mxu0 0.0
        %2093 = vmatprep.subr.mxu0 0.0
        %2094 = vmatpush1.msra.mxu0 %v2056
        %2095 = vmatprep.subr.mxu0 0.0
        %2096 = vmatpush1.msra.mxu0 %v2054
        %2097 = vmatprep.subr.mxu0 0.0
        %2098 = vmatpush2.msra.mxu0 0.0
        %2099 = vmatprep.subr.mxu0 0.0
        %2100 = vmatpush2.msra.mxu0 0.0
        %2101 = vmatprep.subr.mxu0 0.0
        %2102 = vmatpush2.msra.mxu0 0.0
        %2103 = vmatprep.subr.mxu0 0.0
        %2104 = vmatpush2.msra.mxu0 0.0
        %2105 = vmatprep.subr.mxu0 0.0
        %2106 = vmatpush2.msra.mxu0 0.0
        %2107 = vmatprep.subr.mxu0 0.0
        %2108 = vmatpush2.msra.mxu0 0.0
        %2109 = vmatprep.subr.mxu0 0.0
        %2110 = vmatpush2.msra.mxu0 0.0
        %2111 = vmatprep.subr.mxu0 0.0
        %2112 = vmatpush2.msra.mxu0 0.0
        %2113 = vmatprep.subr.mxu0 0.0
        %2114 = vmatpush2.msra.mxu0 0.0
        %2115 = vmatprep.subr.mxu0 0.0
        %2116 = vmatpush2.msra.mxu0 0.0
        %2117 = vmatprep.subr.mxu0 0.0
        %2118 = vmatpush2.msra.mxu0 0.0
        %2119 = vmatprep.subr.mxu0 0.0
        %2120 = vmatpush2.msra.mxu0 0.0
        %2121 = vmatprep.subr.mxu0 0.0
        %2122 = vmatpush2.msra.mxu0 0.0
        %2123 = vmatprep.subr.mxu0 0.0
        %2124 = vmatpush2.msra.mxu0 0.0
        %2125 = vmatprep.subr.mxu0 0.0
        %2126 = vmatpush2.msra.mxu0 0.0
        %2127 = vmatprep.subr.mxu0 0.0
        %2128 = vmatpush2.msra.mxu0 0.0
        %2129 = vmatprep.mubr.f32.mxu0 0.0
        %2130 = vmatmul.mubr.f32.gmra.mxu0 %v2060
        %v2131 = vpop.f32.mrf.mxu0
        %v2132 = vadd.f32 0.0, %v2131
        %v2133 = vpop.f32.mrf.mxu0
        %2134 = vmatprep.mubr.f32.mxu0 0.0
        %2135 = vmatmul.mubr.f32.gmra.mxu0 %v2063
        %v2136 = vpop.f32.mrf.mxu0
        %v2137 = vadd.f32 0.0, %v2136
        %v2138 = vpop.f32.mrf.mxu0
        %2139 = vdwg.mxu0
        %2140 = vst.msk [vmem:[#allocation2] sm:$0xff] %vm560, %v1523
        %2141 = vst.msk [vmem:[#allocation2 + $0x8] sm:$0xff] %vm560, %v1528
        %2142 = vst.msk [vmem:[#allocation2 + $0x10] sm:$0xff] %vm560, %v1610
        %2143 = vst.msk [vmem:[#allocation2 + $0x18] sm:$0xff] %vm560, %v1615
        %2144 = vst.msk [vmem:[#allocation2 + $0x20] sm:$0xff] %vm560, %v1697
        %2145 = vst.msk [vmem:[#allocation2 + $0x28] sm:$0xff] %vm560, %v1702
        %2146 = vst.msk [vmem:[#allocation2 + $0x30] sm:$0xff] %vm560, %v1784
        %2147 = vst.msk [vmem:[#allocation2 + $0x38] sm:$0xff] %vm560, %v1789
        %2148 = vst.msk [vmem:[#allocation2 + $0x40] sm:$0xff] %vm560, %v1871
        %2149 = vst.msk [vmem:[#allocation2 + $0x48] sm:$0xff] %vm560, %v1876
        %2150 = vst.msk [vmem:[#allocation2 + $0x50] sm:$0xff] %vm560, %v1958
        %2151 = vst.msk [vmem:[#allocation2 + $0x58] sm:$0xff] %vm560, %v1963
        %2152 = vst.msk [vmem:[#allocation2 + $0x60] sm:$0xff] %vm560, %v2045
        %2153 = vst.msk [vmem:[#allocation2 + $0x68] sm:$0xff] %vm560, %v2050
        %2154 = vst.msk [vmem:[#allocation2 + $0x70] sm:$0xff] %vm560, %v2132
        %2155 = vst.msk [vmem:[#allocation2 + $0x78] sm:$0xff] %vm560, %v2137
        %s2156 = scalar_lea.vmem [#allocation9], 128
        %v2157 = vld [vmem:[%s2156] sm:$0xff]
        %v2158 = vld [vmem:[%s2156 + $0x8] sm:$0xff]
        %v2159 = vld [vmem:[%s2156 + $0x10] sm:$0xff]
        %v2160 = vld [vmem:[%s2156 + $0x18] sm:$0xff]
        %v2161 = vld [vmem:[%s2156 + $0x20] sm:$0xff]
        %v2162 = vld [vmem:[%s2156 + $0x28] sm:$0xff]
        %v2163 = vld [vmem:[%s2156 + $0x30] sm:$0xff]
        %v2164 = vld [vmem:[%s2156 + $0x38] sm:$0xff]
        %v2165 = vld [vmem:[%s2156 + $0x40] sm:$0xff]
        %v2166 = vld [vmem:[%s2156 + $0x48] sm:$0xff]
        %v2167 = vld [vmem:[%s2156 + $0x50] sm:$0xff]
        %v2168 = vld [vmem:[%s2156 + $0x58] sm:$0xff]
        %v2169 = vld [vmem:[%s2156 + $0x60] sm:$0xff]
        %v2170 = vld [vmem:[%s2156 + $0x68] sm:$0xff]
        %v2171 = vld [vmem:[%s2156 + $0x70] sm:$0xff]
        %v2172 = vld [vmem:[%s2156 + $0x78] sm:$0xff]
        %2173 = vrot.lane.b32.xlu0 %v460, 120
        %v2174 = vpop.permute.xlu0 %2173
        %2175 = vrot.lane.b32.xlu0 %v465, 120
        %v2176 = vpop.permute.xlu0 %2175
        %2177 = vrot.lane.b32.xlu0 %v460, 88
        %v2178 = vpop.permute.xlu0 %2177
        %2179 = vrot.lane.b32.xlu0 %v465, 88
        %v2180 = vpop.permute.xlu0 %2179
        %v2181 = vsel %vm560, %v2174, 0
        %v2183 = vsel %vm560, %v2176, 0
        %v2185 = vsel %vm560, %v2178, 0
        %v2187 = vsel %vm560, %v2180, 0
        %2189 = vmatprep.subr.mxu0 0.0
        %2190 = vmatpush1.xpose.msra.mxu0 0.0
        %2191 = vmatprep.subr.mxu0 0.0
        %2192 = vmatpush1.xpose.msra.mxu0 0.0
        %2193 = vmatprep.subr.mxu0 0.0
        %2194 = vmatpush1.xpose.msra.mxu0 0.0
        %2195 = vmatprep.subr.mxu0 0.0
        %2196 = vmatpush1.xpose.msra.mxu0 0.0
        %2197 = vmatprep.subr.mxu0 0.0
        %2198 = vmatpush1.xpose.msra.mxu0 0.0
        %2199 = vmatprep.subr.mxu0 0.0
        %2200 = vmatpush1.xpose.msra.mxu0 0.0
        %2201 = vmatprep.subr.mxu0 0.0
        %2202 = vmatpush1.xpose.msra.mxu0 0.0
        %2203 = vmatprep.subr.mxu0 0.0
        %2204 = vmatpush1.xpose.msra.mxu0 0.0
        %2205 = vmatprep.subr.mxu0 0.0
        %2206 = vmatpush1.xpose.msra.mxu0 0.0
        %2207 = vmatprep.subr.mxu0 0.0
        %2208 = vmatpush1.xpose.msra.mxu0 0.0
        %2209 = vmatprep.subr.mxu0 0.0
        %2210 = vmatpush1.xpose.msra.mxu0 0.0
        %2211 = vmatprep.subr.mxu0 0.0
        %2212 = vmatpush1.xpose.msra.mxu0 0.0
        %2213 = vmatprep.subr.mxu0 0.0
        %2214 = vmatpush1.xpose.msra.mxu0 0.0
        %2215 = vmatprep.subr.mxu0 0.0
        %2216 = vmatpush1.xpose.msra.mxu0 0.0
        %2217 = vmatprep.subr.mxu0 0.0
        %2218 = vmatpush1.xpose.msra.mxu0 %v2187
        %2219 = vmatprep.subr.mxu0 0.0
        %2220 = vmatpush1.xpose.msra.mxu0 %v2185
        %2221 = vmatprep.subr.mxu0 0.0
        %2222 = vmatpush2.xpose.msra.mxu0 0.0
        %2223 = vmatprep.subr.mxu0 0.0
        %2224 = vmatpush2.xpose.msra.mxu0 0.0
        %2225 = vmatprep.subr.mxu0 0.0
        %2226 = vmatpush2.xpose.msra.mxu0 0.0
        %2227 = vmatprep.subr.mxu0 0.0
        %2228 = vmatpush2.xpose.msra.mxu0 0.0
        %2229 = vmatprep.subr.mxu0 0.0
        %2230 = vmatpush2.xpose.msra.mxu0 0.0
        %2231 = vmatprep.subr.mxu0 0.0
        %2232 = vmatpush2.xpose.msra.mxu0 0.0
        %2233 = vmatprep.subr.mxu0 0.0
        %2234 = vmatpush2.xpose.msra.mxu0 0.0
        %2235 = vmatprep.subr.mxu0 0.0
        %2236 = vmatpush2.xpose.msra.mxu0 0.0
        %2237 = vmatprep.subr.mxu0 0.0
        %2238 = vmatpush2.xpose.msra.mxu0 0.0
        %2239 = vmatprep.subr.mxu0 0.0
        %2240 = vmatpush2.xpose.msra.mxu0 0.0
        %2241 = vmatprep.subr.mxu0 0.0
        %2242 = vmatpush2.xpose.msra.mxu0 0.0
        %2243 = vmatprep.subr.mxu0 0.0
        %2244 = vmatpush2.xpose.msra.mxu0 0.0
        %2245 = vmatprep.subr.mxu0 0.0
        %2246 = vmatpush2.xpose.msra.mxu0 0.0
        %2247 = vmatprep.subr.mxu0 0.0
        %2248 = vmatpush2.xpose.msra.mxu0 0.0
        %2249 = vmatprep.subr.mxu0 0.0
        %2250 = vmatpush2.xpose.msra.mxu0 0.0
        %2251 = vmatprep.subr.mxu0 0.0
        %2252 = vmatpush2.xpose.msra.mxu0 0.0
        %2253 = vmatprep.mubr.f32.mxu0 0.0
        %2254 = vmatmul.mubr.f32.gmra.mxu0 %v2181
        %v2255 = vpop.f32.mrf.mxu0
        %v2256 = vadd.f32 %v2157, %v2255
        %v2257 = vpop.f32.mrf.mxu0
        %2258 = vmatprep.mubr.f32.mxu0 0.0
        %2259 = vmatmul.mubr.f32.gmra.mxu0 %v2183
        %v2260 = vpop.f32.mrf.mxu0
        %v2261 = vadd.f32 %v2158, %v2260
        %v2262 = vpop.f32.mrf.mxu0
        %2263 = vdwg.mxu0
        %2264 = vrot.lane.b32.xlu0 %v470, 120
        %v2265 = vpop.permute.xlu0 %2264
        %2266 = vrot.lane.b32.xlu0 %v475, 120
        %v2267 = vpop.permute.xlu0 %2266
        %2268 = vrot.lane.b32.xlu0 %v470, 88
        %v2269 = vpop.permute.xlu0 %2268
        %2270 = vrot.lane.b32.xlu0 %v475, 88
        %v2271 = vpop.permute.xlu0 %2270
        %v2272 = vsel %vm560, %v2265, 0
        %v2274 = vsel %vm560, %v2267, 0
        %v2276 = vsel %vm560, %v2269, 0
        %v2278 = vsel %vm560, %v2271, 0
        %2280 = vmatprep.subr.mxu0 0.0
        %2281 = vmatpush1.xpose.msra.mxu0 0.0
        %2282 = vmatprep.subr.mxu0 0.0
        %2283 = vmatpush1.xpose.msra.mxu0 0.0
        %2284 = vmatprep.subr.mxu0 0.0
        %2285 = vmatpush1.xpose.msra.mxu0 0.0
        %2286 = vmatprep.subr.mxu0 0.0
        %2287 = vmatpush1.xpose.msra.mxu0 0.0
        %2288 = vmatprep.subr.mxu0 0.0
        %2289 = vmatpush1.xpose.msra.mxu0 0.0
        %2290 = vmatprep.subr.mxu0 0.0
        %2291 = vmatpush1.xpose.msra.mxu0 0.0
        %2292 = vmatprep.subr.mxu0 0.0
        %2293 = vmatpush1.xpose.msra.mxu0 0.0
        %2294 = vmatprep.subr.mxu0 0.0
        %2295 = vmatpush1.xpose.msra.mxu0 0.0
        %2296 = vmatprep.subr.mxu0 0.0
        %2297 = vmatpush1.xpose.msra.mxu0 0.0
        %2298 = vmatprep.subr.mxu0 0.0
        %2299 = vmatpush1.xpose.msra.mxu0 0.0
        %2300 = vmatprep.subr.mxu0 0.0
        %2301 = vmatpush1.xpose.msra.mxu0 0.0
        %2302 = vmatprep.subr.mxu0 0.0
        %2303 = vmatpush1.xpose.msra.mxu0 0.0
        %2304 = vmatprep.subr.mxu0 0.0
        %2305 = vmatpush1.xpose.msra.mxu0 0.0
        %2306 = vmatprep.subr.mxu0 0.0
        %2307 = vmatpush1.xpose.msra.mxu0 0.0
        %2308 = vmatprep.subr.mxu0 0.0
        %2309 = vmatpush1.xpose.msra.mxu0 %v2278
        %2310 = vmatprep.subr.mxu0 0.0
        %2311 = vmatpush1.xpose.msra.mxu0 %v2276
        %2312 = vmatprep.subr.mxu0 0.0
        %2313 = vmatpush2.xpose.msra.mxu0 0.0
        %2314 = vmatprep.subr.mxu0 0.0
        %2315 = vmatpush2.xpose.msra.mxu0 0.0
        %2316 = vmatprep.subr.mxu0 0.0
        %2317 = vmatpush2.xpose.msra.mxu0 0.0
        %2318 = vmatprep.subr.mxu0 0.0
        %2319 = vmatpush2.xpose.msra.mxu0 0.0
        %2320 = vmatprep.subr.mxu0 0.0
        %2321 = vmatpush2.xpose.msra.mxu0 0.0
        %2322 = vmatprep.subr.mxu0 0.0
        %2323 = vmatpush2.xpose.msra.mxu0 0.0
        %2324 = vmatprep.subr.mxu0 0.0
        %2325 = vmatpush2.xpose.msra.mxu0 0.0
        %2326 = vmatprep.subr.mxu0 0.0
        %2327 = vmatpush2.xpose.msra.mxu0 0.0
        %2328 = vmatprep.subr.mxu0 0.0
        %2329 = vmatpush2.xpose.msra.mxu0 0.0
        %2330 = vmatprep.subr.mxu0 0.0
        %2331 = vmatpush2.xpose.msra.mxu0 0.0
        %2332 = vmatprep.subr.mxu0 0.0
        %2333 = vmatpush2.xpose.msra.mxu0 0.0
        %2334 = vmatprep.subr.mxu0 0.0
        %2335 = vmatpush2.xpose.msra.mxu0 0.0
        %2336 = vmatprep.subr.mxu0 0.0
        %2337 = vmatpush2.xpose.msra.mxu0 0.0
        %2338 = vmatprep.subr.mxu0 0.0
        %2339 = vmatpush2.xpose.msra.mxu0 0.0
        %2340 = vmatprep.subr.mxu0 0.0
        %2341 = vmatpush2.xpose.msra.mxu0 0.0
        %2342 = vmatprep.subr.mxu0 0.0
        %2343 = vmatpush2.xpose.msra.mxu0 0.0
        %2344 = vmatprep.mubr.f32.mxu0 0.0
        %2345 = vmatmul.mubr.f32.gmra.mxu0 %v2272
        %v2346 = vpop.f32.mrf.mxu0
        %v2347 = vadd.f32 %v2159, %v2346
        %v2348 = vpop.f32.mrf.mxu0
        %2349 = vmatprep.mubr.f32.mxu0 0.0
        %2350 = vmatmul.mubr.f32.gmra.mxu0 %v2274
        %v2351 = vpop.f32.mrf.mxu0
        %v2352 = vadd.f32 %v2160, %v2351
        %v2353 = vpop.f32.mrf.mxu0
        %2354 = vdwg.mxu0
        %2355 = vrot.lane.b32.xlu0 %v480, 120
        %v2356 = vpop.permute.xlu0 %2355
        %2357 = vrot.lane.b32.xlu0 %v485, 120
        %v2358 = vpop.permute.xlu0 %2357
        %2359 = vrot.lane.b32.xlu0 %v480, 88
        %v2360 = vpop.permute.xlu0 %2359
        %2361 = vrot.lane.b32.xlu0 %v485, 88
        %v2362 = vpop.permute.xlu0 %2361
        %v2363 = vsel %vm560, %v2356, 0
        %v2365 = vsel %vm560, %v2358, 0
        %v2367 = vsel %vm560, %v2360, 0
        %v2369 = vsel %vm560, %v2362, 0
        %2371 = vmatprep.subr.mxu0 0.0
        %2372 = vmatpush1.xpose.msra.mxu0 0.0
        %2373 = vmatprep.subr.mxu0 0.0
        %2374 = vmatpush1.xpose.msra.mxu0 0.0
        %2375 = vmatprep.subr.mxu0 0.0
        %2376 = vmatpush1.xpose.msra.mxu0 0.0
        %2377 = vmatprep.subr.mxu0 0.0
        %2378 = vmatpush1.xpose.msra.mxu0 0.0
        %2379 = vmatprep.subr.mxu0 0.0
        %2380 = vmatpush1.xpose.msra.mxu0 0.0
        %2381 = vmatprep.subr.mxu0 0.0
        %2382 = vmatpush1.xpose.msra.mxu0 0.0
        %2383 = vmatprep.subr.mxu0 0.0
        %2384 = vmatpush1.xpose.msra.mxu0 0.0
        %2385 = vmatprep.subr.mxu0 0.0
        %2386 = vmatpush1.xpose.msra.mxu0 0.0
        %2387 = vmatprep.subr.mxu0 0.0
        %2388 = vmatpush1.xpose.msra.mxu0 0.0
        %2389 = vmatprep.subr.mxu0 0.0
        %2390 = vmatpush1.xpose.msra.mxu0 0.0
        %2391 = vmatprep.subr.mxu0 0.0
        %2392 = vmatpush1.xpose.msra.mxu0 0.0
        %2393 = vmatprep.subr.mxu0 0.0
        %2394 = vmatpush1.xpose.msra.mxu0 0.0
        %2395 = vmatprep.subr.mxu0 0.0
        %2396 = vmatpush1.xpose.msra.mxu0 0.0
        %2397 = vmatprep.subr.mxu0 0.0
        %2398 = vmatpush1.xpose.msra.mxu0 0.0
        %2399 = vmatprep.subr.mxu0 0.0
        %2400 = vmatpush1.xpose.msra.mxu0 %v2369
        %2401 = vmatprep.subr.mxu0 0.0
        %2402 = vmatpush1.xpose.msra.mxu0 %v2367
        %2403 = vmatprep.subr.mxu0 0.0
        %2404 = vmatpush2.xpose.msra.mxu0 0.0
        %2405 = vmatprep.subr.mxu0 0.0
        %2406 = vmatpush2.xpose.msra.mxu0 0.0
        %2407 = vmatprep.subr.mxu0 0.0
        %2408 = vmatpush2.xpose.msra.mxu0 0.0
        %2409 = vmatprep.subr.mxu0 0.0
        %2410 = vmatpush2.xpose.msra.mxu0 0.0
        %2411 = vmatprep.subr.mxu0 0.0
        %2412 = vmatpush2.xpose.msra.mxu0 0.0
        %2413 = vmatprep.subr.mxu0 0.0
        %2414 = vmatpush2.xpose.msra.mxu0 0.0
        %2415 = vmatprep.subr.mxu0 0.0
        %2416 = vmatpush2.xpose.msra.mxu0 0.0
        %2417 = vmatprep.subr.mxu0 0.0
        %2418 = vmatpush2.xpose.msra.mxu0 0.0
        %2419 = vmatprep.subr.mxu0 0.0
        %2420 = vmatpush2.xpose.msra.mxu0 0.0
        %2421 = vmatprep.subr.mxu0 0.0
        %2422 = vmatpush2.xpose.msra.mxu0 0.0
        %2423 = vmatprep.subr.mxu0 0.0
        %2424 = vmatpush2.xpose.msra.mxu0 0.0
        %2425 = vmatprep.subr.mxu0 0.0
        %2426 = vmatpush2.xpose.msra.mxu0 0.0
        %2427 = vmatprep.subr.mxu0 0.0
        %2428 = vmatpush2.xpose.msra.mxu0 0.0
        %2429 = vmatprep.subr.mxu0 0.0
        %2430 = vmatpush2.xpose.msra.mxu0 0.0
        %2431 = vmatprep.subr.mxu0 0.0
        %2432 = vmatpush2.xpose.msra.mxu0 0.0
        %2433 = vmatprep.subr.mxu0 0.0
        %2434 = vmatpush2.xpose.msra.mxu0 0.0
        %2435 = vmatprep.mubr.f32.mxu0 0.0
        %2436 = vmatmul.mubr.f32.gmra.mxu0 %v2363
        %v2437 = vpop.f32.mrf.mxu0
        %v2438 = vadd.f32 %v2161, %v2437
        %v2439 = vpop.f32.mrf.mxu0
        %2440 = vmatprep.mubr.f32.mxu0 0.0
        %2441 = vmatmul.mubr.f32.gmra.mxu0 %v2365
        %v2442 = vpop.f32.mrf.mxu0
        %v2443 = vadd.f32 %v2162, %v2442
        %v2444 = vpop.f32.mrf.mxu0
        %2445 = vdwg.mxu0
        %2446 = vrot.lane.b32.xlu0 %v490, 120
        %v2447 = vpop.permute.xlu0 %2446
        %2448 = vrot.lane.b32.xlu0 %v495, 120
        %v2449 = vpop.permute.xlu0 %2448
        %2450 = vrot.lane.b32.xlu0 %v490, 88
        %v2451 = vpop.permute.xlu0 %2450
        %2452 = vrot.lane.b32.xlu0 %v495, 88
        %v2453 = vpop.permute.xlu0 %2452
        %v2454 = vsel %vm560, %v2447, 0
        %v2456 = vsel %vm560, %v2449, 0
        %v2458 = vsel %vm560, %v2451, 0
        %v2460 = vsel %vm560, %v2453, 0
        %2462 = vmatprep.subr.mxu0 0.0
        %2463 = vmatpush1.xpose.msra.mxu0 0.0
        %2464 = vmatprep.subr.mxu0 0.0
        %2465 = vmatpush1.xpose.msra.mxu0 0.0
        %2466 = vmatprep.subr.mxu0 0.0
        %2467 = vmatpush1.xpose.msra.mxu0 0.0
        %2468 = vmatprep.subr.mxu0 0.0
        %2469 = vmatpush1.xpose.msra.mxu0 0.0
        %2470 = vmatprep.subr.mxu0 0.0
        %2471 = vmatpush1.xpose.msra.mxu0 0.0
        %2472 = vmatprep.subr.mxu0 0.0
        %2473 = vmatpush1.xpose.msra.mxu0 0.0
        %2474 = vmatprep.subr.mxu0 0.0
        %2475 = vmatpush1.xpose.msra.mxu0 0.0
        %2476 = vmatprep.subr.mxu0 0.0
        %2477 = vmatpush1.xpose.msra.mxu0 0.0
        %2478 = vmatprep.subr.mxu0 0.0
        %2479 = vmatpush1.xpose.msra.mxu0 0.0
        %2480 = vmatprep.subr.mxu0 0.0
        %2481 = vmatpush1.xpose.msra.mxu0 0.0
        %2482 = vmatprep.subr.mxu0 0.0
        %2483 = vmatpush1.xpose.msra.mxu0 0.0
        %2484 = vmatprep.subr.mxu0 0.0
        %2485 = vmatpush1.xpose.msra.mxu0 0.0
        %2486 = vmatprep.subr.mxu0 0.0
        %2487 = vmatpush1.xpose.msra.mxu0 0.0
        %2488 = vmatprep.subr.mxu0 0.0
        %2489 = vmatpush1.xpose.msra.mxu0 0.0
        %2490 = vmatprep.subr.mxu0 0.0
        %2491 = vmatpush1.xpose.msra.mxu0 %v2460
        %2492 = vmatprep.subr.mxu0 0.0
        %2493 = vmatpush1.xpose.msra.mxu0 %v2458
        %2494 = vmatprep.subr.mxu0 0.0
        %2495 = vmatpush2.xpose.msra.mxu0 0.0
        %2496 = vmatprep.subr.mxu0 0.0
        %2497 = vmatpush2.xpose.msra.mxu0 0.0
        %2498 = vmatprep.subr.mxu0 0.0
        %2499 = vmatpush2.xpose.msra.mxu0 0.0
        %2500 = vmatprep.subr.mxu0 0.0
        %2501 = vmatpush2.xpose.msra.mxu0 0.0
        %2502 = vmatprep.subr.mxu0 0.0
        %2503 = vmatpush2.xpose.msra.mxu0 0.0
        %2504 = vmatprep.subr.mxu0 0.0
        %2505 = vmatpush2.xpose.msra.mxu0 0.0
        %2506 = vmatprep.subr.mxu0 0.0
        %2507 = vmatpush2.xpose.msra.mxu0 0.0
        %2508 = vmatprep.subr.mxu0 0.0
        %2509 = vmatpush2.xpose.msra.mxu0 0.0
        %2510 = vmatprep.subr.mxu0 0.0
        %2511 = vmatpush2.xpose.msra.mxu0 0.0
        %2512 = vmatprep.subr.mxu0 0.0
        %2513 = vmatpush2.xpose.msra.mxu0 0.0
        %2514 = vmatprep.subr.mxu0 0.0
        %2515 = vmatpush2.xpose.msra.mxu0 0.0
        %2516 = vmatprep.subr.mxu0 0.0
        %2517 = vmatpush2.xpose.msra.mxu0 0.0
        %2518 = vmatprep.subr.mxu0 0.0
        %2519 = vmatpush2.xpose.msra.mxu0 0.0
        %2520 = vmatprep.subr.mxu0 0.0
        %2521 = vmatpush2.xpose.msra.mxu0 0.0
        %2522 = vmatprep.subr.mxu0 0.0
        %2523 = vmatpush2.xpose.msra.mxu0 0.0
        %2524 = vmatprep.subr.mxu0 0.0
        %2525 = vmatpush2.xpose.msra.mxu0 0.0
        %2526 = vmatprep.mubr.f32.mxu0 0.0
        %2527 = vmatmul.mubr.f32.gmra.mxu0 %v2454
        %v2528 = vpop.f32.mrf.mxu0
        %v2529 = vadd.f32 %v2163, %v2528
        %v2530 = vpop.f32.mrf.mxu0
        %2531 = vmatprep.mubr.f32.mxu0 0.0
        %2532 = vmatmul.mubr.f32.gmra.mxu0 %v2456
        %v2533 = vpop.f32.mrf.mxu0
        %v2534 = vadd.f32 %v2164, %v2533
        %v2535 = vpop.f32.mrf.mxu0
        %2536 = vdwg.mxu0
        %2537 = vrot.lane.b32.xlu0 %v500, 120
        %v2538 = vpop.permute.xlu0 %2537
        %2539 = vrot.lane.b32.xlu0 %v505, 120
        %v2540 = vpop.permute.xlu0 %2539
        %2541 = vrot.lane.b32.xlu0 %v500, 88
        %v2542 = vpop.permute.xlu0 %2541
        %2543 = vrot.lane.b32.xlu0 %v505, 88
        %v2544 = vpop.permute.xlu0 %2543
        %v2545 = vsel %vm560, %v2538, 0
        %v2547 = vsel %vm560, %v2540, 0
        %v2549 = vsel %vm560, %v2542, 0
        %v2551 = vsel %vm560, %v2544, 0
        %2553 = vmatprep.subr.mxu0 0.0
        %2554 = vmatpush1.xpose.msra.mxu0 0.0
        %2555 = vmatprep.subr.mxu0 0.0
        %2556 = vmatpush1.xpose.msra.mxu0 0.0
        %2557 = vmatprep.subr.mxu0 0.0
        %2558 = vmatpush1.xpose.msra.mxu0 0.0
        %2559 = vmatprep.subr.mxu0 0.0
        %2560 = vmatpush1.xpose.msra.mxu0 0.0
        %2561 = vmatprep.subr.mxu0 0.0
        %2562 = vmatpush1.xpose.msra.mxu0 0.0
        %2563 = vmatprep.subr.mxu0 0.0
        %2564 = vmatpush1.xpose.msra.mxu0 0.0
        %2565 = vmatprep.subr.mxu0 0.0
        %2566 = vmatpush1.xpose.msra.mxu0 0.0
        %2567 = vmatprep.subr.mxu0 0.0
        %2568 = vmatpush1.xpose.msra.mxu0 0.0
        %2569 = vmatprep.subr.mxu0 0.0
        %2570 = vmatpush1.xpose.msra.mxu0 0.0
        %2571 = vmatprep.subr.mxu0 0.0
        %2572 = vmatpush1.xpose.msra.mxu0 0.0
        %2573 = vmatprep.subr.mxu0 0.0
        %2574 = vmatpush1.xpose.msra.mxu0 0.0
        %2575 = vmatprep.subr.mxu0 0.0
        %2576 = vmatpush1.xpose.msra.mxu0 0.0
        %2577 = vmatprep.subr.mxu0 0.0
        %2578 = vmatpush1.xpose.msra.mxu0 0.0
        %2579 = vmatprep.subr.mxu0 0.0
        %2580 = vmatpush1.xpose.msra.mxu0 0.0
        %2581 = vmatprep.subr.mxu0 0.0
        %2582 = vmatpush1.xpose.msra.mxu0 %v2551
        %2583 = vmatprep.subr.mxu0 0.0
        %2584 = vmatpush1.xpose.msra.mxu0 %v2549
        %2585 = vmatprep.subr.mxu0 0.0
        %2586 = vmatpush2.xpose.msra.mxu0 0.0
        %2587 = vmatprep.subr.mxu0 0.0
        %2588 = vmatpush2.xpose.msra.mxu0 0.0
        %2589 = vmatprep.subr.mxu0 0.0
        %2590 = vmatpush2.xpose.msra.mxu0 0.0
        %2591 = vmatprep.subr.mxu0 0.0
        %2592 = vmatpush2.xpose.msra.mxu0 0.0
        %2593 = vmatprep.subr.mxu0 0.0
        %2594 = vmatpush2.xpose.msra.mxu0 0.0
        %2595 = vmatprep.subr.mxu0 0.0
        %2596 = vmatpush2.xpose.msra.mxu0 0.0
        %2597 = vmatprep.subr.mxu0 0.0
        %2598 = vmatpush2.xpose.msra.mxu0 0.0
        %2599 = vmatprep.subr.mxu0 0.0
        %2600 = vmatpush2.xpose.msra.mxu0 0.0
        %2601 = vmatprep.subr.mxu0 0.0
        %2602 = vmatpush2.xpose.msra.mxu0 0.0
        %2603 = vmatprep.subr.mxu0 0.0
        %2604 = vmatpush2.xpose.msra.mxu0 0.0
        %2605 = vmatprep.subr.mxu0 0.0
        %2606 = vmatpush2.xpose.msra.mxu0 0.0
        %2607 = vmatprep.subr.mxu0 0.0
        %2608 = vmatpush2.xpose.msra.mxu0 0.0
        %2609 = vmatprep.subr.mxu0 0.0
        %2610 = vmatpush2.xpose.msra.mxu0 0.0
        %2611 = vmatprep.subr.mxu0 0.0
        %2612 = vmatpush2.xpose.msra.mxu0 0.0
        %2613 = vmatprep.subr.mxu0 0.0
        %2614 = vmatpush2.xpose.msra.mxu0 0.0
        %2615 = vmatprep.subr.mxu0 0.0
        %2616 = vmatpush2.xpose.msra.mxu0 0.0
        %2617 = vmatprep.mubr.f32.mxu0 0.0
        %2618 = vmatmul.mubr.f32.gmra.mxu0 %v2545
        %v2619 = vpop.f32.mrf.mxu0
        %v2620 = vadd.f32 %v2165, %v2619
        %v2621 = vpop.f32.mrf.mxu0
        %2622 = vmatprep.mubr.f32.mxu0 0.0
        %2623 = vmatmul.mubr.f32.gmra.mxu0 %v2547
        %v2624 = vpop.f32.mrf.mxu0
        %v2625 = vadd.f32 %v2166, %v2624
        %v2626 = vpop.f32.mrf.mxu0
        %2627 = vdwg.mxu0
        %2628 = vrot.lane.b32.xlu0 %v510, 120
        %v2629 = vpop.permute.xlu0 %2628
        %2630 = vrot.lane.b32.xlu0 %v515, 120
        %v2631 = vpop.permute.xlu0 %2630
        %2632 = vrot.lane.b32.xlu0 %v510, 88
        %v2633 = vpop.permute.xlu0 %2632
        %2634 = vrot.lane.b32.xlu0 %v515, 88
        %v2635 = vpop.permute.xlu0 %2634
        %v2636 = vsel %vm560, %v2629, 0
        %v2638 = vsel %vm560, %v2631, 0
        %v2640 = vsel %vm560, %v2633, 0
        %v2642 = vsel %vm560, %v2635, 0
        %2644 = vmatprep.subr.mxu0 0.0
        %2645 = vmatpush1.xpose.msra.mxu0 0.0
        %2646 = vmatprep.subr.mxu0 0.0
        %2647 = vmatpush1.xpose.msra.mxu0 0.0
        %2648 = vmatprep.subr.mxu0 0.0
        %2649 = vmatpush1.xpose.msra.mxu0 0.0
        %2650 = vmatprep.subr.mxu0 0.0
        %2651 = vmatpush1.xpose.msra.mxu0 0.0
        %2652 = vmatprep.subr.mxu0 0.0
        %2653 = vmatpush1.xpose.msra.mxu0 0.0
        %2654 = vmatprep.subr.mxu0 0.0
        %2655 = vmatpush1.xpose.msra.mxu0 0.0
        %2656 = vmatprep.subr.mxu0 0.0
        %2657 = vmatpush1.xpose.msra.mxu0 0.0
        %2658 = vmatprep.subr.mxu0 0.0
        %2659 = vmatpush1.xpose.msra.mxu0 0.0
        %2660 = vmatprep.subr.mxu0 0.0
        %2661 = vmatpush1.xpose.msra.mxu0 0.0
        %2662 = vmatprep.subr.mxu0 0.0
        %2663 = vmatpush1.xpose.msra.mxu0 0.0
        %2664 = vmatprep.subr.mxu0 0.0
        %2665 = vmatpush1.xpose.msra.mxu0 0.0
        %2666 = vmatprep.subr.mxu0 0.0
        %2667 = vmatpush1.xpose.msra.mxu0 0.0
        %2668 = vmatprep.subr.mxu0 0.0
        %2669 = vmatpush1.xpose.msra.mxu0 0.0
        %2670 = vmatprep.subr.mxu0 0.0
        %2671 = vmatpush1.xpose.msra.mxu0 0.0
        %2672 = vmatprep.subr.mxu0 0.0
        %2673 = vmatpush1.xpose.msra.mxu0 %v2642
        %2674 = vmatprep.subr.mxu0 0.0
        %2675 = vmatpush1.xpose.msra.mxu0 %v2640
        %2676 = vmatprep.subr.mxu0 0.0
        %2677 = vmatpush2.xpose.msra.mxu0 0.0
        %2678 = vmatprep.subr.mxu0 0.0
        %2679 = vmatpush2.xpose.msra.mxu0 0.0
        %2680 = vmatprep.subr.mxu0 0.0
        %2681 = vmatpush2.xpose.msra.mxu0 0.0
        %2682 = vmatprep.subr.mxu0 0.0
        %2683 = vmatpush2.xpose.msra.mxu0 0.0
        %2684 = vmatprep.subr.mxu0 0.0
        %2685 = vmatpush2.xpose.msra.mxu0 0.0
        %2686 = vmatprep.subr.mxu0 0.0
        %2687 = vmatpush2.xpose.msra.mxu0 0.0
        %2688 = vmatprep.subr.mxu0 0.0
        %2689 = vmatpush2.xpose.msra.mxu0 0.0
        %2690 = vmatprep.subr.mxu0 0.0
        %2691 = vmatpush2.xpose.msra.mxu0 0.0
        %2692 = vmatprep.subr.mxu0 0.0
        %2693 = vmatpush2.xpose.msra.mxu0 0.0
        %2694 = vmatprep.subr.mxu0 0.0
        %2695 = vmatpush2.xpose.msra.mxu0 0.0
        %2696 = vmatprep.subr.mxu0 0.0
        %2697 = vmatpush2.xpose.msra.mxu0 0.0
        %2698 = vmatprep.subr.mxu0 0.0
        %2699 = vmatpush2.xpose.msra.mxu0 0.0
        %2700 = vmatprep.subr.mxu0 0.0
        %2701 = vmatpush2.xpose.msra.mxu0 0.0
        %2702 = vmatprep.subr.mxu0 0.0
        %2703 = vmatpush2.xpose.msra.mxu0 0.0
        %2704 = vmatprep.subr.mxu0 0.0
        %2705 = vmatpush2.xpose.msra.mxu0 0.0
        %2706 = vmatprep.subr.mxu0 0.0
        %2707 = vmatpush2.xpose.msra.mxu0 0.0
        %2708 = vmatprep.mubr.f32.mxu0 0.0
        %2709 = vmatmul.mubr.f32.gmra.mxu0 %v2636
        %v2710 = vpop.f32.mrf.mxu0
        %v2711 = vadd.f32 %v2167, %v2710
        %v2712 = vpop.f32.mrf.mxu0
        %2713 = vmatprep.mubr.f32.mxu0 0.0
        %2714 = vmatmul.mubr.f32.gmra.mxu0 %v2638
        %v2715 = vpop.f32.mrf.mxu0
        %v2716 = vadd.f32 %v2168, %v2715
        %v2717 = vpop.f32.mrf.mxu0
        %2718 = vdwg.mxu0
        %2719 = vrot.lane.b32.xlu0 %v520, 120
        %v2720 = vpop.permute.xlu0 %2719
        %2721 = vrot.lane.b32.xlu0 %v525, 120
        %v2722 = vpop.permute.xlu0 %2721
        %2723 = vrot.lane.b32.xlu0 %v520, 88
        %v2724 = vpop.permute.xlu0 %2723
        %2725 = vrot.lane.b32.xlu0 %v525, 88
        %v2726 = vpop.permute.xlu0 %2725
        %v2727 = vsel %vm560, %v2720, 0
        %v2729 = vsel %vm560, %v2722, 0
        %v2731 = vsel %vm560, %v2724, 0
        %v2733 = vsel %vm560, %v2726, 0
        %2735 = vmatprep.subr.mxu0 0.0
        %2736 = vmatpush1.xpose.msra.mxu0 0.0
        %2737 = vmatprep.subr.mxu0 0.0
        %2738 = vmatpush1.xpose.msra.mxu0 0.0
        %2739 = vmatprep.subr.mxu0 0.0
        %2740 = vmatpush1.xpose.msra.mxu0 0.0
        %2741 = vmatprep.subr.mxu0 0.0
        %2742 = vmatpush1.xpose.msra.mxu0 0.0
        %2743 = vmatprep.subr.mxu0 0.0
        %2744 = vmatpush1.xpose.msra.mxu0 0.0
        %2745 = vmatprep.subr.mxu0 0.0
        %2746 = vmatpush1.xpose.msra.mxu0 0.0
        %2747 = vmatprep.subr.mxu0 0.0
        %2748 = vmatpush1.xpose.msra.mxu0 0.0
        %2749 = vmatprep.subr.mxu0 0.0
        %2750 = vmatpush1.xpose.msra.mxu0 0.0
        %2751 = vmatprep.subr.mxu0 0.0
        %2752 = vmatpush1.xpose.msra.mxu0 0.0
        %2753 = vmatprep.subr.mxu0 0.0
        %2754 = vmatpush1.xpose.msra.mxu0 0.0
        %2755 = vmatprep.subr.mxu0 0.0
        %2756 = vmatpush1.xpose.msra.mxu0 0.0
        %2757 = vmatprep.subr.mxu0 0.0
        %2758 = vmatpush1.xpose.msra.mxu0 0.0
        %2759 = vmatprep.subr.mxu0 0.0
        %2760 = vmatpush1.xpose.msra.mxu0 0.0
        %2761 = vmatprep.subr.mxu0 0.0
        %2762 = vmatpush1.xpose.msra.mxu0 0.0
        %2763 = vmatprep.subr.mxu0 0.0
        %2764 = vmatpush1.xpose.msra.mxu0 %v2733
        %2765 = vmatprep.subr.mxu0 0.0
        %2766 = vmatpush1.xpose.msra.mxu0 %v2731
        %2767 = vmatprep.subr.mxu0 0.0
        %2768 = vmatpush2.xpose.msra.mxu0 0.0
        %2769 = vmatprep.subr.mxu0 0.0
        %2770 = vmatpush2.xpose.msra.mxu0 0.0
        %2771 = vmatprep.subr.mxu0 0.0
        %2772 = vmatpush2.xpose.msra.mxu0 0.0
        %2773 = vmatprep.subr.mxu0 0.0
        %2774 = vmatpush2.xpose.msra.mxu0 0.0
        %2775 = vmatprep.subr.mxu0 0.0
        %2776 = vmatpush2.xpose.msra.mxu0 0.0
        %2777 = vmatprep.subr.mxu0 0.0
        %2778 = vmatpush2.xpose.msra.mxu0 0.0
        %2779 = vmatprep.subr.mxu0 0.0
        %2780 = vmatpush2.xpose.msra.mxu0 0.0
        %2781 = vmatprep.subr.mxu0 0.0
        %2782 = vmatpush2.xpose.msra.mxu0 0.0
        %2783 = vmatprep.subr.mxu0 0.0
        %2784 = vmatpush2.xpose.msra.mxu0 0.0
        %2785 = vmatprep.subr.mxu0 0.0
        %2786 = vmatpush2.xpose.msra.mxu0 0.0
        %2787 = vmatprep.subr.mxu0 0.0
        %2788 = vmatpush2.xpose.msra.mxu0 0.0
        %2789 = vmatprep.subr.mxu0 0.0
        %2790 = vmatpush2.xpose.msra.mxu0 0.0
        %2791 = vmatprep.subr.mxu0 0.0
        %2792 = vmatpush2.xpose.msra.mxu0 0.0
        %2793 = vmatprep.subr.mxu0 0.0
        %2794 = vmatpush2.xpose.msra.mxu0 0.0
        %2795 = vmatprep.subr.mxu0 0.0
        %2796 = vmatpush2.xpose.msra.mxu0 0.0
        %2797 = vmatprep.subr.mxu0 0.0
        %2798 = vmatpush2.xpose.msra.mxu0 0.0
        %2799 = vmatprep.mubr.f32.mxu0 0.0
        %2800 = vmatmul.mubr.f32.gmra.mxu0 %v2727
        %v2801 = vpop.f32.mrf.mxu0
        %v2802 = vadd.f32 %v2169, %v2801
        %v2803 = vpop.f32.mrf.mxu0
        %2804 = vmatprep.mubr.f32.mxu0 0.0
        %2805 = vmatmul.mubr.f32.gmra.mxu0 %v2729
        %v2806 = vpop.f32.mrf.mxu0
        %v2807 = vadd.f32 %v2170, %v2806
        %v2808 = vpop.f32.mrf.mxu0
        %2809 = vdwg.mxu0
        %2810 = vrot.lane.b32.xlu0 %v530, 120
        %v2811 = vpop.permute.xlu0 %2810
        %2812 = vrot.lane.b32.xlu0 %v535, 120
        %v2813 = vpop.permute.xlu0 %2812
        %2814 = vrot.lane.b32.xlu0 %v530, 88
        %v2815 = vpop.permute.xlu0 %2814
        %2816 = vrot.lane.b32.xlu0 %v535, 88
        %v2817 = vpop.permute.xlu0 %2816
        %v2818 = vsel %vm560, %v2811, 0
        %v2820 = vsel %vm560, %v2813, 0
        %v2822 = vsel %vm560, %v2815, 0
        %v2824 = vsel %vm560, %v2817, 0
        %2826 = vmatprep.subr.mxu0 0.0
        %2827 = vmatpush1.xpose.msra.mxu0 0.0
        %2828 = vmatprep.subr.mxu0 0.0
        %2829 = vmatpush1.xpose.msra.mxu0 0.0
        %2830 = vmatprep.subr.mxu0 0.0
        %2831 = vmatpush1.xpose.msra.mxu0 0.0
        %2832 = vmatprep.subr.mxu0 0.0
        %2833 = vmatpush1.xpose.msra.mxu0 0.0
        %2834 = vmatprep.subr.mxu0 0.0
        %2835 = vmatpush1.xpose.msra.mxu0 0.0
        %2836 = vmatprep.subr.mxu0 0.0
        %2837 = vmatpush1.xpose.msra.mxu0 0.0
        %2838 = vmatprep.subr.mxu0 0.0
        %2839 = vmatpush1.xpose.msra.mxu0 0.0
        %2840 = vmatprep.subr.mxu0 0.0
        %2841 = vmatpush1.xpose.msra.mxu0 0.0
        %2842 = vmatprep.subr.mxu0 0.0
        %2843 = vmatpush1.xpose.msra.mxu0 0.0
        %2844 = vmatprep.subr.mxu0 0.0
        %2845 = vmatpush1.xpose.msra.mxu0 0.0
        %2846 = vmatprep.subr.mxu0 0.0
        %2847 = vmatpush1.xpose.msra.mxu0 0.0
        %2848 = vmatprep.subr.mxu0 0.0
        %2849 = vmatpush1.xpose.msra.mxu0 0.0
        %2850 = vmatprep.subr.mxu0 0.0
        %2851 = vmatpush1.xpose.msra.mxu0 0.0
        %2852 = vmatprep.subr.mxu0 0.0
        %2853 = vmatpush1.xpose.msra.mxu0 0.0
        %2854 = vmatprep.subr.mxu0 0.0
        %2855 = vmatpush1.xpose.msra.mxu0 %v2824
        %2856 = vmatprep.subr.mxu0 0.0
        %2857 = vmatpush1.xpose.msra.mxu0 %v2822
        %2858 = vmatprep.subr.mxu0 0.0
        %2859 = vmatpush2.xpose.msra.mxu0 0.0
        %2860 = vmatprep.subr.mxu0 0.0
        %2861 = vmatpush2.xpose.msra.mxu0 0.0
        %2862 = vmatprep.subr.mxu0 0.0
        %2863 = vmatpush2.xpose.msra.mxu0 0.0
        %2864 = vmatprep.subr.mxu0 0.0
        %2865 = vmatpush2.xpose.msra.mxu0 0.0
        %2866 = vmatprep.subr.mxu0 0.0
        %2867 = vmatpush2.xpose.msra.mxu0 0.0
        %2868 = vmatprep.subr.mxu0 0.0
        %2869 = vmatpush2.xpose.msra.mxu0 0.0
        %2870 = vmatprep.subr.mxu0 0.0
        %2871 = vmatpush2.xpose.msra.mxu0 0.0
        %2872 = vmatprep.subr.mxu0 0.0
        %2873 = vmatpush2.xpose.msra.mxu0 0.0
        %2874 = vmatprep.subr.mxu0 0.0
        %2875 = vmatpush2.xpose.msra.mxu0 0.0
        %2876 = vmatprep.subr.mxu0 0.0
        %2877 = vmatpush2.xpose.msra.mxu0 0.0
        %2878 = vmatprep.subr.mxu0 0.0
        %2879 = vmatpush2.xpose.msra.mxu0 0.0
        %2880 = vmatprep.subr.mxu0 0.0
        %2881 = vmatpush2.xpose.msra.mxu0 0.0
        %2882 = vmatprep.subr.mxu0 0.0
        %2883 = vmatpush2.xpose.msra.mxu0 0.0
        %2884 = vmatprep.subr.mxu0 0.0
        %2885 = vmatpush2.xpose.msra.mxu0 0.0
        %2886 = vmatprep.subr.mxu0 0.0
        %2887 = vmatpush2.xpose.msra.mxu0 0.0
        %2888 = vmatprep.subr.mxu0 0.0
        %2889 = vmatpush2.xpose.msra.mxu0 0.0
        %2890 = vmatprep.mubr.f32.mxu0 0.0
        %2891 = vmatmul.mubr.f32.gmra.mxu0 %v2818
        %v2892 = vpop.f32.mrf.mxu0
        %v2893 = vadd.f32 %v2171, %v2892
        %v2894 = vpop.f32.mrf.mxu0
        %2895 = vmatprep.mubr.f32.mxu0 0.0
        %2896 = vmatmul.mubr.f32.gmra.mxu0 %v2820
        %v2897 = vpop.f32.mrf.mxu0
        %v2898 = vadd.f32 %v2172, %v2897
        %v2899 = vpop.f32.mrf.mxu0
        %2900 = vdwg.mxu0
        %v2901 = vsel %vm1267, %v2256, -inf
        %2902 = vmax.xlane.f32.xlu0 %v2901
        %v2903 = vpop.xlane.xlu0 %2902
        %v2904 = vsel %vm1267, %v2261, -inf
        %2905 = vmax.xlane.f32.xlu0 %v2904
        %v2906 = vpop.xlane.xlu0 %2905
        %v2907 = vsel %vm1267, %v2347, -inf
        %2908 = vmax.xlane.f32.xlu0 %v2907
        %v2909 = vpop.xlane.xlu0 %2908
        %v2910 = vsel %vm1267, %v2352, -inf
        %2911 = vmax.xlane.f32.xlu0 %v2910
        %v2912 = vpop.xlane.xlu0 %2911
        %v2913 = vsel %vm1267, %v2438, -inf
        %2914 = vmax.xlane.f32.xlu0 %v2913
        %v2915 = vpop.xlane.xlu0 %2914
        %v2916 = vsel %vm1267, %v2443, -inf
        %2917 = vmax.xlane.f32.xlu0 %v2916
        %v2918 = vpop.xlane.xlu0 %2917
        %v2919 = vsel %vm1267, %v2529, -inf
        %2920 = vmax.xlane.f32.xlu0 %v2919
        %v2921 = vpop.xlane.xlu0 %2920
        %v2922 = vsel %vm1267, %v2534, -inf
        %2923 = vmax.xlane.f32.xlu0 %v2922
        %v2924 = vpop.xlane.xlu0 %2923
        %v2925 = vsel %vm1267, %v2620, -inf
        %2926 = vmax.xlane.f32.xlu0 %v2925
        %v2927 = vpop.xlane.xlu0 %2926
        %v2928 = vsel %vm1267, %v2625, -inf
        %2929 = vmax.xlane.f32.xlu0 %v2928
        %v2930 = vpop.xlane.xlu0 %2929
        %v2931 = vsel %vm1267, %v2711, -inf
        %2932 = vmax.xlane.f32.xlu0 %v2931
        %v2933 = vpop.xlane.xlu0 %2932
        %v2934 = vsel %vm1267, %v2716, -inf
        %2935 = vmax.xlane.f32.xlu0 %v2934
        %v2936 = vpop.xlane.xlu0 %2935
        %v2937 = vsel %vm1267, %v2802, -inf
        %2938 = vmax.xlane.f32.xlu0 %v2937
        %v2939 = vpop.xlane.xlu0 %2938
        %v2940 = vsel %vm1267, %v2807, -inf
        %2941 = vmax.xlane.f32.xlu0 %v2940
        %v2942 = vpop.xlane.xlu0 %2941
        %v2943 = vsel %vm1267, %v2893, -inf
        %2944 = vmax.xlane.f32.xlu0 %v2943
        %v2945 = vpop.xlane.xlu0 %2944
        %v2946 = vsel %vm1267, %v2898, -inf
        %2947 = vmax.xlane.f32.xlu0 %v2946
        %v2948 = vpop.xlane.xlu0 %2947
        %v2949 = vsub.f32 %v2256, %v2903
        %v2950 = vsub.f32 %v2261, %v2906
        %v2951 = vsub.f32 %v2347, %v2909
        %v2952 = vsub.f32 %v2352, %v2912
        %v2953 = vsub.f32 %v2438, %v2915
        %v2954 = vsub.f32 %v2443, %v2918
        %v2955 = vsub.f32 %v2529, %v2921
        %v2956 = vsub.f32 %v2534, %v2924
        %v2957 = vsub.f32 %v2620, %v2927
        %v2958 = vsub.f32 %v2625, %v2930
        %v2959 = vsub.f32 %v2711, %v2933
        %v2960 = vsub.f32 %v2716, %v2936
        %v2961 = vsub.f32 %v2802, %v2939
        %v2962 = vsub.f32 %v2807, %v2942
        %v2963 = vsub.f32 %v2893, %v2945
        %v2964 = vsub.f32 %v2898, %v2948
        %v2965 = vmul.f32 %v2949, 1.442695
        %v2966 = vpow.pop %v2965
        %v2967 = vmul.f32 %v2950, 1.442695
        %v2968 = vpow.pop %v2967
        %v2969 = vmul.f32 %v2951, 1.442695
        %v2970 = vpow.pop %v2969
        %v2971 = vmul.f32 %v2952, 1.442695
        %v2972 = vpow.pop %v2971
        %v2973 = vmul.f32 %v2953, 1.442695
        %v2974 = vpow.pop %v2973
        %v2975 = vmul.f32 %v2954, 1.442695
        %v2976 = vpow.pop %v2975
        %v2977 = vmul.f32 %v2955, 1.442695
        %v2978 = vpow.pop %v2977
        %v2979 = vmul.f32 %v2956, 1.442695
        %v2980 = vpow.pop %v2979
        %v2981 = vmul.f32 %v2957, 1.442695
        %v2982 = vpow.pop %v2981
        %v2983 = vmul.f32 %v2958, 1.442695
        %v2984 = vpow.pop %v2983
        %v2985 = vmul.f32 %v2959, 1.442695
        %v2986 = vpow.pop %v2985
        %v2987 = vmul.f32 %v2960, 1.442695
        %v2988 = vpow.pop %v2987
        %v2989 = vmul.f32 %v2961, 1.442695
        %v2990 = vpow.pop %v2989
        %v2991 = vmul.f32 %v2962, 1.442695
        %v2992 = vpow.pop %v2991
        %v2993 = vmul.f32 %v2963, 1.442695
        %v2994 = vpow.pop %v2993
        %v2995 = vmul.f32 %v2964, 1.442695
        %v2996 = vpow.pop %v2995
        %v2997 = vsel %vm1267, %v2966, 0.0
        %2998 = vadd.xlane.f32.xlu0 %v2997
        %v2999 = vpop.xlane.xlu0 %2998
        %v3000 = vsel %vm1267, %v2968, 0.0
        %3001 = vadd.xlane.f32.xlu0 %v3000
        %v3002 = vpop.xlane.xlu0 %3001
        %v3003 = vsel %vm1267, %v2970, 0.0
        %3004 = vadd.xlane.f32.xlu0 %v3003
        %v3005 = vpop.xlane.xlu0 %3004
        %v3006 = vsel %vm1267, %v2972, 0.0
        %3007 = vadd.xlane.f32.xlu0 %v3006
        %v3008 = vpop.xlane.xlu0 %3007
        %v3009 = vsel %vm1267, %v2974, 0.0
        %3010 = vadd.xlane.f32.xlu0 %v3009
        %v3011 = vpop.xlane.xlu0 %3010
        %v3012 = vsel %vm1267, %v2976, 0.0
        %3013 = vadd.xlane.f32.xlu0 %v3012
        %v3014 = vpop.xlane.xlu0 %3013
        %v3015 = vsel %vm1267, %v2978, 0.0
        %3016 = vadd.xlane.f32.xlu0 %v3015
        %v3017 = vpop.xlane.xlu0 %3016
        %v3018 = vsel %vm1267, %v2980, 0.0
        %3019 = vadd.xlane.f32.xlu0 %v3018
        %v3020 = vpop.xlane.xlu0 %3019
        %v3021 = vsel %vm1267, %v2982, 0.0
        %3022 = vadd.xlane.f32.xlu0 %v3021
        %v3023 = vpop.xlane.xlu0 %3022
        %v3024 = vsel %vm1267, %v2984, 0.0
        %3025 = vadd.xlane.f32.xlu0 %v3024
        %v3026 = vpop.xlane.xlu0 %3025
        %v3027 = vsel %vm1267, %v2986, 0.0
        %3028 = vadd.xlane.f32.xlu0 %v3027
        %v3029 = vpop.xlane.xlu0 %3028
        %v3030 = vsel %vm1267, %v2988, 0.0
        %3031 = vadd.xlane.f32.xlu0 %v3030
        %v3032 = vpop.xlane.xlu0 %3031
        %v3033 = vsel %vm1267, %v2990, 0.0
        %3034 = vadd.xlane.f32.xlu0 %v3033
        %v3035 = vpop.xlane.xlu0 %3034
        %v3036 = vsel %vm1267, %v2992, 0.0
        %3037 = vadd.xlane.f32.xlu0 %v3036
        %v3038 = vpop.xlane.xlu0 %3037
        %v3039 = vsel %vm1267, %v2994, 0.0
        %3040 = vadd.xlane.f32.xlu0 %v3039
        %v3041 = vpop.xlane.xlu0 %3040
        %v3042 = vsel %vm1267, %v2996, 0.0
        %3043 = vadd.xlane.f32.xlu0 %v3042
        %v3044 = vpop.xlane.xlu0 %3043
        %v3045 = vrcp.pop %v2999
        %v3046 = vrcp.pop %v3002
        %v3047 = vrcp.pop %v3005
        %v3048 = vrcp.pop %v3008
        %v3049 = vrcp.pop %v3011
        %v3050 = vrcp.pop %v3014
        %v3051 = vrcp.pop %v3017
        %v3052 = vrcp.pop %v3020
        %v3053 = vrcp.pop %v3023
        %v3054 = vrcp.pop %v3026
        %v3055 = vrcp.pop %v3029
        %v3056 = vrcp.pop %v3032
        %v3057 = vrcp.pop %v3035
        %v3058 = vrcp.pop %v3038
        %v3059 = vrcp.pop %v3041
        %v3060 = vrcp.pop %v3044
        %v3061 = vmul.f32 %v2966, %v3045
        %v3062 = vmul.f32 %v2968, %v3046
        %v3063 = vmul.f32 %v2970, %v3047
        %v3064 = vmul.f32 %v2972, %v3048
        %v3065 = vmul.f32 %v2974, %v3049
        %v3066 = vmul.f32 %v2976, %v3050
        %v3067 = vmul.f32 %v2978, %v3051
        %v3068 = vmul.f32 %v2980, %v3052
        %v3069 = vmul.f32 %v2982, %v3053
        %v3070 = vmul.f32 %v2984, %v3054
        %v3071 = vmul.f32 %v2986, %v3055
        %v3072 = vmul.f32 %v2988, %v3056
        %v3073 = vmul.f32 %v2990, %v3057
        %v3074 = vmul.f32 %v2992, %v3058
        %v3075 = vmul.f32 %v2994, %v3059
        %v3076 = vmul.f32 %v2996, %v3060
        %3077 = vrot.lane.b32.xlu0 %v460, 56
        %v3078 = vpop.permute.xlu0 %3077
        %3079 = vrot.lane.b32.xlu0 %v465, 56
        %v3080 = vpop.permute.xlu0 %3079
        %v3084 = vsel %vm1267, %v3061, 0
        %v3087 = vsel %vm1267, %v3062, 0
        %3089 = vmatprep.subr.mxu0 0.0
        %3090 = vmatpush1.msra.mxu0 0.0
        %3091 = vmatprep.subr.mxu0 0.0
        %3092 = vmatpush1.msra.mxu0 0.0
        %3093 = vmatprep.subr.mxu0 0.0
        %3094 = vmatpush1.msra.mxu0 0.0
        %3095 = vmatprep.subr.mxu0 0.0
        %3096 = vmatpush1.msra.mxu0 0.0
        %3097 = vmatprep.subr.mxu0 0.0
        %3098 = vmatpush1.msra.mxu0 0.0
        %3099 = vmatprep.subr.mxu0 0.0
        %3100 = vmatpush1.msra.mxu0 0.0
        %3101 = vmatprep.subr.mxu0 0.0
        %3102 = vmatpush1.msra.mxu0 0.0
        %3103 = vmatprep.subr.mxu0 0.0
        %3104 = vmatpush1.msra.mxu0 0.0
        %3105 = vmatprep.subr.mxu0 0.0
        %3106 = vmatpush1.msra.mxu0 0.0
        %3107 = vmatprep.subr.mxu0 0.0
        %3108 = vmatpush1.msra.mxu0 0.0
        %3109 = vmatprep.subr.mxu0 0.0
        %3110 = vmatpush1.msra.mxu0 0.0
        %3111 = vmatprep.subr.mxu0 0.0
        %3112 = vmatpush1.msra.mxu0 0.0
        %3113 = vmatprep.subr.mxu0 0.0
        %3114 = vmatpush1.msra.mxu0 0.0
        %3115 = vmatprep.subr.mxu0 0.0
        %3116 = vmatpush1.msra.mxu0 0.0
        %3117 = vmatprep.subr.mxu0 0.0
        %3118 = vmatpush1.msra.mxu0 %v3080
        %3119 = vmatprep.subr.mxu0 0.0
        %3120 = vmatpush1.msra.mxu0 %v3078
        %3121 = vmatprep.subr.mxu0 0.0
        %3122 = vmatpush2.msra.mxu0 0.0
        %3123 = vmatprep.subr.mxu0 0.0
        %3124 = vmatpush2.msra.mxu0 0.0
        %3125 = vmatprep.subr.mxu0 0.0
        %3126 = vmatpush2.msra.mxu0 0.0
        %3127 = vmatprep.subr.mxu0 0.0
        %3128 = vmatpush2.msra.mxu0 0.0
        %3129 = vmatprep.subr.mxu0 0.0
        %3130 = vmatpush2.msra.mxu0 0.0
        %3131 = vmatprep.subr.mxu0 0.0
        %3132 = vmatpush2.msra.mxu0 0.0
        %3133 = vmatprep.subr.mxu0 0.0
        %3134 = vmatpush2.msra.mxu0 0.0
        %3135 = vmatprep.subr.mxu0 0.0
        %3136 = vmatpush2.msra.mxu0 0.0
        %3137 = vmatprep.subr.mxu0 0.0
        %3138 = vmatpush2.msra.mxu0 0.0
        %3139 = vmatprep.subr.mxu0 0.0
        %3140 = vmatpush2.msra.mxu0 0.0
        %3141 = vmatprep.subr.mxu0 0.0
        %3142 = vmatpush2.msra.mxu0 0.0
        %3143 = vmatprep.subr.mxu0 0.0
        %3144 = vmatpush2.msra.mxu0 0.0
        %3145 = vmatprep.subr.mxu0 0.0
        %3146 = vmatpush2.msra.mxu0 0.0
        %3147 = vmatprep.subr.mxu0 0.0
        %3148 = vmatpush2.msra.mxu0 0.0
        %3149 = vmatprep.subr.mxu0 0.0
        %3150 = vmatpush2.msra.mxu0 0.0
        %3151 = vmatprep.subr.mxu0 0.0
        %3152 = vmatpush2.msra.mxu0 0.0
        %3153 = vmatprep.mubr.f32.mxu0 0.0
        %3154 = vmatmul.mubr.f32.gmra.mxu0 %v3084
        %v3155 = vpop.f32.mrf.mxu0
        %v3156 = vadd.f32 0.0, %v3155
        %v3157 = vpop.f32.mrf.mxu0
        %3158 = vmatprep.mubr.f32.mxu0 0.0
        %3159 = vmatmul.mubr.f32.gmra.mxu0 %v3087
        %v3160 = vpop.f32.mrf.mxu0
        %v3161 = vadd.f32 0.0, %v3160
        %v3162 = vpop.f32.mrf.mxu0
        %3163 = vdwg.mxu0
        %3164 = vrot.lane.b32.xlu0 %v470, 56
        %v3165 = vpop.permute.xlu0 %3164
        %3166 = vrot.lane.b32.xlu0 %v475, 56
        %v3167 = vpop.permute.xlu0 %3166
        %v3171 = vsel %vm1267, %v3063, 0
        %v3174 = vsel %vm1267, %v3064, 0
        %3176 = vmatprep.subr.mxu0 0.0
        %3177 = vmatpush1.msra.mxu0 0.0
        %3178 = vmatprep.subr.mxu0 0.0
        %3179 = vmatpush1.msra.mxu0 0.0
        %3180 = vmatprep.subr.mxu0 0.0
        %3181 = vmatpush1.msra.mxu0 0.0
        %3182 = vmatprep.subr.mxu0 0.0
        %3183 = vmatpush1.msra.mxu0 0.0
        %3184 = vmatprep.subr.mxu0 0.0
        %3185 = vmatpush1.msra.mxu0 0.0
        %3186 = vmatprep.subr.mxu0 0.0
        %3187 = vmatpush1.msra.mxu0 0.0
        %3188 = vmatprep.subr.mxu0 0.0
        %3189 = vmatpush1.msra.mxu0 0.0
        %3190 = vmatprep.subr.mxu0 0.0
        %3191 = vmatpush1.msra.mxu0 0.0
        %3192 = vmatprep.subr.mxu0 0.0
        %3193 = vmatpush1.msra.mxu0 0.0
        %3194 = vmatprep.subr.mxu0 0.0
        %3195 = vmatpush1.msra.mxu0 0.0
        %3196 = vmatprep.subr.mxu0 0.0
        %3197 = vmatpush1.msra.mxu0 0.0
        %3198 = vmatprep.subr.mxu0 0.0
        %3199 = vmatpush1.msra.mxu0 0.0
        %3200 = vmatprep.subr.mxu0 0.0
        %3201 = vmatpush1.msra.mxu0 0.0
        %3202 = vmatprep.subr.mxu0 0.0
        %3203 = vmatpush1.msra.mxu0 0.0
        %3204 = vmatprep.subr.mxu0 0.0
        %3205 = vmatpush1.msra.mxu0 %v3167
        %3206 = vmatprep.subr.mxu0 0.0
        %3207 = vmatpush1.msra.mxu0 %v3165
        %3208 = vmatprep.subr.mxu0 0.0
        %3209 = vmatpush2.msra.mxu0 0.0
        %3210 = vmatprep.subr.mxu0 0.0
        %3211 = vmatpush2.msra.mxu0 0.0
        %3212 = vmatprep.subr.mxu0 0.0
        %3213 = vmatpush2.msra.mxu0 0.0
        %3214 = vmatprep.subr.mxu0 0.0
        %3215 = vmatpush2.msra.mxu0 0.0
        %3216 = vmatprep.subr.mxu0 0.0
        %3217 = vmatpush2.msra.mxu0 0.0
        %3218 = vmatprep.subr.mxu0 0.0
        %3219 = vmatpush2.msra.mxu0 0.0
        %3220 = vmatprep.subr.mxu0 0.0
        %3221 = vmatpush2.msra.mxu0 0.0
        %3222 = vmatprep.subr.mxu0 0.0
        %3223 = vmatpush2.msra.mxu0 0.0
        %3224 = vmatprep.subr.mxu0 0.0
        %3225 = vmatpush2.msra.mxu0 0.0
        %3226 = vmatprep.subr.mxu0 0.0
        %3227 = vmatpush2.msra.mxu0 0.0
        %3228 = vmatprep.subr.mxu0 0.0
        %3229 = vmatpush2.msra.mxu0 0.0
        %3230 = vmatprep.subr.mxu0 0.0
        %3231 = vmatpush2.msra.mxu0 0.0
        %3232 = vmatprep.subr.mxu0 0.0
        %3233 = vmatpush2.msra.mxu0 0.0
        %3234 = vmatprep.subr.mxu0 0.0
        %3235 = vmatpush2.msra.mxu0 0.0
        %3236 = vmatprep.subr.mxu0 0.0
        %3237 = vmatpush2.msra.mxu0 0.0
        %3238 = vmatprep.subr.mxu0 0.0
        %3239 = vmatpush2.msra.mxu0 0.0
        %3240 = vmatprep.mubr.f32.mxu0 0.0
        %3241 = vmatmul.mubr.f32.gmra.mxu0 %v3171
        %v3242 = vpop.f32.mrf.mxu0
        %v3243 = vadd.f32 0.0, %v3242
        %v3244 = vpop.f32.mrf.mxu0
        %3245 = vmatprep.mubr.f32.mxu0 0.0
        %3246 = vmatmul.mubr.f32.gmra.mxu0 %v3174
        %v3247 = vpop.f32.mrf.mxu0
        %v3248 = vadd.f32 0.0, %v3247
        %v3249 = vpop.f32.mrf.mxu0
        %3250 = vdwg.mxu0
        %3251 = vrot.lane.b32.xlu0 %v480, 56
        %v3252 = vpop.permute.xlu0 %3251
        %3253 = vrot.lane.b32.xlu0 %v485, 56
        %v3254 = vpop.permute.xlu0 %3253
        %v3258 = vsel %vm1267, %v3065, 0
        %v3261 = vsel %vm1267, %v3066, 0
        %3263 = vmatprep.subr.mxu0 0.0
        %3264 = vmatpush1.msra.mxu0 0.0
        %3265 = vmatprep.subr.mxu0 0.0
        %3266 = vmatpush1.msra.mxu0 0.0
        %3267 = vmatprep.subr.mxu0 0.0
        %3268 = vmatpush1.msra.mxu0 0.0
        %3269 = vmatprep.subr.mxu0 0.0
        %3270 = vmatpush1.msra.mxu0 0.0
        %3271 = vmatprep.subr.mxu0 0.0
        %3272 = vmatpush1.msra.mxu0 0.0
        %3273 = vmatprep.subr.mxu0 0.0
        %3274 = vmatpush1.msra.mxu0 0.0
        %3275 = vmatprep.subr.mxu0 0.0
        %3276 = vmatpush1.msra.mxu0 0.0
        %3277 = vmatprep.subr.mxu0 0.0
        %3278 = vmatpush1.msra.mxu0 0.0
        %3279 = vmatprep.subr.mxu0 0.0
        %3280 = vmatpush1.msra.mxu0 0.0
        %3281 = vmatprep.subr.mxu0 0.0
        %3282 = vmatpush1.msra.mxu0 0.0
        %3283 = vmatprep.subr.mxu0 0.0
        %3284 = vmatpush1.msra.mxu0 0.0
        %3285 = vmatprep.subr.mxu0 0.0
        %3286 = vmatpush1.msra.mxu0 0.0
        %3287 = vmatprep.subr.mxu0 0.0
        %3288 = vmatpush1.msra.mxu0 0.0
        %3289 = vmatprep.subr.mxu0 0.0
        %3290 = vmatpush1.msra.mxu0 0.0
        %3291 = vmatprep.subr.mxu0 0.0
        %3292 = vmatpush1.msra.mxu0 %v3254
        %3293 = vmatprep.subr.mxu0 0.0
        %3294 = vmatpush1.msra.mxu0 %v3252
        %3295 = vmatprep.subr.mxu0 0.0
        %3296 = vmatpush2.msra.mxu0 0.0
        %3297 = vmatprep.subr.mxu0 0.0
        %3298 = vmatpush2.msra.mxu0 0.0
        %3299 = vmatprep.subr.mxu0 0.0
        %3300 = vmatpush2.msra.mxu0 0.0
        %3301 = vmatprep.subr.mxu0 0.0
        %3302 = vmatpush2.msra.mxu0 0.0
        %3303 = vmatprep.subr.mxu0 0.0
        %3304 = vmatpush2.msra.mxu0 0.0
        %3305 = vmatprep.subr.mxu0 0.0
        %3306 = vmatpush2.msra.mxu0 0.0
        %3307 = vmatprep.subr.mxu0 0.0
        %3308 = vmatpush2.msra.mxu0 0.0
        %3309 = vmatprep.subr.mxu0 0.0
        %3310 = vmatpush2.msra.mxu0 0.0
        %3311 = vmatprep.subr.mxu0 0.0
        %3312 = vmatpush2.msra.mxu0 0.0
        %3313 = vmatprep.subr.mxu0 0.0
        %3314 = vmatpush2.msra.mxu0 0.0
        %3315 = vmatprep.subr.mxu0 0.0
        %3316 = vmatpush2.msra.mxu0 0.0
        %3317 = vmatprep.subr.mxu0 0.0
        %3318 = vmatpush2.msra.mxu0 0.0
        %3319 = vmatprep.subr.mxu0 0.0
        %3320 = vmatpush2.msra.mxu0 0.0
        %3321 = vmatprep.subr.mxu0 0.0
        %3322 = vmatpush2.msra.mxu0 0.0
        %3323 = vmatprep.subr.mxu0 0.0
        %3324 = vmatpush2.msra.mxu0 0.0
        %3325 = vmatprep.subr.mxu0 0.0
        %3326 = vmatpush2.msra.mxu0 0.0
        %3327 = vmatprep.mubr.f32.mxu0 0.0
        %3328 = vmatmul.mubr.f32.gmra.mxu0 %v3258
        %v3329 = vpop.f32.mrf.mxu0
        %v3330 = vadd.f32 0.0, %v3329
        %v3331 = vpop.f32.mrf.mxu0
        %3332 = vmatprep.mubr.f32.mxu0 0.0
        %3333 = vmatmul.mubr.f32.gmra.mxu0 %v3261
        %v3334 = vpop.f32.mrf.mxu0
        %v3335 = vadd.f32 0.0, %v3334
        %v3336 = vpop.f32.mrf.mxu0
        %3337 = vdwg.mxu0
        %3338 = vrot.lane.b32.xlu0 %v490, 56
        %v3339 = vpop.permute.xlu0 %3338
        %3340 = vrot.lane.b32.xlu0 %v495, 56
        %v3341 = vpop.permute.xlu0 %3340
        %v3345 = vsel %vm1267, %v3067, 0
        %v3348 = vsel %vm1267, %v3068, 0
        %3350 = vmatprep.subr.mxu0 0.0
        %3351 = vmatpush1.msra.mxu0 0.0
        %3352 = vmatprep.subr.mxu0 0.0
        %3353 = vmatpush1.msra.mxu0 0.0
        %3354 = vmatprep.subr.mxu0 0.0
        %3355 = vmatpush1.msra.mxu0 0.0
        %3356 = vmatprep.subr.mxu0 0.0
        %3357 = vmatpush1.msra.mxu0 0.0
        %3358 = vmatprep.subr.mxu0 0.0
        %3359 = vmatpush1.msra.mxu0 0.0
        %3360 = vmatprep.subr.mxu0 0.0
        %3361 = vmatpush1.msra.mxu0 0.0
        %3362 = vmatprep.subr.mxu0 0.0
        %3363 = vmatpush1.msra.mxu0 0.0
        %3364 = vmatprep.subr.mxu0 0.0
        %3365 = vmatpush1.msra.mxu0 0.0
        %3366 = vmatprep.subr.mxu0 0.0
        %3367 = vmatpush1.msra.mxu0 0.0
        %3368 = vmatprep.subr.mxu0 0.0
        %3369 = vmatpush1.msra.mxu0 0.0
        %3370 = vmatprep.subr.mxu0 0.0
        %3371 = vmatpush1.msra.mxu0 0.0
        %3372 = vmatprep.subr.mxu0 0.0
        %3373 = vmatpush1.msra.mxu0 0.0
        %3374 = vmatprep.subr.mxu0 0.0
        %3375 = vmatpush1.msra.mxu0 0.0
        %3376 = vmatprep.subr.mxu0 0.0
        %3377 = vmatpush1.msra.mxu0 0.0
        %3378 = vmatprep.subr.mxu0 0.0
        %3379 = vmatpush1.msra.mxu0 %v3341
        %3380 = vmatprep.subr.mxu0 0.0
        %3381 = vmatpush1.msra.mxu0 %v3339
        %3382 = vmatprep.subr.mxu0 0.0
        %3383 = vmatpush2.msra.mxu0 0.0
        %3384 = vmatprep.subr.mxu0 0.0
        %3385 = vmatpush2.msra.mxu0 0.0
        %3386 = vmatprep.subr.mxu0 0.0
        %3387 = vmatpush2.msra.mxu0 0.0
        %3388 = vmatprep.subr.mxu0 0.0
        %3389 = vmatpush2.msra.mxu0 0.0
        %3390 = vmatprep.subr.mxu0 0.0
        %3391 = vmatpush2.msra.mxu0 0.0
        %3392 = vmatprep.subr.mxu0 0.0
        %3393 = vmatpush2.msra.mxu0 0.0
        %3394 = vmatprep.subr.mxu0 0.0
        %3395 = vmatpush2.msra.mxu0 0.0
        %3396 = vmatprep.subr.mxu0 0.0
        %3397 = vmatpush2.msra.mxu0 0.0
        %3398 = vmatprep.subr.mxu0 0.0
        %3399 = vmatpush2.msra.mxu0 0.0
        %3400 = vmatprep.subr.mxu0 0.0
        %3401 = vmatpush2.msra.mxu0 0.0
        %3402 = vmatprep.subr.mxu0 0.0
        %3403 = vmatpush2.msra.mxu0 0.0
        %3404 = vmatprep.subr.mxu0 0.0
        %3405 = vmatpush2.msra.mxu0 0.0
        %3406 = vmatprep.subr.mxu0 0.0
        %3407 = vmatpush2.msra.mxu0 0.0
        %3408 = vmatprep.subr.mxu0 0.0
        %3409 = vmatpush2.msra.mxu0 0.0
        %3410 = vmatprep.subr.mxu0 0.0
        %3411 = vmatpush2.msra.mxu0 0.0
        %3412 = vmatprep.subr.mxu0 0.0
        %3413 = vmatpush2.msra.mxu0 0.0
        %3414 = vmatprep.mubr.f32.mxu0 0.0
        %3415 = vmatmul.mubr.f32.gmra.mxu0 %v3345
        %v3416 = vpop.f32.mrf.mxu0
        %v3417 = vadd.f32 0.0, %v3416
        %v3418 = vpop.f32.mrf.mxu0
        %3419 = vmatprep.mubr.f32.mxu0 0.0
        %3420 = vmatmul.mubr.f32.gmra.mxu0 %v3348
        %v3421 = vpop.f32.mrf.mxu0
        %v3422 = vadd.f32 0.0, %v3421
        %v3423 = vpop.f32.mrf.mxu0
        %3424 = vdwg.mxu0
        %3425 = vrot.lane.b32.xlu0 %v500, 56
        %v3426 = vpop.permute.xlu0 %3425
        %3427 = vrot.lane.b32.xlu0 %v505, 56
        %v3428 = vpop.permute.xlu0 %3427
        %v3432 = vsel %vm1267, %v3069, 0
        %v3435 = vsel %vm1267, %v3070, 0
        %3437 = vmatprep.subr.mxu0 0.0
        %3438 = vmatpush1.msra.mxu0 0.0
        %3439 = vmatprep.subr.mxu0 0.0
        %3440 = vmatpush1.msra.mxu0 0.0
        %3441 = vmatprep.subr.mxu0 0.0
        %3442 = vmatpush1.msra.mxu0 0.0
        %3443 = vmatprep.subr.mxu0 0.0
        %3444 = vmatpush1.msra.mxu0 0.0
        %3445 = vmatprep.subr.mxu0 0.0
        %3446 = vmatpush1.msra.mxu0 0.0
        %3447 = vmatprep.subr.mxu0 0.0
        %3448 = vmatpush1.msra.mxu0 0.0
        %3449 = vmatprep.subr.mxu0 0.0
        %3450 = vmatpush1.msra.mxu0 0.0
        %3451 = vmatprep.subr.mxu0 0.0
        %3452 = vmatpush1.msra.mxu0 0.0
        %3453 = vmatprep.subr.mxu0 0.0
        %3454 = vmatpush1.msra.mxu0 0.0
        %3455 = vmatprep.subr.mxu0 0.0
        %3456 = vmatpush1.msra.mxu0 0.0
        %3457 = vmatprep.subr.mxu0 0.0
        %3458 = vmatpush1.msra.mxu0 0.0
        %3459 = vmatprep.subr.mxu0 0.0
        %3460 = vmatpush1.msra.mxu0 0.0
        %3461 = vmatprep.subr.mxu0 0.0
        %3462 = vmatpush1.msra.mxu0 0.0
        %3463 = vmatprep.subr.mxu0 0.0
        %3464 = vmatpush1.msra.mxu0 0.0
        %3465 = vmatprep.subr.mxu0 0.0
        %3466 = vmatpush1.msra.mxu0 %v3428
        %3467 = vmatprep.subr.mxu0 0.0
        %3468 = vmatpush1.msra.mxu0 %v3426
        %3469 = vmatprep.subr.mxu0 0.0
        %3470 = vmatpush2.msra.mxu0 0.0
        %3471 = vmatprep.subr.mxu0 0.0
        %3472 = vmatpush2.msra.mxu0 0.0
        %3473 = vmatprep.subr.mxu0 0.0
        %3474 = vmatpush2.msra.mxu0 0.0
        %3475 = vmatprep.subr.mxu0 0.0
        %3476 = vmatpush2.msra.mxu0 0.0
        %3477 = vmatprep.subr.mxu0 0.0
        %3478 = vmatpush2.msra.mxu0 0.0
        %3479 = vmatprep.subr.mxu0 0.0
        %3480 = vmatpush2.msra.mxu0 0.0
        %3481 = vmatprep.subr.mxu0 0.0
        %3482 = vmatpush2.msra.mxu0 0.0
        %3483 = vmatprep.subr.mxu0 0.0
        %3484 = vmatpush2.msra.mxu0 0.0
        %3485 = vmatprep.subr.mxu0 0.0
        %3486 = vmatpush2.msra.mxu0 0.0
        %3487 = vmatprep.subr.mxu0 0.0
        %3488 = vmatpush2.msra.mxu0 0.0
        %3489 = vmatprep.subr.mxu0 0.0
        %3490 = vmatpush2.msra.mxu0 0.0
        %3491 = vmatprep.subr.mxu0 0.0
        %3492 = vmatpush2.msra.mxu0 0.0
        %3493 = vmatprep.subr.mxu0 0.0
        %3494 = vmatpush2.msra.mxu0 0.0
        %3495 = vmatprep.subr.mxu0 0.0
        %3496 = vmatpush2.msra.mxu0 0.0
        %3497 = vmatprep.subr.mxu0 0.0
        %3498 = vmatpush2.msra.mxu0 0.0
        %3499 = vmatprep.subr.mxu0 0.0
        %3500 = vmatpush2.msra.mxu0 0.0
        %3501 = vmatprep.mubr.f32.mxu0 0.0
        %3502 = vmatmul.mubr.f32.gmra.mxu0 %v3432
        %v3503 = vpop.f32.mrf.mxu0
        %v3504 = vadd.f32 0.0, %v3503
        %v3505 = vpop.f32.mrf.mxu0
        %3506 = vmatprep.mubr.f32.mxu0 0.0
        %3507 = vmatmul.mubr.f32.gmra.mxu0 %v3435
        %v3508 = vpop.f32.mrf.mxu0
        %v3509 = vadd.f32 0.0, %v3508
        %v3510 = vpop.f32.mrf.mxu0
        %3511 = vdwg.mxu0
        %3512 = vrot.lane.b32.xlu0 %v510, 56
        %v3513 = vpop.permute.xlu0 %3512
        %3514 = vrot.lane.b32.xlu0 %v515, 56
        %v3515 = vpop.permute.xlu0 %3514
        %v3519 = vsel %vm1267, %v3071, 0
        %v3522 = vsel %vm1267, %v3072, 0
        %3524 = vmatprep.subr.mxu0 0.0
        %3525 = vmatpush1.msra.mxu0 0.0
        %3526 = vmatprep.subr.mxu0 0.0
        %3527 = vmatpush1.msra.mxu0 0.0
        %3528 = vmatprep.subr.mxu0 0.0
        %3529 = vmatpush1.msra.mxu0 0.0
        %3530 = vmatprep.subr.mxu0 0.0
        %3531 = vmatpush1.msra.mxu0 0.0
        %3532 = vmatprep.subr.mxu0 0.0
        %3533 = vmatpush1.msra.mxu0 0.0
        %3534 = vmatprep.subr.mxu0 0.0
        %3535 = vmatpush1.msra.mxu0 0.0
        %3536 = vmatprep.subr.mxu0 0.0
        %3537 = vmatpush1.msra.mxu0 0.0
        %3538 = vmatprep.subr.mxu0 0.0
        %3539 = vmatpush1.msra.mxu0 0.0
        %3540 = vmatprep.subr.mxu0 0.0
        %3541 = vmatpush1.msra.mxu0 0.0
        %3542 = vmatprep.subr.mxu0 0.0
        %3543 = vmatpush1.msra.mxu0 0.0
        %3544 = vmatprep.subr.mxu0 0.0
        %3545 = vmatpush1.msra.mxu0 0.0
        %3546 = vmatprep.subr.mxu0 0.0
        %3547 = vmatpush1.msra.mxu0 0.0
        %3548 = vmatprep.subr.mxu0 0.0
        %3549 = vmatpush1.msra.mxu0 0.0
        %3550 = vmatprep.subr.mxu0 0.0
        %3551 = vmatpush1.msra.mxu0 0.0
        %3552 = vmatprep.subr.mxu0 0.0
        %3553 = vmatpush1.msra.mxu0 %v3515
        %3554 = vmatprep.subr.mxu0 0.0
        %3555 = vmatpush1.msra.mxu0 %v3513
        %3556 = vmatprep.subr.mxu0 0.0
        %3557 = vmatpush2.msra.mxu0 0.0
        %3558 = vmatprep.subr.mxu0 0.0
        %3559 = vmatpush2.msra.mxu0 0.0
        %3560 = vmatprep.subr.mxu0 0.0
        %3561 = vmatpush2.msra.mxu0 0.0
        %3562 = vmatprep.subr.mxu0 0.0
        %3563 = vmatpush2.msra.mxu0 0.0
        %3564 = vmatprep.subr.mxu0 0.0
        %3565 = vmatpush2.msra.mxu0 0.0
        %3566 = vmatprep.subr.mxu0 0.0
        %3567 = vmatpush2.msra.mxu0 0.0
        %3568 = vmatprep.subr.mxu0 0.0
        %3569 = vmatpush2.msra.mxu0 0.0
        %3570 = vmatprep.subr.mxu0 0.0
        %3571 = vmatpush2.msra.mxu0 0.0
        %3572 = vmatprep.subr.mxu0 0.0
        %3573 = vmatpush2.msra.mxu0 0.0
        %3574 = vmatprep.subr.mxu0 0.0
        %3575 = vmatpush2.msra.mxu0 0.0
        %3576 = vmatprep.subr.mxu0 0.0
        %3577 = vmatpush2.msra.mxu0 0.0
        %3578 = vmatprep.subr.mxu0 0.0
        %3579 = vmatpush2.msra.mxu0 0.0
        %3580 = vmatprep.subr.mxu0 0.0
        %3581 = vmatpush2.msra.mxu0 0.0
        %3582 = vmatprep.subr.mxu0 0.0
        %3583 = vmatpush2.msra.mxu0 0.0
        %3584 = vmatprep.subr.mxu0 0.0
        %3585 = vmatpush2.msra.mxu0 0.0
        %3586 = vmatprep.subr.mxu0 0.0
        %3587 = vmatpush2.msra.mxu0 0.0
        %3588 = vmatprep.mubr.f32.mxu0 0.0
        %3589 = vmatmul.mubr.f32.gmra.mxu0 %v3519
        %v3590 = vpop.f32.mrf.mxu0
        %v3591 = vadd.f32 0.0, %v3590
        %v3592 = vpop.f32.mrf.mxu0
        %3593 = vmatprep.mubr.f32.mxu0 0.0
        %3594 = vmatmul.mubr.f32.gmra.mxu0 %v3522
        %v3595 = vpop.f32.mrf.mxu0
        %v3596 = vadd.f32 0.0, %v3595
        %v3597 = vpop.f32.mrf.mxu0
        %3598 = vdwg.mxu0
        %3599 = vrot.lane.b32.xlu0 %v520, 56
        %v3600 = vpop.permute.xlu0 %3599
        %3601 = vrot.lane.b32.xlu0 %v525, 56
        %v3602 = vpop.permute.xlu0 %3601
        %v3606 = vsel %vm1267, %v3073, 0
        %v3609 = vsel %vm1267, %v3074, 0
        %3611 = vmatprep.subr.mxu0 0.0
        %3612 = vmatpush1.msra.mxu0 0.0
        %3613 = vmatprep.subr.mxu0 0.0
        %3614 = vmatpush1.msra.mxu0 0.0
        %3615 = vmatprep.subr.mxu0 0.0
        %3616 = vmatpush1.msra.mxu0 0.0
        %3617 = vmatprep.subr.mxu0 0.0
        %3618 = vmatpush1.msra.mxu0 0.0
        %3619 = vmatprep.subr.mxu0 0.0
        %3620 = vmatpush1.msra.mxu0 0.0
        %3621 = vmatprep.subr.mxu0 0.0
        %3622 = vmatpush1.msra.mxu0 0.0
        %3623 = vmatprep.subr.mxu0 0.0
        %3624 = vmatpush1.msra.mxu0 0.0
        %3625 = vmatprep.subr.mxu0 0.0
        %3626 = vmatpush1.msra.mxu0 0.0
        %3627 = vmatprep.subr.mxu0 0.0
        %3628 = vmatpush1.msra.mxu0 0.0
        %3629 = vmatprep.subr.mxu0 0.0
        %3630 = vmatpush1.msra.mxu0 0.0
        %3631 = vmatprep.subr.mxu0 0.0
        %3632 = vmatpush1.msra.mxu0 0.0
        %3633 = vmatprep.subr.mxu0 0.0
        %3634 = vmatpush1.msra.mxu0 0.0
        %3635 = vmatprep.subr.mxu0 0.0
        %3636 = vmatpush1.msra.mxu0 0.0
        %3637 = vmatprep.subr.mxu0 0.0
        %3638 = vmatpush1.msra.mxu0 0.0
        %3639 = vmatprep.subr.mxu0 0.0
        %3640 = vmatpush1.msra.mxu0 %v3602
        %3641 = vmatprep.subr.mxu0 0.0
        %3642 = vmatpush1.msra.mxu0 %v3600
        %3643 = vmatprep.subr.mxu0 0.0
        %3644 = vmatpush2.msra.mxu0 0.0
        %3645 = vmatprep.subr.mxu0 0.0
        %3646 = vmatpush2.msra.mxu0 0.0
        %3647 = vmatprep.subr.mxu0 0.0
        %3648 = vmatpush2.msra.mxu0 0.0
        %3649 = vmatprep.subr.mxu0 0.0
        %3650 = vmatpush2.msra.mxu0 0.0
        %3651 = vmatprep.subr.mxu0 0.0
        %3652 = vmatpush2.msra.mxu0 0.0
        %3653 = vmatprep.subr.mxu0 0.0
        %3654 = vmatpush2.msra.mxu0 0.0
        %3655 = vmatprep.subr.mxu0 0.0
        %3656 = vmatpush2.msra.mxu0 0.0
        %3657 = vmatprep.subr.mxu0 0.0
        %3658 = vmatpush2.msra.mxu0 0.0
        %3659 = vmatprep.subr.mxu0 0.0
        %3660 = vmatpush2.msra.mxu0 0.0
        %3661 = vmatprep.subr.mxu0 0.0
        %3662 = vmatpush2.msra.mxu0 0.0
        %3663 = vmatprep.subr.mxu0 0.0
        %3664 = vmatpush2.msra.mxu0 0.0
        %3665 = vmatprep.subr.mxu0 0.0
        %3666 = vmatpush2.msra.mxu0 0.0
        %3667 = vmatprep.subr.mxu0 0.0
        %3668 = vmatpush2.msra.mxu0 0.0
        %3669 = vmatprep.subr.mxu0 0.0
        %3670 = vmatpush2.msra.mxu0 0.0
        %3671 = vmatprep.subr.mxu0 0.0
        %3672 = vmatpush2.msra.mxu0 0.0
        %3673 = vmatprep.subr.mxu0 0.0
        %3674 = vmatpush2.msra.mxu0 0.0
        %3675 = vmatprep.mubr.f32.mxu0 0.0
        %3676 = vmatmul.mubr.f32.gmra.mxu0 %v3606
        %v3677 = vpop.f32.mrf.mxu0
        %v3678 = vadd.f32 0.0, %v3677
        %v3679 = vpop.f32.mrf.mxu0
        %3680 = vmatprep.mubr.f32.mxu0 0.0
        %3681 = vmatmul.mubr.f32.gmra.mxu0 %v3609
        %v3682 = vpop.f32.mrf.mxu0
        %v3683 = vadd.f32 0.0, %v3682
        %v3684 = vpop.f32.mrf.mxu0
        %3685 = vdwg.mxu0
        %3686 = vrot.lane.b32.xlu0 %v530, 56
        %v3687 = vpop.permute.xlu0 %3686
        %3688 = vrot.lane.b32.xlu0 %v535, 56
        %v3689 = vpop.permute.xlu0 %3688
        %v3693 = vsel %vm1267, %v3075, 0
        %v3696 = vsel %vm1267, %v3076, 0
        %3698 = vmatprep.subr.mxu0 0.0
        %3699 = vmatpush1.msra.mxu0 0.0
        %3700 = vmatprep.subr.mxu0 0.0
        %3701 = vmatpush1.msra.mxu0 0.0
        %3702 = vmatprep.subr.mxu0 0.0
        %3703 = vmatpush1.msra.mxu0 0.0
        %3704 = vmatprep.subr.mxu0 0.0
        %3705 = vmatpush1.msra.mxu0 0.0
        %3706 = vmatprep.subr.mxu0 0.0
        %3707 = vmatpush1.msra.mxu0 0.0
        %3708 = vmatprep.subr.mxu0 0.0
        %3709 = vmatpush1.msra.mxu0 0.0
        %3710 = vmatprep.subr.mxu0 0.0
        %3711 = vmatpush1.msra.mxu0 0.0
        %3712 = vmatprep.subr.mxu0 0.0
        %3713 = vmatpush1.msra.mxu0 0.0
        %3714 = vmatprep.subr.mxu0 0.0
        %3715 = vmatpush1.msra.mxu0 0.0
        %3716 = vmatprep.subr.mxu0 0.0
        %3717 = vmatpush1.msra.mxu0 0.0
        %3718 = vmatprep.subr.mxu0 0.0
        %3719 = vmatpush1.msra.mxu0 0.0
        %3720 = vmatprep.subr.mxu0 0.0
        %3721 = vmatpush1.msra.mxu0 0.0
        %3722 = vmatprep.subr.mxu0 0.0
        %3723 = vmatpush1.msra.mxu0 0.0
        %3724 = vmatprep.subr.mxu0 0.0
        %3725 = vmatpush1.msra.mxu0 0.0
        %3726 = vmatprep.subr.mxu0 0.0
        %3727 = vmatpush1.msra.mxu0 %v3689
        %3728 = vmatprep.subr.mxu0 0.0
        %3729 = vmatpush1.msra.mxu0 %v3687
        %3730 = vmatprep.subr.mxu0 0.0
        %3731 = vmatpush2.msra.mxu0 0.0
        %3732 = vmatprep.subr.mxu0 0.0
        %3733 = vmatpush2.msra.mxu0 0.0
        %3734 = vmatprep.subr.mxu0 0.0
        %3735 = vmatpush2.msra.mxu0 0.0
        %3736 = vmatprep.subr.mxu0 0.0
        %3737 = vmatpush2.msra.mxu0 0.0
        %3738 = vmatprep.subr.mxu0 0.0
        %3739 = vmatpush2.msra.mxu0 0.0
        %3740 = vmatprep.subr.mxu0 0.0
        %3741 = vmatpush2.msra.mxu0 0.0
        %3742 = vmatprep.subr.mxu0 0.0
        %3743 = vmatpush2.msra.mxu0 0.0
        %3744 = vmatprep.subr.mxu0 0.0
        %3745 = vmatpush2.msra.mxu0 0.0
        %3746 = vmatprep.subr.mxu0 0.0
        %3747 = vmatpush2.msra.mxu0 0.0
        %3748 = vmatprep.subr.mxu0 0.0
        %3749 = vmatpush2.msra.mxu0 0.0
        %3750 = vmatprep.subr.mxu0 0.0
        %3751 = vmatpush2.msra.mxu0 0.0
        %3752 = vmatprep.subr.mxu0 0.0
        %3753 = vmatpush2.msra.mxu0 0.0
        %3754 = vmatprep.subr.mxu0 0.0
        %3755 = vmatpush2.msra.mxu0 0.0
        %3756 = vmatprep.subr.mxu0 0.0
        %3757 = vmatpush2.msra.mxu0 0.0
        %3758 = vmatprep.subr.mxu0 0.0
        %3759 = vmatpush2.msra.mxu0 0.0
        %3760 = vmatprep.subr.mxu0 0.0
        %3761 = vmatpush2.msra.mxu0 0.0
        %3762 = vmatprep.mubr.f32.mxu0 0.0
        %3763 = vmatmul.mubr.f32.gmra.mxu0 %v3693
        %v3764 = vpop.f32.mrf.mxu0
        %v3765 = vadd.f32 0.0, %v3764
        %v3766 = vpop.f32.mrf.mxu0
        %3767 = vmatprep.mubr.f32.mxu0 0.0
        %3768 = vmatmul.mubr.f32.gmra.mxu0 %v3696
        %v3769 = vpop.f32.mrf.mxu0
        %v3770 = vadd.f32 0.0, %v3769
        %v3771 = vpop.f32.mrf.mxu0
        %3772 = vdwg.mxu0
        %3789 = vrot.lane.b32.xlu0 %v3156, 8
        %v3790 = vpop.permute.xlu0 %3789
        %3791 = vrot.lane.b32.xlu0 %v3161, 8
        %v3792 = vpop.permute.xlu0 %3791
        %3793 = vrot.lane.b32.xlu0 %v3243, 8
        %v3794 = vpop.permute.xlu0 %3793
        %3795 = vrot.lane.b32.xlu0 %v3248, 8
        %v3796 = vpop.permute.xlu0 %3795
        %3797 = vrot.lane.b32.xlu0 %v3330, 8
        %v3798 = vpop.permute.xlu0 %3797
        %3799 = vrot.lane.b32.xlu0 %v3335, 8
        %v3800 = vpop.permute.xlu0 %3799
        %3801 = vrot.lane.b32.xlu0 %v3417, 8
        %v3802 = vpop.permute.xlu0 %3801
        %3803 = vrot.lane.b32.xlu0 %v3422, 8
        %v3804 = vpop.permute.xlu0 %3803
        %3805 = vrot.lane.b32.xlu0 %v3504, 8
        %v3806 = vpop.permute.xlu0 %3805
        %3807 = vrot.lane.b32.xlu0 %v3509, 8
        %v3808 = vpop.permute.xlu0 %3807
        %3809 = vrot.lane.b32.xlu0 %v3591, 8
        %v3810 = vpop.permute.xlu0 %3809
        %3811 = vrot.lane.b32.xlu0 %v3596, 8
        %v3812 = vpop.permute.xlu0 %3811
        %3813 = vrot.lane.b32.xlu0 %v3678, 8
        %v3814 = vpop.permute.xlu0 %3813
        %3815 = vrot.lane.b32.xlu0 %v3683, 8
        %v3816 = vpop.permute.xlu0 %3815
        %3817 = vrot.lane.b32.xlu0 %v3765, 8
        %v3818 = vpop.permute.xlu0 %3817
        %3819 = vrot.lane.b32.xlu0 %v3770, 8
        %v3820 = vpop.permute.xlu0 %3819
        %vm3837 = vcmask 130112
        %3838 = vst.msk [vmem:[#allocation2] sm:$0xff] %vm3837, %v3790
        %3839 = vst.msk [vmem:[#allocation2 + $0x8] sm:$0xff] %vm3837, %v3792
        %3840 = vst.msk [vmem:[#allocation2 + $0x10] sm:$0xff] %vm3837, %v3794
        %3841 = vst.msk [vmem:[#allocation2 + $0x18] sm:$0xff] %vm3837, %v3796
        %3842 = vst.msk [vmem:[#allocation2 + $0x20] sm:$0xff] %vm3837, %v3798
        %3843 = vst.msk [vmem:[#allocation2 + $0x28] sm:$0xff] %vm3837, %v3800
        %3844 = vst.msk [vmem:[#allocation2 + $0x30] sm:$0xff] %vm3837, %v3802
        %3845 = vst.msk [vmem:[#allocation2 + $0x38] sm:$0xff] %vm3837, %v3804
        %3846 = vst.msk [vmem:[#allocation2 + $0x40] sm:$0xff] %vm3837, %v3806
        %3847 = vst.msk [vmem:[#allocation2 + $0x48] sm:$0xff] %vm3837, %v3808
        %3848 = vst.msk [vmem:[#allocation2 + $0x50] sm:$0xff] %vm3837, %v3810
        %3849 = vst.msk [vmem:[#allocation2 + $0x58] sm:$0xff] %vm3837, %v3812
        %3850 = vst.msk [vmem:[#allocation2 + $0x60] sm:$0xff] %vm3837, %v3814
        %3851 = vst.msk [vmem:[#allocation2 + $0x68] sm:$0xff] %vm3837, %v3816
        %3852 = vst.msk [vmem:[#allocation2 + $0x70] sm:$0xff] %vm3837, %v3818
        %3853 = vst.msk [vmem:[#allocation2 + $0x78] sm:$0xff] %vm3837, %v3820
        %s3854 = scalar_lea.vmem [#allocation9], 256
        %v3855 = vld [vmem:[%s3854] sm:$0xff]
        %v3856 = vld [vmem:[%s3854 + $0x8] sm:$0xff]
        %v3857 = vld [vmem:[%s3854 + $0x10] sm:$0xff]
        %v3858 = vld [vmem:[%s3854 + $0x18] sm:$0xff]
        %v3859 = vld [vmem:[%s3854 + $0x20] sm:$0xff]
        %v3860 = vld [vmem:[%s3854 + $0x28] sm:$0xff]
        %v3861 = vld [vmem:[%s3854 + $0x30] sm:$0xff]
        %v3862 = vld [vmem:[%s3854 + $0x38] sm:$0xff]
        %v3863 = vld [vmem:[%s3854 + $0x40] sm:$0xff]
        %v3864 = vld [vmem:[%s3854 + $0x48] sm:$0xff]
        %v3865 = vld [vmem:[%s3854 + $0x50] sm:$0xff]
        %v3866 = vld [vmem:[%s3854 + $0x58] sm:$0xff]
        %v3867 = vld [vmem:[%s3854 + $0x60] sm:$0xff]
        %v3868 = vld [vmem:[%s3854 + $0x68] sm:$0xff]
        %v3869 = vld [vmem:[%s3854 + $0x70] sm:$0xff]
        %v3870 = vld [vmem:[%s3854 + $0x78] sm:$0xff]
        %3871 = vrot.lane.b32.xlu0 %v460, 112
        %v3872 = vpop.permute.xlu0 %3871
        %3873 = vrot.lane.b32.xlu0 %v465, 112
        %v3874 = vpop.permute.xlu0 %3873
        %3875 = vrot.lane.b32.xlu0 %v460, 80
        %v3876 = vpop.permute.xlu0 %3875
        %3877 = vrot.lane.b32.xlu0 %v465, 80
        %v3878 = vpop.permute.xlu0 %3877
        %v3879 = vsel %vm560, %v3872, 0
        %v3881 = vsel %vm560, %v3874, 0
        %v3883 = vsel %vm560, %v3876, 0
        %v3885 = vsel %vm560, %v3878, 0
        %3887 = vmatprep.subr.mxu0 0.0
        %3888 = vmatpush1.xpose.msra.mxu0 0.0
        %3889 = vmatprep.subr.mxu0 0.0
        %3890 = vmatpush1.xpose.msra.mxu0 0.0
        %3891 = vmatprep.subr.mxu0 0.0
        %3892 = vmatpush1.xpose.msra.mxu0 0.0
        %3893 = vmatprep.subr.mxu0 0.0
        %3894 = vmatpush1.xpose.msra.mxu0 0.0
        %3895 = vmatprep.subr.mxu0 0.0
        %3896 = vmatpush1.xpose.msra.mxu0 0.0
        %3897 = vmatprep.subr.mxu0 0.0
        %3898 = vmatpush1.xpose.msra.mxu0 0.0
        %3899 = vmatprep.subr.mxu0 0.0
        %3900 = vmatpush1.xpose.msra.mxu0 0.0
        %3901 = vmatprep.subr.mxu0 0.0
        %3902 = vmatpush1.xpose.msra.mxu0 0.0
        %3903 = vmatprep.subr.mxu0 0.0
        %3904 = vmatpush1.xpose.msra.mxu0 0.0
        %3905 = vmatprep.subr.mxu0 0.0
        %3906 = vmatpush1.xpose.msra.mxu0 0.0
        %3907 = vmatprep.subr.mxu0 0.0
        %3908 = vmatpush1.xpose.msra.mxu0 0.0
        %3909 = vmatprep.subr.mxu0 0.0
        %3910 = vmatpush1.xpose.msra.mxu0 0.0
        %3911 = vmatprep.subr.mxu0 0.0
        %3912 = vmatpush1.xpose.msra.mxu0 0.0
        %3913 = vmatprep.subr.mxu0 0.0
        %3914 = vmatpush1.xpose.msra.mxu0 0.0
        %3915 = vmatprep.subr.mxu0 0.0
        %3916 = vmatpush1.xpose.msra.mxu0 %v3885
        %3917 = vmatprep.subr.mxu0 0.0
        %3918 = vmatpush1.xpose.msra.mxu0 %v3883
        %3919 = vmatprep.subr.mxu0 0.0
        %3920 = vmatpush2.xpose.msra.mxu0 0.0
        %3921 = vmatprep.subr.mxu0 0.0
        %3922 = vmatpush2.xpose.msra.mxu0 0.0
        %3923 = vmatprep.subr.mxu0 0.0
        %3924 = vmatpush2.xpose.msra.mxu0 0.0
        %3925 = vmatprep.subr.mxu0 0.0
        %3926 = vmatpush2.xpose.msra.mxu0 0.0
        %3927 = vmatprep.subr.mxu0 0.0
        %3928 = vmatpush2.xpose.msra.mxu0 0.0
        %3929 = vmatprep.subr.mxu0 0.0
        %3930 = vmatpush2.xpose.msra.mxu0 0.0
        %3931 = vmatprep.subr.mxu0 0.0
        %3932 = vmatpush2.xpose.msra.mxu0 0.0
        %3933 = vmatprep.subr.mxu0 0.0
        %3934 = vmatpush2.xpose.msra.mxu0 0.0
        %3935 = vmatprep.subr.mxu0 0.0
        %3936 = vmatpush2.xpose.msra.mxu0 0.0
        %3937 = vmatprep.subr.mxu0 0.0
        %3938 = vmatpush2.xpose.msra.mxu0 0.0
        %3939 = vmatprep.subr.mxu0 0.0
        %3940 = vmatpush2.xpose.msra.mxu0 0.0
        %3941 = vmatprep.subr.mxu0 0.0
        %3942 = vmatpush2.xpose.msra.mxu0 0.0
        %3943 = vmatprep.subr.mxu0 0.0
        %3944 = vmatpush2.xpose.msra.mxu0 0.0
        %3945 = vmatprep.subr.mxu0 0.0
        %3946 = vmatpush2.xpose.msra.mxu0 0.0
        %3947 = vmatprep.subr.mxu0 0.0
        %3948 = vmatpush2.xpose.msra.mxu0 0.0
        %3949 = vmatprep.subr.mxu0 0.0
        %3950 = vmatpush2.xpose.msra.mxu0 0.0
        %3951 = vmatprep.mubr.f32.mxu0 0.0
        %3952 = vmatmul.mubr.f32.gmra.mxu0 %v3879
        %v3953 = vpop.f32.mrf.mxu0
        %v3954 = vadd.f32 %v3855, %v3953
        %v3955 = vpop.f32.mrf.mxu0
        %3956 = vmatprep.mubr.f32.mxu0 0.0
        %3957 = vmatmul.mubr.f32.gmra.mxu0 %v3881
        %v3958 = vpop.f32.mrf.mxu0
        %v3959 = vadd.f32 %v3856, %v3958
        %v3960 = vpop.f32.mrf.mxu0
        %3961 = vdwg.mxu0
        %3962 = vrot.lane.b32.xlu0 %v470, 112
        %v3963 = vpop.permute.xlu0 %3962
        %3964 = vrot.lane.b32.xlu0 %v475, 112
        %v3965 = vpop.permute.xlu0 %3964
        %3966 = vrot.lane.b32.xlu0 %v470, 80
        %v3967 = vpop.permute.xlu0 %3966
        %3968 = vrot.lane.b32.xlu0 %v475, 80
        %v3969 = vpop.permute.xlu0 %3968
        %v3970 = vsel %vm560, %v3963, 0
        %v3972 = vsel %vm560, %v3965, 0
        %v3974 = vsel %vm560, %v3967, 0
        %v3976 = vsel %vm560, %v3969, 0
        %3978 = vmatprep.subr.mxu0 0.0
        %3979 = vmatpush1.xpose.msra.mxu0 0.0
        %3980 = vmatprep.subr.mxu0 0.0
        %3981 = vmatpush1.xpose.msra.mxu0 0.0
        %3982 = vmatprep.subr.mxu0 0.0
        %3983 = vmatpush1.xpose.msra.mxu0 0.0
        %3984 = vmatprep.subr.mxu0 0.0
        %3985 = vmatpush1.xpose.msra.mxu0 0.0
        %3986 = vmatprep.subr.mxu0 0.0
        %3987 = vmatpush1.xpose.msra.mxu0 0.0
        %3988 = vmatprep.subr.mxu0 0.0
        %3989 = vmatpush1.xpose.msra.mxu0 0.0
        %3990 = vmatprep.subr.mxu0 0.0
        %3991 = vmatpush1.xpose.msra.mxu0 0.0
        %3992 = vmatprep.subr.mxu0 0.0
        %3993 = vmatpush1.xpose.msra.mxu0 0.0
        %3994 = vmatprep.subr.mxu0 0.0
        %3995 = vmatpush1.xpose.msra.mxu0 0.0
        %3996 = vmatprep.subr.mxu0 0.0
        %3997 = vmatpush1.xpose.msra.mxu0 0.0
        %3998 = vmatprep.subr.mxu0 0.0
        %3999 = vmatpush1.xpose.msra.mxu0 0.0
        %4000 = vmatprep.subr.mxu0 0.0
        %4001 = vmatpush1.xpose.msra.mxu0 0.0
        %4002 = vmatprep.subr.mxu0 0.0
        %4003 = vmatpush1.xpose.msra.mxu0 0.0
        %4004 = vmatprep.subr.mxu0 0.0
        %4005 = vmatpush1.xpose.msra.mxu0 0.0
        %4006 = vmatprep.subr.mxu0 0.0
        %4007 = vmatpush1.xpose.msra.mxu0 %v3976
        %4008 = vmatprep.subr.mxu0 0.0
        %4009 = vmatpush1.xpose.msra.mxu0 %v3974
        %4010 = vmatprep.subr.mxu0 0.0
        %4011 = vmatpush2.xpose.msra.mxu0 0.0
        %4012 = vmatprep.subr.mxu0 0.0
        %4013 = vmatpush2.xpose.msra.mxu0 0.0
        %4014 = vmatprep.subr.mxu0 0.0
        %4015 = vmatpush2.xpose.msra.mxu0 0.0
        %4016 = vmatprep.subr.mxu0 0.0
        %4017 = vmatpush2.xpose.msra.mxu0 0.0
        %4018 = vmatprep.subr.mxu0 0.0
        %4019 = vmatpush2.xpose.msra.mxu0 0.0
        %4020 = vmatprep.subr.mxu0 0.0
        %4021 = vmatpush2.xpose.msra.mxu0 0.0
        %4022 = vmatprep.subr.mxu0 0.0
        %4023 = vmatpush2.xpose.msra.mxu0 0.0
        %4024 = vmatprep.subr.mxu0 0.0
        %4025 = vmatpush2.xpose.msra.mxu0 0.0
        %4026 = vmatprep.subr.mxu0 0.0
        %4027 = vmatpush2.xpose.msra.mxu0 0.0
        %4028 = vmatprep.subr.mxu0 0.0
        %4029 = vmatpush2.xpose.msra.mxu0 0.0
        %4030 = vmatprep.subr.mxu0 0.0
        %4031 = vmatpush2.xpose.msra.mxu0 0.0
        %4032 = vmatprep.subr.mxu0 0.0
        %4033 = vmatpush2.xpose.msra.mxu0 0.0
        %4034 = vmatprep.subr.mxu0 0.0
        %4035 = vmatpush2.xpose.msra.mxu0 0.0
        %4036 = vmatprep.subr.mxu0 0.0
        %4037 = vmatpush2.xpose.msra.mxu0 0.0
        %4038 = vmatprep.subr.mxu0 0.0
        %4039 = vmatpush2.xpose.msra.mxu0 0.0
        %4040 = vmatprep.subr.mxu0 0.0
        %4041 = vmatpush2.xpose.msra.mxu0 0.0
        %4042 = vmatprep.mubr.f32.mxu0 0.0
        %4043 = vmatmul.mubr.f32.gmra.mxu0 %v3970
        %v4044 = vpop.f32.mrf.mxu0
        %v4045 = vadd.f32 %v3857, %v4044
        %v4046 = vpop.f32.mrf.mxu0
        %4047 = vmatprep.mubr.f32.mxu0 0.0
        %4048 = vmatmul.mubr.f32.gmra.mxu0 %v3972
        %v4049 = vpop.f32.mrf.mxu0
        %v4050 = vadd.f32 %v3858, %v4049
        %v4051 = vpop.f32.mrf.mxu0
        %4052 = vdwg.mxu0
        %4053 = vrot.lane.b32.xlu0 %v480, 112
        %v4054 = vpop.permute.xlu0 %4053
        %4055 = vrot.lane.b32.xlu0 %v485, 112
        %v4056 = vpop.permute.xlu0 %4055
        %4057 = vrot.lane.b32.xlu0 %v480, 80
        %v4058 = vpop.permute.xlu0 %4057
        %4059 = vrot.lane.b32.xlu0 %v485, 80
        %v4060 = vpop.permute.xlu0 %4059
        %v4061 = vsel %vm560, %v4054, 0
        %v4063 = vsel %vm560, %v4056, 0
        %v4065 = vsel %vm560, %v4058, 0
        %v4067 = vsel %vm560, %v4060, 0
        %4069 = vmatprep.subr.mxu0 0.0
        %4070 = vmatpush1.xpose.msra.mxu0 0.0
        %4071 = vmatprep.subr.mxu0 0.0
        %4072 = vmatpush1.xpose.msra.mxu0 0.0
        %4073 = vmatprep.subr.mxu0 0.0
        %4074 = vmatpush1.xpose.msra.mxu0 0.0
        %4075 = vmatprep.subr.mxu0 0.0
        %4076 = vmatpush1.xpose.msra.mxu0 0.0
        %4077 = vmatprep.subr.mxu0 0.0
        %4078 = vmatpush1.xpose.msra.mxu0 0.0
        %4079 = vmatprep.subr.mxu0 0.0
        %4080 = vmatpush1.xpose.msra.mxu0 0.0
        %4081 = vmatprep.subr.mxu0 0.0
        %4082 = vmatpush1.xpose.msra.mxu0 0.0
        %4083 = vmatprep.subr.mxu0 0.0
        %4084 = vmatpush1.xpose.msra.mxu0 0.0
        %4085 = vmatprep.subr.mxu0 0.0
        %4086 = vmatpush1.xpose.msra.mxu0 0.0
        %4087 = vmatprep.subr.mxu0 0.0
        %4088 = vmatpush1.xpose.msra.mxu0 0.0
        %4089 = vmatprep.subr.mxu0 0.0
        %4090 = vmatpush1.xpose.msra.mxu0 0.0
        %4091 = vmatprep.subr.mxu0 0.0
        %4092 = vmatpush1.xpose.msra.mxu0 0.0
        %4093 = vmatprep.subr.mxu0 0.0
        %4094 = vmatpush1.xpose.msra.mxu0 0.0
        %4095 = vmatprep.subr.mxu0 0.0
        %4096 = vmatpush1.xpose.msra.mxu0 0.0
        %4097 = vmatprep.subr.mxu0 0.0
        %4098 = vmatpush1.xpose.msra.mxu0 %v4067
        %4099 = vmatprep.subr.mxu0 0.0
        %4100 = vmatpush1.xpose.msra.mxu0 %v4065
        %4101 = vmatprep.subr.mxu0 0.0
        %4102 = vmatpush2.xpose.msra.mxu0 0.0
        %4103 = vmatprep.subr.mxu0 0.0
        %4104 = vmatpush2.xpose.msra.mxu0 0.0
        %4105 = vmatprep.subr.mxu0 0.0
        %4106 = vmatpush2.xpose.msra.mxu0 0.0
        %4107 = vmatprep.subr.mxu0 0.0
        %4108 = vmatpush2.xpose.msra.mxu0 0.0
        %4109 = vmatprep.subr.mxu0 0.0
        %4110 = vmatpush2.xpose.msra.mxu0 0.0
        %4111 = vmatprep.subr.mxu0 0.0
        %4112 = vmatpush2.xpose.msra.mxu0 0.0
        %4113 = vmatprep.subr.mxu0 0.0
        %4114 = vmatpush2.xpose.msra.mxu0 0.0
        %4115 = vmatprep.subr.mxu0 0.0
        %4116 = vmatpush2.xpose.msra.mxu0 0.0
        %4117 = vmatprep.subr.mxu0 0.0
        %4118 = vmatpush2.xpose.msra.mxu0 0.0
        %4119 = vmatprep.subr.mxu0 0.0
        %4120 = vmatpush2.xpose.msra.mxu0 0.0
        %4121 = vmatprep.subr.mxu0 0.0
        %4122 = vmatpush2.xpose.msra.mxu0 0.0
        %4123 = vmatprep.subr.mxu0 0.0
        %4124 = vmatpush2.xpose.msra.mxu0 0.0
        %4125 = vmatprep.subr.mxu0 0.0
        %4126 = vmatpush2.xpose.msra.mxu0 0.0
        %4127 = vmatprep.subr.mxu0 0.0
        %4128 = vmatpush2.xpose.msra.mxu0 0.0
        %4129 = vmatprep.subr.mxu0 0.0
        %4130 = vmatpush2.xpose.msra.mxu0 0.0
        %4131 = vmatprep.subr.mxu0 0.0
        %4132 = vmatpush2.xpose.msra.mxu0 0.0
        %4133 = vmatprep.mubr.f32.mxu0 0.0
        %4134 = vmatmul.mubr.f32.gmra.mxu0 %v4061
        %v4135 = vpop.f32.mrf.mxu0
        %v4136 = vadd.f32 %v3859, %v4135
        %v4137 = vpop.f32.mrf.mxu0
        %4138 = vmatprep.mubr.f32.mxu0 0.0
        %4139 = vmatmul.mubr.f32.gmra.mxu0 %v4063
        %v4140 = vpop.f32.mrf.mxu0
        %v4141 = vadd.f32 %v3860, %v4140
        %v4142 = vpop.f32.mrf.mxu0
        %4143 = vdwg.mxu0
        %4144 = vrot.lane.b32.xlu0 %v490, 112
        %v4145 = vpop.permute.xlu0 %4144
        %4146 = vrot.lane.b32.xlu0 %v495, 112
        %v4147 = vpop.permute.xlu0 %4146
        %4148 = vrot.lane.b32.xlu0 %v490, 80
        %v4149 = vpop.permute.xlu0 %4148
        %4150 = vrot.lane.b32.xlu0 %v495, 80
        %v4151 = vpop.permute.xlu0 %4150
        %v4152 = vsel %vm560, %v4145, 0
        %v4154 = vsel %vm560, %v4147, 0
        %v4156 = vsel %vm560, %v4149, 0
        %v4158 = vsel %vm560, %v4151, 0
        %4160 = vmatprep.subr.mxu0 0.0
        %4161 = vmatpush1.xpose.msra.mxu0 0.0
        %4162 = vmatprep.subr.mxu0 0.0
        %4163 = vmatpush1.xpose.msra.mxu0 0.0
        %4164 = vmatprep.subr.mxu0 0.0
        %4165 = vmatpush1.xpose.msra.mxu0 0.0
        %4166 = vmatprep.subr.mxu0 0.0
        %4167 = vmatpush1.xpose.msra.mxu0 0.0
        %4168 = vmatprep.subr.mxu0 0.0
        %4169 = vmatpush1.xpose.msra.mxu0 0.0
        %4170 = vmatprep.subr.mxu0 0.0
        %4171 = vmatpush1.xpose.msra.mxu0 0.0
        %4172 = vmatprep.subr.mxu0 0.0
        %4173 = vmatpush1.xpose.msra.mxu0 0.0
        %4174 = vmatprep.subr.mxu0 0.0
        %4175 = vmatpush1.xpose.msra.mxu0 0.0
        %4176 = vmatprep.subr.mxu0 0.0
        %4177 = vmatpush1.xpose.msra.mxu0 0.0
        %4178 = vmatprep.subr.mxu0 0.0
        %4179 = vmatpush1.xpose.msra.mxu0 0.0
        %4180 = vmatprep.subr.mxu0 0.0
        %4181 = vmatpush1.xpose.msra.mxu0 0.0
        %4182 = vmatprep.subr.mxu0 0.0
        %4183 = vmatpush1.xpose.msra.mxu0 0.0
        %4184 = vmatprep.subr.mxu0 0.0
        %4185 = vmatpush1.xpose.msra.mxu0 0.0
        %4186 = vmatprep.subr.mxu0 0.0
        %4187 = vmatpush1.xpose.msra.mxu0 0.0
        %4188 = vmatprep.subr.mxu0 0.0
        %4189 = vmatpush1.xpose.msra.mxu0 %v4158
        %4190 = vmatprep.subr.mxu0 0.0
        %4191 = vmatpush1.xpose.msra.mxu0 %v4156
        %4192 = vmatprep.subr.mxu0 0.0
        %4193 = vmatpush2.xpose.msra.mxu0 0.0
        %4194 = vmatprep.subr.mxu0 0.0
        %4195 = vmatpush2.xpose.msra.mxu0 0.0
        %4196 = vmatprep.subr.mxu0 0.0
        %4197 = vmatpush2.xpose.msra.mxu0 0.0
        %4198 = vmatprep.subr.mxu0 0.0
        %4199 = vmatpush2.xpose.msra.mxu0 0.0
        %4200 = vmatprep.subr.mxu0 0.0
        %4201 = vmatpush2.xpose.msra.mxu0 0.0
        %4202 = vmatprep.subr.mxu0 0.0
        %4203 = vmatpush2.xpose.msra.mxu0 0.0
        %4204 = vmatprep.subr.mxu0 0.0
        %4205 = vmatpush2.xpose.msra.mxu0 0.0
        %4206 = vmatprep.subr.mxu0 0.0
        %4207 = vmatpush2.xpose.msra.mxu0 0.0
        %4208 = vmatprep.subr.mxu0 0.0
        %4209 = vmatpush2.xpose.msra.mxu0 0.0
        %4210 = vmatprep.subr.mxu0 0.0
        %4211 = vmatpush2.xpose.msra.mxu0 0.0
        %4212 = vmatprep.subr.mxu0 0.0
        %4213 = vmatpush2.xpose.msra.mxu0 0.0
        %4214 = vmatprep.subr.mxu0 0.0
        %4215 = vmatpush2.xpose.msra.mxu0 0.0
        %4216 = vmatprep.subr.mxu0 0.0
        %4217 = vmatpush2.xpose.msra.mxu0 0.0
        %4218 = vmatprep.subr.mxu0 0.0
        %4219 = vmatpush2.xpose.msra.mxu0 0.0
        %4220 = vmatprep.subr.mxu0 0.0
        %4221 = vmatpush2.xpose.msra.mxu0 0.0
        %4222 = vmatprep.subr.mxu0 0.0
        %4223 = vmatpush2.xpose.msra.mxu0 0.0
        %4224 = vmatprep.mubr.f32.mxu0 0.0
        %4225 = vmatmul.mubr.f32.gmra.mxu0 %v4152
        %v4226 = vpop.f32.mrf.mxu0
        %v4227 = vadd.f32 %v3861, %v4226
        %v4228 = vpop.f32.mrf.mxu0
        %4229 = vmatprep.mubr.f32.mxu0 0.0
        %4230 = vmatmul.mubr.f32.gmra.mxu0 %v4154
        %v4231 = vpop.f32.mrf.mxu0
        %v4232 = vadd.f32 %v3862, %v4231
        %v4233 = vpop.f32.mrf.mxu0
        %4234 = vdwg.mxu0
        %4235 = vrot.lane.b32.xlu0 %v500, 112
        %v4236 = vpop.permute.xlu0 %4235
        %4237 = vrot.lane.b32.xlu0 %v505, 112
        %v4238 = vpop.permute.xlu0 %4237
        %4239 = vrot.lane.b32.xlu0 %v500, 80
        %v4240 = vpop.permute.xlu0 %4239
        %4241 = vrot.lane.b32.xlu0 %v505, 80
        %v4242 = vpop.permute.xlu0 %4241
        %v4243 = vsel %vm560, %v4236, 0
        %v4245 = vsel %vm560, %v4238, 0
        %v4247 = vsel %vm560, %v4240, 0
        %v4249 = vsel %vm560, %v4242, 0
        %4251 = vmatprep.subr.mxu0 0.0
        %4252 = vmatpush1.xpose.msra.mxu0 0.0
        %4253 = vmatprep.subr.mxu0 0.0
        %4254 = vmatpush1.xpose.msra.mxu0 0.0
        %4255 = vmatprep.subr.mxu0 0.0
        %4256 = vmatpush1.xpose.msra.mxu0 0.0
        %4257 = vmatprep.subr.mxu0 0.0
        %4258 = vmatpush1.xpose.msra.mxu0 0.0
        %4259 = vmatprep.subr.mxu0 0.0
        %4260 = vmatpush1.xpose.msra.mxu0 0.0
        %4261 = vmatprep.subr.mxu0 0.0
        %4262 = vmatpush1.xpose.msra.mxu0 0.0
        %4263 = vmatprep.subr.mxu0 0.0
        %4264 = vmatpush1.xpose.msra.mxu0 0.0
        %4265 = vmatprep.subr.mxu0 0.0
        %4266 = vmatpush1.xpose.msra.mxu0 0.0
        %4267 = vmatprep.subr.mxu0 0.0
        %4268 = vmatpush1.xpose.msra.mxu0 0.0
        %4269 = vmatprep.subr.mxu0 0.0
        %4270 = vmatpush1.xpose.msra.mxu0 0.0
        %4271 = vmatprep.subr.mxu0 0.0
        %4272 = vmatpush1.xpose.msra.mxu0 0.0
        %4273 = vmatprep.subr.mxu0 0.0
        %4274 = vmatpush1.xpose.msra.mxu0 0.0
        %4275 = vmatprep.subr.mxu0 0.0
        %4276 = vmatpush1.xpose.msra.mxu0 0.0
        %4277 = vmatprep.subr.mxu0 0.0
        %4278 = vmatpush1.xpose.msra.mxu0 0.0
        %4279 = vmatprep.subr.mxu0 0.0
        %4280 = vmatpush1.xpose.msra.mxu0 %v4249
        %4281 = vmatprep.subr.mxu0 0.0
        %4282 = vmatpush1.xpose.msra.mxu0 %v4247
        %4283 = vmatprep.subr.mxu0 0.0
        %4284 = vmatpush2.xpose.msra.mxu0 0.0
        %4285 = vmatprep.subr.mxu0 0.0
        %4286 = vmatpush2.xpose.msra.mxu0 0.0
        %4287 = vmatprep.subr.mxu0 0.0
        %4288 = vmatpush2.xpose.msra.mxu0 0.0
        %4289 = vmatprep.subr.mxu0 0.0
        %4290 = vmatpush2.xpose.msra.mxu0 0.0
        %4291 = vmatprep.subr.mxu0 0.0
        %4292 = vmatpush2.xpose.msra.mxu0 0.0
        %4293 = vmatprep.subr.mxu0 0.0
        %4294 = vmatpush2.xpose.msra.mxu0 0.0
        %4295 = vmatprep.subr.mxu0 0.0
        %4296 = vmatpush2.xpose.msra.mxu0 0.0
        %4297 = vmatprep.subr.mxu0 0.0
        %4298 = vmatpush2.xpose.msra.mxu0 0.0
        %4299 = vmatprep.subr.mxu0 0.0
        %4300 = vmatpush2.xpose.msra.mxu0 0.0
        %4301 = vmatprep.subr.mxu0 0.0
        %4302 = vmatpush2.xpose.msra.mxu0 0.0
        %4303 = vmatprep.subr.mxu0 0.0
        %4304 = vmatpush2.xpose.msra.mxu0 0.0
        %4305 = vmatprep.subr.mxu0 0.0
        %4306 = vmatpush2.xpose.msra.mxu0 0.0
        %4307 = vmatprep.subr.mxu0 0.0
        %4308 = vmatpush2.xpose.msra.mxu0 0.0
        %4309 = vmatprep.subr.mxu0 0.0
        %4310 = vmatpush2.xpose.msra.mxu0 0.0
        %4311 = vmatprep.subr.mxu0 0.0
        %4312 = vmatpush2.xpose.msra.mxu0 0.0
        %4313 = vmatprep.subr.mxu0 0.0
        %4314 = vmatpush2.xpose.msra.mxu0 0.0
        %4315 = vmatprep.mubr.f32.mxu0 0.0
        %4316 = vmatmul.mubr.f32.gmra.mxu0 %v4243
        %v4317 = vpop.f32.mrf.mxu0
        %v4318 = vadd.f32 %v3863, %v4317
        %v4319 = vpop.f32.mrf.mxu0
        %4320 = vmatprep.mubr.f32.mxu0 0.0
        %4321 = vmatmul.mubr.f32.gmra.mxu0 %v4245
        %v4322 = vpop.f32.mrf.mxu0
        %v4323 = vadd.f32 %v3864, %v4322
        %v4324 = vpop.f32.mrf.mxu0
        %4325 = vdwg.mxu0
        %4326 = vrot.lane.b32.xlu0 %v510, 112
        %v4327 = vpop.permute.xlu0 %4326
        %4328 = vrot.lane.b32.xlu0 %v515, 112
        %v4329 = vpop.permute.xlu0 %4328
        %4330 = vrot.lane.b32.xlu0 %v510, 80
        %v4331 = vpop.permute.xlu0 %4330
        %4332 = vrot.lane.b32.xlu0 %v515, 80
        %v4333 = vpop.permute.xlu0 %4332
        %v4334 = vsel %vm560, %v4327, 0
        %v4336 = vsel %vm560, %v4329, 0
        %v4338 = vsel %vm560, %v4331, 0
        %v4340 = vsel %vm560, %v4333, 0
        %4342 = vmatprep.subr.mxu0 0.0
        %4343 = vmatpush1.xpose.msra.mxu0 0.0
        %4344 = vmatprep.subr.mxu0 0.0
        %4345 = vmatpush1.xpose.msra.mxu0 0.0
        %4346 = vmatprep.subr.mxu0 0.0
        %4347 = vmatpush1.xpose.msra.mxu0 0.0
        %4348 = vmatprep.subr.mxu0 0.0
        %4349 = vmatpush1.xpose.msra.mxu0 0.0
        %4350 = vmatprep.subr.mxu0 0.0
        %4351 = vmatpush1.xpose.msra.mxu0 0.0
        %4352 = vmatprep.subr.mxu0 0.0
        %4353 = vmatpush1.xpose.msra.mxu0 0.0
        %4354 = vmatprep.subr.mxu0 0.0
        %4355 = vmatpush1.xpose.msra.mxu0 0.0
        %4356 = vmatprep.subr.mxu0 0.0
        %4357 = vmatpush1.xpose.msra.mxu0 0.0
        %4358 = vmatprep.subr.mxu0 0.0
        %4359 = vmatpush1.xpose.msra.mxu0 0.0
        %4360 = vmatprep.subr.mxu0 0.0
        %4361 = vmatpush1.xpose.msra.mxu0 0.0
        %4362 = vmatprep.subr.mxu0 0.0
        %4363 = vmatpush1.xpose.msra.mxu0 0.0
        %4364 = vmatprep.subr.mxu0 0.0
        %4365 = vmatpush1.xpose.msra.mxu0 0.0
        %4366 = vmatprep.subr.mxu0 0.0
        %4367 = vmatpush1.xpose.msra.mxu0 0.0
        %4368 = vmatprep.subr.mxu0 0.0
        %4369 = vmatpush1.xpose.msra.mxu0 0.0
        %4370 = vmatprep.subr.mxu0 0.0
        %4371 = vmatpush1.xpose.msra.mxu0 %v4340
        %4372 = vmatprep.subr.mxu0 0.0
        %4373 = vmatpush1.xpose.msra.mxu0 %v4338
        %4374 = vmatprep.subr.mxu0 0.0
        %4375 = vmatpush2.xpose.msra.mxu0 0.0
        %4376 = vmatprep.subr.mxu0 0.0
        %4377 = vmatpush2.xpose.msra.mxu0 0.0
        %4378 = vmatprep.subr.mxu0 0.0
        %4379 = vmatpush2.xpose.msra.mxu0 0.0
        %4380 = vmatprep.subr.mxu0 0.0
        %4381 = vmatpush2.xpose.msra.mxu0 0.0
        %4382 = vmatprep.subr.mxu0 0.0
        %4383 = vmatpush2.xpose.msra.mxu0 0.0
        %4384 = vmatprep.subr.mxu0 0.0
        %4385 = vmatpush2.xpose.msra.mxu0 0.0
        %4386 = vmatprep.subr.mxu0 0.0
        %4387 = vmatpush2.xpose.msra.mxu0 0.0
        %4388 = vmatprep.subr.mxu0 0.0
        %4389 = vmatpush2.xpose.msra.mxu0 0.0
        %4390 = vmatprep.subr.mxu0 0.0
        %4391 = vmatpush2.xpose.msra.mxu0 0.0
        %4392 = vmatprep.subr.mxu0 0.0
        %4393 = vmatpush2.xpose.msra.mxu0 0.0
        %4394 = vmatprep.subr.mxu0 0.0
        %4395 = vmatpush2.xpose.msra.mxu0 0.0
        %4396 = vmatprep.subr.mxu0 0.0
        %4397 = vmatpush2.xpose.msra.mxu0 0.0
        %4398 = vmatprep.subr.mxu0 0.0
        %4399 = vmatpush2.xpose.msra.mxu0 0.0
        %4400 = vmatprep.subr.mxu0 0.0
        %4401 = vmatpush2.xpose.msra.mxu0 0.0
        %4402 = vmatprep.subr.mxu0 0.0
        %4403 = vmatpush2.xpose.msra.mxu0 0.0
        %4404 = vmatprep.subr.mxu0 0.0
        %4405 = vmatpush2.xpose.msra.mxu0 0.0
        %4406 = vmatprep.mubr.f32.mxu0 0.0
        %4407 = vmatmul.mubr.f32.gmra.mxu0 %v4334
        %v4408 = vpop.f32.mrf.mxu0
        %v4409 = vadd.f32 %v3865, %v4408
        %v4410 = vpop.f32.mrf.mxu0
        %4411 = vmatprep.mubr.f32.mxu0 0.0
        %4412 = vmatmul.mubr.f32.gmra.mxu0 %v4336
        %v4413 = vpop.f32.mrf.mxu0
        %v4414 = vadd.f32 %v3866, %v4413
        %v4415 = vpop.f32.mrf.mxu0
        %4416 = vdwg.mxu0
        %4417 = vrot.lane.b32.xlu0 %v520, 112
        %v4418 = vpop.permute.xlu0 %4417
        %4419 = vrot.lane.b32.xlu0 %v525, 112
        %v4420 = vpop.permute.xlu0 %4419
        %4421 = vrot.lane.b32.xlu0 %v520, 80
        %v4422 = vpop.permute.xlu0 %4421
        %4423 = vrot.lane.b32.xlu0 %v525, 80
        %v4424 = vpop.permute.xlu0 %4423
        %v4425 = vsel %vm560, %v4418, 0
        %v4427 = vsel %vm560, %v4420, 0
        %v4429 = vsel %vm560, %v4422, 0
        %v4431 = vsel %vm560, %v4424, 0
        %4433 = vmatprep.subr.mxu0 0.0
        %4434 = vmatpush1.xpose.msra.mxu0 0.0
        %4435 = vmatprep.subr.mxu0 0.0
        %4436 = vmatpush1.xpose.msra.mxu0 0.0
        %4437 = vmatprep.subr.mxu0 0.0
        %4438 = vmatpush1.xpose.msra.mxu0 0.0
        %4439 = vmatprep.subr.mxu0 0.0
        %4440 = vmatpush1.xpose.msra.mxu0 0.0
        %4441 = vmatprep.subr.mxu0 0.0
        %4442 = vmatpush1.xpose.msra.mxu0 0.0
        %4443 = vmatprep.subr.mxu0 0.0
        %4444 = vmatpush1.xpose.msra.mxu0 0.0
        %4445 = vmatprep.subr.mxu0 0.0
        %4446 = vmatpush1.xpose.msra.mxu0 0.0
        %4447 = vmatprep.subr.mxu0 0.0
        %4448 = vmatpush1.xpose.msra.mxu0 0.0
        %4449 = vmatprep.subr.mxu0 0.0
        %4450 = vmatpush1.xpose.msra.mxu0 0.0
        %4451 = vmatprep.subr.mxu0 0.0
        %4452 = vmatpush1.xpose.msra.mxu0 0.0
        %4453 = vmatprep.subr.mxu0 0.0
        %4454 = vmatpush1.xpose.msra.mxu0 0.0
        %4455 = vmatprep.subr.mxu0 0.0
        %4456 = vmatpush1.xpose.msra.mxu0 0.0
        %4457 = vmatprep.subr.mxu0 0.0
        %4458 = vmatpush1.xpose.msra.mxu0 0.0
        %4459 = vmatprep.subr.mxu0 0.0
        %4460 = vmatpush1.xpose.msra.mxu0 0.0
        %4461 = vmatprep.subr.mxu0 0.0
        %4462 = vmatpush1.xpose.msra.mxu0 %v4431
        %4463 = vmatprep.subr.mxu0 0.0
        %4464 = vmatpush1.xpose.msra.mxu0 %v4429
        %4465 = vmatprep.subr.mxu0 0.0
        %4466 = vmatpush2.xpose.msra.mxu0 0.0
        %4467 = vmatprep.subr.mxu0 0.0
        %4468 = vmatpush2.xpose.msra.mxu0 0.0
        %4469 = vmatprep.subr.mxu0 0.0
        %4470 = vmatpush2.xpose.msra.mxu0 0.0
        %4471 = vmatprep.subr.mxu0 0.0
        %4472 = vmatpush2.xpose.msra.mxu0 0.0
        %4473 = vmatprep.subr.mxu0 0.0
        %4474 = vmatpush2.xpose.msra.mxu0 0.0
        %4475 = vmatprep.subr.mxu0 0.0
        %4476 = vmatpush2.xpose.msra.mxu0 0.0
        %4477 = vmatprep.subr.mxu0 0.0
        %4478 = vmatpush2.xpose.msra.mxu0 0.0
        %4479 = vmatprep.subr.mxu0 0.0
        %4480 = vmatpush2.xpose.msra.mxu0 0.0
        %4481 = vmatprep.subr.mxu0 0.0
        %4482 = vmatpush2.xpose.msra.mxu0 0.0
        %4483 = vmatprep.subr.mxu0 0.0
        %4484 = vmatpush2.xpose.msra.mxu0 0.0
        %4485 = vmatprep.subr.mxu0 0.0
        %4486 = vmatpush2.xpose.msra.mxu0 0.0
        %4487 = vmatprep.subr.mxu0 0.0
        %4488 = vmatpush2.xpose.msra.mxu0 0.0
        %4489 = vmatprep.subr.mxu0 0.0
        %4490 = vmatpush2.xpose.msra.mxu0 0.0
        %4491 = vmatprep.subr.mxu0 0.0
        %4492 = vmatpush2.xpose.msra.mxu0 0.0
        %4493 = vmatprep.subr.mxu0 0.0
        %4494 = vmatpush2.xpose.msra.mxu0 0.0
        %4495 = vmatprep.subr.mxu0 0.0
        %4496 = vmatpush2.xpose.msra.mxu0 0.0
        %4497 = vmatprep.mubr.f32.mxu0 0.0
        %4498 = vmatmul.mubr.f32.gmra.mxu0 %v4425
        %v4499 = vpop.f32.mrf.mxu0
        %v4500 = vadd.f32 %v3867, %v4499
        %v4501 = vpop.f32.mrf.mxu0
        %4502 = vmatprep.mubr.f32.mxu0 0.0
        %4503 = vmatmul.mubr.f32.gmra.mxu0 %v4427
        %v4504 = vpop.f32.mrf.mxu0
        %v4505 = vadd.f32 %v3868, %v4504
        %v4506 = vpop.f32.mrf.mxu0
        %4507 = vdwg.mxu0
        %4508 = vrot.lane.b32.xlu0 %v530, 112
        %v4509 = vpop.permute.xlu0 %4508
        %4510 = vrot.lane.b32.xlu0 %v535, 112
        %v4511 = vpop.permute.xlu0 %4510
        %4512 = vrot.lane.b32.xlu0 %v530, 80
        %v4513 = vpop.permute.xlu0 %4512
        %4514 = vrot.lane.b32.xlu0 %v535, 80
        %v4515 = vpop.permute.xlu0 %4514
        %v4516 = vsel %vm560, %v4509, 0
        %v4518 = vsel %vm560, %v4511, 0
        %v4520 = vsel %vm560, %v4513, 0
        %v4522 = vsel %vm560, %v4515, 0
        %4524 = vmatprep.subr.mxu0 0.0
        %4525 = vmatpush1.xpose.msra.mxu0 0.0
        %4526 = vmatprep.subr.mxu0 0.0
        %4527 = vmatpush1.xpose.msra.mxu0 0.0
        %4528 = vmatprep.subr.mxu0 0.0
        %4529 = vmatpush1.xpose.msra.mxu0 0.0
        %4530 = vmatprep.subr.mxu0 0.0
        %4531 = vmatpush1.xpose.msra.mxu0 0.0
        %4532 = vmatprep.subr.mxu0 0.0
        %4533 = vmatpush1.xpose.msra.mxu0 0.0
        %4534 = vmatprep.subr.mxu0 0.0
        %4535 = vmatpush1.xpose.msra.mxu0 0.0
        %4536 = vmatprep.subr.mxu0 0.0
        %4537 = vmatpush1.xpose.msra.mxu0 0.0
        %4538 = vmatprep.subr.mxu0 0.0
        %4539 = vmatpush1.xpose.msra.mxu0 0.0
        %4540 = vmatprep.subr.mxu0 0.0
        %4541 = vmatpush1.xpose.msra.mxu0 0.0
        %4542 = vmatprep.subr.mxu0 0.0
        %4543 = vmatpush1.xpose.msra.mxu0 0.0
        %4544 = vmatprep.subr.mxu0 0.0
        %4545 = vmatpush1.xpose.msra.mxu0 0.0
        %4546 = vmatprep.subr.mxu0 0.0
        %4547 = vmatpush1.xpose.msra.mxu0 0.0
        %4548 = vmatprep.subr.mxu0 0.0
        %4549 = vmatpush1.xpose.msra.mxu0 0.0
        %4550 = vmatprep.subr.mxu0 0.0
        %4551 = vmatpush1.xpose.msra.mxu0 0.0
        %4552 = vmatprep.subr.mxu0 0.0
        %4553 = vmatpush1.xpose.msra.mxu0 %v4522
        %4554 = vmatprep.subr.mxu0 0.0
        %4555 = vmatpush1.xpose.msra.mxu0 %v4520
        %4556 = vmatprep.subr.mxu0 0.0
        %4557 = vmatpush2.xpose.msra.mxu0 0.0
        %4558 = vmatprep.subr.mxu0 0.0
        %4559 = vmatpush2.xpose.msra.mxu0 0.0
        %4560 = vmatprep.subr.mxu0 0.0
        %4561 = vmatpush2.xpose.msra.mxu0 0.0
        %4562 = vmatprep.subr.mxu0 0.0
        %4563 = vmatpush2.xpose.msra.mxu0 0.0
        %4564 = vmatprep.subr.mxu0 0.0
        %4565 = vmatpush2.xpose.msra.mxu0 0.0
        %4566 = vmatprep.subr.mxu0 0.0
        %4567 = vmatpush2.xpose.msra.mxu0 0.0
        %4568 = vmatprep.subr.mxu0 0.0
        %4569 = vmatpush2.xpose.msra.mxu0 0.0
        %4570 = vmatprep.subr.mxu0 0.0
        %4571 = vmatpush2.xpose.msra.mxu0 0.0
        %4572 = vmatprep.subr.mxu0 0.0
        %4573 = vmatpush2.xpose.msra.mxu0 0.0
        %4574 = vmatprep.subr.mxu0 0.0
        %4575 = vmatpush2.xpose.msra.mxu0 0.0
        %4576 = vmatprep.subr.mxu0 0.0
        %4577 = vmatpush2.xpose.msra.mxu0 0.0
        %4578 = vmatprep.subr.mxu0 0.0
        %4579 = vmatpush2.xpose.msra.mxu0 0.0
        %4580 = vmatprep.subr.mxu0 0.0
        %4581 = vmatpush2.xpose.msra.mxu0 0.0
        %4582 = vmatprep.subr.mxu0 0.0
        %4583 = vmatpush2.xpose.msra.mxu0 0.0
        %4584 = vmatprep.subr.mxu0 0.0
        %4585 = vmatpush2.xpose.msra.mxu0 0.0
        %4586 = vmatprep.subr.mxu0 0.0
        %4587 = vmatpush2.xpose.msra.mxu0 0.0
        %4588 = vmatprep.mubr.f32.mxu0 0.0
        %4589 = vmatmul.mubr.f32.gmra.mxu0 %v4516
        %v4590 = vpop.f32.mrf.mxu0
        %v4591 = vadd.f32 %v3869, %v4590
        %v4592 = vpop.f32.mrf.mxu0
        %4593 = vmatprep.mubr.f32.mxu0 0.0
        %4594 = vmatmul.mubr.f32.gmra.mxu0 %v4518
        %v4595 = vpop.f32.mrf.mxu0
        %v4596 = vadd.f32 %v3870, %v4595
        %v4597 = vpop.f32.mrf.mxu0
        %4598 = vdwg.mxu0
        %v4599 = vsel %vm1267, %v3954, -inf
        %4600 = vmax.xlane.f32.xlu0 %v4599
        %v4601 = vpop.xlane.xlu0 %4600
        %v4602 = vsel %vm1267, %v3959, -inf
        %4603 = vmax.xlane.f32.xlu0 %v4602
        %v4604 = vpop.xlane.xlu0 %4603
        %v4605 = vsel %vm1267, %v4045, -inf
        %4606 = vmax.xlane.f32.xlu0 %v4605
        %v4607 = vpop.xlane.xlu0 %4606
        %v4608 = vsel %vm1267, %v4050, -inf
        %4609 = vmax.xlane.f32.xlu0 %v4608
        %v4610 = vpop.xlane.xlu0 %4609
        %v4611 = vsel %vm1267, %v4136, -inf
        %4612 = vmax.xlane.f32.xlu0 %v4611
        %v4613 = vpop.xlane.xlu0 %4612
        %v4614 = vsel %vm1267, %v4141, -inf
        %4615 = vmax.xlane.f32.xlu0 %v4614
        %v4616 = vpop.xlane.xlu0 %4615
        %v4617 = vsel %vm1267, %v4227, -inf
        %4618 = vmax.xlane.f32.xlu0 %v4617
        %v4619 = vpop.xlane.xlu0 %4618
        %v4620 = vsel %vm1267, %v4232, -inf
        %4621 = vmax.xlane.f32.xlu0 %v4620
        %v4622 = vpop.xlane.xlu0 %4621
        %v4623 = vsel %vm1267, %v4318, -inf
        %4624 = vmax.xlane.f32.xlu0 %v4623
        %v4625 = vpop.xlane.xlu0 %4624
        %v4626 = vsel %vm1267, %v4323, -inf
        %4627 = vmax.xlane.f32.xlu0 %v4626
        %v4628 = vpop.xlane.xlu0 %4627
        %v4629 = vsel %vm1267, %v4409, -inf
        %4630 = vmax.xlane.f32.xlu0 %v4629
        %v4631 = vpop.xlane.xlu0 %4630
        %v4632 = vsel %vm1267, %v4414, -inf
        %4633 = vmax.xlane.f32.xlu0 %v4632
        %v4634 = vpop.xlane.xlu0 %4633
        %v4635 = vsel %vm1267, %v4500, -inf
        %4636 = vmax.xlane.f32.xlu0 %v4635
        %v4637 = vpop.xlane.xlu0 %4636
        %v4638 = vsel %vm1267, %v4505, -inf
        %4639 = vmax.xlane.f32.xlu0 %v4638
        %v4640 = vpop.xlane.xlu0 %4639
        %v4641 = vsel %vm1267, %v4591, -inf
        %4642 = vmax.xlane.f32.xlu0 %v4641
        %v4643 = vpop.xlane.xlu0 %4642
        %v4644 = vsel %vm1267, %v4596, -inf
        %4645 = vmax.xlane.f32.xlu0 %v4644
        %v4646 = vpop.xlane.xlu0 %4645
        %v4647 = vsub.f32 %v3954, %v4601
        %v4648 = vsub.f32 %v3959, %v4604
        %v4649 = vsub.f32 %v4045, %v4607
        %v4650 = vsub.f32 %v4050, %v4610
        %v4651 = vsub.f32 %v4136, %v4613
        %v4652 = vsub.f32 %v4141, %v4616
        %v4653 = vsub.f32 %v4227, %v4619
        %v4654 = vsub.f32 %v4232, %v4622
        %v4655 = vsub.f32 %v4318, %v4625
        %v4656 = vsub.f32 %v4323, %v4628
        %v4657 = vsub.f32 %v4409, %v4631
        %v4658 = vsub.f32 %v4414, %v4634
        %v4659 = vsub.f32 %v4500, %v4637
        %v4660 = vsub.f32 %v4505, %v4640
        %v4661 = vsub.f32 %v4591, %v4643
        %v4662 = vsub.f32 %v4596, %v4646
        %v4663 = vmul.f32 %v4647, 1.442695
        %v4664 = vpow.pop %v4663
        %v4665 = vmul.f32 %v4648, 1.442695
        %v4666 = vpow.pop %v4665
        %v4667 = vmul.f32 %v4649, 1.442695
        %v4668 = vpow.pop %v4667
        %v4669 = vmul.f32 %v4650, 1.442695
        %v4670 = vpow.pop %v4669
        %v4671 = vmul.f32 %v4651, 1.442695
        %v4672 = vpow.pop %v4671
        %v4673 = vmul.f32 %v4652, 1.442695
        %v4674 = vpow.pop %v4673
        %v4675 = vmul.f32 %v4653, 1.442695
        %v4676 = vpow.pop %v4675
        %v4677 = vmul.f32 %v4654, 1.442695
        %v4678 = vpow.pop %v4677
        %v4679 = vmul.f32 %v4655, 1.442695
        %v4680 = vpow.pop %v4679
        %v4681 = vmul.f32 %v4656, 1.442695
        %v4682 = vpow.pop %v4681
        %v4683 = vmul.f32 %v4657, 1.442695
        %v4684 = vpow.pop %v4683
        %v4685 = vmul.f32 %v4658, 1.442695
        %v4686 = vpow.pop %v4685
        %v4687 = vmul.f32 %v4659, 1.442695
        %v4688 = vpow.pop %v4687
        %v4689 = vmul.f32 %v4660, 1.442695
        %v4690 = vpow.pop %v4689
        %v4691 = vmul.f32 %v4661, 1.442695
        %v4692 = vpow.pop %v4691
        %v4693 = vmul.f32 %v4662, 1.442695
        %v4694 = vpow.pop %v4693
        %v4695 = vsel %vm1267, %v4664, 0.0
        %4696 = vadd.xlane.f32.xlu0 %v4695
        %v4697 = vpop.xlane.xlu0 %4696
        %v4698 = vsel %vm1267, %v4666, 0.0
        %4699 = vadd.xlane.f32.xlu0 %v4698
        %v4700 = vpop.xlane.xlu0 %4699
        %v4701 = vsel %vm1267, %v4668, 0.0
        %4702 = vadd.xlane.f32.xlu0 %v4701
        %v4703 = vpop.xlane.xlu0 %4702
        %v4704 = vsel %vm1267, %v4670, 0.0
        %4705 = vadd.xlane.f32.xlu0 %v4704
        %v4706 = vpop.xlane.xlu0 %4705
        %v4707 = vsel %vm1267, %v4672, 0.0
        %4708 = vadd.xlane.f32.xlu0 %v4707
        %v4709 = vpop.xlane.xlu0 %4708
        %v4710 = vsel %vm1267, %v4674, 0.0
        %4711 = vadd.xlane.f32.xlu0 %v4710
        %v4712 = vpop.xlane.xlu0 %4711
        %v4713 = vsel %vm1267, %v4676, 0.0
        %4714 = vadd.xlane.f32.xlu0 %v4713
        %v4715 = vpop.xlane.xlu0 %4714
        %v4716 = vsel %vm1267, %v4678, 0.0
        %4717 = vadd.xlane.f32.xlu0 %v4716
        %v4718 = vpop.xlane.xlu0 %4717
        %v4719 = vsel %vm1267, %v4680, 0.0
        %4720 = vadd.xlane.f32.xlu0 %v4719
        %v4721 = vpop.xlane.xlu0 %4720
        %v4722 = vsel %vm1267, %v4682, 0.0
        %4723 = vadd.xlane.f32.xlu0 %v4722
        %v4724 = vpop.xlane.xlu0 %4723
        %v4725 = vsel %vm1267, %v4684, 0.0
        %4726 = vadd.xlane.f32.xlu0 %v4725
        %v4727 = vpop.xlane.xlu0 %4726
        %v4728 = vsel %vm1267, %v4686, 0.0
        %4729 = vadd.xlane.f32.xlu0 %v4728
        %v4730 = vpop.xlane.xlu0 %4729
        %v4731 = vsel %vm1267, %v4688, 0.0
        %4732 = vadd.xlane.f32.xlu0 %v4731
        %v4733 = vpop.xlane.xlu0 %4732
        %v4734 = vsel %vm1267, %v4690, 0.0
        %4735 = vadd.xlane.f32.xlu0 %v4734
        %v4736 = vpop.xlane.xlu0 %4735
        %v4737 = vsel %vm1267, %v4692, 0.0
        %4738 = vadd.xlane.f32.xlu0 %v4737
        %v4739 = vpop.xlane.xlu0 %4738
        %v4740 = vsel %vm1267, %v4694, 0.0
        %4741 = vadd.xlane.f32.xlu0 %v4740
        %v4742 = vpop.xlane.xlu0 %4741
        %v4743 = vrcp.pop %v4697
        %v4744 = vrcp.pop %v4700
        %v4745 = vrcp.pop %v4703
        %v4746 = vrcp.pop %v4706
        %v4747 = vrcp.pop %v4709
        %v4748 = vrcp.pop %v4712
        %v4749 = vrcp.pop %v4715
        %v4750 = vrcp.pop %v4718
        %v4751 = vrcp.pop %v4721
        %v4752 = vrcp.pop %v4724
        %v4753 = vrcp.pop %v4727
        %v4754 = vrcp.pop %v4730
        %v4755 = vrcp.pop %v4733
        %v4756 = vrcp.pop %v4736
        %v4757 = vrcp.pop %v4739
        %v4758 = vrcp.pop %v4742
        %v4759 = vmul.f32 %v4664, %v4743
        %v4760 = vmul.f32 %v4666, %v4744
        %v4761 = vmul.f32 %v4668, %v4745
        %v4762 = vmul.f32 %v4670, %v4746
        %v4763 = vmul.f32 %v4672, %v4747
        %v4764 = vmul.f32 %v4674, %v4748
        %v4765 = vmul.f32 %v4676, %v4749
        %v4766 = vmul.f32 %v4678, %v4750
        %v4767 = vmul.f32 %v4680, %v4751
        %v4768 = vmul.f32 %v4682, %v4752
        %v4769 = vmul.f32 %v4684, %v4753
        %v4770 = vmul.f32 %v4686, %v4754
        %v4771 = vmul.f32 %v4688, %v4755
        %v4772 = vmul.f32 %v4690, %v4756
        %v4773 = vmul.f32 %v4692, %v4757
        %v4774 = vmul.f32 %v4694, %v4758
        %4775 = vrot.lane.b32.xlu0 %v460, 48
        %v4776 = vpop.permute.xlu0 %4775
        %4777 = vrot.lane.b32.xlu0 %v465, 48
        %v4778 = vpop.permute.xlu0 %4777
        %v4782 = vsel %vm1267, %v4759, 0
        %v4785 = vsel %vm1267, %v4760, 0
        %4787 = vmatprep.subr.mxu0 0.0
        %4788 = vmatpush1.msra.mxu0 0.0
        %4789 = vmatprep.subr.mxu0 0.0
        %4790 = vmatpush1.msra.mxu0 0.0
        %4791 = vmatprep.subr.mxu0 0.0
        %4792 = vmatpush1.msra.mxu0 0.0
        %4793 = vmatprep.subr.mxu0 0.0
        %4794 = vmatpush1.msra.mxu0 0.0
        %4795 = vmatprep.subr.mxu0 0.0
        %4796 = vmatpush1.msra.mxu0 0.0
        %4797 = vmatprep.subr.mxu0 0.0
        %4798 = vmatpush1.msra.mxu0 0.0
        %4799 = vmatprep.subr.mxu0 0.0
        %4800 = vmatpush1.msra.mxu0 0.0
        %4801 = vmatprep.subr.mxu0 0.0
        %4802 = vmatpush1.msra.mxu0 0.0
        %4803 = vmatprep.subr.mxu0 0.0
        %4804 = vmatpush1.msra.mxu0 0.0
        %4805 = vmatprep.subr.mxu0 0.0
        %4806 = vmatpush1.msra.mxu0 0.0
        %4807 = vmatprep.subr.mxu0 0.0
        %4808 = vmatpush1.msra.mxu0 0.0
        %4809 = vmatprep.subr.mxu0 0.0
        %4810 = vmatpush1.msra.mxu0 0.0
        %4811 = vmatprep.subr.mxu0 0.0
        %4812 = vmatpush1.msra.mxu0 0.0
        %4813 = vmatprep.subr.mxu0 0.0
        %4814 = vmatpush1.msra.mxu0 0.0
        %4815 = vmatprep.subr.mxu0 0.0
        %4816 = vmatpush1.msra.mxu0 %v4778
        %4817 = vmatprep.subr.mxu0 0.0
        %4818 = vmatpush1.msra.mxu0 %v4776
        %4819 = vmatprep.subr.mxu0 0.0
        %4820 = vmatpush2.msra.mxu0 0.0
        %4821 = vmatprep.subr.mxu0 0.0
        %4822 = vmatpush2.msra.mxu0 0.0
        %4823 = vmatprep.subr.mxu0 0.0
        %4824 = vmatpush2.msra.mxu0 0.0
        %4825 = vmatprep.subr.mxu0 0.0
        %4826 = vmatpush2.msra.mxu0 0.0
        %4827 = vmatprep.subr.mxu0 0.0
        %4828 = vmatpush2.msra.mxu0 0.0
        %4829 = vmatprep.subr.mxu0 0.0
        %4830 = vmatpush2.msra.mxu0 0.0
        %4831 = vmatprep.subr.mxu0 0.0
        %4832 = vmatpush2.msra.mxu0 0.0
        %4833 = vmatprep.subr.mxu0 0.0
        %4834 = vmatpush2.msra.mxu0 0.0
        %4835 = vmatprep.subr.mxu0 0.0
        %4836 = vmatpush2.msra.mxu0 0.0
        %4837 = vmatprep.subr.mxu0 0.0
        %4838 = vmatpush2.msra.mxu0 0.0
        %4839 = vmatprep.subr.mxu0 0.0
        %4840 = vmatpush2.msra.mxu0 0.0
        %4841 = vmatprep.subr.mxu0 0.0
        %4842 = vmatpush2.msra.mxu0 0.0
        %4843 = vmatprep.subr.mxu0 0.0
        %4844 = vmatpush2.msra.mxu0 0.0
        %4845 = vmatprep.subr.mxu0 0.0
        %4846 = vmatpush2.msra.mxu0 0.0
        %4847 = vmatprep.subr.mxu0 0.0
        %4848 = vmatpush2.msra.mxu0 0.0
        %4849 = vmatprep.subr.mxu0 0.0
        %4850 = vmatpush2.msra.mxu0 0.0
        %4851 = vmatprep.mubr.f32.mxu0 0.0
        %4852 = vmatmul.mubr.f32.gmra.mxu0 %v4782
        %v4853 = vpop.f32.mrf.mxu0
        %v4854 = vadd.f32 0.0, %v4853
        %v4855 = vpop.f32.mrf.mxu0
        %4856 = vmatprep.mubr.f32.mxu0 0.0
        %4857 = vmatmul.mubr.f32.gmra.mxu0 %v4785
        %v4858 = vpop.f32.mrf.mxu0
        %v4859 = vadd.f32 0.0, %v4858
        %v4860 = vpop.f32.mrf.mxu0
        %4861 = vdwg.mxu0
        %4862 = vrot.lane.b32.xlu0 %v470, 48
        %v4863 = vpop.permute.xlu0 %4862
        %4864 = vrot.lane.b32.xlu0 %v475, 48
        %v4865 = vpop.permute.xlu0 %4864
        %v4869 = vsel %vm1267, %v4761, 0
        %v4872 = vsel %vm1267, %v4762, 0
        %4874 = vmatprep.subr.mxu0 0.0
        %4875 = vmatpush1.msra.mxu0 0.0
        %4876 = vmatprep.subr.mxu0 0.0
        %4877 = vmatpush1.msra.mxu0 0.0
        %4878 = vmatprep.subr.mxu0 0.0
        %4879 = vmatpush1.msra.mxu0 0.0
        %4880 = vmatprep.subr.mxu0 0.0
        %4881 = vmatpush1.msra.mxu0 0.0
        %4882 = vmatprep.subr.mxu0 0.0
        %4883 = vmatpush1.msra.mxu0 0.0
        %4884 = vmatprep.subr.mxu0 0.0
        %4885 = vmatpush1.msra.mxu0 0.0
        %4886 = vmatprep.subr.mxu0 0.0
        %4887 = vmatpush1.msra.mxu0 0.0
        %4888 = vmatprep.subr.mxu0 0.0
        %4889 = vmatpush1.msra.mxu0 0.0
        %4890 = vmatprep.subr.mxu0 0.0
        %4891 = vmatpush1.msra.mxu0 0.0
        %4892 = vmatprep.subr.mxu0 0.0
        %4893 = vmatpush1.msra.mxu0 0.0
        %4894 = vmatprep.subr.mxu0 0.0
        %4895 = vmatpush1.msra.mxu0 0.0
        %4896 = vmatprep.subr.mxu0 0.0
        %4897 = vmatpush1.msra.mxu0 0.0
        %4898 = vmatprep.subr.mxu0 0.0
        %4899 = vmatpush1.msra.mxu0 0.0
        %4900 = vmatprep.subr.mxu0 0.0
        %4901 = vmatpush1.msra.mxu0 0.0
        %4902 = vmatprep.subr.mxu0 0.0
        %4903 = vmatpush1.msra.mxu0 %v4865
        %4904 = vmatprep.subr.mxu0 0.0
        %4905 = vmatpush1.msra.mxu0 %v4863
        %4906 = vmatprep.subr.mxu0 0.0
        %4907 = vmatpush2.msra.mxu0 0.0
        %4908 = vmatprep.subr.mxu0 0.0
        %4909 = vmatpush2.msra.mxu0 0.0
        %4910 = vmatprep.subr.mxu0 0.0
        %4911 = vmatpush2.msra.mxu0 0.0
        %4912 = vmatprep.subr.mxu0 0.0
        %4913 = vmatpush2.msra.mxu0 0.0
        %4914 = vmatprep.subr.mxu0 0.0
        %4915 = vmatpush2.msra.mxu0 0.0
        %4916 = vmatprep.subr.mxu0 0.0
        %4917 = vmatpush2.msra.mxu0 0.0
        %4918 = vmatprep.subr.mxu0 0.0
        %4919 = vmatpush2.msra.mxu0 0.0
        %4920 = vmatprep.subr.mxu0 0.0
        %4921 = vmatpush2.msra.mxu0 0.0
        %4922 = vmatprep.subr.mxu0 0.0
        %4923 = vmatpush2.msra.mxu0 0.0
        %4924 = vmatprep.subr.mxu0 0.0
        %4925 = vmatpush2.msra.mxu0 0.0
        %4926 = vmatprep.subr.mxu0 0.0
        %4927 = vmatpush2.msra.mxu0 0.0
        %4928 = vmatprep.subr.mxu0 0.0
        %4929 = vmatpush2.msra.mxu0 0.0
        %4930 = vmatprep.subr.mxu0 0.0
        %4931 = vmatpush2.msra.mxu0 0.0
        %4932 = vmatprep.subr.mxu0 0.0
        %4933 = vmatpush2.msra.mxu0 0.0
        %4934 = vmatprep.subr.mxu0 0.0
        %4935 = vmatpush2.msra.mxu0 0.0
        %4936 = vmatprep.subr.mxu0 0.0
        %4937 = vmatpush2.msra.mxu0 0.0
        %4938 = vmatprep.mubr.f32.mxu0 0.0
        %4939 = vmatmul.mubr.f32.gmra.mxu0 %v4869
        %v4940 = vpop.f32.mrf.mxu0
        %v4941 = vadd.f32 0.0, %v4940
        %v4942 = vpop.f32.mrf.mxu0
        %4943 = vmatprep.mubr.f32.mxu0 0.0
        %4944 = vmatmul.mubr.f32.gmra.mxu0 %v4872
        %v4945 = vpop.f32.mrf.mxu0
        %v4946 = vadd.f32 0.0, %v4945
        %v4947 = vpop.f32.mrf.mxu0
        %4948 = vdwg.mxu0
        %4949 = vrot.lane.b32.xlu0 %v480, 48
        %v4950 = vpop.permute.xlu0 %4949
        %4951 = vrot.lane.b32.xlu0 %v485, 48
        %v4952 = vpop.permute.xlu0 %4951
        %v4956 = vsel %vm1267, %v4763, 0
        %v4959 = vsel %vm1267, %v4764, 0
        %4961 = vmatprep.subr.mxu0 0.0
        %4962 = vmatpush1.msra.mxu0 0.0
        %4963 = vmatprep.subr.mxu0 0.0
        %4964 = vmatpush1.msra.mxu0 0.0
        %4965 = vmatprep.subr.mxu0 0.0
        %4966 = vmatpush1.msra.mxu0 0.0
        %4967 = vmatprep.subr.mxu0 0.0
        %4968 = vmatpush1.msra.mxu0 0.0
        %4969 = vmatprep.subr.mxu0 0.0
        %4970 = vmatpush1.msra.mxu0 0.0
        %4971 = vmatprep.subr.mxu0 0.0
        %4972 = vmatpush1.msra.mxu0 0.0
        %4973 = vmatprep.subr.mxu0 0.0
        %4974 = vmatpush1.msra.mxu0 0.0
        %4975 = vmatprep.subr.mxu0 0.0
        %4976 = vmatpush1.msra.mxu0 0.0
        %4977 = vmatprep.subr.mxu0 0.0
        %4978 = vmatpush1.msra.mxu0 0.0
        %4979 = vmatprep.subr.mxu0 0.0
        %4980 = vmatpush1.msra.mxu0 0.0
        %4981 = vmatprep.subr.mxu0 0.0
        %4982 = vmatpush1.msra.mxu0 0.0
        %4983 = vmatprep.subr.mxu0 0.0
        %4984 = vmatpush1.msra.mxu0 0.0
        %4985 = vmatprep.subr.mxu0 0.0
        %4986 = vmatpush1.msra.mxu0 0.0
        %4987 = vmatprep.subr.mxu0 0.0
        %4988 = vmatpush1.msra.mxu0 0.0
        %4989 = vmatprep.subr.mxu0 0.0
        %4990 = vmatpush1.msra.mxu0 %v4952
        %4991 = vmatprep.subr.mxu0 0.0
        %4992 = vmatpush1.msra.mxu0 %v4950
        %4993 = vmatprep.subr.mxu0 0.0
        %4994 = vmatpush2.msra.mxu0 0.0
        %4995 = vmatprep.subr.mxu0 0.0
        %4996 = vmatpush2.msra.mxu0 0.0
        %4997 = vmatprep.subr.mxu0 0.0
        %4998 = vmatpush2.msra.mxu0 0.0
        %4999 = vmatprep.subr.mxu0 0.0
        %5000 = vmatpush2.msra.mxu0 0.0
        %5001 = vmatprep.subr.mxu0 0.0
        %5002 = vmatpush2.msra.mxu0 0.0
        %5003 = vmatprep.subr.mxu0 0.0
        %5004 = vmatpush2.msra.mxu0 0.0
        %5005 = vmatprep.subr.mxu0 0.0
        %5006 = vmatpush2.msra.mxu0 0.0
        %5007 = vmatprep.subr.mxu0 0.0
        %5008 = vmatpush2.msra.mxu0 0.0
        %5009 = vmatprep.subr.mxu0 0.0
        %5010 = vmatpush2.msra.mxu0 0.0
        %5011 = vmatprep.subr.mxu0 0.0
        %5012 = vmatpush2.msra.mxu0 0.0
        %5013 = vmatprep.subr.mxu0 0.0
        %5014 = vmatpush2.msra.mxu0 0.0
        %5015 = vmatprep.subr.mxu0 0.0
        %5016 = vmatpush2.msra.mxu0 0.0
        %5017 = vmatprep.subr.mxu0 0.0
        %5018 = vmatpush2.msra.mxu0 0.0
        %5019 = vmatprep.subr.mxu0 0.0
        %5020 = vmatpush2.msra.mxu0 0.0
        %5021 = vmatprep.subr.mxu0 0.0
        %5022 = vmatpush2.msra.mxu0 0.0
        %5023 = vmatprep.subr.mxu0 0.0
        %5024 = vmatpush2.msra.mxu0 0.0
        %5025 = vmatprep.mubr.f32.mxu0 0.0
        %5026 = vmatmul.mubr.f32.gmra.mxu0 %v4956
        %v5027 = vpop.f32.mrf.mxu0
        %v5028 = vadd.f32 0.0, %v5027
        %v5029 = vpop.f32.mrf.mxu0
        %5030 = vmatprep.mubr.f32.mxu0 0.0
        %5031 = vmatmul.mubr.f32.gmra.mxu0 %v4959
        %v5032 = vpop.f32.mrf.mxu0
        %v5033 = vadd.f32 0.0, %v5032
        %v5034 = vpop.f32.mrf.mxu0
        %5035 = vdwg.mxu0
        %5036 = vrot.lane.b32.xlu0 %v490, 48
        %v5037 = vpop.permute.xlu0 %5036
        %5038 = vrot.lane.b32.xlu0 %v495, 48
        %v5039 = vpop.permute.xlu0 %5038
        %v5043 = vsel %vm1267, %v4765, 0
        %v5046 = vsel %vm1267, %v4766, 0
        %5048 = vmatprep.subr.mxu0 0.0
        %5049 = vmatpush1.msra.mxu0 0.0
        %5050 = vmatprep.subr.mxu0 0.0
        %5051 = vmatpush1.msra.mxu0 0.0
        %5052 = vmatprep.subr.mxu0 0.0
        %5053 = vmatpush1.msra.mxu0 0.0
        %5054 = vmatprep.subr.mxu0 0.0
        %5055 = vmatpush1.msra.mxu0 0.0
        %5056 = vmatprep.subr.mxu0 0.0
        %5057 = vmatpush1.msra.mxu0 0.0
        %5058 = vmatprep.subr.mxu0 0.0
        %5059 = vmatpush1.msra.mxu0 0.0
        %5060 = vmatprep.subr.mxu0 0.0
        %5061 = vmatpush1.msra.mxu0 0.0
        %5062 = vmatprep.subr.mxu0 0.0
        %5063 = vmatpush1.msra.mxu0 0.0
        %5064 = vmatprep.subr.mxu0 0.0
        %5065 = vmatpush1.msra.mxu0 0.0
        %5066 = vmatprep.subr.mxu0 0.0
        %5067 = vmatpush1.msra.mxu0 0.0
        %5068 = vmatprep.subr.mxu0 0.0
        %5069 = vmatpush1.msra.mxu0 0.0
        %5070 = vmatprep.subr.mxu0 0.0
        %5071 = vmatpush1.msra.mxu0 0.0
        %5072 = vmatprep.subr.mxu0 0.0
        %5073 = vmatpush1.msra.mxu0 0.0
        %5074 = vmatprep.subr.mxu0 0.0
        %5075 = vmatpush1.msra.mxu0 0.0
        %5076 = vmatprep.subr.mxu0 0.0
        %5077 = vmatpush1.msra.mxu0 %v5039
        %5078 = vmatprep.subr.mxu0 0.0
        %5079 = vmatpush1.msra.mxu0 %v5037
        %5080 = vmatprep.subr.mxu0 0.0
        %5081 = vmatpush2.msra.mxu0 0.0
        %5082 = vmatprep.subr.mxu0 0.0
        %5083 = vmatpush2.msra.mxu0 0.0
        %5084 = vmatprep.subr.mxu0 0.0
        %5085 = vmatpush2.msra.mxu0 0.0
        %5086 = vmatprep.subr.mxu0 0.0
        %5087 = vmatpush2.msra.mxu0 0.0
        %5088 = vmatprep.subr.mxu0 0.0
        %5089 = vmatpush2.msra.mxu0 0.0
        %5090 = vmatprep.subr.mxu0 0.0
        %5091 = vmatpush2.msra.mxu0 0.0
        %5092 = vmatprep.subr.mxu0 0.0
        %5093 = vmatpush2.msra.mxu0 0.0
        %5094 = vmatprep.subr.mxu0 0.0
        %5095 = vmatpush2.msra.mxu0 0.0
        %5096 = vmatprep.subr.mxu0 0.0
        %5097 = vmatpush2.msra.mxu0 0.0
        %5098 = vmatprep.subr.mxu0 0.0
        %5099 = vmatpush2.msra.mxu0 0.0
        %5100 = vmatprep.subr.mxu0 0.0
        %5101 = vmatpush2.msra.mxu0 0.0
        %5102 = vmatprep.subr.mxu0 0.0
        %5103 = vmatpush2.msra.mxu0 0.0
        %5104 = vmatprep.subr.mxu0 0.0
        %5105 = vmatpush2.msra.mxu0 0.0
        %5106 = vmatprep.subr.mxu0 0.0
        %5107 = vmatpush2.msra.mxu0 0.0
        %5108 = vmatprep.subr.mxu0 0.0
        %5109 = vmatpush2.msra.mxu0 0.0
        %5110 = vmatprep.subr.mxu0 0.0
        %5111 = vmatpush2.msra.mxu0 0.0
        %5112 = vmatprep.mubr.f32.mxu0 0.0
        %5113 = vmatmul.mubr.f32.gmra.mxu0 %v5043
        %v5114 = vpop.f32.mrf.mxu0
        %v5115 = vadd.f32 0.0, %v5114
        %v5116 = vpop.f32.mrf.mxu0
        %5117 = vmatprep.mubr.f32.mxu0 0.0
        %5118 = vmatmul.mubr.f32.gmra.mxu0 %v5046
        %v5119 = vpop.f32.mrf.mxu0
        %v5120 = vadd.f32 0.0, %v5119
        %v5121 = vpop.f32.mrf.mxu0
        %5122 = vdwg.mxu0
        %5123 = vrot.lane.b32.xlu0 %v500, 48
        %v5124 = vpop.permute.xlu0 %5123
        %5125 = vrot.lane.b32.xlu0 %v505, 48
        %v5126 = vpop.permute.xlu0 %5125
        %v5130 = vsel %vm1267, %v4767, 0
        %v5133 = vsel %vm1267, %v4768, 0
        %5135 = vmatprep.subr.mxu0 0.0
        %5136 = vmatpush1.msra.mxu0 0.0
        %5137 = vmatprep.subr.mxu0 0.0
        %5138 = vmatpush1.msra.mxu0 0.0
        %5139 = vmatprep.subr.mxu0 0.0
        %5140 = vmatpush1.msra.mxu0 0.0
        %5141 = vmatprep.subr.mxu0 0.0
        %5142 = vmatpush1.msra.mxu0 0.0
        %5143 = vmatprep.subr.mxu0 0.0
        %5144 = vmatpush1.msra.mxu0 0.0
        %5145 = vmatprep.subr.mxu0 0.0
        %5146 = vmatpush1.msra.mxu0 0.0
        %5147 = vmatprep.subr.mxu0 0.0
        %5148 = vmatpush1.msra.mxu0 0.0
        %5149 = vmatprep.subr.mxu0 0.0
        %5150 = vmatpush1.msra.mxu0 0.0
        %5151 = vmatprep.subr.mxu0 0.0
        %5152 = vmatpush1.msra.mxu0 0.0
        %5153 = vmatprep.subr.mxu0 0.0
        %5154 = vmatpush1.msra.mxu0 0.0
        %5155 = vmatprep.subr.mxu0 0.0
        %5156 = vmatpush1.msra.mxu0 0.0
        %5157 = vmatprep.subr.mxu0 0.0
        %5158 = vmatpush1.msra.mxu0 0.0
        %5159 = vmatprep.subr.mxu0 0.0
        %5160 = vmatpush1.msra.mxu0 0.0
        %5161 = vmatprep.subr.mxu0 0.0
        %5162 = vmatpush1.msra.mxu0 0.0
        %5163 = vmatprep.subr.mxu0 0.0
        %5164 = vmatpush1.msra.mxu0 %v5126
        %5165 = vmatprep.subr.mxu0 0.0
        %5166 = vmatpush1.msra.mxu0 %v5124
        %5167 = vmatprep.subr.mxu0 0.0
        %5168 = vmatpush2.msra.mxu0 0.0
        %5169 = vmatprep.subr.mxu0 0.0
        %5170 = vmatpush2.msra.mxu0 0.0
        %5171 = vmatprep.subr.mxu0 0.0
        %5172 = vmatpush2.msra.mxu0 0.0
        %5173 = vmatprep.subr.mxu0 0.0
        %5174 = vmatpush2.msra.mxu0 0.0
        %5175 = vmatprep.subr.mxu0 0.0
        %5176 = vmatpush2.msra.mxu0 0.0
        %5177 = vmatprep.subr.mxu0 0.0
        %5178 = vmatpush2.msra.mxu0 0.0
        %5179 = vmatprep.subr.mxu0 0.0
        %5180 = vmatpush2.msra.mxu0 0.0
        %5181 = vmatprep.subr.mxu0 0.0
        %5182 = vmatpush2.msra.mxu0 0.0
        %5183 = vmatprep.subr.mxu0 0.0
        %5184 = vmatpush2.msra.mxu0 0.0
        %5185 = vmatprep.subr.mxu0 0.0
        %5186 = vmatpush2.msra.mxu0 0.0
        %5187 = vmatprep.subr.mxu0 0.0
        %5188 = vmatpush2.msra.mxu0 0.0
        %5189 = vmatprep.subr.mxu0 0.0
        %5190 = vmatpush2.msra.mxu0 0.0
        %5191 = vmatprep.subr.mxu0 0.0
        %5192 = vmatpush2.msra.mxu0 0.0
        %5193 = vmatprep.subr.mxu0 0.0
        %5194 = vmatpush2.msra.mxu0 0.0
        %5195 = vmatprep.subr.mxu0 0.0
        %5196 = vmatpush2.msra.mxu0 0.0
        %5197 = vmatprep.subr.mxu0 0.0
        %5198 = vmatpush2.msra.mxu0 0.0
        %5199 = vmatprep.mubr.f32.mxu0 0.0
        %5200 = vmatmul.mubr.f32.gmra.mxu0 %v5130
        %v5201 = vpop.f32.mrf.mxu0
        %v5202 = vadd.f32 0.0, %v5201
        %v5203 = vpop.f32.mrf.mxu0
        %5204 = vmatprep.mubr.f32.mxu0 0.0
        %5205 = vmatmul.mubr.f32.gmra.mxu0 %v5133
        %v5206 = vpop.f32.mrf.mxu0
        %v5207 = vadd.f32 0.0, %v5206
        %v5208 = vpop.f32.mrf.mxu0
        %5209 = vdwg.mxu0
        %5210 = vrot.lane.b32.xlu0 %v510, 48
        %v5211 = vpop.permute.xlu0 %5210
        %5212 = vrot.lane.b32.xlu0 %v515, 48
        %v5213 = vpop.permute.xlu0 %5212
        %v5217 = vsel %vm1267, %v4769, 0
        %v5220 = vsel %vm1267, %v4770, 0
        %5222 = vmatprep.subr.mxu0 0.0
        %5223 = vmatpush1.msra.mxu0 0.0
        %5224 = vmatprep.subr.mxu0 0.0
        %5225 = vmatpush1.msra.mxu0 0.0
        %5226 = vmatprep.subr.mxu0 0.0
        %5227 = vmatpush1.msra.mxu0 0.0
        %5228 = vmatprep.subr.mxu0 0.0
        %5229 = vmatpush1.msra.mxu0 0.0
        %5230 = vmatprep.subr.mxu0 0.0
        %5231 = vmatpush1.msra.mxu0 0.0
        %5232 = vmatprep.subr.mxu0 0.0
        %5233 = vmatpush1.msra.mxu0 0.0
        %5234 = vmatprep.subr.mxu0 0.0
        %5235 = vmatpush1.msra.mxu0 0.0
        %5236 = vmatprep.subr.mxu0 0.0
        %5237 = vmatpush1.msra.mxu0 0.0
        %5238 = vmatprep.subr.mxu0 0.0
        %5239 = vmatpush1.msra.mxu0 0.0
        %5240 = vmatprep.subr.mxu0 0.0
        %5241 = vmatpush1.msra.mxu0 0.0
        %5242 = vmatprep.subr.mxu0 0.0
        %5243 = vmatpush1.msra.mxu0 0.0
        %5244 = vmatprep.subr.mxu0 0.0
        %5245 = vmatpush1.msra.mxu0 0.0
        %5246 = vmatprep.subr.mxu0 0.0
        %5247 = vmatpush1.msra.mxu0 0.0
        %5248 = vmatprep.subr.mxu0 0.0
        %5249 = vmatpush1.msra.mxu0 0.0
        %5250 = vmatprep.subr.mxu0 0.0
        %5251 = vmatpush1.msra.mxu0 %v5213
        %5252 = vmatprep.subr.mxu0 0.0
        %5253 = vmatpush1.msra.mxu0 %v5211
        %5254 = vmatprep.subr.mxu0 0.0
        %5255 = vmatpush2.msra.mxu0 0.0
        %5256 = vmatprep.subr.mxu0 0.0
        %5257 = vmatpush2.msra.mxu0 0.0
        %5258 = vmatprep.subr.mxu0 0.0
        %5259 = vmatpush2.msra.mxu0 0.0
        %5260 = vmatprep.subr.mxu0 0.0
        %5261 = vmatpush2.msra.mxu0 0.0
        %5262 = vmatprep.subr.mxu0 0.0
        %5263 = vmatpush2.msra.mxu0 0.0
        %5264 = vmatprep.subr.mxu0 0.0
        %5265 = vmatpush2.msra.mxu0 0.0
        %5266 = vmatprep.subr.mxu0 0.0
        %5267 = vmatpush2.msra.mxu0 0.0
        %5268 = vmatprep.subr.mxu0 0.0
        %5269 = vmatpush2.msra.mxu0 0.0
        %5270 = vmatprep.subr.mxu0 0.0
        %5271 = vmatpush2.msra.mxu0 0.0
        %5272 = vmatprep.subr.mxu0 0.0
        %5273 = vmatpush2.msra.mxu0 0.0
        %5274 = vmatprep.subr.mxu0 0.0
        %5275 = vmatpush2.msra.mxu0 0.0
        %5276 = vmatprep.subr.mxu0 0.0
        %5277 = vmatpush2.msra.mxu0 0.0
        %5278 = vmatprep.subr.mxu0 0.0
        %5279 = vmatpush2.msra.mxu0 0.0
        %5280 = vmatprep.subr.mxu0 0.0
        %5281 = vmatpush2.msra.mxu0 0.0
        %5282 = vmatprep.subr.mxu0 0.0
        %5283 = vmatpush2.msra.mxu0 0.0
        %5284 = vmatprep.subr.mxu0 0.0
        %5285 = vmatpush2.msra.mxu0 0.0
        %5286 = vmatprep.mubr.f32.mxu0 0.0
        %5287 = vmatmul.mubr.f32.gmra.mxu0 %v5217
        %v5288 = vpop.f32.mrf.mxu0
        %v5289 = vadd.f32 0.0, %v5288
        %v5290 = vpop.f32.mrf.mxu0
        %5291 = vmatprep.mubr.f32.mxu0 0.0
        %5292 = vmatmul.mubr.f32.gmra.mxu0 %v5220
        %v5293 = vpop.f32.mrf.mxu0
        %v5294 = vadd.f32 0.0, %v5293
        %v5295 = vpop.f32.mrf.mxu0
        %5296 = vdwg.mxu0
        %5297 = vrot.lane.b32.xlu0 %v520, 48
        %v5298 = vpop.permute.xlu0 %5297
        %5299 = vrot.lane.b32.xlu0 %v525, 48
        %v5300 = vpop.permute.xlu0 %5299
        %v5304 = vsel %vm1267, %v4771, 0
        %v5307 = vsel %vm1267, %v4772, 0
        %5309 = vmatprep.subr.mxu0 0.0
        %5310 = vmatpush1.msra.mxu0 0.0
        %5311 = vmatprep.subr.mxu0 0.0
        %5312 = vmatpush1.msra.mxu0 0.0
        %5313 = vmatprep.subr.mxu0 0.0
        %5314 = vmatpush1.msra.mxu0 0.0
        %5315 = vmatprep.subr.mxu0 0.0
        %5316 = vmatpush1.msra.mxu0 0.0
        %5317 = vmatprep.subr.mxu0 0.0
        %5318 = vmatpush1.msra.mxu0 0.0
        %5319 = vmatprep.subr.mxu0 0.0
        %5320 = vmatpush1.msra.mxu0 0.0
        %5321 = vmatprep.subr.mxu0 0.0
        %5322 = vmatpush1.msra.mxu0 0.0
        %5323 = vmatprep.subr.mxu0 0.0
        %5324 = vmatpush1.msra.mxu0 0.0
        %5325 = vmatprep.subr.mxu0 0.0
        %5326 = vmatpush1.msra.mxu0 0.0
        %5327 = vmatprep.subr.mxu0 0.0
        %5328 = vmatpush1.msra.mxu0 0.0
        %5329 = vmatprep.subr.mxu0 0.0
        %5330 = vmatpush1.msra.mxu0 0.0
        %5331 = vmatprep.subr.mxu0 0.0
        %5332 = vmatpush1.msra.mxu0 0.0
        %5333 = vmatprep.subr.mxu0 0.0
        %5334 = vmatpush1.msra.mxu0 0.0
        %5335 = vmatprep.subr.mxu0 0.0
        %5336 = vmatpush1.msra.mxu0 0.0
        %5337 = vmatprep.subr.mxu0 0.0
        %5338 = vmatpush1.msra.mxu0 %v5300
        %5339 = vmatprep.subr.mxu0 0.0
        %5340 = vmatpush1.msra.mxu0 %v5298
        %5341 = vmatprep.subr.mxu0 0.0
        %5342 = vmatpush2.msra.mxu0 0.0
        %5343 = vmatprep.subr.mxu0 0.0
        %5344 = vmatpush2.msra.mxu0 0.0
        %5345 = vmatprep.subr.mxu0 0.0
        %5346 = vmatpush2.msra.mxu0 0.0
        %5347 = vmatprep.subr.mxu0 0.0
        %5348 = vmatpush2.msra.mxu0 0.0
        %5349 = vmatprep.subr.mxu0 0.0
        %5350 = vmatpush2.msra.mxu0 0.0
        %5351 = vmatprep.subr.mxu0 0.0
        %5352 = vmatpush2.msra.mxu0 0.0
        %5353 = vmatprep.subr.mxu0 0.0
        %5354 = vmatpush2.msra.mxu0 0.0
        %5355 = vmatprep.subr.mxu0 0.0
        %5356 = vmatpush2.msra.mxu0 0.0
        %5357 = vmatprep.subr.mxu0 0.0
        %5358 = vmatpush2.msra.mxu0 0.0
        %5359 = vmatprep.subr.mxu0 0.0
        %5360 = vmatpush2.msra.mxu0 0.0
        %5361 = vmatprep.subr.mxu0 0.0
        %5362 = vmatpush2.msra.mxu0 0.0
        %5363 = vmatprep.subr.mxu0 0.0
        %5364 = vmatpush2.msra.mxu0 0.0
        %5365 = vmatprep.subr.mxu0 0.0
        %5366 = vmatpush2.msra.mxu0 0.0
        %5367 = vmatprep.subr.mxu0 0.0
        %5368 = vmatpush2.msra.mxu0 0.0
        %5369 = vmatprep.subr.mxu0 0.0
        %5370 = vmatpush2.msra.mxu0 0.0
        %5371 = vmatprep.subr.mxu0 0.0
        %5372 = vmatpush2.msra.mxu0 0.0
        %5373 = vmatprep.mubr.f32.mxu0 0.0
        %5374 = vmatmul.mubr.f32.gmra.mxu0 %v5304
        %v5375 = vpop.f32.mrf.mxu0
        %v5376 = vadd.f32 0.0, %v5375
        %v5377 = vpop.f32.mrf.mxu0
        %5378 = vmatprep.mubr.f32.mxu0 0.0
        %5379 = vmatmul.mubr.f32.gmra.mxu0 %v5307
        %v5380 = vpop.f32.mrf.mxu0
        %v5381 = vadd.f32 0.0, %v5380
        %v5382 = vpop.f32.mrf.mxu0
        %5383 = vdwg.mxu0
        %5384 = vrot.lane.b32.xlu0 %v530, 48
        %v5385 = vpop.permute.xlu0 %5384
        %5386 = vrot.lane.b32.xlu0 %v535, 48
        %v5387 = vpop.permute.xlu0 %5386
        %v5391 = vsel %vm1267, %v4773, 0
        %v5394 = vsel %vm1267, %v4774, 0
        %5396 = vmatprep.subr.mxu0 0.0
        %5397 = vmatpush1.msra.mxu0 0.0
        %5398 = vmatprep.subr.mxu0 0.0
        %5399 = vmatpush1.msra.mxu0 0.0
        %5400 = vmatprep.subr.mxu0 0.0
        %5401 = vmatpush1.msra.mxu0 0.0
        %5402 = vmatprep.subr.mxu0 0.0
        %5403 = vmatpush1.msra.mxu0 0.0
        %5404 = vmatprep.subr.mxu0 0.0
        %5405 = vmatpush1.msra.mxu0 0.0
        %5406 = vmatprep.subr.mxu0 0.0
        %5407 = vmatpush1.msra.mxu0 0.0
        %5408 = vmatprep.subr.mxu0 0.0
        %5409 = vmatpush1.msra.mxu0 0.0
        %5410 = vmatprep.subr.mxu0 0.0
        %5411 = vmatpush1.msra.mxu0 0.0
        %5412 = vmatprep.subr.mxu0 0.0
        %5413 = vmatpush1.msra.mxu0 0.0
        %5414 = vmatprep.subr.mxu0 0.0
        %5415 = vmatpush1.msra.mxu0 0.0
        %5416 = vmatprep.subr.mxu0 0.0
        %5417 = vmatpush1.msra.mxu0 0.0
        %5418 = vmatprep.subr.mxu0 0.0
        %5419 = vmatpush1.msra.mxu0 0.0
        %5420 = vmatprep.subr.mxu0 0.0
        %5421 = vmatpush1.msra.mxu0 0.0
        %5422 = vmatprep.subr.mxu0 0.0
        %5423 = vmatpush1.msra.mxu0 0.0
        %5424 = vmatprep.subr.mxu0 0.0
        %5425 = vmatpush1.msra.mxu0 %v5387
        %5426 = vmatprep.subr.mxu0 0.0
        %5427 = vmatpush1.msra.mxu0 %v5385
        %5428 = vmatprep.subr.mxu0 0.0
        %5429 = vmatpush2.msra.mxu0 0.0
        %5430 = vmatprep.subr.mxu0 0.0
        %5431 = vmatpush2.msra.mxu0 0.0
        %5432 = vmatprep.subr.mxu0 0.0
        %5433 = vmatpush2.msra.mxu0 0.0
        %5434 = vmatprep.subr.mxu0 0.0
        %5435 = vmatpush2.msra.mxu0 0.0
        %5436 = vmatprep.subr.mxu0 0.0
        %5437 = vmatpush2.msra.mxu0 0.0
        %5438 = vmatprep.subr.mxu0 0.0
        %5439 = vmatpush2.msra.mxu0 0.0
        %5440 = vmatprep.subr.mxu0 0.0
        %5441 = vmatpush2.msra.mxu0 0.0
        %5442 = vmatprep.subr.mxu0 0.0
        %5443 = vmatpush2.msra.mxu0 0.0
        %5444 = vmatprep.subr.mxu0 0.0
        %5445 = vmatpush2.msra.mxu0 0.0
        %5446 = vmatprep.subr.mxu0 0.0
        %5447 = vmatpush2.msra.mxu0 0.0
        %5448 = vmatprep.subr.mxu0 0.0
        %5449 = vmatpush2.msra.mxu0 0.0
        %5450 = vmatprep.subr.mxu0 0.0
        %5451 = vmatpush2.msra.mxu0 0.0
        %5452 = vmatprep.subr.mxu0 0.0
        %5453 = vmatpush2.msra.mxu0 0.0
        %5454 = vmatprep.subr.mxu0 0.0
        %5455 = vmatpush2.msra.mxu0 0.0
        %5456 = vmatprep.subr.mxu0 0.0
        %5457 = vmatpush2.msra.mxu0 0.0
        %5458 = vmatprep.subr.mxu0 0.0
        %5459 = vmatpush2.msra.mxu0 0.0
        %5460 = vmatprep.mubr.f32.mxu0 0.0
        %5461 = vmatmul.mubr.f32.gmra.mxu0 %v5391
        %v5462 = vpop.f32.mrf.mxu0
        %v5463 = vadd.f32 0.0, %v5462
        %v5464 = vpop.f32.mrf.mxu0
        %5465 = vmatprep.mubr.f32.mxu0 0.0
        %5466 = vmatmul.mubr.f32.gmra.mxu0 %v5394
        %v5467 = vpop.f32.mrf.mxu0
        %v5468 = vadd.f32 0.0, %v5467
        %v5469 = vpop.f32.mrf.mxu0
        %5470 = vdwg.mxu0
        %5487 = vrot.lane.b32.xlu0 %v4854, 16
        %v5488 = vpop.permute.xlu0 %5487
        %5489 = vrot.lane.b32.xlu0 %v4859, 16
        %v5490 = vpop.permute.xlu0 %5489
        %5491 = vrot.lane.b32.xlu0 %v4941, 16
        %v5492 = vpop.permute.xlu0 %5491
        %5493 = vrot.lane.b32.xlu0 %v4946, 16
        %v5494 = vpop.permute.xlu0 %5493
        %5495 = vrot.lane.b32.xlu0 %v5028, 16
        %v5496 = vpop.permute.xlu0 %5495
        %5497 = vrot.lane.b32.xlu0 %v5033, 16
        %v5498 = vpop.permute.xlu0 %5497
        %5499 = vrot.lane.b32.xlu0 %v5115, 16
        %v5500 = vpop.permute.xlu0 %5499
        %5501 = vrot.lane.b32.xlu0 %v5120, 16
        %v5502 = vpop.permute.xlu0 %5501
        %5503 = vrot.lane.b32.xlu0 %v5202, 16
        %v5504 = vpop.permute.xlu0 %5503
        %5505 = vrot.lane.b32.xlu0 %v5207, 16
        %v5506 = vpop.permute.xlu0 %5505
        %5507 = vrot.lane.b32.xlu0 %v5289, 16
        %v5508 = vpop.permute.xlu0 %5507
        %5509 = vrot.lane.b32.xlu0 %v5294, 16
        %v5510 = vpop.permute.xlu0 %5509
        %5511 = vrot.lane.b32.xlu0 %v5376, 16
        %v5512 = vpop.permute.xlu0 %5511
        %5513 = vrot.lane.b32.xlu0 %v5381, 16
        %v5514 = vpop.permute.xlu0 %5513
        %5515 = vrot.lane.b32.xlu0 %v5463, 16
        %v5516 = vpop.permute.xlu0 %5515
        %5517 = vrot.lane.b32.xlu0 %v5468, 16
        %v5518 = vpop.permute.xlu0 %5517
        %vm5535 = vcmask 195712
        %5536 = vst.msk [vmem:[#allocation2] sm:$0xff] %vm5535, %v5488
        %5537 = vst.msk [vmem:[#allocation2 + $0x8] sm:$0xff] %vm5535, %v5490
        %5538 = vst.msk [vmem:[#allocation2 + $0x10] sm:$0xff] %vm5535, %v5492
        %5539 = vst.msk [vmem:[#allocation2 + $0x18] sm:$0xff] %vm5535, %v5494
        %5540 = vst.msk [vmem:[#allocation2 + $0x20] sm:$0xff] %vm5535, %v5496
        %5541 = vst.msk [vmem:[#allocation2 + $0x28] sm:$0xff] %vm5535, %v5498
        %5542 = vst.msk [vmem:[#allocation2 + $0x30] sm:$0xff] %vm5535, %v5500
        %5543 = vst.msk [vmem:[#allocation2 + $0x38] sm:$0xff] %vm5535, %v5502
        %5544 = vst.msk [vmem:[#allocation2 + $0x40] sm:$0xff] %vm5535, %v5504
        %5545 = vst.msk [vmem:[#allocation2 + $0x48] sm:$0xff] %vm5535, %v5506
        %5546 = vst.msk [vmem:[#allocation2 + $0x50] sm:$0xff] %vm5535, %v5508
        %5547 = vst.msk [vmem:[#allocation2 + $0x58] sm:$0xff] %vm5535, %v5510
        %5548 = vst.msk [vmem:[#allocation2 + $0x60] sm:$0xff] %vm5535, %v5512
        %5549 = vst.msk [vmem:[#allocation2 + $0x68] sm:$0xff] %vm5535, %v5514
        %5550 = vst.msk [vmem:[#allocation2 + $0x70] sm:$0xff] %vm5535, %v5516
        %5551 = vst.msk [vmem:[#allocation2 + $0x78] sm:$0xff] %vm5535, %v5518
        %s5552 = scalar_lea.vmem [#allocation9], 384
        %v5553 = vld [vmem:[%s5552] sm:$0xff]
        %v5554 = vld [vmem:[%s5552 + $0x8] sm:$0xff]
        %v5555 = vld [vmem:[%s5552 + $0x10] sm:$0xff]
        %v5556 = vld [vmem:[%s5552 + $0x18] sm:$0xff]
        %v5557 = vld [vmem:[%s5552 + $0x20] sm:$0xff]
        %v5558 = vld [vmem:[%s5552 + $0x28] sm:$0xff]
        %v5559 = vld [vmem:[%s5552 + $0x30] sm:$0xff]
        %v5560 = vld [vmem:[%s5552 + $0x38] sm:$0xff]
        %v5561 = vld [vmem:[%s5552 + $0x40] sm:$0xff]
        %v5562 = vld [vmem:[%s5552 + $0x48] sm:$0xff]
        %v5563 = vld [vmem:[%s5552 + $0x50] sm:$0xff]
        %v5564 = vld [vmem:[%s5552 + $0x58] sm:$0xff]
        %v5565 = vld [vmem:[%s5552 + $0x60] sm:$0xff]
        %v5566 = vld [vmem:[%s5552 + $0x68] sm:$0xff]
        %v5567 = vld [vmem:[%s5552 + $0x70] sm:$0xff]
        %v5568 = vld [vmem:[%s5552 + $0x78] sm:$0xff]
        %5569 = vrot.lane.b32.xlu0 %v460, 104
        %v5570 = vpop.permute.xlu0 %5569
        %5571 = vrot.lane.b32.xlu0 %v465, 104
        %v5572 = vpop.permute.xlu0 %5571
        %5573 = vrot.lane.b32.xlu0 %v460, 72
        %v5574 = vpop.permute.xlu0 %5573
        %5575 = vrot.lane.b32.xlu0 %v465, 72
        %v5576 = vpop.permute.xlu0 %5575
        %v5577 = vsel %vm560, %v5570, 0
        %v5579 = vsel %vm560, %v5572, 0
        %v5581 = vsel %vm560, %v5574, 0
        %v5583 = vsel %vm560, %v5576, 0
        %5585 = vmatprep.subr.mxu0 0.0
        %5586 = vmatpush1.xpose.msra.mxu0 0.0
        %5587 = vmatprep.subr.mxu0 0.0
        %5588 = vmatpush1.xpose.msra.mxu0 0.0
        %5589 = vmatprep.subr.mxu0 0.0
        %5590 = vmatpush1.xpose.msra.mxu0 0.0
        %5591 = vmatprep.subr.mxu0 0.0
        %5592 = vmatpush1.xpose.msra.mxu0 0.0
        %5593 = vmatprep.subr.mxu0 0.0
        %5594 = vmatpush1.xpose.msra.mxu0 0.0
        %5595 = vmatprep.subr.mxu0 0.0
        %5596 = vmatpush1.xpose.msra.mxu0 0.0
        %5597 = vmatprep.subr.mxu0 0.0
        %5598 = vmatpush1.xpose.msra.mxu0 0.0
        %5599 = vmatprep.subr.mxu0 0.0
        %5600 = vmatpush1.xpose.msra.mxu0 0.0
        %5601 = vmatprep.subr.mxu0 0.0
        %5602 = vmatpush1.xpose.msra.mxu0 0.0
        %5603 = vmatprep.subr.mxu0 0.0
        %5604 = vmatpush1.xpose.msra.mxu0 0.0
        %5605 = vmatprep.subr.mxu0 0.0
        %5606 = vmatpush1.xpose.msra.mxu0 0.0
        %5607 = vmatprep.subr.mxu0 0.0
        %5608 = vmatpush1.xpose.msra.mxu0 0.0
        %5609 = vmatprep.subr.mxu0 0.0
        %5610 = vmatpush1.xpose.msra.mxu0 0.0
        %5611 = vmatprep.subr.mxu0 0.0
        %5612 = vmatpush1.xpose.msra.mxu0 0.0
        %5613 = vmatprep.subr.mxu0 0.0
        %5614 = vmatpush1.xpose.msra.mxu0 %v5583
        %5615 = vmatprep.subr.mxu0 0.0
        %5616 = vmatpush1.xpose.msra.mxu0 %v5581
        %5617 = vmatprep.subr.mxu0 0.0
        %5618 = vmatpush2.xpose.msra.mxu0 0.0
        %5619 = vmatprep.subr.mxu0 0.0
        %5620 = vmatpush2.xpose.msra.mxu0 0.0
        %5621 = vmatprep.subr.mxu0 0.0
        %5622 = vmatpush2.xpose.msra.mxu0 0.0
        %5623 = vmatprep.subr.mxu0 0.0
        %5624 = vmatpush2.xpose.msra.mxu0 0.0
        %5625 = vmatprep.subr.mxu0 0.0
        %5626 = vmatpush2.xpose.msra.mxu0 0.0
        %5627 = vmatprep.subr.mxu0 0.0
        %5628 = vmatpush2.xpose.msra.mxu0 0.0
        %5629 = vmatprep.subr.mxu0 0.0
        %5630 = vmatpush2.xpose.msra.mxu0 0.0
        %5631 = vmatprep.subr.mxu0 0.0
        %5632 = vmatpush2.xpose.msra.mxu0 0.0
        %5633 = vmatprep.subr.mxu0 0.0
        %5634 = vmatpush2.xpose.msra.mxu0 0.0
        %5635 = vmatprep.subr.mxu0 0.0
        %5636 = vmatpush2.xpose.msra.mxu0 0.0
        %5637 = vmatprep.subr.mxu0 0.0
        %5638 = vmatpush2.xpose.msra.mxu0 0.0
        %5639 = vmatprep.subr.mxu0 0.0
        %5640 = vmatpush2.xpose.msra.mxu0 0.0
        %5641 = vmatprep.subr.mxu0 0.0
        %5642 = vmatpush2.xpose.msra.mxu0 0.0
        %5643 = vmatprep.subr.mxu0 0.0
        %5644 = vmatpush2.xpose.msra.mxu0 0.0
        %5645 = vmatprep.subr.mxu0 0.0
        %5646 = vmatpush2.xpose.msra.mxu0 0.0
        %5647 = vmatprep.subr.mxu0 0.0
        %5648 = vmatpush2.xpose.msra.mxu0 0.0
        %5649 = vmatprep.mubr.f32.mxu0 0.0
        %5650 = vmatmul.mubr.f32.gmra.mxu0 %v5577
        %v5651 = vpop.f32.mrf.mxu0
        %v5652 = vadd.f32 %v5553, %v5651
        %v5653 = vpop.f32.mrf.mxu0
        %5654 = vmatprep.mubr.f32.mxu0 0.0
        %5655 = vmatmul.mubr.f32.gmra.mxu0 %v5579
        %v5656 = vpop.f32.mrf.mxu0
        %v5657 = vadd.f32 %v5554, %v5656
        %v5658 = vpop.f32.mrf.mxu0
        %5659 = vdwg.mxu0
        %5660 = vrot.lane.b32.xlu0 %v470, 104
        %v5661 = vpop.permute.xlu0 %5660
        %5662 = vrot.lane.b32.xlu0 %v475, 104
        %v5663 = vpop.permute.xlu0 %5662
        %5664 = vrot.lane.b32.xlu0 %v470, 72
        %v5665 = vpop.permute.xlu0 %5664
        %5666 = vrot.lane.b32.xlu0 %v475, 72
        %v5667 = vpop.permute.xlu0 %5666
        %v5668 = vsel %vm560, %v5661, 0
        %v5670 = vsel %vm560, %v5663, 0
        %v5672 = vsel %vm560, %v5665, 0
        %v5674 = vsel %vm560, %v5667, 0
        %5676 = vmatprep.subr.mxu0 0.0
        %5677 = vmatpush1.xpose.msra.mxu0 0.0
        %5678 = vmatprep.subr.mxu0 0.0
        %5679 = vmatpush1.xpose.msra.mxu0 0.0
        %5680 = vmatprep.subr.mxu0 0.0
        %5681 = vmatpush1.xpose.msra.mxu0 0.0
        %5682 = vmatprep.subr.mxu0 0.0
        %5683 = vmatpush1.xpose.msra.mxu0 0.0
        %5684 = vmatprep.subr.mxu0 0.0
        %5685 = vmatpush1.xpose.msra.mxu0 0.0
        %5686 = vmatprep.subr.mxu0 0.0
        %5687 = vmatpush1.xpose.msra.mxu0 0.0
        %5688 = vmatprep.subr.mxu0 0.0
        %5689 = vmatpush1.xpose.msra.mxu0 0.0
        %5690 = vmatprep.subr.mxu0 0.0
        %5691 = vmatpush1.xpose.msra.mxu0 0.0
        %5692 = vmatprep.subr.mxu0 0.0
        %5693 = vmatpush1.xpose.msra.mxu0 0.0
        %5694 = vmatprep.subr.mxu0 0.0
        %5695 = vmatpush1.xpose.msra.mxu0 0.0
        %5696 = vmatprep.subr.mxu0 0.0
        %5697 = vmatpush1.xpose.msra.mxu0 0.0
        %5698 = vmatprep.subr.mxu0 0.0
        %5699 = vmatpush1.xpose.msra.mxu0 0.0
        %5700 = vmatprep.subr.mxu0 0.0
        %5701 = vmatpush1.xpose.msra.mxu0 0.0
        %5702 = vmatprep.subr.mxu0 0.0
        %5703 = vmatpush1.xpose.msra.mxu0 0.0
        %5704 = vmatprep.subr.mxu0 0.0
        %5705 = vmatpush1.xpose.msra.mxu0 %v5674
        %5706 = vmatprep.subr.mxu0 0.0
        %5707 = vmatpush1.xpose.msra.mxu0 %v5672
        %5708 = vmatprep.subr.mxu0 0.0
        %5709 = vmatpush2.xpose.msra.mxu0 0.0
        %5710 = vmatprep.subr.mxu0 0.0
        %5711 = vmatpush2.xpose.msra.mxu0 0.0
        %5712 = vmatprep.subr.mxu0 0.0
        %5713 = vmatpush2.xpose.msra.mxu0 0.0
        %5714 = vmatprep.subr.mxu0 0.0
        %5715 = vmatpush2.xpose.msra.mxu0 0.0
        %5716 = vmatprep.subr.mxu0 0.0
        %5717 = vmatpush2.xpose.msra.mxu0 0.0
        %5718 = vmatprep.subr.mxu0 0.0
        %5719 = vmatpush2.xpose.msra.mxu0 0.0
        %5720 = vmatprep.subr.mxu0 0.0
        %5721 = vmatpush2.xpose.msra.mxu0 0.0
        %5722 = vmatprep.subr.mxu0 0.0
        %5723 = vmatpush2.xpose.msra.mxu0 0.0
        %5724 = vmatprep.subr.mxu0 0.0
        %5725 = vmatpush2.xpose.msra.mxu0 0.0
        %5726 = vmatprep.subr.mxu0 0.0
        %5727 = vmatpush2.xpose.msra.mxu0 0.0
        %5728 = vmatprep.subr.mxu0 0.0
        %5729 = vmatpush2.xpose.msra.mxu0 0.0
        %5730 = vmatprep.subr.mxu0 0.0
        %5731 = vmatpush2.xpose.msra.mxu0 0.0
        %5732 = vmatprep.subr.mxu0 0.0
        %5733 = vmatpush2.xpose.msra.mxu0 0.0
        %5734 = vmatprep.subr.mxu0 0.0
        %5735 = vmatpush2.xpose.msra.mxu0 0.0
        %5736 = vmatprep.subr.mxu0 0.0
        %5737 = vmatpush2.xpose.msra.mxu0 0.0
        %5738 = vmatprep.subr.mxu0 0.0
        %5739 = vmatpush2.xpose.msra.mxu0 0.0
        %5740 = vmatprep.mubr.f32.mxu0 0.0
        %5741 = vmatmul.mubr.f32.gmra.mxu0 %v5668
        %v5742 = vpop.f32.mrf.mxu0
        %v5743 = vadd.f32 %v5555, %v5742
        %v5744 = vpop.f32.mrf.mxu0
        %5745 = vmatprep.mubr.f32.mxu0 0.0
        %5746 = vmatmul.mubr.f32.gmra.mxu0 %v5670
        %v5747 = vpop.f32.mrf.mxu0
        %v5748 = vadd.f32 %v5556, %v5747
        %v5749 = vpop.f32.mrf.mxu0
        %5750 = vdwg.mxu0
        %5751 = vrot.lane.b32.xlu0 %v480, 104
        %v5752 = vpop.permute.xlu0 %5751
        %5753 = vrot.lane.b32.xlu0 %v485, 104
        %v5754 = vpop.permute.xlu0 %5753
        %5755 = vrot.lane.b32.xlu0 %v480, 72
        %v5756 = vpop.permute.xlu0 %5755
        %5757 = vrot.lane.b32.xlu0 %v485, 72
        %v5758 = vpop.permute.xlu0 %5757
        %v5759 = vsel %vm560, %v5752, 0
        %v5761 = vsel %vm560, %v5754, 0
        %v5763 = vsel %vm560, %v5756, 0
        %v5765 = vsel %vm560, %v5758, 0
        %5767 = vmatprep.subr.mxu0 0.0
        %5768 = vmatpush1.xpose.msra.mxu0 0.0
        %5769 = vmatprep.subr.mxu0 0.0
        %5770 = vmatpush1.xpose.msra.mxu0 0.0
        %5771 = vmatprep.subr.mxu0 0.0
        %5772 = vmatpush1.xpose.msra.mxu0 0.0
        %5773 = vmatprep.subr.mxu0 0.0
        %5774 = vmatpush1.xpose.msra.mxu0 0.0
        %5775 = vmatprep.subr.mxu0 0.0
        %5776 = vmatpush1.xpose.msra.mxu0 0.0
        %5777 = vmatprep.subr.mxu0 0.0
        %5778 = vmatpush1.xpose.msra.mxu0 0.0
        %5779 = vmatprep.subr.mxu0 0.0
        %5780 = vmatpush1.xpose.msra.mxu0 0.0
        %5781 = vmatprep.subr.mxu0 0.0
        %5782 = vmatpush1.xpose.msra.mxu0 0.0
        %5783 = vmatprep.subr.mxu0 0.0
        %5784 = vmatpush1.xpose.msra.mxu0 0.0
        %5785 = vmatprep.subr.mxu0 0.0
        %5786 = vmatpush1.xpose.msra.mxu0 0.0
        %5787 = vmatprep.subr.mxu0 0.0
        %5788 = vmatpush1.xpose.msra.mxu0 0.0
        %5789 = vmatprep.subr.mxu0 0.0
        %5790 = vmatpush1.xpose.msra.mxu0 0.0
        %5791 = vmatprep.subr.mxu0 0.0
        %5792 = vmatpush1.xpose.msra.mxu0 0.0
        %5793 = vmatprep.subr.mxu0 0.0
        %5794 = vmatpush1.xpose.msra.mxu0 0.0
        %5795 = vmatprep.subr.mxu0 0.0
        %5796 = vmatpush1.xpose.msra.mxu0 %v5765
        %5797 = vmatprep.subr.mxu0 0.0
        %5798 = vmatpush1.xpose.msra.mxu0 %v5763
        %5799 = vmatprep.subr.mxu0 0.0
        %5800 = vmatpush2.xpose.msra.mxu0 0.0
        %5801 = vmatprep.subr.mxu0 0.0
        %5802 = vmatpush2.xpose.msra.mxu0 0.0
        %5803 = vmatprep.subr.mxu0 0.0
        %5804 = vmatpush2.xpose.msra.mxu0 0.0
        %5805 = vmatprep.subr.mxu0 0.0
        %5806 = vmatpush2.xpose.msra.mxu0 0.0
        %5807 = vmatprep.subr.mxu0 0.0
        %5808 = vmatpush2.xpose.msra.mxu0 0.0
        %5809 = vmatprep.subr.mxu0 0.0
        %5810 = vmatpush2.xpose.msra.mxu0 0.0
        %5811 = vmatprep.subr.mxu0 0.0
        %5812 = vmatpush2.xpose.msra.mxu0 0.0
        %5813 = vmatprep.subr.mxu0 0.0
        %5814 = vmatpush2.xpose.msra.mxu0 0.0
        %5815 = vmatprep.subr.mxu0 0.0
        %5816 = vmatpush2.xpose.msra.mxu0 0.0
        %5817 = vmatprep.subr.mxu0 0.0
        %5818 = vmatpush2.xpose.msra.mxu0 0.0
        %5819 = vmatprep.subr.mxu0 0.0
        %5820 = vmatpush2.xpose.msra.mxu0 0.0
        %5821 = vmatprep.subr.mxu0 0.0
        %5822 = vmatpush2.xpose.msra.mxu0 0.0
        %5823 = vmatprep.subr.mxu0 0.0
        %5824 = vmatpush2.xpose.msra.mxu0 0.0
        %5825 = vmatprep.subr.mxu0 0.0
        %5826 = vmatpush2.xpose.msra.mxu0 0.0
        %5827 = vmatprep.subr.mxu0 0.0
        %5828 = vmatpush2.xpose.msra.mxu0 0.0
        %5829 = vmatprep.subr.mxu0 0.0
        %5830 = vmatpush2.xpose.msra.mxu0 0.0
        %5831 = vmatprep.mubr.f32.mxu0 0.0
        %5832 = vmatmul.mubr.f32.gmra.mxu0 %v5759
        %v5833 = vpop.f32.mrf.mxu0
        %v5834 = vadd.f32 %v5557, %v5833
        %v5835 = vpop.f32.mrf.mxu0
        %5836 = vmatprep.mubr.f32.mxu0 0.0
        %5837 = vmatmul.mubr.f32.gmra.mxu0 %v5761
        %v5838 = vpop.f32.mrf.mxu0
        %v5839 = vadd.f32 %v5558, %v5838
        %v5840 = vpop.f32.mrf.mxu0
        %5841 = vdwg.mxu0
        %5842 = vrot.lane.b32.xlu0 %v490, 104
        %v5843 = vpop.permute.xlu0 %5842
        %5844 = vrot.lane.b32.xlu0 %v495, 104
        %v5845 = vpop.permute.xlu0 %5844
        %5846 = vrot.lane.b32.xlu0 %v490, 72
        %v5847 = vpop.permute.xlu0 %5846
        %5848 = vrot.lane.b32.xlu0 %v495, 72
        %v5849 = vpop.permute.xlu0 %5848
        %v5850 = vsel %vm560, %v5843, 0
        %v5852 = vsel %vm560, %v5845, 0
        %v5854 = vsel %vm560, %v5847, 0
        %v5856 = vsel %vm560, %v5849, 0
        %5858 = vmatprep.subr.mxu0 0.0
        %5859 = vmatpush1.xpose.msra.mxu0 0.0
        %5860 = vmatprep.subr.mxu0 0.0
        %5861 = vmatpush1.xpose.msra.mxu0 0.0
        %5862 = vmatprep.subr.mxu0 0.0
        %5863 = vmatpush1.xpose.msra.mxu0 0.0
        %5864 = vmatprep.subr.mxu0 0.0
        %5865 = vmatpush1.xpose.msra.mxu0 0.0
        %5866 = vmatprep.subr.mxu0 0.0
        %5867 = vmatpush1.xpose.msra.mxu0 0.0
        %5868 = vmatprep.subr.mxu0 0.0
        %5869 = vmatpush1.xpose.msra.mxu0 0.0
        %5870 = vmatprep.subr.mxu0 0.0
        %5871 = vmatpush1.xpose.msra.mxu0 0.0
        %5872 = vmatprep.subr.mxu0 0.0
        %5873 = vmatpush1.xpose.msra.mxu0 0.0
        %5874 = vmatprep.subr.mxu0 0.0
        %5875 = vmatpush1.xpose.msra.mxu0 0.0
        %5876 = vmatprep.subr.mxu0 0.0
        %5877 = vmatpush1.xpose.msra.mxu0 0.0
        %5878 = vmatprep.subr.mxu0 0.0
        %5879 = vmatpush1.xpose.msra.mxu0 0.0
        %5880 = vmatprep.subr.mxu0 0.0
        %5881 = vmatpush1.xpose.msra.mxu0 0.0
        %5882 = vmatprep.subr.mxu0 0.0
        %5883 = vmatpush1.xpose.msra.mxu0 0.0
        %5884 = vmatprep.subr.mxu0 0.0
        %5885 = vmatpush1.xpose.msra.mxu0 0.0
        %5886 = vmatprep.subr.mxu0 0.0
        %5887 = vmatpush1.xpose.msra.mxu0 %v5856
        %5888 = vmatprep.subr.mxu0 0.0
        %5889 = vmatpush1.xpose.msra.mxu0 %v5854
        %5890 = vmatprep.subr.mxu0 0.0
        %5891 = vmatpush2.xpose.msra.mxu0 0.0
        %5892 = vmatprep.subr.mxu0 0.0
        %5893 = vmatpush2.xpose.msra.mxu0 0.0
        %5894 = vmatprep.subr.mxu0 0.0
        %5895 = vmatpush2.xpose.msra.mxu0 0.0
        %5896 = vmatprep.subr.mxu0 0.0
        %5897 = vmatpush2.xpose.msra.mxu0 0.0
        %5898 = vmatprep.subr.mxu0 0.0
        %5899 = vmatpush2.xpose.msra.mxu0 0.0
        %5900 = vmatprep.subr.mxu0 0.0
        %5901 = vmatpush2.xpose.msra.mxu0 0.0
        %5902 = vmatprep.subr.mxu0 0.0
        %5903 = vmatpush2.xpose.msra.mxu0 0.0
        %5904 = vmatprep.subr.mxu0 0.0
        %5905 = vmatpush2.xpose.msra.mxu0 0.0
        %5906 = vmatprep.subr.mxu0 0.0
        %5907 = vmatpush2.xpose.msra.mxu0 0.0
        %5908 = vmatprep.subr.mxu0 0.0
        %5909 = vmatpush2.xpose.msra.mxu0 0.0
        %5910 = vmatprep.subr.mxu0 0.0
        %5911 = vmatpush2.xpose.msra.mxu0 0.0
        %5912 = vmatprep.subr.mxu0 0.0
        %5913 = vmatpush2.xpose.msra.mxu0 0.0
        %5914 = vmatprep.subr.mxu0 0.0
        %5915 = vmatpush2.xpose.msra.mxu0 0.0
        %5916 = vmatprep.subr.mxu0 0.0
        %5917 = vmatpush2.xpose.msra.mxu0 0.0
        %5918 = vmatprep.subr.mxu0 0.0
        %5919 = vmatpush2.xpose.msra.mxu0 0.0
        %5920 = vmatprep.subr.mxu0 0.0
        %5921 = vmatpush2.xpose.msra.mxu0 0.0
        %5922 = vmatprep.mubr.f32.mxu0 0.0
        %5923 = vmatmul.mubr.f32.gmra.mxu0 %v5850
        %v5924 = vpop.f32.mrf.mxu0
        %v5925 = vadd.f32 %v5559, %v5924
        %v5926 = vpop.f32.mrf.mxu0
        %5927 = vmatprep.mubr.f32.mxu0 0.0
        %5928 = vmatmul.mubr.f32.gmra.mxu0 %v5852
        %v5929 = vpop.f32.mrf.mxu0
        %v5930 = vadd.f32 %v5560, %v5929
        %v5931 = vpop.f32.mrf.mxu0
        %5932 = vdwg.mxu0
        %5933 = vrot.lane.b32.xlu0 %v500, 104
        %v5934 = vpop.permute.xlu0 %5933
        %5935 = vrot.lane.b32.xlu0 %v505, 104
        %v5936 = vpop.permute.xlu0 %5935
        %5937 = vrot.lane.b32.xlu0 %v500, 72
        %v5938 = vpop.permute.xlu0 %5937
        %5939 = vrot.lane.b32.xlu0 %v505, 72
        %v5940 = vpop.permute.xlu0 %5939
        %v5941 = vsel %vm560, %v5934, 0
        %v5943 = vsel %vm560, %v5936, 0
        %v5945 = vsel %vm560, %v5938, 0
        %v5947 = vsel %vm560, %v5940, 0
        %5949 = vmatprep.subr.mxu0 0.0
        %5950 = vmatpush1.xpose.msra.mxu0 0.0
        %5951 = vmatprep.subr.mxu0 0.0
        %5952 = vmatpush1.xpose.msra.mxu0 0.0
        %5953 = vmatprep.subr.mxu0 0.0
        %5954 = vmatpush1.xpose.msra.mxu0 0.0
        %5955 = vmatprep.subr.mxu0 0.0
        %5956 = vmatpush1.xpose.msra.mxu0 0.0
        %5957 = vmatprep.subr.mxu0 0.0
        %5958 = vmatpush1.xpose.msra.mxu0 0.0
        %5959 = vmatprep.subr.mxu0 0.0
        %5960 = vmatpush1.xpose.msra.mxu0 0.0
        %5961 = vmatprep.subr.mxu0 0.0
        %5962 = vmatpush1.xpose.msra.mxu0 0.0
        %5963 = vmatprep.subr.mxu0 0.0
        %5964 = vmatpush1.xpose.msra.mxu0 0.0
        %5965 = vmatprep.subr.mxu0 0.0
        %5966 = vmatpush1.xpose.msra.mxu0 0.0
        %5967 = vmatprep.subr.mxu0 0.0
        %5968 = vmatpush1.xpose.msra.mxu0 0.0
        %5969 = vmatprep.subr.mxu0 0.0
        %5970 = vmatpush1.xpose.msra.mxu0 0.0
        %5971 = vmatprep.subr.mxu0 0.0
        %5972 = vmatpush1.xpose.msra.mxu0 0.0
        %5973 = vmatprep.subr.mxu0 0.0
        %5974 = vmatpush1.xpose.msra.mxu0 0.0
        %5975 = vmatprep.subr.mxu0 0.0
        %5976 = vmatpush1.xpose.msra.mxu0 0.0
        %5977 = vmatprep.subr.mxu0 0.0
        %5978 = vmatpush1.xpose.msra.mxu0 %v5947
        %5979 = vmatprep.subr.mxu0 0.0
        %5980 = vmatpush1.xpose.msra.mxu0 %v5945
        %5981 = vmatprep.subr.mxu0 0.0
        %5982 = vmatpush2.xpose.msra.mxu0 0.0
        %5983 = vmatprep.subr.mxu0 0.0
        %5984 = vmatpush2.xpose.msra.mxu0 0.0
        %5985 = vmatprep.subr.mxu0 0.0
        %5986 = vmatpush2.xpose.msra.mxu0 0.0
        %5987 = vmatprep.subr.mxu0 0.0
        %5988 = vmatpush2.xpose.msra.mxu0 0.0
        %5989 = vmatprep.subr.mxu0 0.0
        %5990 = vmatpush2.xpose.msra.mxu0 0.0
        %5991 = vmatprep.subr.mxu0 0.0
        %5992 = vmatpush2.xpose.msra.mxu0 0.0
        %5993 = vmatprep.subr.mxu0 0.0
        %5994 = vmatpush2.xpose.msra.mxu0 0.0
        %5995 = vmatprep.subr.mxu0 0.0
        %5996 = vmatpush2.xpose.msra.mxu0 0.0
        %5997 = vmatprep.subr.mxu0 0.0
        %5998 = vmatpush2.xpose.msra.mxu0 0.0
        %5999 = vmatprep.subr.mxu0 0.0
        %6000 = vmatpush2.xpose.msra.mxu0 0.0
        %6001 = vmatprep.subr.mxu0 0.0
        %6002 = vmatpush2.xpose.msra.mxu0 0.0
        %6003 = vmatprep.subr.mxu0 0.0
        %6004 = vmatpush2.xpose.msra.mxu0 0.0
        %6005 = vmatprep.subr.mxu0 0.0
        %6006 = vmatpush2.xpose.msra.mxu0 0.0
        %6007 = vmatprep.subr.mxu0 0.0
        %6008 = vmatpush2.xpose.msra.mxu0 0.0
        %6009 = vmatprep.subr.mxu0 0.0
        %6010 = vmatpush2.xpose.msra.mxu0 0.0
        %6011 = vmatprep.subr.mxu0 0.0
        %6012 = vmatpush2.xpose.msra.mxu0 0.0
        %6013 = vmatprep.mubr.f32.mxu0 0.0
        %6014 = vmatmul.mubr.f32.gmra.mxu0 %v5941
        %v6015 = vpop.f32.mrf.mxu0
        %v6016 = vadd.f32 %v5561, %v6015
        %v6017 = vpop.f32.mrf.mxu0
        %6018 = vmatprep.mubr.f32.mxu0 0.0
        %6019 = vmatmul.mubr.f32.gmra.mxu0 %v5943
        %v6020 = vpop.f32.mrf.mxu0
        %v6021 = vadd.f32 %v5562, %v6020
        %v6022 = vpop.f32.mrf.mxu0
        %6023 = vdwg.mxu0
        %6024 = vrot.lane.b32.xlu0 %v510, 104
        %v6025 = vpop.permute.xlu0 %6024
        %6026 = vrot.lane.b32.xlu0 %v515, 104
        %v6027 = vpop.permute.xlu0 %6026
        %6028 = vrot.lane.b32.xlu0 %v510, 72
        %v6029 = vpop.permute.xlu0 %6028
        %6030 = vrot.lane.b32.xlu0 %v515, 72
        %v6031 = vpop.permute.xlu0 %6030
        %v6032 = vsel %vm560, %v6025, 0
        %v6034 = vsel %vm560, %v6027, 0
        %v6036 = vsel %vm560, %v6029, 0
        %v6038 = vsel %vm560, %v6031, 0
        %6040 = vmatprep.subr.mxu0 0.0
        %6041 = vmatpush1.xpose.msra.mxu0 0.0
        %6042 = vmatprep.subr.mxu0 0.0
        %6043 = vmatpush1.xpose.msra.mxu0 0.0
        %6044 = vmatprep.subr.mxu0 0.0
        %6045 = vmatpush1.xpose.msra.mxu0 0.0
        %6046 = vmatprep.subr.mxu0 0.0
        %6047 = vmatpush1.xpose.msra.mxu0 0.0
        %6048 = vmatprep.subr.mxu0 0.0
        %6049 = vmatpush1.xpose.msra.mxu0 0.0
        %6050 = vmatprep.subr.mxu0 0.0
        %6051 = vmatpush1.xpose.msra.mxu0 0.0
        %6052 = vmatprep.subr.mxu0 0.0
        %6053 = vmatpush1.xpose.msra.mxu0 0.0
        %6054 = vmatprep.subr.mxu0 0.0
        %6055 = vmatpush1.xpose.msra.mxu0 0.0
        %6056 = vmatprep.subr.mxu0 0.0
        %6057 = vmatpush1.xpose.msra.mxu0 0.0
        %6058 = vmatprep.subr.mxu0 0.0
        %6059 = vmatpush1.xpose.msra.mxu0 0.0
        %6060 = vmatprep.subr.mxu0 0.0
        %6061 = vmatpush1.xpose.msra.mxu0 0.0
        %6062 = vmatprep.subr.mxu0 0.0
        %6063 = vmatpush1.xpose.msra.mxu0 0.0
        %6064 = vmatprep.subr.mxu0 0.0
        %6065 = vmatpush1.xpose.msra.mxu0 0.0
        %6066 = vmatprep.subr.mxu0 0.0
        %6067 = vmatpush1.xpose.msra.mxu0 0.0
        %6068 = vmatprep.subr.mxu0 0.0
        %6069 = vmatpush1.xpose.msra.mxu0 %v6038
        %6070 = vmatprep.subr.mxu0 0.0
        %6071 = vmatpush1.xpose.msra.mxu0 %v6036
        %6072 = vmatprep.subr.mxu0 0.0
        %6073 = vmatpush2.xpose.msra.mxu0 0.0
        %6074 = vmatprep.subr.mxu0 0.0
        %6075 = vmatpush2.xpose.msra.mxu0 0.0
        %6076 = vmatprep.subr.mxu0 0.0
        %6077 = vmatpush2.xpose.msra.mxu0 0.0
        %6078 = vmatprep.subr.mxu0 0.0
        %6079 = vmatpush2.xpose.msra.mxu0 0.0
        %6080 = vmatprep.subr.mxu0 0.0
        %6081 = vmatpush2.xpose.msra.mxu0 0.0
        %6082 = vmatprep.subr.mxu0 0.0
        %6083 = vmatpush2.xpose.msra.mxu0 0.0
        %6084 = vmatprep.subr.mxu0 0.0
        %6085 = vmatpush2.xpose.msra.mxu0 0.0
        %6086 = vmatprep.subr.mxu0 0.0
        %6087 = vmatpush2.xpose.msra.mxu0 0.0
        %6088 = vmatprep.subr.mxu0 0.0
        %6089 = vmatpush2.xpose.msra.mxu0 0.0
        %6090 = vmatprep.subr.mxu0 0.0
        %6091 = vmatpush2.xpose.msra.mxu0 0.0
        %6092 = vmatprep.subr.mxu0 0.0
        %6093 = vmatpush2.xpose.msra.mxu0 0.0
        %6094 = vmatprep.subr.mxu0 0.0
        %6095 = vmatpush2.xpose.msra.mxu0 0.0
        %6096 = vmatprep.subr.mxu0 0.0
        %6097 = vmatpush2.xpose.msra.mxu0 0.0
        %6098 = vmatprep.subr.mxu0 0.0
        %6099 = vmatpush2.xpose.msra.mxu0 0.0
        %6100 = vmatprep.subr.mxu0 0.0
        %6101 = vmatpush2.xpose.msra.mxu0 0.0
        %6102 = vmatprep.subr.mxu0 0.0
        %6103 = vmatpush2.xpose.msra.mxu0 0.0
        %6104 = vmatprep.mubr.f32.mxu0 0.0
        %6105 = vmatmul.mubr.f32.gmra.mxu0 %v6032
        %v6106 = vpop.f32.mrf.mxu0
        %v6107 = vadd.f32 %v5563, %v6106
        %v6108 = vpop.f32.mrf.mxu0
        %6109 = vmatprep.mubr.f32.mxu0 0.0
        %6110 = vmatmul.mubr.f32.gmra.mxu0 %v6034
        %v6111 = vpop.f32.mrf.mxu0
        %v6112 = vadd.f32 %v5564, %v6111
        %v6113 = vpop.f32.mrf.mxu0
        %6114 = vdwg.mxu0
        %6115 = vrot.lane.b32.xlu0 %v520, 104
        %v6116 = vpop.permute.xlu0 %6115
        %6117 = vrot.lane.b32.xlu0 %v525, 104
        %v6118 = vpop.permute.xlu0 %6117
        %6119 = vrot.lane.b32.xlu0 %v520, 72
        %v6120 = vpop.permute.xlu0 %6119
        %6121 = vrot.lane.b32.xlu0 %v525, 72
        %v6122 = vpop.permute.xlu0 %6121
        %v6123 = vsel %vm560, %v6116, 0
        %v6125 = vsel %vm560, %v6118, 0
        %v6127 = vsel %vm560, %v6120, 0
        %v6129 = vsel %vm560, %v6122, 0
        %6131 = vmatprep.subr.mxu0 0.0
        %6132 = vmatpush1.xpose.msra.mxu0 0.0
        %6133 = vmatprep.subr.mxu0 0.0
        %6134 = vmatpush1.xpose.msra.mxu0 0.0
        %6135 = vmatprep.subr.mxu0 0.0
        %6136 = vmatpush1.xpose.msra.mxu0 0.0
        %6137 = vmatprep.subr.mxu0 0.0
        %6138 = vmatpush1.xpose.msra.mxu0 0.0
        %6139 = vmatprep.subr.mxu0 0.0
        %6140 = vmatpush1.xpose.msra.mxu0 0.0
        %6141 = vmatprep.subr.mxu0 0.0
        %6142 = vmatpush1.xpose.msra.mxu0 0.0
        %6143 = vmatprep.subr.mxu0 0.0
        %6144 = vmatpush1.xpose.msra.mxu0 0.0
        %6145 = vmatprep.subr.mxu0 0.0
        %6146 = vmatpush1.xpose.msra.mxu0 0.0
        %6147 = vmatprep.subr.mxu0 0.0
        %6148 = vmatpush1.xpose.msra.mxu0 0.0
        %6149 = vmatprep.subr.mxu0 0.0
        %6150 = vmatpush1.xpose.msra.mxu0 0.0
        %6151 = vmatprep.subr.mxu0 0.0
        %6152 = vmatpush1.xpose.msra.mxu0 0.0
        %6153 = vmatprep.subr.mxu0 0.0
        %6154 = vmatpush1.xpose.msra.mxu0 0.0
        %6155 = vmatprep.subr.mxu0 0.0
        %6156 = vmatpush1.xpose.msra.mxu0 0.0
        %6157 = vmatprep.subr.mxu0 0.0
        %6158 = vmatpush1.xpose.msra.mxu0 0.0
        %6159 = vmatprep.subr.mxu0 0.0
        %6160 = vmatpush1.xpose.msra.mxu0 %v6129
        %6161 = vmatprep.subr.mxu0 0.0
        %6162 = vmatpush1.xpose.msra.mxu0 %v6127
        %6163 = vmatprep.subr.mxu0 0.0
        %6164 = vmatpush2.xpose.msra.mxu0 0.0
        %6165 = vmatprep.subr.mxu0 0.0
        %6166 = vmatpush2.xpose.msra.mxu0 0.0
        %6167 = vmatprep.subr.mxu0 0.0
        %6168 = vmatpush2.xpose.msra.mxu0 0.0
        %6169 = vmatprep.subr.mxu0 0.0
        %6170 = vmatpush2.xpose.msra.mxu0 0.0
        %6171 = vmatprep.subr.mxu0 0.0
        %6172 = vmatpush2.xpose.msra.mxu0 0.0
        %6173 = vmatprep.subr.mxu0 0.0
        %6174 = vmatpush2.xpose.msra.mxu0 0.0
        %6175 = vmatprep.subr.mxu0 0.0
        %6176 = vmatpush2.xpose.msra.mxu0 0.0
        %6177 = vmatprep.subr.mxu0 0.0
        %6178 = vmatpush2.xpose.msra.mxu0 0.0
        %6179 = vmatprep.subr.mxu0 0.0
        %6180 = vmatpush2.xpose.msra.mxu0 0.0
        %6181 = vmatprep.subr.mxu0 0.0
        %6182 = vmatpush2.xpose.msra.mxu0 0.0
        %6183 = vmatprep.subr.mxu0 0.0
        %6184 = vmatpush2.xpose.msra.mxu0 0.0
        %6185 = vmatprep.subr.mxu0 0.0
        %6186 = vmatpush2.xpose.msra.mxu0 0.0
        %6187 = vmatprep.subr.mxu0 0.0
        %6188 = vmatpush2.xpose.msra.mxu0 0.0
        %6189 = vmatprep.subr.mxu0 0.0
        %6190 = vmatpush2.xpose.msra.mxu0 0.0
        %6191 = vmatprep.subr.mxu0 0.0
        %6192 = vmatpush2.xpose.msra.mxu0 0.0
        %6193 = vmatprep.subr.mxu0 0.0
        %6194 = vmatpush2.xpose.msra.mxu0 0.0
        %6195 = vmatprep.mubr.f32.mxu0 0.0
        %6196 = vmatmul.mubr.f32.gmra.mxu0 %v6123
        %v6197 = vpop.f32.mrf.mxu0
        %v6198 = vadd.f32 %v5565, %v6197
        %v6199 = vpop.f32.mrf.mxu0
        %6200 = vmatprep.mubr.f32.mxu0 0.0
        %6201 = vmatmul.mubr.f32.gmra.mxu0 %v6125
        %v6202 = vpop.f32.mrf.mxu0
        %v6203 = vadd.f32 %v5566, %v6202
        %v6204 = vpop.f32.mrf.mxu0
        %6205 = vdwg.mxu0
        %6206 = vrot.lane.b32.xlu0 %v530, 104
        %v6207 = vpop.permute.xlu0 %6206
        %6208 = vrot.lane.b32.xlu0 %v535, 104
        %v6209 = vpop.permute.xlu0 %6208
        %6210 = vrot.lane.b32.xlu0 %v530, 72
        %v6211 = vpop.permute.xlu0 %6210
        %6212 = vrot.lane.b32.xlu0 %v535, 72
        %v6213 = vpop.permute.xlu0 %6212
        %v6214 = vsel %vm560, %v6207, 0
        %v6216 = vsel %vm560, %v6209, 0
        %v6218 = vsel %vm560, %v6211, 0
        %v6220 = vsel %vm560, %v6213, 0
        %6222 = vmatprep.subr.mxu0 0.0
        %6223 = vmatpush1.xpose.msra.mxu0 0.0
        %6224 = vmatprep.subr.mxu0 0.0
        %6225 = vmatpush1.xpose.msra.mxu0 0.0
        %6226 = vmatprep.subr.mxu0 0.0
        %6227 = vmatpush1.xpose.msra.mxu0 0.0
        %6228 = vmatprep.subr.mxu0 0.0
        %6229 = vmatpush1.xpose.msra.mxu0 0.0
        %6230 = vmatprep.subr.mxu0 0.0
        %6231 = vmatpush1.xpose.msra.mxu0 0.0
        %6232 = vmatprep.subr.mxu0 0.0
        %6233 = vmatpush1.xpose.msra.mxu0 0.0
        %6234 = vmatprep.subr.mxu0 0.0
        %6235 = vmatpush1.xpose.msra.mxu0 0.0
        %6236 = vmatprep.subr.mxu0 0.0
        %6237 = vmatpush1.xpose.msra.mxu0 0.0
        %6238 = vmatprep.subr.mxu0 0.0
        %6239 = vmatpush1.xpose.msra.mxu0 0.0
        %6240 = vmatprep.subr.mxu0 0.0
        %6241 = vmatpush1.xpose.msra.mxu0 0.0
        %6242 = vmatprep.subr.mxu0 0.0
        %6243 = vmatpush1.xpose.msra.mxu0 0.0
        %6244 = vmatprep.subr.mxu0 0.0
        %6245 = vmatpush1.xpose.msra.mxu0 0.0
        %6246 = vmatprep.subr.mxu0 0.0
        %6247 = vmatpush1.xpose.msra.mxu0 0.0
        %6248 = vmatprep.subr.mxu0 0.0
        %6249 = vmatpush1.xpose.msra.mxu0 0.0
        %6250 = vmatprep.subr.mxu0 0.0
        %6251 = vmatpush1.xpose.msra.mxu0 %v6220
        %6252 = vmatprep.subr.mxu0 0.0
        %6253 = vmatpush1.xpose.msra.mxu0 %v6218
        %6254 = vmatprep.subr.mxu0 0.0
        %6255 = vmatpush2.xpose.msra.mxu0 0.0
        %6256 = vmatprep.subr.mxu0 0.0
        %6257 = vmatpush2.xpose.msra.mxu0 0.0
        %6258 = vmatprep.subr.mxu0 0.0
        %6259 = vmatpush2.xpose.msra.mxu0 0.0
        %6260 = vmatprep.subr.mxu0 0.0
        %6261 = vmatpush2.xpose.msra.mxu0 0.0
        %6262 = vmatprep.subr.mxu0 0.0
        %6263 = vmatpush2.xpose.msra.mxu0 0.0
        %6264 = vmatprep.subr.mxu0 0.0
        %6265 = vmatpush2.xpose.msra.mxu0 0.0
        %6266 = vmatprep.subr.mxu0 0.0
        %6267 = vmatpush2.xpose.msra.mxu0 0.0
        %6268 = vmatprep.subr.mxu0 0.0
        %6269 = vmatpush2.xpose.msra.mxu0 0.0
        %6270 = vmatprep.subr.mxu0 0.0
        %6271 = vmatpush2.xpose.msra.mxu0 0.0
        %6272 = vmatprep.subr.mxu0 0.0
        %6273 = vmatpush2.xpose.msra.mxu0 0.0
        %6274 = vmatprep.subr.mxu0 0.0
        %6275 = vmatpush2.xpose.msra.mxu0 0.0
        %6276 = vmatprep.subr.mxu0 0.0
        %6277 = vmatpush2.xpose.msra.mxu0 0.0
        %6278 = vmatprep.subr.mxu0 0.0
        %6279 = vmatpush2.xpose.msra.mxu0 0.0
        %6280 = vmatprep.subr.mxu0 0.0
        %6281 = vmatpush2.xpose.msra.mxu0 0.0
        %6282 = vmatprep.subr.mxu0 0.0
        %6283 = vmatpush2.xpose.msra.mxu0 0.0
        %6284 = vmatprep.subr.mxu0 0.0
        %6285 = vmatpush2.xpose.msra.mxu0 0.0
        %6286 = vmatprep.mubr.f32.mxu0 0.0
        %6287 = vmatmul.mubr.f32.gmra.mxu0 %v6214
        %v6288 = vpop.f32.mrf.mxu0
        %v6289 = vadd.f32 %v5567, %v6288
        %v6290 = vpop.f32.mrf.mxu0
        %6291 = vmatprep.mubr.f32.mxu0 0.0
        %6292 = vmatmul.mubr.f32.gmra.mxu0 %v6216
        %v6293 = vpop.f32.mrf.mxu0
        %v6294 = vadd.f32 %v5568, %v6293
        %v6295 = vpop.f32.mrf.mxu0
        %6296 = vdwg.mxu0
        %v6297 = vsel %vm1267, %v5652, -inf
        %6298 = vmax.xlane.f32.xlu0 %v6297
        %v6299 = vpop.xlane.xlu0 %6298
        %v6300 = vsel %vm1267, %v5657, -inf
        %6301 = vmax.xlane.f32.xlu0 %v6300
        %v6302 = vpop.xlane.xlu0 %6301
        %v6303 = vsel %vm1267, %v5743, -inf
        %6304 = vmax.xlane.f32.xlu0 %v6303
        %v6305 = vpop.xlane.xlu0 %6304
        %v6306 = vsel %vm1267, %v5748, -inf
        %6307 = vmax.xlane.f32.xlu0 %v6306
        %v6308 = vpop.xlane.xlu0 %6307
        %v6309 = vsel %vm1267, %v5834, -inf
        %6310 = vmax.xlane.f32.xlu0 %v6309
        %v6311 = vpop.xlane.xlu0 %6310
        %v6312 = vsel %vm1267, %v5839, -inf
        %6313 = vmax.xlane.f32.xlu0 %v6312
        %v6314 = vpop.xlane.xlu0 %6313
        %v6315 = vsel %vm1267, %v5925, -inf
        %6316 = vmax.xlane.f32.xlu0 %v6315
        %v6317 = vpop.xlane.xlu0 %6316
        %v6318 = vsel %vm1267, %v5930, -inf
        %6319 = vmax.xlane.f32.xlu0 %v6318
        %v6320 = vpop.xlane.xlu0 %6319
        %v6321 = vsel %vm1267, %v6016, -inf
        %6322 = vmax.xlane.f32.xlu0 %v6321
        %v6323 = vpop.xlane.xlu0 %6322
        %v6324 = vsel %vm1267, %v6021, -inf
        %6325 = vmax.xlane.f32.xlu0 %v6324
        %v6326 = vpop.xlane.xlu0 %6325
        %v6327 = vsel %vm1267, %v6107, -inf
        %6328 = vmax.xlane.f32.xlu0 %v6327
        %v6329 = vpop.xlane.xlu0 %6328
        %v6330 = vsel %vm1267, %v6112, -inf
        %6331 = vmax.xlane.f32.xlu0 %v6330
        %v6332 = vpop.xlane.xlu0 %6331
        %v6333 = vsel %vm1267, %v6198, -inf
        %6334 = vmax.xlane.f32.xlu0 %v6333
        %v6335 = vpop.xlane.xlu0 %6334
        %v6336 = vsel %vm1267, %v6203, -inf
        %6337 = vmax.xlane.f32.xlu0 %v6336
        %v6338 = vpop.xlane.xlu0 %6337
        %v6339 = vsel %vm1267, %v6289, -inf
        %6340 = vmax.xlane.f32.xlu0 %v6339
        %v6341 = vpop.xlane.xlu0 %6340
        %v6342 = vsel %vm1267, %v6294, -inf
        %6343 = vmax.xlane.f32.xlu0 %v6342
        %v6344 = vpop.xlane.xlu0 %6343
        %v6345 = vsub.f32 %v5652, %v6299
        %v6346 = vsub.f32 %v5657, %v6302
        %v6347 = vsub.f32 %v5743, %v6305
        %v6348 = vsub.f32 %v5748, %v6308
        %v6349 = vsub.f32 %v5834, %v6311
        %v6350 = vsub.f32 %v5839, %v6314
        %v6351 = vsub.f32 %v5925, %v6317
        %v6352 = vsub.f32 %v5930, %v6320
        %v6353 = vsub.f32 %v6016, %v6323
        %v6354 = vsub.f32 %v6021, %v6326
        %v6355 = vsub.f32 %v6107, %v6329
        %v6356 = vsub.f32 %v6112, %v6332
        %v6357 = vsub.f32 %v6198, %v6335
        %v6358 = vsub.f32 %v6203, %v6338
        %v6359 = vsub.f32 %v6289, %v6341
        %v6360 = vsub.f32 %v6294, %v6344
        %v6361 = vmul.f32 %v6345, 1.442695
        %v6362 = vpow.pop %v6361
        %v6363 = vmul.f32 %v6346, 1.442695
        %v6364 = vpow.pop %v6363
        %v6365 = vmul.f32 %v6347, 1.442695
        %v6366 = vpow.pop %v6365
        %v6367 = vmul.f32 %v6348, 1.442695
        %v6368 = vpow.pop %v6367
        %v6369 = vmul.f32 %v6349, 1.442695
        %v6370 = vpow.pop %v6369
        %v6371 = vmul.f32 %v6350, 1.442695
        %v6372 = vpow.pop %v6371
        %v6373 = vmul.f32 %v6351, 1.442695
        %v6374 = vpow.pop %v6373
        %v6375 = vmul.f32 %v6352, 1.442695
        %v6376 = vpow.pop %v6375
        %v6377 = vmul.f32 %v6353, 1.442695
        %v6378 = vpow.pop %v6377
        %v6379 = vmul.f32 %v6354, 1.442695
        %v6380 = vpow.pop %v6379
        %v6381 = vmul.f32 %v6355, 1.442695
        %v6382 = vpow.pop %v6381
        %v6383 = vmul.f32 %v6356, 1.442695
        %v6384 = vpow.pop %v6383
        %v6385 = vmul.f32 %v6357, 1.442695
        %v6386 = vpow.pop %v6385
        %v6387 = vmul.f32 %v6358, 1.442695
        %v6388 = vpow.pop %v6387
        %v6389 = vmul.f32 %v6359, 1.442695
        %v6390 = vpow.pop %v6389
        %v6391 = vmul.f32 %v6360, 1.442695
        %v6392 = vpow.pop %v6391
        %v6393 = vsel %vm1267, %v6362, 0.0
        %6394 = vadd.xlane.f32.xlu0 %v6393
        %v6395 = vpop.xlane.xlu0 %6394
        %v6396 = vsel %vm1267, %v6364, 0.0
        %6397 = vadd.xlane.f32.xlu0 %v6396
        %v6398 = vpop.xlane.xlu0 %6397
        %v6399 = vsel %vm1267, %v6366, 0.0
        %6400 = vadd.xlane.f32.xlu0 %v6399
        %v6401 = vpop.xlane.xlu0 %6400
        %v6402 = vsel %vm1267, %v6368, 0.0
        %6403 = vadd.xlane.f32.xlu0 %v6402
        %v6404 = vpop.xlane.xlu0 %6403
        %v6405 = vsel %vm1267, %v6370, 0.0
        %6406 = vadd.xlane.f32.xlu0 %v6405
        %v6407 = vpop.xlane.xlu0 %6406
        %v6408 = vsel %vm1267, %v6372, 0.0
        %6409 = vadd.xlane.f32.xlu0 %v6408
        %v6410 = vpop.xlane.xlu0 %6409
        %v6411 = vsel %vm1267, %v6374, 0.0
        %6412 = vadd.xlane.f32.xlu0 %v6411
        %v6413 = vpop.xlane.xlu0 %6412
        %v6414 = vsel %vm1267, %v6376, 0.0
        %6415 = vadd.xlane.f32.xlu0 %v6414
        %v6416 = vpop.xlane.xlu0 %6415
        %v6417 = vsel %vm1267, %v6378, 0.0
        %6418 = vadd.xlane.f32.xlu0 %v6417
        %v6419 = vpop.xlane.xlu0 %6418
        %v6420 = vsel %vm1267, %v6380, 0.0
        %6421 = vadd.xlane.f32.xlu0 %v6420
        %v6422 = vpop.xlane.xlu0 %6421
        %v6423 = vsel %vm1267, %v6382, 0.0
        %6424 = vadd.xlane.f32.xlu0 %v6423
        %v6425 = vpop.xlane.xlu0 %6424
        %v6426 = vsel %vm1267, %v6384, 0.0
        %6427 = vadd.xlane.f32.xlu0 %v6426
        %v6428 = vpop.xlane.xlu0 %6427
        %v6429 = vsel %vm1267, %v6386, 0.0
        %6430 = vadd.xlane.f32.xlu0 %v6429
        %v6431 = vpop.xlane.xlu0 %6430
        %v6432 = vsel %vm1267, %v6388, 0.0
        %6433 = vadd.xlane.f32.xlu0 %v6432
        %v6434 = vpop.xlane.xlu0 %6433
        %v6435 = vsel %vm1267, %v6390, 0.0
        %6436 = vadd.xlane.f32.xlu0 %v6435
        %v6437 = vpop.xlane.xlu0 %6436
        %v6438 = vsel %vm1267, %v6392, 0.0
        %6439 = vadd.xlane.f32.xlu0 %v6438
        %v6440 = vpop.xlane.xlu0 %6439
        %v6441 = vrcp.pop %v6395
        %v6442 = vrcp.pop %v6398
        %v6443 = vrcp.pop %v6401
        %v6444 = vrcp.pop %v6404
        %v6445 = vrcp.pop %v6407
        %v6446 = vrcp.pop %v6410
        %v6447 = vrcp.pop %v6413
        %v6448 = vrcp.pop %v6416
        %v6449 = vrcp.pop %v6419
        %v6450 = vrcp.pop %v6422
        %v6451 = vrcp.pop %v6425
        %v6452 = vrcp.pop %v6428
        %v6453 = vrcp.pop %v6431
        %v6454 = vrcp.pop %v6434
        %v6455 = vrcp.pop %v6437
        %v6456 = vrcp.pop %v6440
        %v6457 = vmul.f32 %v6362, %v6441
        %v6458 = vmul.f32 %v6364, %v6442
        %v6459 = vmul.f32 %v6366, %v6443
        %v6460 = vmul.f32 %v6368, %v6444
        %v6461 = vmul.f32 %v6370, %v6445
        %v6462 = vmul.f32 %v6372, %v6446
        %v6463 = vmul.f32 %v6374, %v6447
        %v6464 = vmul.f32 %v6376, %v6448
        %v6465 = vmul.f32 %v6378, %v6449
        %v6466 = vmul.f32 %v6380, %v6450
        %v6467 = vmul.f32 %v6382, %v6451
        %v6468 = vmul.f32 %v6384, %v6452
        %v6469 = vmul.f32 %v6386, %v6453
        %v6470 = vmul.f32 %v6388, %v6454
        %v6471 = vmul.f32 %v6390, %v6455
        %v6472 = vmul.f32 %v6392, %v6456
        %6473 = vrot.lane.b32.xlu0 %v460, 40
        %v6474 = vpop.permute.xlu0 %6473
        %6475 = vrot.lane.b32.xlu0 %v465, 40
        %v6476 = vpop.permute.xlu0 %6475
        %v6480 = vsel %vm1267, %v6457, 0
        %v6483 = vsel %vm1267, %v6458, 0
        %6485 = vmatprep.subr.mxu0 0.0
        %6486 = vmatpush1.msra.mxu0 0.0
        %6487 = vmatprep.subr.mxu0 0.0
        %6488 = vmatpush1.msra.mxu0 0.0
        %6489 = vmatprep.subr.mxu0 0.0
        %6490 = vmatpush1.msra.mxu0 0.0
        %6491 = vmatprep.subr.mxu0 0.0
        %6492 = vmatpush1.msra.mxu0 0.0
        %6493 = vmatprep.subr.mxu0 0.0
        %6494 = vmatpush1.msra.mxu0 0.0
        %6495 = vmatprep.subr.mxu0 0.0
        %6496 = vmatpush1.msra.mxu0 0.0
        %6497 = vmatprep.subr.mxu0 0.0
        %6498 = vmatpush1.msra.mxu0 0.0
        %6499 = vmatprep.subr.mxu0 0.0
        %6500 = vmatpush1.msra.mxu0 0.0
        %6501 = vmatprep.subr.mxu0 0.0
        %6502 = vmatpush1.msra.mxu0 0.0
        %6503 = vmatprep.subr.mxu0 0.0
        %6504 = vmatpush1.msra.mxu0 0.0
        %6505 = vmatprep.subr.mxu0 0.0
        %6506 = vmatpush1.msra.mxu0 0.0
        %6507 = vmatprep.subr.mxu0 0.0
        %6508 = vmatpush1.msra.mxu0 0.0
        %6509 = vmatprep.subr.mxu0 0.0
        %6510 = vmatpush1.msra.mxu0 0.0
        %6511 = vmatprep.subr.mxu0 0.0
        %6512 = vmatpush1.msra.mxu0 0.0
        %6513 = vmatprep.subr.mxu0 0.0
        %6514 = vmatpush1.msra.mxu0 %v6476
        %6515 = vmatprep.subr.mxu0 0.0
        %6516 = vmatpush1.msra.mxu0 %v6474
        %6517 = vmatprep.subr.mxu0 0.0
        %6518 = vmatpush2.msra.mxu0 0.0
        %6519 = vmatprep.subr.mxu0 0.0
        %6520 = vmatpush2.msra.mxu0 0.0
        %6521 = vmatprep.subr.mxu0 0.0
        %6522 = vmatpush2.msra.mxu0 0.0
        %6523 = vmatprep.subr.mxu0 0.0
        %6524 = vmatpush2.msra.mxu0 0.0
        %6525 = vmatprep.subr.mxu0 0.0
        %6526 = vmatpush2.msra.mxu0 0.0
        %6527 = vmatprep.subr.mxu0 0.0
        %6528 = vmatpush2.msra.mxu0 0.0
        %6529 = vmatprep.subr.mxu0 0.0
        %6530 = vmatpush2.msra.mxu0 0.0
        %6531 = vmatprep.subr.mxu0 0.0
        %6532 = vmatpush2.msra.mxu0 0.0
        %6533 = vmatprep.subr.mxu0 0.0
        %6534 = vmatpush2.msra.mxu0 0.0
        %6535 = vmatprep.subr.mxu0 0.0
        %6536 = vmatpush2.msra.mxu0 0.0
        %6537 = vmatprep.subr.mxu0 0.0
        %6538 = vmatpush2.msra.mxu0 0.0
        %6539 = vmatprep.subr.mxu0 0.0
        %6540 = vmatpush2.msra.mxu0 0.0
        %6541 = vmatprep.subr.mxu0 0.0
        %6542 = vmatpush2.msra.mxu0 0.0
        %6543 = vmatprep.subr.mxu0 0.0
        %6544 = vmatpush2.msra.mxu0 0.0
        %6545 = vmatprep.subr.mxu0 0.0
        %6546 = vmatpush2.msra.mxu0 0.0
        %6547 = vmatprep.subr.mxu0 0.0
        %6548 = vmatpush2.msra.mxu0 0.0
        %6549 = vmatprep.mubr.f32.mxu0 0.0
        %6550 = vmatmul.mubr.f32.gmra.mxu0 %v6480
        %v6551 = vpop.f32.mrf.mxu0
        %v6552 = vadd.f32 0.0, %v6551
        %v6553 = vpop.f32.mrf.mxu0
        %6554 = vmatprep.mubr.f32.mxu0 0.0
        %6555 = vmatmul.mubr.f32.gmra.mxu0 %v6483
        %v6556 = vpop.f32.mrf.mxu0
        %v6557 = vadd.f32 0.0, %v6556
        %v6558 = vpop.f32.mrf.mxu0
        %6559 = vdwg.mxu0
        %6560 = vrot.lane.b32.xlu0 %v470, 40
        %v6561 = vpop.permute.xlu0 %6560
        %6562 = vrot.lane.b32.xlu0 %v475, 40
        %v6563 = vpop.permute.xlu0 %6562
        %v6567 = vsel %vm1267, %v6459, 0
        %v6570 = vsel %vm1267, %v6460, 0
        %6572 = vmatprep.subr.mxu0 0.0
        %6573 = vmatpush1.msra.mxu0 0.0
        %6574 = vmatprep.subr.mxu0 0.0
        %6575 = vmatpush1.msra.mxu0 0.0
        %6576 = vmatprep.subr.mxu0 0.0
        %6577 = vmatpush1.msra.mxu0 0.0
        %6578 = vmatprep.subr.mxu0 0.0
        %6579 = vmatpush1.msra.mxu0 0.0
        %6580 = vmatprep.subr.mxu0 0.0
        %6581 = vmatpush1.msra.mxu0 0.0
        %6582 = vmatprep.subr.mxu0 0.0
        %6583 = vmatpush1.msra.mxu0 0.0
        %6584 = vmatprep.subr.mxu0 0.0
        %6585 = vmatpush1.msra.mxu0 0.0
        %6586 = vmatprep.subr.mxu0 0.0
        %6587 = vmatpush1.msra.mxu0 0.0
        %6588 = vmatprep.subr.mxu0 0.0
        %6589 = vmatpush1.msra.mxu0 0.0
        %6590 = vmatprep.subr.mxu0 0.0
        %6591 = vmatpush1.msra.mxu0 0.0
        %6592 = vmatprep.subr.mxu0 0.0
        %6593 = vmatpush1.msra.mxu0 0.0
        %6594 = vmatprep.subr.mxu0 0.0
        %6595 = vmatpush1.msra.mxu0 0.0
        %6596 = vmatprep.subr.mxu0 0.0
        %6597 = vmatpush1.msra.mxu0 0.0
        %6598 = vmatprep.subr.mxu0 0.0
        %6599 = vmatpush1.msra.mxu0 0.0
        %6600 = vmatprep.subr.mxu0 0.0
        %6601 = vmatpush1.msra.mxu0 %v6563
        %6602 = vmatprep.subr.mxu0 0.0
        %6603 = vmatpush1.msra.mxu0 %v6561
        %6604 = vmatprep.subr.mxu0 0.0
        %6605 = vmatpush2.msra.mxu0 0.0
        %6606 = vmatprep.subr.mxu0 0.0
        %6607 = vmatpush2.msra.mxu0 0.0
        %6608 = vmatprep.subr.mxu0 0.0
        %6609 = vmatpush2.msra.mxu0 0.0
        %6610 = vmatprep.subr.mxu0 0.0
        %6611 = vmatpush2.msra.mxu0 0.0
        %6612 = vmatprep.subr.mxu0 0.0
        %6613 = vmatpush2.msra.mxu0 0.0
        %6614 = vmatprep.subr.mxu0 0.0
        %6615 = vmatpush2.msra.mxu0 0.0
        %6616 = vmatprep.subr.mxu0 0.0
        %6617 = vmatpush2.msra.mxu0 0.0
        %6618 = vmatprep.subr.mxu0 0.0
        %6619 = vmatpush2.msra.mxu0 0.0
        %6620 = vmatprep.subr.mxu0 0.0
        %6621 = vmatpush2.msra.mxu0 0.0
        %6622 = vmatprep.subr.mxu0 0.0
        %6623 = vmatpush2.msra.mxu0 0.0
        %6624 = vmatprep.subr.mxu0 0.0
        %6625 = vmatpush2.msra.mxu0 0.0
        %6626 = vmatprep.subr.mxu0 0.0
        %6627 = vmatpush2.msra.mxu0 0.0
        %6628 = vmatprep.subr.mxu0 0.0
        %6629 = vmatpush2.msra.mxu0 0.0
        %6630 = vmatprep.subr.mxu0 0.0
        %6631 = vmatpush2.msra.mxu0 0.0
        %6632 = vmatprep.subr.mxu0 0.0
        %6633 = vmatpush2.msra.mxu0 0.0
        %6634 = vmatprep.subr.mxu0 0.0
        %6635 = vmatpush2.msra.mxu0 0.0
        %6636 = vmatprep.mubr.f32.mxu0 0.0
        %6637 = vmatmul.mubr.f32.gmra.mxu0 %v6567
        %v6638 = vpop.f32.mrf.mxu0
        %v6639 = vadd.f32 0.0, %v6638
        %v6640 = vpop.f32.mrf.mxu0
        %6641 = vmatprep.mubr.f32.mxu0 0.0
        %6642 = vmatmul.mubr.f32.gmra.mxu0 %v6570
        %v6643 = vpop.f32.mrf.mxu0
        %v6644 = vadd.f32 0.0, %v6643
        %v6645 = vpop.f32.mrf.mxu0
        %6646 = vdwg.mxu0
        %6647 = vrot.lane.b32.xlu0 %v480, 40
        %v6648 = vpop.permute.xlu0 %6647
        %6649 = vrot.lane.b32.xlu0 %v485, 40
        %v6650 = vpop.permute.xlu0 %6649
        %v6654 = vsel %vm1267, %v6461, 0
        %v6657 = vsel %vm1267, %v6462, 0
        %6659 = vmatprep.subr.mxu0 0.0
        %6660 = vmatpush1.msra.mxu0 0.0
        %6661 = vmatprep.subr.mxu0 0.0
        %6662 = vmatpush1.msra.mxu0 0.0
        %6663 = vmatprep.subr.mxu0 0.0
        %6664 = vmatpush1.msra.mxu0 0.0
        %6665 = vmatprep.subr.mxu0 0.0
        %6666 = vmatpush1.msra.mxu0 0.0
        %6667 = vmatprep.subr.mxu0 0.0
        %6668 = vmatpush1.msra.mxu0 0.0
        %6669 = vmatprep.subr.mxu0 0.0
        %6670 = vmatpush1.msra.mxu0 0.0
        %6671 = vmatprep.subr.mxu0 0.0
        %6672 = vmatpush1.msra.mxu0 0.0
        %6673 = vmatprep.subr.mxu0 0.0
        %6674 = vmatpush1.msra.mxu0 0.0
        %6675 = vmatprep.subr.mxu0 0.0
        %6676 = vmatpush1.msra.mxu0 0.0
        %6677 = vmatprep.subr.mxu0 0.0
        %6678 = vmatpush1.msra.mxu0 0.0
        %6679 = vmatprep.subr.mxu0 0.0
        %6680 = vmatpush1.msra.mxu0 0.0
        %6681 = vmatprep.subr.mxu0 0.0
        %6682 = vmatpush1.msra.mxu0 0.0
        %6683 = vmatprep.subr.mxu0 0.0
        %6684 = vmatpush1.msra.mxu0 0.0
        %6685 = vmatprep.subr.mxu0 0.0
        %6686 = vmatpush1.msra.mxu0 0.0
        %6687 = vmatprep.subr.mxu0 0.0
        %6688 = vmatpush1.msra.mxu0 %v6650
        %6689 = vmatprep.subr.mxu0 0.0
        %6690 = vmatpush1.msra.mxu0 %v6648
        %6691 = vmatprep.subr.mxu0 0.0
        %6692 = vmatpush2.msra.mxu0 0.0
        %6693 = vmatprep.subr.mxu0 0.0
        %6694 = vmatpush2.msra.mxu0 0.0
        %6695 = vmatprep.subr.mxu0 0.0
        %6696 = vmatpush2.msra.mxu0 0.0
        %6697 = vmatprep.subr.mxu0 0.0
        %6698 = vmatpush2.msra.mxu0 0.0
        %6699 = vmatprep.subr.mxu0 0.0
        %6700 = vmatpush2.msra.mxu0 0.0
        %6701 = vmatprep.subr.mxu0 0.0
        %6702 = vmatpush2.msra.mxu0 0.0
        %6703 = vmatprep.subr.mxu0 0.0
        %6704 = vmatpush2.msra.mxu0 0.0
        %6705 = vmatprep.subr.mxu0 0.0
        %6706 = vmatpush2.msra.mxu0 0.0
        %6707 = vmatprep.subr.mxu0 0.0
        %6708 = vmatpush2.msra.mxu0 0.0
        %6709 = vmatprep.subr.mxu0 0.0
        %6710 = vmatpush2.msra.mxu0 0.0
        %6711 = vmatprep.subr.mxu0 0.0
        %6712 = vmatpush2.msra.mxu0 0.0
        %6713 = vmatprep.subr.mxu0 0.0
        %6714 = vmatpush2.msra.mxu0 0.0
        %6715 = vmatprep.subr.mxu0 0.0
        %6716 = vmatpush2.msra.mxu0 0.0
        %6717 = vmatprep.subr.mxu0 0.0
        %6718 = vmatpush2.msra.mxu0 0.0
        %6719 = vmatprep.subr.mxu0 0.0
        %6720 = vmatpush2.msra.mxu0 0.0
        %6721 = vmatprep.subr.mxu0 0.0
        %6722 = vmatpush2.msra.mxu0 0.0
        %6723 = vmatprep.mubr.f32.mxu0 0.0
        %6724 = vmatmul.mubr.f32.gmra.mxu0 %v6654
        %v6725 = vpop.f32.mrf.mxu0
        %v6726 = vadd.f32 0.0, %v6725
        %v6727 = vpop.f32.mrf.mxu0
        %6728 = vmatprep.mubr.f32.mxu0 0.0
        %6729 = vmatmul.mubr.f32.gmra.mxu0 %v6657
        %v6730 = vpop.f32.mrf.mxu0
        %v6731 = vadd.f32 0.0, %v6730
        %v6732 = vpop.f32.mrf.mxu0
        %6733 = vdwg.mxu0
        %6734 = vrot.lane.b32.xlu0 %v490, 40
        %v6735 = vpop.permute.xlu0 %6734
        %6736 = vrot.lane.b32.xlu0 %v495, 40
        %v6737 = vpop.permute.xlu0 %6736
        %v6741 = vsel %vm1267, %v6463, 0
        %v6744 = vsel %vm1267, %v6464, 0
        %6746 = vmatprep.subr.mxu0 0.0
        %6747 = vmatpush1.msra.mxu0 0.0
        %6748 = vmatprep.subr.mxu0 0.0
        %6749 = vmatpush1.msra.mxu0 0.0
        %6750 = vmatprep.subr.mxu0 0.0
        %6751 = vmatpush1.msra.mxu0 0.0
        %6752 = vmatprep.subr.mxu0 0.0
        %6753 = vmatpush1.msra.mxu0 0.0
        %6754 = vmatprep.subr.mxu0 0.0
        %6755 = vmatpush1.msra.mxu0 0.0
        %6756 = vmatprep.subr.mxu0 0.0
        %6757 = vmatpush1.msra.mxu0 0.0
        %6758 = vmatprep.subr.mxu0 0.0
        %6759 = vmatpush1.msra.mxu0 0.0
        %6760 = vmatprep.subr.mxu0 0.0
        %6761 = vmatpush1.msra.mxu0 0.0
        %6762 = vmatprep.subr.mxu0 0.0
        %6763 = vmatpush1.msra.mxu0 0.0
        %6764 = vmatprep.subr.mxu0 0.0
        %6765 = vmatpush1.msra.mxu0 0.0
        %6766 = vmatprep.subr.mxu0 0.0
        %6767 = vmatpush1.msra.mxu0 0.0
        %6768 = vmatprep.subr.mxu0 0.0
        %6769 = vmatpush1.msra.mxu0 0.0
        %6770 = vmatprep.subr.mxu0 0.0
        %6771 = vmatpush1.msra.mxu0 0.0
        %6772 = vmatprep.subr.mxu0 0.0
        %6773 = vmatpush1.msra.mxu0 0.0
        %6774 = vmatprep.subr.mxu0 0.0
        %6775 = vmatpush1.msra.mxu0 %v6737
        %6776 = vmatprep.subr.mxu0 0.0
        %6777 = vmatpush1.msra.mxu0 %v6735
        %6778 = vmatprep.subr.mxu0 0.0
        %6779 = vmatpush2.msra.mxu0 0.0
        %6780 = vmatprep.subr.mxu0 0.0
        %6781 = vmatpush2.msra.mxu0 0.0
        %6782 = vmatprep.subr.mxu0 0.0
        %6783 = vmatpush2.msra.mxu0 0.0
        %6784 = vmatprep.subr.mxu0 0.0
        %6785 = vmatpush2.msra.mxu0 0.0
        %6786 = vmatprep.subr.mxu0 0.0
        %6787 = vmatpush2.msra.mxu0 0.0
        %6788 = vmatprep.subr.mxu0 0.0
        %6789 = vmatpush2.msra.mxu0 0.0
        %6790 = vmatprep.subr.mxu0 0.0
        %6791 = vmatpush2.msra.mxu0 0.0
        %6792 = vmatprep.subr.mxu0 0.0
        %6793 = vmatpush2.msra.mxu0 0.0
        %6794 = vmatprep.subr.mxu0 0.0
        %6795 = vmatpush2.msra.mxu0 0.0
        %6796 = vmatprep.subr.mxu0 0.0
        %6797 = vmatpush2.msra.mxu0 0.0
        %6798 = vmatprep.subr.mxu0 0.0
        %6799 = vmatpush2.msra.mxu0 0.0
        %6800 = vmatprep.subr.mxu0 0.0
        %6801 = vmatpush2.msra.mxu0 0.0
        %6802 = vmatprep.subr.mxu0 0.0
        %6803 = vmatpush2.msra.mxu0 0.0
        %6804 = vmatprep.subr.mxu0 0.0
        %6805 = vmatpush2.msra.mxu0 0.0
        %6806 = vmatprep.subr.mxu0 0.0
        %6807 = vmatpush2.msra.mxu0 0.0
        %6808 = vmatprep.subr.mxu0 0.0
        %6809 = vmatpush2.msra.mxu0 0.0
        %6810 = vmatprep.mubr.f32.mxu0 0.0
        %6811 = vmatmul.mubr.f32.gmra.mxu0 %v6741
        %v6812 = vpop.f32.mrf.mxu0
        %v6813 = vadd.f32 0.0, %v6812
        %v6814 = vpop.f32.mrf.mxu0
        %6815 = vmatprep.mubr.f32.mxu0 0.0
        %6816 = vmatmul.mubr.f32.gmra.mxu0 %v6744
        %v6817 = vpop.f32.mrf.mxu0
        %v6818 = vadd.f32 0.0, %v6817
        %v6819 = vpop.f32.mrf.mxu0
        %6820 = vdwg.mxu0
        %6821 = vrot.lane.b32.xlu0 %v500, 40
        %v6822 = vpop.permute.xlu0 %6821
        %6823 = vrot.lane.b32.xlu0 %v505, 40
        %v6824 = vpop.permute.xlu0 %6823
        %v6828 = vsel %vm1267, %v6465, 0
        %v6831 = vsel %vm1267, %v6466, 0
        %6833 = vmatprep.subr.mxu0 0.0
        %6834 = vmatpush1.msra.mxu0 0.0
        %6835 = vmatprep.subr.mxu0 0.0
        %6836 = vmatpush1.msra.mxu0 0.0
        %6837 = vmatprep.subr.mxu0 0.0
        %6838 = vmatpush1.msra.mxu0 0.0
        %6839 = vmatprep.subr.mxu0 0.0
        %6840 = vmatpush1.msra.mxu0 0.0
        %6841 = vmatprep.subr.mxu0 0.0
        %6842 = vmatpush1.msra.mxu0 0.0
        %6843 = vmatprep.subr.mxu0 0.0
        %6844 = vmatpush1.msra.mxu0 0.0
        %6845 = vmatprep.subr.mxu0 0.0
        %6846 = vmatpush1.msra.mxu0 0.0
        %6847 = vmatprep.subr.mxu0 0.0
        %6848 = vmatpush1.msra.mxu0 0.0
        %6849 = vmatprep.subr.mxu0 0.0
        %6850 = vmatpush1.msra.mxu0 0.0
        %6851 = vmatprep.subr.mxu0 0.0
        %6852 = vmatpush1.msra.mxu0 0.0
        %6853 = vmatprep.subr.mxu0 0.0
        %6854 = vmatpush1.msra.mxu0 0.0
        %6855 = vmatprep.subr.mxu0 0.0
        %6856 = vmatpush1.msra.mxu0 0.0
        %6857 = vmatprep.subr.mxu0 0.0
        %6858 = vmatpush1.msra.mxu0 0.0
        %6859 = vmatprep.subr.mxu0 0.0
        %6860 = vmatpush1.msra.mxu0 0.0
        %6861 = vmatprep.subr.mxu0 0.0
        %6862 = vmatpush1.msra.mxu0 %v6824
        %6863 = vmatprep.subr.mxu0 0.0
        %6864 = vmatpush1.msra.mxu0 %v6822
        %6865 = vmatprep.subr.mxu0 0.0
        %6866 = vmatpush2.msra.mxu0 0.0
        %6867 = vmatprep.subr.mxu0 0.0
        %6868 = vmatpush2.msra.mxu0 0.0
        %6869 = vmatprep.subr.mxu0 0.0
        %6870 = vmatpush2.msra.mxu0 0.0
        %6871 = vmatprep.subr.mxu0 0.0
        %6872 = vmatpush2.msra.mxu0 0.0
        %6873 = vmatprep.subr.mxu0 0.0
        %6874 = vmatpush2.msra.mxu0 0.0
        %6875 = vmatprep.subr.mxu0 0.0
        %6876 = vmatpush2.msra.mxu0 0.0
        %6877 = vmatprep.subr.mxu0 0.0
        %6878 = vmatpush2.msra.mxu0 0.0
        %6879 = vmatprep.subr.mxu0 0.0
        %6880 = vmatpush2.msra.mxu0 0.0
        %6881 = vmatprep.subr.mxu0 0.0
        %6882 = vmatpush2.msra.mxu0 0.0
        %6883 = vmatprep.subr.mxu0 0.0
        %6884 = vmatpush2.msra.mxu0 0.0
        %6885 = vmatprep.subr.mxu0 0.0
        %6886 = vmatpush2.msra.mxu0 0.0
        %6887 = vmatprep.subr.mxu0 0.0
        %6888 = vmatpush2.msra.mxu0 0.0
        %6889 = vmatprep.subr.mxu0 0.0
        %6890 = vmatpush2.msra.mxu0 0.0
        %6891 = vmatprep.subr.mxu0 0.0
        %6892 = vmatpush2.msra.mxu0 0.0
        %6893 = vmatprep.subr.mxu0 0.0
        %6894 = vmatpush2.msra.mxu0 0.0
        %6895 = vmatprep.subr.mxu0 0.0
        %6896 = vmatpush2.msra.mxu0 0.0
        %6897 = vmatprep.mubr.f32.mxu0 0.0
        %6898 = vmatmul.mubr.f32.gmra.mxu0 %v6828
        %v6899 = vpop.f32.mrf.mxu0
        %v6900 = vadd.f32 0.0, %v6899
        %v6901 = vpop.f32.mrf.mxu0
        %6902 = vmatprep.mubr.f32.mxu0 0.0
        %6903 = vmatmul.mubr.f32.gmra.mxu0 %v6831
        %v6904 = vpop.f32.mrf.mxu0
        %v6905 = vadd.f32 0.0, %v6904
        %v6906 = vpop.f32.mrf.mxu0
        %6907 = vdwg.mxu0
        %6908 = vrot.lane.b32.xlu0 %v510, 40
        %v6909 = vpop.permute.xlu0 %6908
        %6910 = vrot.lane.b32.xlu0 %v515, 40
        %v6911 = vpop.permute.xlu0 %6910
        %v6915 = vsel %vm1267, %v6467, 0
        %v6918 = vsel %vm1267, %v6468, 0
        %6920 = vmatprep.subr.mxu0 0.0
        %6921 = vmatpush1.msra.mxu0 0.0
        %6922 = vmatprep.subr.mxu0 0.0
        %6923 = vmatpush1.msra.mxu0 0.0
        %6924 = vmatprep.subr.mxu0 0.0
        %6925 = vmatpush1.msra.mxu0 0.0
        %6926 = vmatprep.subr.mxu0 0.0
        %6927 = vmatpush1.msra.mxu0 0.0
        %6928 = vmatprep.subr.mxu0 0.0
        %6929 = vmatpush1.msra.mxu0 0.0
        %6930 = vmatprep.subr.mxu0 0.0
        %6931 = vmatpush1.msra.mxu0 0.0
        %6932 = vmatprep.subr.mxu0 0.0
        %6933 = vmatpush1.msra.mxu0 0.0
        %6934 = vmatprep.subr.mxu0 0.0
        %6935 = vmatpush1.msra.mxu0 0.0
        %6936 = vmatprep.subr.mxu0 0.0
        %6937 = vmatpush1.msra.mxu0 0.0
        %6938 = vmatprep.subr.mxu0 0.0
        %6939 = vmatpush1.msra.mxu0 0.0
        %6940 = vmatprep.subr.mxu0 0.0
        %6941 = vmatpush1.msra.mxu0 0.0
        %6942 = vmatprep.subr.mxu0 0.0
        %6943 = vmatpush1.msra.mxu0 0.0
        %6944 = vmatprep.subr.mxu0 0.0
        %6945 = vmatpush1.msra.mxu0 0.0
        %6946 = vmatprep.subr.mxu0 0.0
        %6947 = vmatpush1.msra.mxu0 0.0
        %6948 = vmatprep.subr.mxu0 0.0
        %6949 = vmatpush1.msra.mxu0 %v6911
        %6950 = vmatprep.subr.mxu0 0.0
        %6951 = vmatpush1.msra.mxu0 %v6909
        %6952 = vmatprep.subr.mxu0 0.0
        %6953 = vmatpush2.msra.mxu0 0.0
        %6954 = vmatprep.subr.mxu0 0.0
        %6955 = vmatpush2.msra.mxu0 0.0
        %6956 = vmatprep.subr.mxu0 0.0
        %6957 = vmatpush2.msra.mxu0 0.0
        %6958 = vmatprep.subr.mxu0 0.0
        %6959 = vmatpush2.msra.mxu0 0.0
        %6960 = vmatprep.subr.mxu0 0.0
        %6961 = vmatpush2.msra.mxu0 0.0
        %6962 = vmatprep.subr.mxu0 0.0
        %6963 = vmatpush2.msra.mxu0 0.0
        %6964 = vmatprep.subr.mxu0 0.0
        %6965 = vmatpush2.msra.mxu0 0.0
        %6966 = vmatprep.subr.mxu0 0.0
        %6967 = vmatpush2.msra.mxu0 0.0
        %6968 = vmatprep.subr.mxu0 0.0
        %6969 = vmatpush2.msra.mxu0 0.0
        %6970 = vmatprep.subr.mxu0 0.0
        %6971 = vmatpush2.msra.mxu0 0.0
        %6972 = vmatprep.subr.mxu0 0.0
        %6973 = vmatpush2.msra.mxu0 0.0
        %6974 = vmatprep.subr.mxu0 0.0
        %6975 = vmatpush2.msra.mxu0 0.0
        %6976 = vmatprep.subr.mxu0 0.0
        %6977 = vmatpush2.msra.mxu0 0.0
        %6978 = vmatprep.subr.mxu0 0.0
        %6979 = vmatpush2.msra.mxu0 0.0
        %6980 = vmatprep.subr.mxu0 0.0
        %6981 = vmatpush2.msra.mxu0 0.0
        %6982 = vmatprep.subr.mxu0 0.0
        %6983 = vmatpush2.msra.mxu0 0.0
        %6984 = vmatprep.mubr.f32.mxu0 0.0
        %6985 = vmatmul.mubr.f32.gmra.mxu0 %v6915
        %v6986 = vpop.f32.mrf.mxu0
        %v6987 = vadd.f32 0.0, %v6986
        %v6988 = vpop.f32.mrf.mxu0
        %6989 = vmatprep.mubr.f32.mxu0 0.0
        %6990 = vmatmul.mubr.f32.gmra.mxu0 %v6918
        %v6991 = vpop.f32.mrf.mxu0
        %v6992 = vadd.f32 0.0, %v6991
        %v6993 = vpop.f32.mrf.mxu0
        %6994 = vdwg.mxu0
        %6995 = vrot.lane.b32.xlu0 %v520, 40
        %v6996 = vpop.permute.xlu0 %6995
        %6997 = vrot.lane.b32.xlu0 %v525, 40
        %v6998 = vpop.permute.xlu0 %6997
        %v7002 = vsel %vm1267, %v6469, 0
        %v7005 = vsel %vm1267, %v6470, 0
        %7007 = vmatprep.subr.mxu0 0.0
        %7008 = vmatpush1.msra.mxu0 0.0
        %7009 = vmatprep.subr.mxu0 0.0
        %7010 = vmatpush1.msra.mxu0 0.0
        %7011 = vmatprep.subr.mxu0 0.0
        %7012 = vmatpush1.msra.mxu0 0.0
        %7013 = vmatprep.subr.mxu0 0.0
        %7014 = vmatpush1.msra.mxu0 0.0
        %7015 = vmatprep.subr.mxu0 0.0
        %7016 = vmatpush1.msra.mxu0 0.0
        %7017 = vmatprep.subr.mxu0 0.0
        %7018 = vmatpush1.msra.mxu0 0.0
        %7019 = vmatprep.subr.mxu0 0.0
        %7020 = vmatpush1.msra.mxu0 0.0
        %7021 = vmatprep.subr.mxu0 0.0
        %7022 = vmatpush1.msra.mxu0 0.0
        %7023 = vmatprep.subr.mxu0 0.0
        %7024 = vmatpush1.msra.mxu0 0.0
        %7025 = vmatprep.subr.mxu0 0.0
        %7026 = vmatpush1.msra.mxu0 0.0
        %7027 = vmatprep.subr.mxu0 0.0
        %7028 = vmatpush1.msra.mxu0 0.0
        %7029 = vmatprep.subr.mxu0 0.0
        %7030 = vmatpush1.msra.mxu0 0.0
        %7031 = vmatprep.subr.mxu0 0.0
        %7032 = vmatpush1.msra.mxu0 0.0
        %7033 = vmatprep.subr.mxu0 0.0
        %7034 = vmatpush1.msra.mxu0 0.0
        %7035 = vmatprep.subr.mxu0 0.0
        %7036 = vmatpush1.msra.mxu0 %v6998
        %7037 = vmatprep.subr.mxu0 0.0
        %7038 = vmatpush1.msra.mxu0 %v6996
        %7039 = vmatprep.subr.mxu0 0.0
        %7040 = vmatpush2.msra.mxu0 0.0
        %7041 = vmatprep.subr.mxu0 0.0
        %7042 = vmatpush2.msra.mxu0 0.0
        %7043 = vmatprep.subr.mxu0 0.0
        %7044 = vmatpush2.msra.mxu0 0.0
        %7045 = vmatprep.subr.mxu0 0.0
        %7046 = vmatpush2.msra.mxu0 0.0
        %7047 = vmatprep.subr.mxu0 0.0
        %7048 = vmatpush2.msra.mxu0 0.0
        %7049 = vmatprep.subr.mxu0 0.0
        %7050 = vmatpush2.msra.mxu0 0.0
        %7051 = vmatprep.subr.mxu0 0.0
        %7052 = vmatpush2.msra.mxu0 0.0
        %7053 = vmatprep.subr.mxu0 0.0
        %7054 = vmatpush2.msra.mxu0 0.0
        %7055 = vmatprep.subr.mxu0 0.0
        %7056 = vmatpush2.msra.mxu0 0.0
        %7057 = vmatprep.subr.mxu0 0.0
        %7058 = vmatpush2.msra.mxu0 0.0
        %7059 = vmatprep.subr.mxu0 0.0
        %7060 = vmatpush2.msra.mxu0 0.0
        %7061 = vmatprep.subr.mxu0 0.0
        %7062 = vmatpush2.msra.mxu0 0.0
        %7063 = vmatprep.subr.mxu0 0.0
        %7064 = vmatpush2.msra.mxu0 0.0
        %7065 = vmatprep.subr.mxu0 0.0
        %7066 = vmatpush2.msra.mxu0 0.0
        %7067 = vmatprep.subr.mxu0 0.0
        %7068 = vmatpush2.msra.mxu0 0.0
        %7069 = vmatprep.subr.mxu0 0.0
        %7070 = vmatpush2.msra.mxu0 0.0
        %7071 = vmatprep.mubr.f32.mxu0 0.0
        %7072 = vmatmul.mubr.f32.gmra.mxu0 %v7002
        %v7073 = vpop.f32.mrf.mxu0
        %v7074 = vadd.f32 0.0, %v7073
        %v7075 = vpop.f32.mrf.mxu0
        %7076 = vmatprep.mubr.f32.mxu0 0.0
        %7077 = vmatmul.mubr.f32.gmra.mxu0 %v7005
        %v7078 = vpop.f32.mrf.mxu0
        %v7079 = vadd.f32 0.0, %v7078
        %v7080 = vpop.f32.mrf.mxu0
        %7081 = vdwg.mxu0
        %7082 = vrot.lane.b32.xlu0 %v530, 40
        %v7083 = vpop.permute.xlu0 %7082
        %7084 = vrot.lane.b32.xlu0 %v535, 40
        %v7085 = vpop.permute.xlu0 %7084
        %v7089 = vsel %vm1267, %v6471, 0
        %v7092 = vsel %vm1267, %v6472, 0
        %7094 = vmatprep.subr.mxu0 0.0
        %7095 = vmatpush1.msra.mxu0 0.0
        %7096 = vmatprep.subr.mxu0 0.0
        %7097 = vmatpush1.msra.mxu0 0.0
        %7098 = vmatprep.subr.mxu0 0.0
        %7099 = vmatpush1.msra.mxu0 0.0
        %7100 = vmatprep.subr.mxu0 0.0
        %7101 = vmatpush1.msra.mxu0 0.0
        %7102 = vmatprep.subr.mxu0 0.0
        %7103 = vmatpush1.msra.mxu0 0.0
        %7104 = vmatprep.subr.mxu0 0.0
        %7105 = vmatpush1.msra.mxu0 0.0
        %7106 = vmatprep.subr.mxu0 0.0
        %7107 = vmatpush1.msra.mxu0 0.0
        %7108 = vmatprep.subr.mxu0 0.0
        %7109 = vmatpush1.msra.mxu0 0.0
        %7110 = vmatprep.subr.mxu0 0.0
        %7111 = vmatpush1.msra.mxu0 0.0
        %7112 = vmatprep.subr.mxu0 0.0
        %7113 = vmatpush1.msra.mxu0 0.0
        %7114 = vmatprep.subr.mxu0 0.0
        %7115 = vmatpush1.msra.mxu0 0.0
        %7116 = vmatprep.subr.mxu0 0.0
        %7117 = vmatpush1.msra.mxu0 0.0
        %7118 = vmatprep.subr.mxu0 0.0
        %7119 = vmatpush1.msra.mxu0 0.0
        %7120 = vmatprep.subr.mxu0 0.0
        %7121 = vmatpush1.msra.mxu0 0.0
        %7122 = vmatprep.subr.mxu0 0.0
        %7123 = vmatpush1.msra.mxu0 %v7085
        %7124 = vmatprep.subr.mxu0 0.0
        %7125 = vmatpush1.msra.mxu0 %v7083
        %7126 = vmatprep.subr.mxu0 0.0
        %7127 = vmatpush2.msra.mxu0 0.0
        %7128 = vmatprep.subr.mxu0 0.0
        %7129 = vmatpush2.msra.mxu0 0.0
        %7130 = vmatprep.subr.mxu0 0.0
        %7131 = vmatpush2.msra.mxu0 0.0
        %7132 = vmatprep.subr.mxu0 0.0
        %7133 = vmatpush2.msra.mxu0 0.0
        %7134 = vmatprep.subr.mxu0 0.0
        %7135 = vmatpush2.msra.mxu0 0.0
        %7136 = vmatprep.subr.mxu0 0.0
        %7137 = vmatpush2.msra.mxu0 0.0
        %7138 = vmatprep.subr.mxu0 0.0
        %7139 = vmatpush2.msra.mxu0 0.0
        %7140 = vmatprep.subr.mxu0 0.0
        %7141 = vmatpush2.msra.mxu0 0.0
        %7142 = vmatprep.subr.mxu0 0.0
        %7143 = vmatpush2.msra.mxu0 0.0
        %7144 = vmatprep.subr.mxu0 0.0
        %7145 = vmatpush2.msra.mxu0 0.0
        %7146 = vmatprep.subr.mxu0 0.0
        %7147 = vmatpush2.msra.mxu0 0.0
        %7148 = vmatprep.subr.mxu0 0.0
        %7149 = vmatpush2.msra.mxu0 0.0
        %7150 = vmatprep.subr.mxu0 0.0
        %7151 = vmatpush2.msra.mxu0 0.0
        %7152 = vmatprep.subr.mxu0 0.0
        %7153 = vmatpush2.msra.mxu0 0.0
        %7154 = vmatprep.subr.mxu0 0.0
        %7155 = vmatpush2.msra.mxu0 0.0
        %7156 = vmatprep.subr.mxu0 0.0
        %7157 = vmatpush2.msra.mxu0 0.0
        %7158 = vmatprep.mubr.f32.mxu0 0.0
        %7159 = vmatmul.mubr.f32.gmra.mxu0 %v7089
        %v7160 = vpop.f32.mrf.mxu0
        %v7161 = vadd.f32 0.0, %v7160
        %v7162 = vpop.f32.mrf.mxu0
        %7163 = vmatprep.mubr.f32.mxu0 0.0
        %7164 = vmatmul.mubr.f32.gmra.mxu0 %v7092
        %v7165 = vpop.f32.mrf.mxu0
        %v7166 = vadd.f32 0.0, %v7165
        %v7167 = vpop.f32.mrf.mxu0
        %7168 = vdwg.mxu0
        %7185 = vrot.lane.b32.xlu0 %v6552, 24
        %v7186 = vpop.permute.xlu0 %7185
        %7187 = vrot.lane.b32.xlu0 %v6557, 24
        %v7188 = vpop.permute.xlu0 %7187
        %7189 = vrot.lane.b32.xlu0 %v6639, 24
        %v7190 = vpop.permute.xlu0 %7189
        %7191 = vrot.lane.b32.xlu0 %v6644, 24
        %v7192 = vpop.permute.xlu0 %7191
        %7193 = vrot.lane.b32.xlu0 %v6726, 24
        %v7194 = vpop.permute.xlu0 %7193
        %7195 = vrot.lane.b32.xlu0 %v6731, 24
        %v7196 = vpop.permute.xlu0 %7195
        %7197 = vrot.lane.b32.xlu0 %v6813, 24
        %v7198 = vpop.permute.xlu0 %7197
        %7199 = vrot.lane.b32.xlu0 %v6818, 24
        %v7200 = vpop.permute.xlu0 %7199
        %7201 = vrot.lane.b32.xlu0 %v6900, 24
        %v7202 = vpop.permute.xlu0 %7201
        %7203 = vrot.lane.b32.xlu0 %v6905, 24
        %v7204 = vpop.permute.xlu0 %7203
        %7205 = vrot.lane.b32.xlu0 %v6987, 24
        %v7206 = vpop.permute.xlu0 %7205
        %7207 = vrot.lane.b32.xlu0 %v6992, 24
        %v7208 = vpop.permute.xlu0 %7207
        %7209 = vrot.lane.b32.xlu0 %v7074, 24
        %v7210 = vpop.permute.xlu0 %7209
        %7211 = vrot.lane.b32.xlu0 %v7079, 24
        %v7212 = vpop.permute.xlu0 %7211
        %7213 = vrot.lane.b32.xlu0 %v7161, 24
        %v7214 = vpop.permute.xlu0 %7213
        %7215 = vrot.lane.b32.xlu0 %v7166, 24
        %v7216 = vpop.permute.xlu0 %7215
        %vm7233 = vcmask 261312
        %7234 = vst.msk [vmem:[#allocation2] sm:$0xff] %vm7233, %v7186
        %7235 = vst.msk [vmem:[#allocation2 + $0x8] sm:$0xff] %vm7233, %v7188
        %7236 = vst.msk [vmem:[#allocation2 + $0x10] sm:$0xff] %vm7233, %v7190
        %7237 = vst.msk [vmem:[#allocation2 + $0x18] sm:$0xff] %vm7233, %v7192
        %7238 = vst.msk [vmem:[#allocation2 + $0x20] sm:$0xff] %vm7233, %v7194
        %7239 = vst.msk [vmem:[#allocation2 + $0x28] sm:$0xff] %vm7233, %v7196
        %7240 = vst.msk [vmem:[#allocation2 + $0x30] sm:$0xff] %vm7233, %v7198
        %7241 = vst.msk [vmem:[#allocation2 + $0x38] sm:$0xff] %vm7233, %v7200
        %7242 = vst.msk [vmem:[#allocation2 + $0x40] sm:$0xff] %vm7233, %v7202
        %7243 = vst.msk [vmem:[#allocation2 + $0x48] sm:$0xff] %vm7233, %v7204
        %7244 = vst.msk [vmem:[#allocation2 + $0x50] sm:$0xff] %vm7233, %v7206
        %7245 = vst.msk [vmem:[#allocation2 + $0x58] sm:$0xff] %vm7233, %v7208
        %7246 = vst.msk [vmem:[#allocation2 + $0x60] sm:$0xff] %vm7233, %v7210
        %7247 = vst.msk [vmem:[#allocation2 + $0x68] sm:$0xff] %vm7233, %v7212
        %7248 = vst.msk [vmem:[#allocation2 + $0x70] sm:$0xff] %vm7233, %v7214
        %7249 = vst.msk [vmem:[#allocation2 + $0x78] sm:$0xff] %vm7233, %v7216
        %v7250 = vld [vmem:[#allocation2] sm:$0xff]
        %v7251 = vld [vmem:[#allocation2 + $0x8] sm:$0xff]
        %v7252 = vld [vmem:[#allocation2 + $0x10] sm:$0xff]
        %v7253 = vld [vmem:[#allocation2 + $0x18] sm:$0xff]
        %v7254 = vld [vmem:[#allocation2 + $0x20] sm:$0xff]
        %v7255 = vld [vmem:[#allocation2 + $0x28] sm:$0xff]
        %v7256 = vld [vmem:[#allocation2 + $0x30] sm:$0xff]
        %v7257 = vld [vmem:[#allocation2 + $0x38] sm:$0xff]
        %v7258 = vld [vmem:[#allocation2 + $0x40] sm:$0xff]
        %v7259 = vld [vmem:[#allocation2 + $0x48] sm:$0xff]
        %v7260 = vld [vmem:[#allocation2 + $0x50] sm:$0xff]
        %v7261 = vld [vmem:[#allocation2 + $0x58] sm:$0xff]
        %v7262 = vld [vmem:[#allocation2 + $0x60] sm:$0xff]
        %v7263 = vld [vmem:[#allocation2 + $0x68] sm:$0xff]
        %v7264 = vld [vmem:[#allocation2 + $0x70] sm:$0xff]
        %v7265 = vld [vmem:[#allocation2 + $0x78] sm:$0xff]
        %v7266 = vld [vmem:[#allocation8] sm:$0xff]
        %v7267 = vld [vmem:[#allocation8 + $0x8] sm:$0xff]
        %v7268 = vld [vmem:[#allocation8 + $0x10] sm:$0xff]
        %v7269 = vld [vmem:[#allocation8 + $0x18] sm:$0xff]
        %v7270 = vld [vmem:[%s4] sm:$0x1]
        %v7272 = vlaneseq
        %v7273 = vshrl.u32 %v7272, 7
        %v7274 = vsub.s32 0, %v7273
        %v7275 = vrot.slane %v7270, %v7274
        %v7278 = vsel %vm344, %v7250, 0
        %v7281 = vsel %vm344, %v7251, 0
        %v7284 = vsel %vm344, %v7252, 0
        %v7287 = vsel %vm344, %v7253, 0
        %v7290 = vsel %vm344, %v7254, 0
        %v7293 = vsel %vm344, %v7255, 0
        %v7296 = vsel %vm344, %v7256, 0
        %v7299 = vsel %vm344, %v7257, 0
        %v7302 = vsel %vm344, %v7258, 0
        %v7305 = vsel %vm344, %v7259, 0
        %v7308 = vsel %vm344, %v7260, 0
        %v7311 = vsel %vm344, %v7261, 0
        %v7314 = vsel %vm344, %v7262, 0
        %v7317 = vsel %vm344, %v7263, 0
        %v7320 = vsel %vm344, %v7264, 0
        %v7323 = vsel %vm344, %v7265, 0
        %7325 = vmatprep.subr.mxu0 0.0
        %7326 = vmatpush1.msra.mxu0 0.0
        %7327 = vmatprep.subr.mxu0 0.0
        %7328 = vmatpush1.msra.mxu0 0.0
        %7329 = vmatprep.subr.mxu0 0.0
        %7330 = vmatpush1.msra.mxu0 0.0
        %7331 = vmatprep.subr.mxu0 0.0
        %7332 = vmatpush1.msra.mxu0 0.0
        %7333 = vmatprep.subr.mxu0 0.0
        %7334 = vmatpush1.msra.mxu0 0.0
        %7335 = vmatprep.subr.mxu0 0.0
        %7336 = vmatpush1.msra.mxu0 0.0
        %7337 = vmatprep.subr.mxu0 0.0
        %7338 = vmatpush1.msra.mxu0 0.0
        %7339 = vmatprep.subr.mxu0 0.0
        %7340 = vmatpush1.msra.mxu0 0.0
        %7341 = vmatprep.subr.mxu0 0.0
        %7342 = vmatpush1.msra.mxu0 0.0
        %7343 = vmatprep.subr.mxu0 0.0
        %7344 = vmatpush1.msra.mxu0 0.0
        %7345 = vmatprep.subr.mxu0 0.0
        %7346 = vmatpush1.msra.mxu0 0.0
        %7347 = vmatprep.subr.mxu0 0.0
        %7348 = vmatpush1.msra.mxu0 0.0
        %7349 = vmatprep.subr.mxu0 0.0
        %7350 = vmatpush1.msra.mxu0 %v7269
        %7351 = vmatprep.subr.mxu0 0.0
        %7352 = vmatpush1.msra.mxu0 %v7268
        %7353 = vmatprep.subr.mxu0 0.0
        %7354 = vmatpush1.msra.mxu0 %v7267
        %7355 = vmatprep.subr.mxu0 0.0
        %7356 = vmatpush1.msra.mxu0 %v7266
        %7357 = vmatprep.subr.mxu0 0.0
        %7358 = vmatpush2.msra.mxu0 0.0
        %7359 = vmatprep.subr.mxu0 0.0
        %7360 = vmatpush2.msra.mxu0 0.0
        %7361 = vmatprep.subr.mxu0 0.0
        %7362 = vmatpush2.msra.mxu0 0.0
        %7363 = vmatprep.subr.mxu0 0.0
        %7364 = vmatpush2.msra.mxu0 0.0
        %7365 = vmatprep.subr.mxu0 0.0
        %7366 = vmatpush2.msra.mxu0 0.0
        %7367 = vmatprep.subr.mxu0 0.0
        %7368 = vmatpush2.msra.mxu0 0.0
        %7369 = vmatprep.subr.mxu0 0.0
        %7370 = vmatpush2.msra.mxu0 0.0
        %7371 = vmatprep.subr.mxu0 0.0
        %7372 = vmatpush2.msra.mxu0 0.0
        %7373 = vmatprep.subr.mxu0 0.0
        %7374 = vmatpush2.msra.mxu0 0.0
        %7375 = vmatprep.subr.mxu0 0.0
        %7376 = vmatpush2.msra.mxu0 0.0
        %7377 = vmatprep.subr.mxu0 0.0
        %7378 = vmatpush2.msra.mxu0 0.0
        %7379 = vmatprep.subr.mxu0 0.0
        %7380 = vmatpush2.msra.mxu0 0.0
        %7381 = vmatprep.subr.mxu0 0.0
        %7382 = vmatpush2.msra.mxu0 0.0
        %7383 = vmatprep.subr.mxu0 0.0
        %7384 = vmatpush2.msra.mxu0 0.0
        %7385 = vmatprep.subr.mxu0 0.0
        %7386 = vmatpush2.msra.mxu0 0.0
        %7387 = vmatprep.subr.mxu0 0.0
        %7388 = vmatpush2.msra.mxu0 0.0
        %7389 = vmatprep.mubr.f32.mxu0 0.0
        %7390 = vmatmul.mubr.f32.gmra.mxu0 %v7278
        %v7391 = vpop.f32.mrf.mxu0
        %v7392 = vadd.f32 %v7275, %v7391
        %v7393 = vpop.f32.mrf.mxu0
        %7394 = vmatprep.mubr.f32.mxu0 0.0
        %7395 = vmatmul.mubr.f32.gmra.mxu0 %v7281
        %v7396 = vpop.f32.mrf.mxu0
        %v7397 = vadd.f32 %v7275, %v7396
        %v7398 = vpop.f32.mrf.mxu0
        %7399 = vmatprep.mubr.f32.mxu0 0.0
        %7400 = vmatmul.mubr.f32.gmra.mxu0 %v7284
        %v7401 = vpop.f32.mrf.mxu0
        %v7402 = vadd.f32 %v7275, %v7401
        %v7403 = vpop.f32.mrf.mxu0
        %7404 = vmatprep.mubr.f32.mxu0 0.0
        %7405 = vmatmul.mubr.f32.gmra.mxu0 %v7287
        %v7406 = vpop.f32.mrf.mxu0
        %v7407 = vadd.f32 %v7275, %v7406
        %v7408 = vpop.f32.mrf.mxu0
        %7409 = vmatprep.mubr.f32.mxu0 0.0
        %7410 = vmatmul.mubr.f32.gmra.mxu0 %v7290
        %v7411 = vpop.f32.mrf.mxu0
        %v7412 = vadd.f32 %v7275, %v7411
        %v7413 = vpop.f32.mrf.mxu0
        %7414 = vmatprep.mubr.f32.mxu0 0.0
        %7415 = vmatmul.mubr.f32.gmra.mxu0 %v7293
        %v7416 = vpop.f32.mrf.mxu0
        %v7417 = vadd.f32 %v7275, %v7416
        %v7418 = vpop.f32.mrf.mxu0
        %7419 = vmatprep.mubr.f32.mxu0 0.0
        %7420 = vmatmul.mubr.f32.gmra.mxu0 %v7296
        %v7421 = vpop.f32.mrf.mxu0
        %v7422 = vadd.f32 %v7275, %v7421
        %v7423 = vpop.f32.mrf.mxu0
        %7424 = vmatprep.mubr.f32.mxu0 0.0
        %7425 = vmatmul.mubr.f32.gmra.mxu0 %v7299
        %v7426 = vpop.f32.mrf.mxu0
        %v7427 = vadd.f32 %v7275, %v7426
        %v7428 = vpop.f32.mrf.mxu0
        %7429 = vmatprep.mubr.f32.mxu0 0.0
        %7430 = vmatmul.mubr.f32.gmra.mxu0 %v7302
        %v7431 = vpop.f32.mrf.mxu0
        %v7432 = vadd.f32 %v7275, %v7431
        %v7433 = vpop.f32.mrf.mxu0
        %7434 = vmatprep.mubr.f32.mxu0 0.0
        %7435 = vmatmul.mubr.f32.gmra.mxu0 %v7305
        %v7436 = vpop.f32.mrf.mxu0
        %v7437 = vadd.f32 %v7275, %v7436
        %v7438 = vpop.f32.mrf.mxu0
        %7439 = vmatprep.mubr.f32.mxu0 0.0
        %7440 = vmatmul.mubr.f32.gmra.mxu0 %v7308
        %v7441 = vpop.f32.mrf.mxu0
        %v7442 = vadd.f32 %v7275, %v7441
        %v7443 = vpop.f32.mrf.mxu0
        %7444 = vmatprep.mubr.f32.mxu0 0.0
        %7445 = vmatmul.mubr.f32.gmra.mxu0 %v7311
        %v7446 = vpop.f32.mrf.mxu0
        %v7447 = vadd.f32 %v7275, %v7446
        %v7448 = vpop.f32.mrf.mxu0
        %7449 = vmatprep.mubr.f32.mxu0 0.0
        %7450 = vmatmul.mubr.f32.gmra.mxu0 %v7314
        %v7451 = vpop.f32.mrf.mxu0
        %v7452 = vadd.f32 %v7275, %v7451
        %v7453 = vpop.f32.mrf.mxu0
        %7454 = vmatprep.mubr.f32.mxu0 0.0
        %7455 = vmatmul.mubr.f32.gmra.mxu0 %v7317
        %v7456 = vpop.f32.mrf.mxu0
        %v7457 = vadd.f32 %v7275, %v7456
        %v7458 = vpop.f32.mrf.mxu0
        %7459 = vmatprep.mubr.f32.mxu0 0.0
        %7460 = vmatmul.mubr.f32.gmra.mxu0 %v7320
        %v7461 = vpop.f32.mrf.mxu0
        %v7462 = vadd.f32 %v7275, %v7461
        %v7463 = vpop.f32.mrf.mxu0
        %7464 = vmatprep.mubr.f32.mxu0 0.0
        %7465 = vmatmul.mubr.f32.gmra.mxu0 %v7323
        %v7466 = vpop.f32.mrf.mxu0
        %v7467 = vadd.f32 %v7275, %v7466
        %v7468 = vpop.f32.mrf.mxu0
        %7469 = vdwg.mxu0
        %7470 = vst.msk [vmem:[%s314] sm:$0xff] %vm344, %v7392
        %7471 = vst.msk [vmem:[%s314 + $0x8] sm:$0xff] %vm344, %v7397
        %7472 = vst.msk [vmem:[%s314 + $0x10] sm:$0xff] %vm344, %v7402
        %7473 = vst.msk [vmem:[%s314 + $0x18] sm:$0xff] %vm344, %v7407
        %7474 = vst.msk [vmem:[%s314 + $0x20] sm:$0xff] %vm344, %v7412
        %7475 = vst.msk [vmem:[%s314 + $0x28] sm:$0xff] %vm344, %v7417
        %7476 = vst.msk [vmem:[%s314 + $0x30] sm:$0xff] %vm344, %v7422
        %7477 = vst.msk [vmem:[%s314 + $0x38] sm:$0xff] %vm344, %v7427
        %7478 = vst.msk [vmem:[%s314 + $0x40] sm:$0xff] %vm344, %v7432
        %7479 = vst.msk [vmem:[%s314 + $0x48] sm:$0xff] %vm344, %v7437
        %7480 = vst.msk [vmem:[%s314 + $0x50] sm:$0xff] %vm344, %v7442
        %7481 = vst.msk [vmem:[%s314 + $0x58] sm:$0xff] %vm344, %v7447
        %7482 = vst.msk [vmem:[%s314 + $0x60] sm:$0xff] %vm344, %v7452
        %7483 = vst.msk [vmem:[%s314 + $0x68] sm:$0xff] %vm344, %v7457
        %7484 = vst.msk [vmem:[%s314 + $0x70] sm:$0xff] %vm344, %v7462
        %7485 = vst.msk [vmem:[%s314 + $0x78] sm:$0xff] %vm344, %v7467
        %s7486 = sand.u32 %s164, 1
        %s7487 = scalar_lea.sflag [#allocation5], %s7486
        %s7488 = sand.u32 %s164, 1
        %s7489 = smul.addr %s7488, 128
        %s7490 = scalar_lea.vmem [#allocation11], %s7489
        // Predicated region
        $region61: #{tpu_custom_call.1} parent=43 // pred_check
          %p7491 = pneg %p174
        $region62: #{tpu_custom_call.1} parent=43 // pred_check_branch
          %7493 = sbr.rel (%p7491) target = $region64
        $region63: #{tpu_custom_call.1} parent=43 // pred_region
          %s7494 = smul.u32 8, %s25
          %s7496 = ssub.s32 2048, 2048
          %7497 = vsyncadd %s7487, %s7496
          %s7498 = smul.addr %s7494, 2
          %s7499 = smul.addr %s7498, 128
          %s7500 = scalar_lea.hbm %s6, %s7499
          %s7501 = sshll.u32 %s7490, 4
          %s7502 = int_to_ptr.vmem [resolvable:$true] %s7501
          %7507 = dma.vmem_to_hbm [thread:$0]  %s7502, 2048, %s7500, %s7487, 128, 128, 8
        $region64: #{tpu_custom_call.1} parent=43 // pred_fallthru
          _
      $region44: #{tpu_custom_call.1} parent=5 // pred_fallthru
        _
      %p7508 = scmp.le.s32.totalorder 2, %s20
      // Predicated region
      $region65: #{tpu_custom_call.1} parent=5 // pred_check
        %p7509 = pneg %p7508
      $region66: #{tpu_custom_call.1} parent=5 // pred_check_branch
        %7511 = sbr.rel (%p7509) target = $region68
      $region67: #{tpu_custom_call.1} parent=5 // pred_region
        %s7512 = ssub.s32 %s20, 2
        // Predicated region
        $region69: #{tpu_custom_call.1} parent=67 // pred_check
          %p7513 = pneg %p180
        $region70: #{tpu_custom_call.1} parent=67 // pred_check_branch
          %7515 = sbr.rel (%p7513) target = $region72
        $region71: #{tpu_custom_call.1} parent=67 // pred_region
          %s7516 = sand.u32 %s165, 1
          %s7517 = scalar_lea.sflag [#allocation5], %s7516
          %s7518 = sand.u32 %s165, 1
          %s7519 = smul.addr %s7518, 128
          %s7520 = scalar_lea.vmem [#allocation11], %s7519
          %7521 = dma.done %s7517, 2048
        $region72: #{tpu_custom_call.1} parent=67 // pred_fallthru
          _
      $region68: #{tpu_custom_call.1} parent=5 // pred_fallthru
        _
    $region6: #{tpu_custom_call.1} parent=1 // loop_footer
      %s24 = sadd.s32 1, %s20
    $region7: #{tpu_custom_call.1} parent=1 // loop_footer_branch
      %19 = sbr.rel target = $region3
    $region8: #{tpu_custom_call.1} parent=1 // loop_exit
      _
    %7522 = vsyncpa [#allocation4], 1
    %s7523 = scalar_lea.sflag [#allocation4], 1
    %7524 = vsyncpa %s7523, 1
    %7525 = vsyncpa [#allocation7], 1
    %7526 = vsyncpa [#allocation10], 1
    %7527 = vsyncpa [#allocation5], 1
    %s7528 = scalar_lea.sflag [#allocation5], 1
    %7529 = vsyncpa %s7528, 1

</llo_original>
